<compile_context>
chip_gen: v5e
topology: v5e:2x2
jax: 0.10.0
libtpu: 0.0.40
codegen_flags: <defaults>
</compile_context>

<pallas_src>
import jax
import jax.numpy as jnp
from jax.experimental import pallas as pl
from jax.experimental.pallas import tpu as pltpu

LANE = 128


def _round_up(x, m):
    return (x + m - 1) // m * m


# ------------------------------ Pallas kernels -------------------------------

def _conv_matmul_relu_kernel(x_ref, w_ref, b_ref, o_ref):
    """One (tm, K) x (K, Cout) MXU tile: bf16 operands, f32 bias+ReLU, bf16 store."""
    acc = jnp.dot(x_ref[...], w_ref[...], preferred_element_type=jnp.float32)
    acc = jnp.maximum(acc + b_ref[...], 0.0)        # (1, Cout) bias broadcasts
    o_ref[...] = acc.astype(o_ref.dtype)


def _maxpool_kernel(x_ref, o_ref):
    """2x2 ceil-mode max over a (1, Ho, 2, Wo, 2*C) block -> (1, Ho, Wo, C).
    Row pair = integer index on a middle dim; the two W phases live in the
    128-aligned lane halves [:C] / [C:] (set up by the wrapper's free reshape)."""
    c = o_ref.shape[-1]
    x = x_ref[...]
    m = jnp.maximum(x[:, :, 0, :, :], x[:, :, 1, :, :])
    o_ref[...] = jnp.maximum(m[..., :c], m[..., c:])


def _tail_kernel(p_ref, wc_ref, bc_ref, w1_ref, b1_ref, w2_ref, b2_ref,
                 w3_ref, b3_ref, o_ref):
    """conv3(+ReLU) -> pool_last -> flatten -> fc1(+ReLU) -> fc2(+ReLU) -> fc3(+sigmoid).

    p_ref holds conv3 im2col patches with rows ordered (ho, wo, n), so every
    spatial position is a contiguous (nb, 128) row slab (Ho=3, Wo=4 pinned by
    fc1's 768-feature input).  The NCHW flatten is folded into fc1's weight row
    order at init, so no in-kernel transpose/reshape is needed.
    """
    nb = o_ref.shape[0]

    h = jnp.dot(p_ref[...], wc_ref[...], preferred_element_type=jnp.float32)
    h = jnp.maximum(h + bc_ref[...], 0.0)           # (12*nb, 128) f32

    def slab(ho, wo):                               # (nb, 128) at spatial (ho, wo)
        k = (ho * 4 + wo) * nb
        return h[k:k + nb, :]

    # MaxPool2d(2, 2, padding=(0, 1), ceil_mode=True) on the 3x4 conv3 map.
    # H windows: {0,1}, {2};  W windows (pad=1, -inf): {0}, {1,2}, {3}.
    pooled = (
        jnp.maximum(slab(0, 0), slab(1, 0)),                        # (po=0, pw=0)
        jnp.maximum(jnp.maximum(slab(0, 1), slab(0, 2)),
                    jnp.maximum(slab(1, 1), slab(1, 2))),           # (0, 1)
        jnp.maximum(slab(0, 3), slab(1, 3)),                        # (0, 2)
        slab(2, 0),                                                 # (1, 0)
        jnp.maximum(slab(2, 1), slab(2, 2)),                        # (1, 1)
        slab(2, 3),                                                 # (1, 2)
    )

    # fc1: accumulate six (nb,128)@(128,768) blocks; w1 rows were permuted at
    # init so block `pos` corresponds to NHWC position pos = po*3 + pw.
    h1 = b1_ref[...]                                                # (1, 768) f32
    for pos, s in enumerate(pooled):
        h1 = h1 + jnp.dot(s.astype(jnp.bfloat16),
                          w1_ref[pos * LANE:(pos + 1) * LANE, :],
                          preferred_element_type=jnp.float32)
    h1 = jnp.maximum(h1, 0.0)                                       # fc1 + ReLU

    h2 = jnp.dot(h1.astype(jnp.bfloat16), w2_ref[...],
                 preferred_element_type=jnp.float32) + b2_ref[...]
    h2 = jnp.maximum(h2, 0.0)                                       # fc2 + ReLU

    h3 = jnp.dot(h2.astype(jnp.bfloat16), w3_ref[...],
                 preferred_element_type=jnp.float32) + b3_ref[...]
    o_ref[...] = jax.nn.sigmoid(h3)                                 # fc3 + sigmoid


# -------------------------------- wrappers ------------------------------------

def _im2col(x, kh, kw, stride, pad_h, pad_w):
    """x: (N,H,W,C) -> (N, Ho, Wo, kh*kw*C) patches, K ordered (kh, kw, Cin)."""
    n, h, w, c = x.shape
    xp = jnp.pad(x, ((0, 0), (pad_h, pad_h), (pad_w, pad_w), (0, 0)))
    ho = (h + 2 * pad_h - kh) // stride + 1
    wo = (w + 2 * pad_w - kw) // stride + 1
    cols = [xp[:, i::stride, j::stride, :][:, :ho, :wo, :]
            for i in range(kh) for j in range(kw)]
    p = jnp.stack(cols, axis=3).reshape(n, ho, wo, kh * kw * c)
    return p, ho, wo


def _matmul_bias_relu(p, w, b, tm):
    """relu(p @ w + b) with a pipelined, megacore-parallel M-tiled grid.
    p: (M, K) bf16, w: (K, Cout) bf16 (Cout % 128 == 0), b: (1, Cout) f32."""
    m, k = p.shape
    kw_, n_out = w.shape
    assert k == kw_ and n_out % LANE == 0
    tm = min(tm, _round_up(m, 16))
    mp = _round_up(m, tm)
    if mp != m:
        p = jnp.pad(p, ((0, mp - m), (0, 0)))
    out = pl.pallas_call(
        _conv_matmul_relu_kernel,
        out_shape=jax.ShapeDtypeStruct((mp, n_out), jnp.bfloat16),
        grid=(mp // tm,),
        in_specs=[
            pl.BlockSpec((tm, k), lambda i: (i, 0)),
            pl.BlockSpec((k, n_out), lambda i: (0, 0)),
            pl.BlockSpec((1, n_out), lambda i: (0, 0)),
        ],
        out_specs=pl.BlockSpec((tm, n_out), lambda i: (i, 0)),
        compiler_params=pltpu.CompilerParams(
            dimension_semantics=("parallel",)),
        cost_estimate=pl.CostEstimate(
            flops=2 * mp * k * n_out,
            transcendentals=0,
            bytes_accessed=mp * k * 2 + k * n_out * 2 + n_out * 4 + mp * n_out * 2),
    )(p, w, b)
    return out if mp == m else out[:m]


def conv2d_relu(x, w, b, kh, kw, stride, pad_h, pad_w, tm):
    """Conv2d + ReLU via im2col + tiled Pallas matmul.  x: NHWC bf16.
    Returns (N, Ho, Wo, Cout_padded) bf16; padded output channels carry zeros."""
    # TODO(synk): im2col is still built XLA-side (kh*kw strided slices + stack);
    # an in-kernel im2col (kh*kw "arbitrary" grid axis + f32 accumulator) would
    # remove those HLOs but needs strided sublane loads — left for a follow-up.
    n = x.shape[0]
    p, ho, wo = _im2col(x, kh, kw, stride, pad_h, pad_w)
    out = _matmul_bias_relu(p.reshape(n * ho * wo, -1), w, b, tm)
    return out.reshape(n, ho, wo, -1)


def maxpool2x2_ceil(x):
    """MaxPool2d(kernel=2, stride=2, ceil_mode=True).  x: NHWC bf16, C % 128 == 0."""
    # TODO(synk): the -inf ceil pad is still one XLA pad/copy of the feature map;
    # folding the odd H edge into the kernel with a masked max would save it.
    n, h, w, c = x.shape
    assert c % LANE == 0
    hp, wp = _round_up(h, 2), _round_up(w, 2)
    ho, wo = hp // 2, wp // 2
    if (hp, wp) != (h, w):
        x = jnp.pad(x, ((0, 0), (0, hp - h), (0, wp - w), (0, 0)),
                    constant_values=-jnp.inf)
    # Free row-major reshape: the two W phases of each window land in the two
    # 128-aligned lane halves of the last dim -> no strided access in the kernel.
    x = x.reshape(n, ho, 2, wo, 2 * c)
    return pl.pallas_call(
        _maxpool_kernel,
        out_shape=jax.ShapeDtypeStruct((n, ho, wo, c), x.dtype),
        grid=(n,),
        in_specs=[pl.BlockSpec((1, ho, 2, wo, 2 * c),
                               lambda i: (i, 0, 0, 0, 0))],
        out_specs=pl.BlockSpec((1, ho, wo, c), lambda i: (i, 0, 0, 0)),
        compiler_params=pltpu.CompilerParams(
            dimension_semantics=("parallel",)),
    )(x)


def fused_tail(p3, params):
    """conv3 + ReLU + pool_last + flatten + fc1/fc2/fc3 in one pallas_call."""
    nb = p3.shape[0] // 12                      # patch rows ordered (ho, wo, n)
    n_out = params["fc3_w"].shape[1]
    args = (p3, params["conv3_w"], params["conv3_b"],
            params["fc1_w"], params["fc1_b"],
            params["fc2_w"], params["fc2_b"],
            params["fc3_w"], params["fc3_b"])

    def full_spec(a):
        nd = a.ndim
        return pl.BlockSpec(a.shape, lambda i, nd=nd: (0,) * nd)

    return pl.pallas_call(
        _tail_kernel,
        out_shape=jax.ShapeDtypeStruct((nb, n_out), jnp.float32),
        grid=(1,),
        in_specs=[full_spec(a) for a in args],
        out_specs=pl.BlockSpec((nb, n_out), lambda i: (0, 0)),
    )(*args)


# -------------------------------- parameters ----------------------------------

def _expand_conv_weight(w, kh, kw, cin, cin_p):
    """(kh*kw*cin, cout) -> (kh*kw*cin_p, cout): zero rows for the zero-padded
    input channels carried from the previous conv/pool stage."""
    cout = w.shape[1]
    w = w.reshape(kh, kw, cin, cout)
    w = jnp.pad(w, ((0, 0), (0, 0), (0, cin_p - cin), (0, 0)))
    return w.reshape(kh * kw * cin_p, cout)


def prepare_params(raw):
    """One-time preprocessing: carried-channel expansion, Cout lane padding,
    bf16 weight casts, f32 (1, N) biases, and fc1 rows permuted from the
    PyTorch NCHW-flatten order (c, ho, wo) to the kernel's (ho, wo, c) order."""
    def conv_w(wm, cout_p):
        cout = wm.shape[1]
        return jnp.pad(wm, ((0, 0), (0, cout_p - cout))).astype(jnp.bfloat16)

    def bias_row(b, n_p=None):
        b = b.astype(jnp.float32)
        if n_p is not None and n_p != b.shape[0]:
            b = jnp.pad(b, (0, n_p - b.shape[0]))       # padded cols -> relu(0)=0
        return b.reshape(1, -1)

    w2 = _expand_conv_weight(raw["conv2_w"], 3, 3, 32, 128)
    w3 = _expand_conv_weight(raw["conv3_w"], 3, 3, 64, 128)
    fc1 = raw["fc1_w"].reshape(128, 6, 768).transpose(1, 0, 2).reshape(768, 768)
    return {
        "conv1_w": conv_w(raw["conv1_w"], 128), "conv1_b": bias_row(raw["conv1_b"], 128),
        "conv2_w": conv_w(w2, 128),             "conv2_b": bias_row(raw["conv2_b"], 128),
        "conv3_w": conv_w(w3, 128),             "conv3_b": bias_row(raw["conv3_b"], 128),
        "fc1_w": fc1.astype(jnp.bfloat16),          "fc1_b": bias_row(raw["fc1_b"]),
        "fc2_w": raw["fc2_w"].astype(jnp.bfloat16), "fc2_b": bias_row(raw["fc2_b"]),
        "fc3_w": raw["fc3_w"].astype(jnp.bfloat16), "fc3_b": bias_row(raw["fc3_b"]),
    }


def init_params(key):
    """Deterministic synthetic weights (matmul layout: conv = (kh*kw*Cin, Cout),
    K ordered (kh,kw,Cin) == a PyTorch (Cout,Cin,kh,kw) weight transposed
    (2,3,1,0); fc = PyTorch weight.T), preprocessed once by prepare_params."""
    def winit(k, fan_in, shape):
        return jax.random.normal(k, shape, jnp.float32) / jnp.sqrt(float(fan_in))

    ks = jax.random.split(key, 12)
    raw = {
        "conv1_w": winit(ks[0], 75, (75, 32)),
        "conv1_b": 0.01 * jax.random.normal(ks[1], (32,), jnp.float32),
        "conv2_w": winit(ks[2], 288, (288, 64)),
        "conv2_b": 0.01 * jax.random.normal(ks[3], (64,), jnp.float32),
        "conv3_w": winit(ks[4], 576, (576, 128)),
        "conv3_b": 0.01 * jax.random.normal(ks[5], (128,), jnp.float32),
        "fc1_w": winit(ks[6], 768, (768, 768)),
        "fc1_b": 0.01 * jax.random.normal(ks[7], (768,), jnp.float32),
        "fc2_w": winit(ks[8], 768, (768, 512)),
        "fc2_b": 0.01 * jax.random.normal(ks[9], (512,), jnp.float32),
        "fc3_w": winit(ks[10], 512, (512, 13)),
        "fc3_b": 0.01 * jax.random.normal(ks[11], (13,), jnp.float32),
    }
    return prepare_params(raw)


# --------------------------------- forward ------------------------------------

def cnn_forward(params, x_nchw):
    n = x_nchw.shape[0]
    # NCHW (PyTorch) -> NHWC bf16 once; all intermediates stay bf16.
    x = jnp.transpose(x_nchw, (0, 2, 3, 1)).astype(jnp.bfloat16)

    # conv1 (3->32 real / 128 carried, k5, s4, pad=(0,1)) + ReLU, then pool.
    # tm=1232 divides M = 2*55*56 = 6160 exactly -> grid=5, no padded tile.
    x = conv2d_relu(x, params["conv1_w"], params["conv1_b"], 5, 5, 4, 0, 1, tm=1232)
    x = maxpool2x2_ceil(x)                                   # (n, 28, 28, 128)

    # conv2 (32->64 real / 128 carried, k3, s2, pad=(0,1)) + ReLU, then pool.
    # tm=192 -> grid=2 so v7x's second TensorCore gets work.
    x = conv2d_relu(x, params["conv2_w"], params["conv2_b"], 3, 3, 2, 0, 1, tm=192)
    x = maxpool2x2_ceil(x)                                   # (n, 7, 7, 128)

    # conv3 + ReLU + pool_last + NCHW flatten + fc head: one fused kernel.
    # Patch rows ordered (ho, wo, n) so each spatial position is a contiguous
    # (n, 128) slab inside the kernel.
    p, ho, wo = _im2col(x, 3, 3, 2, 0, 1)                    # ho=3, wo=4
    p3 = p.transpose(1, 2, 0, 3).reshape(ho * wo * n, -1)
    # self.drop (Dropout p=0.2) is declared in __init__ but never used in forward.
    return fused_tail(p3, params)


# ----------------------------------- main --------------------------------------

if __name__ == "__main__":
    key = jax.random.PRNGKey(0)
    pkey, xkey = jax.random.split(key)
    params = init_params(pkey)

    # batch=2, channels=3; spatial 224x224 is implied by fc1's 768-dim input
    # (the conv/pool stack reduces 224x224 -> 2x3 with 128 channels = 768).
    x = jax.random.normal(xkey, (2, 3, 224, 224), jnp.float32)

    out = jax.block_until_ready(jax.jit(cnn_forward)(params, x))

    assert out.shape == (2, 13), out.shape
    assert bool(jnp.all(jnp.isfinite(out)))
    assert bool(jnp.all((out >= 0.0) & (out <= 1.0)))   # sigmoid output range
    print("KERNEL_OK")
</pallas_src>

<mosaic_0001>
module attributes {stable_mosaic.version = 11 : i64} {
  func.func @_conv_matmul_relu_kernel(%arg0: i32, %arg1: memref<1232x75xbf16, #tpu.memory_space<vmem>>, %arg2: memref<75x128xbf16, #tpu.memory_space<vmem>>, %arg3: memref<1x128xf32, #tpu.memory_space<vmem>>, %arg4: memref<1232x128xbf16, #tpu.memory_space<vmem>>) attributes {dimension_semantics = [#tpu.dimension_semantics<parallel>], iteration_bounds = array<i64: 5>, scalar_prefetch = 0 : i64, scratch_operands = 0 : i64, tpu.core_type = #tpu.core_type<tc>, window_params = [{transform_indices = @transform_0, window_bounds = array<i64: 1232, 75>}, {pipeline_mode = #tpu.pipeline_mode<synchronous>, transform_indices = @transform_1, window_bounds = array<i64: 75, 128>}, {pipeline_mode = #tpu.pipeline_mode<synchronous>, transform_indices = @transform_2, window_bounds = array<i64: 1, 128>}, {transform_indices = @transform_3, window_bounds = array<i64: 1232, 128>}]} {
    %c0 = arith.constant 0 : index
    %c0_0 = arith.constant 0 : index
    %0 = vector.load %arg1[%c0, %c0_0] : memref<1232x75xbf16, #tpu.memory_space<vmem>>, vector<1232x75xbf16>
    %c0_1 = arith.constant 0 : index
    %c0_2 = arith.constant 0 : index
    %1 = vector.load %arg2[%c0_1, %c0_2] : memref<75x128xbf16, #tpu.memory_space<vmem>>, vector<75x128xbf16>
    %cst = arith.constant dense<0.000000e+00> : vector<1232x128xf32>
    %2 = tpu.matmul %0, %1, %cst {dimension_numbers = #tpu.dot_dimension_numbers<[1], [0], [0], [1], [0, 0, 1, 1], [], []>} : vector<1232x75xbf16>, vector<75x128xbf16>, vector<1232x128xf32> -> vector<1232x128xf32>
    %c0_3 = arith.constant 0 : index
    %c0_4 = arith.constant 0 : index
    %3 = vector.load %arg3[%c0_3, %c0_4] : memref<1x128xf32, #tpu.memory_space<vmem>>, vector<1x128xf32>
    %4 = vector.broadcast %3 : vector<1x128xf32> to vector<1232x128xf32>
    %5 = arith.addf %2, %4 : vector<1232x128xf32>
    %cst_5 = arith.constant 0.000000e+00 : f32
    %6 = vector.broadcast %cst_5 : f32 to vector<1232x128xf32>
    %7 = arith.maximumf %5, %6 : vector<1232x128xf32>
    %8 = arith.truncf %7 : vector<1232x128xf32> to vector<1232x128xbf16>
    %c0_6 = arith.constant 0 : index
    %c0_7 = arith.constant 0 : index
    %9 = vector.load %arg4[%c0_6, %c0_7] : memref<1232x128xbf16, #tpu.memory_space<vmem>>, vector<1232x128xbf16>
    tpu.vector_store %arg4[%c0_6, %c0_7], %8 {strides = array<i32>} : memref<1232x128xbf16, #tpu.memory_space<vmem>>, vector<1232x128xbf16>,
    return
  }
  func.func @transform_0(%arg0: i32) -> (i32, i32) {
    %c0_i32 = arith.constant 0 : i32
    %c0_i32_0 = arith.constant 0 : i32
    return %arg0, %c0_i32 : i32, i32
  }
  func.func @transform_1(%arg0: i32) -> (i32, i32) {
    %c0_i32 = arith.constant 0 : i32
    %c0_i32_0 = arith.constant 0 : i32
    %c0_i32_1 = arith.constant 0 : i32
    return %c0_i32, %c0_i32_0 : i32, i32
  }
  func.func @transform_2(%arg0: i32) -> (i32, i32) {
    %c0_i32 = arith.constant 0 : i32
    %c0_i32_0 = arith.constant 0 : i32
    %c0_i32_1 = arith.constant 0 : i32
    return %c0_i32, %c0_i32_0 : i32, i32
  }
  func.func @transform_3(%arg0: i32) -> (i32, i32) {
    %c0_i32 = arith.constant 0 : i32
    %c0_i32_0 = arith.constant 0 : i32
    return %arg0, %c0_i32 : i32, i32
  }
}

module attributes {stable_mosaic.version = 11 : i64} {
  func.func @_maxpool_kernel(%arg0: i32, %arg1: memref<1x28x2x28x256xbf16, #tpu.memory_space<vmem>>, %arg2: memref<1x28x28x128xbf16, #tpu.memory_space<vmem>>) attributes {dimension_semantics = [#tpu.dimension_semantics<parallel>], iteration_bounds = array<i64: 2>, scalar_prefetch = 0 : i64, scratch_operands = 0 : i64, tpu.core_type = #tpu.core_type<tc>, window_params = [{transform_indices = @transform_0, window_bounds = array<i64: 1, 28, 2, 28, 256>}, {transform_indices = @transform_1, window_bounds = array<i64: 1, 28, 28, 128>}]} {
    %c0 = arith.constant 0 : index
    %c0_0 = arith.constant 0 : index
    %c0_1 = arith.constant 0 : index
    %c0_2 = arith.constant 0 : index
    %c0_3 = arith.constant 0 : index
    %0 = vector.load %arg1[%c0, %c0_0, %c0_1, %c0_2, %c0_3] : memref<1x28x2x28x256xbf16, #tpu.memory_space<vmem>>, vector<1x28x2x28x256xbf16>
    %1 = vector.extract_strided_slice %0 {offsets = [0, 0, 0, 0, 0], sizes = [1, 28, 1, 28, 256], strides = [1, 1, 1, 1, 1]} : vector<1x28x2x28x256xbf16> to vector<1x28x1x28x256xbf16>
    %2 = vector.shape_cast %1 : vector<1x28x1x28x256xbf16> to vector<1x28x28x256xbf16>
    %3 = vector.extract_strided_slice %0 {offsets = [0, 0, 1, 0, 0], sizes = [1, 28, 1, 28, 256], strides = [1, 1, 1, 1, 1]} : vector<1x28x2x28x256xbf16> to vector<1x28x1x28x256xbf16>
    %4 = vector.shape_cast %3 : vector<1x28x1x28x256xbf16> to vector<1x28x28x256xbf16>
    %5 = arith.maximumf %2, %4 : vector<1x28x28x256xbf16>
    %6 = vector.extract_strided_slice %5 {offsets = [0, 0, 0, 0], sizes = [1, 28, 28, 128], strides = [1, 1, 1, 1]} : vector<1x28x28x256xbf16> to vector<1x28x28x128xbf16>
    %7 = vector.extract_strided_slice %5 {offsets = [0, 0, 0, 128], sizes = [1, 28, 28, 128], strides = [1, 1, 1, 1]} : vector<1x28x28x256xbf16> to vector<1x28x28x128xbf16>
    %8 = arith.maximumf %6, %7 : vector<1x28x28x128xbf16>
    %c0_4 = arith.constant 0 : index
    %c0_5 = arith.constant 0 : index
    %c0_6 = arith.constant 0 : index
    %c0_7 = arith.constant 0 : index
    %9 = vector.load %arg2[%c0_4, %c0_5, %c0_6, %c0_7] : memref<1x28x28x128xbf16, #tpu.memory_space<vmem>>, vector<1x28x28x128xbf16>
    tpu.vector_store %arg2[%c0_4, %c0_5, %c0_6, %c0_7], %8 {strides = array<i32>} : memref<1x28x28x128xbf16, #tpu.memory_space<vmem>>, vector<1x28x28x128xbf16>,
    return
  }
  func.func @transform_0(%arg0: i32) -> (i32, i32, i32, i32, i32) {
    %c0_i32 = arith.constant 0 : i32
    %c0_i32_0 = arith.constant 0 : i32
    %c0_i32_1 = arith.constant 0 : i32
    %c0_i32_2 = arith.constant 0 : i32
    %c0_i32_3 = arith.constant 0 : i32
    return %arg0, %c0_i32, %c0_i32_0, %c0_i32_1, %c0_i32_2 : i32, i32, i32, i32, i32
  }
  func.func @transform_1(%arg0: i32) -> (i32, i32, i32, i32) {
    %c0_i32 = arith.constant 0 : i32
    %c0_i32_0 = arith.constant 0 : i32
    %c0_i32_1 = arith.constant 0 : i32
    %c0_i32_2 = arith.constant 0 : i32
    return %arg0, %c0_i32, %c0_i32_0, %c0_i32_1 : i32, i32, i32, i32
  }
}

module attributes {stable_mosaic.version = 11 : i64} {
  func.func @_conv_matmul_relu_kernel(%arg0: i32, %arg1: memref<192x1152xbf16, #tpu.memory_space<vmem>>, %arg2: memref<1152x128xbf16, #tpu.memory_space<vmem>>, %arg3: memref<1x128xf32, #tpu.memory_space<vmem>>, %arg4: memref<192x128xbf16, #tpu.memory_space<vmem>>) attributes {dimension_semantics = [#tpu.dimension_semantics<parallel>], iteration_bounds = array<i64: 2>, scalar_prefetch = 0 : i64, scratch_operands = 0 : i64, tpu.core_type = #tpu.core_type<tc>, window_params = [{transform_indices = @transform_0, window_bounds = array<i64: 192, 1152>}, {pipeline_mode = #tpu.pipeline_mode<synchronous>, transform_indices = @transform_1, window_bounds = array<i64: 1152, 128>}, {pipeline_mode = #tpu.pipeline_mode<synchronous>, transform_indices = @transform_2, window_bounds = array<i64: 1, 128>}, {transform_indices = @transform_3, window_bounds = array<i64: 192, 128>}]} {
    %c0 = arith.constant 0 : index
    %c0_0 = arith.constant 0 : index
    %0 = vector.load %arg1[%c0, %c0_0] : memref<192x1152xbf16, #tpu.memory_space<vmem>>, vector<192x1152xbf16>
    %c0_1 = arith.constant 0 : index
    %c0_2 = arith.constant 0 : index
    %1 = vector.load %arg2[%c0_1, %c0_2] : memref<1152x128xbf16, #tpu.memory_space<vmem>>, vector<1152x128xbf16>
    %cst = arith.constant dense<0.000000e+00> : vector<192x128xf32>
    %2 = tpu.matmul %0, %1, %cst {dimension_numbers = #tpu.dot_dimension_numbers<[1], [0], [0], [1], [0, 0, 1, 1], [], []>} : vector<192x1152xbf16>, vector<1152x128xbf16>, vector<192x128xf32> -> vector<192x128xf32>
    %c0_3 = arith.constant 0 : index
    %c0_4 = arith.constant 0 : index
    %3 = vector.load %arg3[%c0_3, %c0_4] : memref<1x128xf32, #tpu.memory_space<vmem>>, vector<1x128xf32>
    %4 = vector.broadcast %3 : vector<1x128xf32> to vector<192x128xf32>
    %5 = arith.addf %2, %4 : vector<192x128xf32>
    %cst_5 = arith.constant 0.000000e+00 : f32
    %6 = vector.broadcast %cst_5 : f32 to vector<192x128xf32>
    %7 = arith.maximumf %5, %6 : vector<192x128xf32>
    %8 = arith.truncf %7 : vector<192x128xf32> to vector<192x128xbf16>
    %c0_6 = arith.constant 0 : index
    %c0_7 = arith.constant 0 : index
    %9 = vector.load %arg4[%c0_6, %c0_7] : memref<192x128xbf16, #tpu.memory_space<vmem>>, vector<192x128xbf16>
    tpu.vector_store %arg4[%c0_6, %c0_7], %8 {strides = array<i32>} : memref<192x128xbf16, #tpu.memory_space<vmem>>, vector<192x128xbf16>,
    return
  }
  func.func @transform_0(%arg0: i32) -> (i32, i32) {
    %c0_i32 = arith.constant 0 : i32
    %c0_i32_0 = arith.constant 0 : i32
    return %arg0, %c0_i32 : i32, i32
  }
  func.func @transform_1(%arg0: i32) -> (i32, i32) {
    %c0_i32 = arith.constant 0 : i32
    %c0_i32_0 = arith.constant 0 : i32
    %c0_i32_1 = arith.constant 0 : i32
    return %c0_i32, %c0_i32_0 : i32, i32
  }
  func.func @transform_2(%arg0: i32) -> (i32, i32) {
    %c0_i32 = arith.constant 0 : i32
    %c0_i32_0 = arith.constant 0 : i32
    %c0_i32_1 = arith.constant 0 : i32
    return %c0_i32, %c0_i32_0 : i32, i32
  }
  func.func @transform_3(%arg0: i32) -> (i32, i32) {
    %c0_i32 = arith.constant 0 : i32
    %c0_i32_0 = arith.constant 0 : i32
    return %arg0, %c0_i32 : i32, i32
  }
}

module attributes {stable_mosaic.version = 11 : i64} {
  func.func @_maxpool_kernel(%arg0: i32, %arg1: memref<1x7x2x7x256xbf16, #tpu.memory_space<vmem>>, %arg2: memref<1x7x7x128xbf16, #tpu.memory_space<vmem>>) attributes {dimension_semantics = [#tpu.dimension_semantics<parallel>], iteration_bounds = array<i64: 2>, scalar_prefetch = 0 : i64, scratch_operands = 0 : i64, tpu.core_type = #tpu.core_type<tc>, window_params = [{transform_indices = @transform_0, window_bounds = array<i64: 1, 7, 2, 7, 256>}, {transform_indices = @transform_1, window_bounds = array<i64: 1, 7, 7, 128>}]} {
    %c0 = arith.constant 0 : index
    %c0_0 = arith.constant 0 : index
    %c0_1 = arith.constant 0 : index
    %c0_2 = arith.constant 0 : index
    %c0_3 = arith.constant 0 : index
    %0 = vector.load %arg1[%c0, %c0_0, %c0_1, %c0_2, %c0_3] : memref<1x7x2x7x256xbf16, #tpu.memory_space<vmem>>, vector<1x7x2x7x256xbf16>
    %1 = vector.extract_strided_slice %0 {offsets = [0, 0, 0, 0, 0], sizes = [1, 7, 1, 7, 256], strides = [1, 1, 1, 1, 1]} : vector<1x7x2x7x256xbf16> to vector<1x7x1x7x256xbf16>
    %2 = vector.shape_cast %1 : vector<1x7x1x7x256xbf16> to vector<1x7x7x256xbf16>
    %3 = vector.extract_strided_slice %0 {offsets = [0, 0, 1, 0, 0], sizes = [1, 7, 1, 7, 256], strides = [1, 1, 1, 1, 1]} : vector<1x7x2x7x256xbf16> to vector<1x7x1x7x256xbf16>
    %4 = vector.shape_cast %3 : vector<1x7x1x7x256xbf16> to vector<1x7x7x256xbf16>
    %5 = arith.maximumf %2, %4 : vector<1x7x7x256xbf16>
    %6 = vector.extract_strided_slice %5 {offsets = [0, 0, 0, 0], sizes = [1, 7, 7, 128], strides = [1, 1, 1, 1]} : vector<1x7x7x256xbf16> to vector<1x7x7x128xbf16>
    %7 = vector.extract_strided_slice %5 {offsets = [0, 0, 0, 128], sizes = [1, 7, 7, 128], strides = [1, 1, 1, 1]} : vector<1x7x7x256xbf16> to vector<1x7x7x128xbf16>
    %8 = arith.maximumf %6, %7 : vector<1x7x7x128xbf16>
    %c0_4 = arith.constant 0 : index
    %c0_5 = arith.constant 0 : index
    %c0_6 = arith.constant 0 : index
    %c0_7 = arith.constant 0 : index
    %9 = vector.load %arg2[%c0_4, %c0_5, %c0_6, %c0_7] : memref<1x7x7x128xbf16, #tpu.memory_space<vmem>>, vector<1x7x7x128xbf16>
    tpu.vector_store %arg2[%c0_4, %c0_5, %c0_6, %c0_7], %8 {strides = array<i32>} : memref<1x7x7x128xbf16, #tpu.memory_space<vmem>>, vector<1x7x7x128xbf16>,
    return
  }
  func.func @transform_0(%arg0: i32) -> (i32, i32, i32, i32, i32) {
    %c0_i32 = arith.constant 0 : i32
    %c0_i32_0 = arith.constant 0 : i32
    %c0_i32_1 = arith.constant 0 : i32
    %c0_i32_2 = arith.constant 0 : i32
    %c0_i32_3 = arith.constant 0 : i32
    return %arg0, %c0_i32, %c0_i32_0, %c0_i32_1, %c0_i32_2 : i32, i32, i32, i32, i32
  }
  func.func @transform_1(%arg0: i32) -> (i32, i32, i32, i32) {
    %c0_i32 = arith.constant 0 : i32
    %c0_i32_0 = arith.constant 0 : i32
    %c0_i32_1 = arith.constant 0 : i32
    %c0_i32_2 = arith.constant 0 : i32
    return %arg0, %c0_i32, %c0_i32_0, %c0_i32_1 : i32, i32, i32, i32
  }
}

module attributes {stable_mosaic.version = 11 : i64} {
  func.func @_tail_kernel(%arg0: i32, %arg1: memref<24x1152xbf16, #tpu.memory_space<vmem>>, %arg2: memref<1152x128xbf16, #tpu.memory_space<vmem>>, %arg3: memref<1x128xf32, #tpu.memory_space<vmem>>, %arg4: memref<768x768xbf16, #tpu.memory_space<vmem>>, %arg5: memref<1x768xf32, #tpu.memory_space<vmem>>, %arg6: memref<768x512xbf16, #tpu.memory_space<vmem>>, %arg7: memref<1x512xf32, #tpu.memory_space<vmem>>, %arg8: memref<512x13xbf16, #tpu.memory_space<vmem>>, %arg9: memref<1x13xf32, #tpu.memory_space<vmem>>, %arg10: memref<2x13xf32, #tpu.memory_space<vmem>>) attributes {dimension_semantics = [#tpu.dimension_semantics<arbitrary>], iteration_bounds = array<i64: 1>, scalar_prefetch = 0 : i64, scratch_operands = 0 : i64, tpu.core_type = #tpu.core_type<tc>, window_params = [{pipeline_mode = #tpu.pipeline_mode<synchronous>, transform_indices = @transform_0, window_bounds = array<i64: 24, 1152>}, {pipeline_mode = #tpu.pipeline_mode<synchronous>, transform_indices = @transform_1, window_bounds = array<i64: 1152, 128>}, {pipeline_mode = #tpu.pipeline_mode<synchronous>, transform_indices = @transform_2, window_bounds = array<i64: 1, 128>}, {pipeline_mode = #tpu.pipeline_mode<synchronous>, transform_indices = @transform_3, window_bounds = array<i64: 768, 768>}, {pipeline_mode = #tpu.pipeline_mode<synchronous>, transform_indices = @transform_4, window_bounds = array<i64: 1, 768>}, {pipeline_mode = #tpu.pipeline_mode<synchronous>, transform_indices = @transform_5, window_bounds = array<i64: 768, 512>}, {pipeline_mode = #tpu.pipeline_mode<synchronous>, transform_indices = @transform_6, window_bounds = array<i64: 1, 512>}, {pipeline_mode = #tpu.pipeline_mode<synchronous>, transform_indices = @transform_7, window_bounds = array<i64: 512, 13>}, {pipeline_mode = #tpu.pipeline_mode<synchronous>, transform_indices = @transform_8, window_bounds = array<i64: 1, 13>}, {pipeline_mode = #tpu.pipeline_mode<synchronous>, transform_indices = @transform_9, window_bounds = array<i64: 2, 13>}]} {
    %c0 = arith.constant 0 : index
    %c0_0 = arith.constant 0 : index
    %0 = vector.load %arg1[%c0, %c0_0] : memref<24x1152xbf16, #tpu.memory_space<vmem>>, vector<24x1152xbf16>
    %c0_1 = arith.constant 0 : index
    %c0_2 = arith.constant 0 : index
    %1 = vector.load %arg2[%c0_1, %c0_2] : memref<1152x128xbf16, #tpu.memory_space<vmem>>, vector<1152x128xbf16>
    %cst = arith.constant dense<0.000000e+00> : vector<24x128xf32>
    %2 = tpu.matmul %0, %1, %cst {dimension_numbers = #tpu.dot_dimension_numbers<[1], [0], [0], [1], [0, 0, 1, 1], [], []>} : vector<24x1152xbf16>, vector<1152x128xbf16>, vector<24x128xf32> -> vector<24x128xf32>
    %c0_3 = arith.constant 0 : index
    %c0_4 = arith.constant 0 : index
    %3 = vector.load %arg3[%c0_3, %c0_4] : memref<1x128xf32, #tpu.memory_space<vmem>>, vector<1x128xf32>
    %4 = vector.broadcast %3 : vector<1x128xf32> to vector<24x128xf32>
    %5 = arith.addf %2, %4 : vector<24x128xf32>
    %cst_5 = arith.constant 0.000000e+00 : f32
    %6 = vector.broadcast %cst_5 : f32 to vector<24x128xf32>
    %7 = arith.maximumf %5, %6 : vector<24x128xf32>
    %8 = vector.extract_strided_slice %7 {offsets = [0, 0], sizes = [2, 128], strides = [1, 1]} : vector<24x128xf32> to vector<2x128xf32>
    %9 = vector.extract_strided_slice %7 {offsets = [8, 0], sizes = [2, 128], strides = [1, 1]} : vector<24x128xf32> to vector<2x128xf32>
    %10 = arith.maximumf %8, %9 : vector<2x128xf32>
    %11 = vector.extract_strided_slice %7 {offsets = [2, 0], sizes = [2, 128], strides = [1, 1]} : vector<24x128xf32> to vector<2x128xf32>
    %12 = vector.extract_strided_slice %7 {offsets = [4, 0], sizes = [2, 128], strides = [1, 1]} : vector<24x128xf32> to vector<2x128xf32>
    %13 = arith.maximumf %11, %12 : vector<2x128xf32>
    %14 = vector.extract_strided_slice %7 {offsets = [10, 0], sizes = [2, 128], strides = [1, 1]} : vector<24x128xf32> to vector<2x128xf32>
    %15 = vector.extract_strided_slice %7 {offsets = [12, 0], sizes = [2, 128], strides = [1, 1]} : vector<24x128xf32> to vector<2x128xf32>
    %16 = arith.maximumf %14, %15 : vector<2x128xf32>
    %17 = arith.maximumf %13, %16 : vector<2x128xf32>
    %18 = vector.extract_strided_slice %7 {offsets = [6, 0], sizes = [2, 128], strides = [1, 1]} : vector<24x128xf32> to vector<2x128xf32>
    %19 = vector.extract_strided_slice %7 {offsets = [14, 0], sizes = [2, 128], strides = [1, 1]} : vector<24x128xf32> to vector<2x128xf32>
    %20 = arith.maximumf %18, %19 : vector<2x128xf32>
    %21 = vector.extract_strided_slice %7 {offsets = [16, 0], sizes = [2, 128], strides = [1, 1]} : vector<24x128xf32> to vector<2x128xf32>
    %22 = vector.extract_strided_slice %7 {offsets = [18, 0], sizes = [2, 128], strides = [1, 1]} : vector<24x128xf32> to vector<2x128xf32>
    %23 = vector.extract_strided_slice %7 {offsets = [20, 0], sizes = [2, 128], strides = [1, 1]} : vector<24x128xf32> to vector<2x128xf32>
    %24 = arith.maximumf %22, %23 : vector<2x128xf32>
    %25 = vector.extract_strided_slice %7 {offsets = [22, 0], sizes = [2, 128], strides = [1, 1]} : vector<24x128xf32> to vector<2x128xf32>
    %c0_6 = arith.constant 0 : index
    %c0_7 = arith.constant 0 : index
    %26 = vector.load %arg5[%c0_6, %c0_7] : memref<1x768xf32, #tpu.memory_space<vmem>>, vector<1x768xf32>
    %27 = arith.truncf %10 : vector<2x128xf32> to vector<2x128xbf16>
    %c0_8 = arith.constant 0 : index
    %c0_9 = arith.constant 0 : index
    %28 = vector.load %arg4[%c0_8, %c0_9] : memref<768x768xbf16, #tpu.memory_space<vmem>>, vector<128x768xbf16>
    %cst_10 = arith.constant dense<0.000000e+00> : vector<2x768xf32>
    %29 = tpu.matmul %27, %28, %cst_10 {dimension_numbers = #tpu.dot_dimension_numbers<[1], [0], [0], [1], [0, 0, 1, 1], [], []>} : vector<2x128xbf16>, vector<128x768xbf16>, vector<2x768xf32> -> vector<2x768xf32>
    %30 = vector.broadcast %26 : vector<1x768xf32> to vector<2x768xf32>
    %31 = arith.addf %30, %29 : vector<2x768xf32>
    %32 = arith.truncf %17 : vector<2x128xf32> to vector<2x128xbf16>
    %c128 = arith.constant 128 : index
    %c0_11 = arith.constant 0 : index
    %33 = vector.load %arg4[%c128, %c0_11] : memref<768x768xbf16, #tpu.memory_space<vmem>>, vector<128x768xbf16>
    %cst_12 = arith.constant dense<0.000000e+00> : vector<2x768xf32>
    %34 = tpu.matmul %32, %33, %cst_12 {dimension_numbers = #tpu.dot_dimension_numbers<[1], [0], [0], [1], [0, 0, 1, 1], [], []>} : vector<2x128xbf16>, vector<128x768xbf16>, vector<2x768xf32> -> vector<2x768xf32>
    %35 = arith.addf %31, %34 : vector<2x768xf32>
    %36 = arith.truncf %20 : vector<2x128xf32> to vector<2x128xbf16>
    %c256 = arith.constant 256 : index
    %c0_13 = arith.constant 0 : index
    %37 = vector.load %arg4[%c256, %c0_13] : memref<768x768xbf16, #tpu.memory_space<vmem>>, vector<128x768xbf16>
    %cst_14 = arith.constant dense<0.000000e+00> : vector<2x768xf32>
    %38 = tpu.matmul %36, %37, %cst_14 {dimension_numbers = #tpu.dot_dimension_numbers<[1], [0], [0], [1], [0, 0, 1, 1], [], []>} : vector<2x128xbf16>, vector<128x768xbf16>, vector<2x768xf32> -> vector<2x768xf32>
    %39 = arith.addf %35, %38 : vector<2x768xf32>
    %40 = arith.truncf %21 : vector<2x128xf32> to vector<2x128xbf16>
    %c384 = arith.constant 384 : index
    %c0_15 = arith.constant 0 : index
    %41 = vector.load %arg4[%c384, %c0_15] : memref<768x768xbf16, #tpu.memory_space<vmem>>, vector<128x768xbf16>
    %cst_16 = arith.constant dense<0.000000e+00> : vector<2x768xf32>
    %42 = tpu.matmul %40, %41, %cst_16 {dimension_numbers = #tpu.dot_dimension_numbers<[1], [0], [0], [1], [0, 0, 1, 1], [], []>} : vector<2x128xbf16>, vector<128x768xbf16>, vector<2x768xf32> -> vector<2x768xf32>
    %43 = arith.addf %39, %42 : vector<2x768xf32>
    %44 = arith.truncf %24 : vector<2x128xf32> to vector<2x128xbf16>
    %c512 = arith.constant 512 : index
    %c0_17 = arith.constant 0 : index
    %45 = vector.load %arg4[%c512, %c0_17] : memref<768x768xbf16, #tpu.memory_space<vmem>>, vector<128x768xbf16>
    %cst_18 = arith.constant dense<0.000000e+00> : vector<2x768xf32>
    %46 = tpu.matmul %44, %45, %cst_18 {dimension_numbers = #tpu.dot_dimension_numbers<[1], [0], [0], [1], [0, 0, 1, 1], [], []>} : vector<2x128xbf16>, vector<128x768xbf16>, vector<2x768xf32> -> vector<2x768xf32>
    %47 = arith.addf %43, %46 : vector<2x768xf32>
    %48 = arith.truncf %25 : vector<2x128xf32> to vector<2x128xbf16>
    %c640 = arith.constant 640 : index
    %c0_19 = arith.constant 0 : index
    %49 = vector.load %arg4[%c640, %c0_19] : memref<768x768xbf16, #tpu.memory_space<vmem>>, vector<128x768xbf16>
    %cst_20 = arith.constant dense<0.000000e+00> : vector<2x768xf32>
    %50 = tpu.matmul %48, %49, %cst_20 {dimension_numbers = #tpu.dot_dimension_numbers<[1], [0], [0], [1], [0, 0, 1, 1], [], []>} : vector<2x128xbf16>, vector<128x768xbf16>, vector<2x768xf32> -> vector<2x768xf32>
    %51 = arith.addf %47, %50 : vector<2x768xf32>
    %cst_21 = arith.constant 0.000000e+00 : f32
    %52 = vector.broadcast %cst_21 : f32 to vector<2x768xf32>
    %53 = arith.maximumf %51, %52 : vector<2x768xf32>
    %54 = arith.truncf %53 : vector<2x768xf32> to vector<2x768xbf16>
    %c0_22 = arith.constant 0 : index
    %c0_23 = arith.constant 0 : index
    %55 = vector.load %arg6[%c0_22, %c0_23] : memref<768x512xbf16, #tpu.memory_space<vmem>>, vector<768x512xbf16>
    %cst_24 = arith.constant dense<0.000000e+00> : vector<2x512xf32>
    %56 = tpu.matmul %54, %55, %cst_24 {dimension_numbers = #tpu.dot_dimension_numbers<[1], [0], [0], [1], [0, 0, 1, 1], [], []>} : vector<2x768xbf16>, vector<768x512xbf16>, vector<2x512xf32> -> vector<2x512xf32>
    %c0_25 = arith.constant 0 : index
    %c0_26 = arith.constant 0 : index
    %57 = vector.load %arg7[%c0_25, %c0_26] : memref<1x512xf32, #tpu.memory_space<vmem>>, vector<1x512xf32>
    %58 = vector.broadcast %57 : vector<1x512xf32> to vector<2x512xf32>
    %59 = arith.addf %56, %58 : vector<2x512xf32>
    %cst_27 = arith.constant 0.000000e+00 : f32
    %60 = vector.broadcast %cst_27 : f32 to vector<2x512xf32>
    %61 = arith.maximumf %59, %60 : vector<2x512xf32>
    %62 = arith.truncf %61 : vector<2x512xf32> to vector<2x512xbf16>
    %c0_28 = arith.constant 0 : index
    %c0_29 = arith.constant 0 : index
    %63 = vector.load %arg8[%c0_28, %c0_29] : memref<512x13xbf16, #tpu.memory_space<vmem>>, vector<512x13xbf16>
    %cst_30 = arith.constant dense<0.000000e+00> : vector<2x13xf32>
    %64 = tpu.matmul %62, %63, %cst_30 {dimension_numbers = #tpu.dot_dimension_numbers<[1], [0], [0], [1], [0, 0, 1, 1], [], []>} : vector<2x512xbf16>, vector<512x13xbf16>, vector<2x13xf32> -> vector<2x13xf32>
    %c0_31 = arith.constant 0 : index
    %c0_32 = arith.constant 0 : index
    %65 = vector.load %arg9[%c0_31, %c0_32] : memref<1x13xf32, #tpu.memory_space<vmem>>, vector<1x13xf32>
    %66 = vector.broadcast %65 : vector<1x13xf32> to vector<2x13xf32>
    %67 = arith.addf %64, %66 : vector<2x13xf32>
    %68 = arith.negf %67 : vector<2x13xf32>
    %69 = math.exp %68 : vector<2x13xf32>
    %cst_33 = arith.constant 1.000000e+00 : f32
    %70 = vector.broadcast %cst_33 : f32 to vector<2x13xf32>
    %71 = arith.addf %70, %69 : vector<2x13xf32>
    %72 = arith.divf %70, %71 : vector<2x13xf32>
    %c0_34 = arith.constant 0 : index
    %c0_35 = arith.constant 0 : index
    %73 = vector.load %arg10[%c0_34, %c0_35] : memref<2x13xf32, #tpu.memory_space<vmem>>, vector<2x13xf32>
    tpu.vector_store %arg10[%c0_34, %c0_35], %72 {strides = array<i32>} : memref<2x13xf32, #tpu.memory_space<vmem>>, vector<2x13xf32>,
    return
  }
  func.func @transform_0(%arg0: i32) -> (i32, i32) {
    %c0_i32 = arith.constant 0 : i32
    %c0_i32_0 = arith.constant 0 : i32
    %c0_i32_1 = arith.constant 0 : i32
    return %c0_i32, %c0_i32_0 : i32, i32
  }
  func.func @transform_1(%arg0: i32) -> (i32, i32) {
    %c0_i32 = arith.constant 0 : i32
    %c0_i32_0 = arith.constant 0 : i32
    %c0_i32_1 = arith.constant 0 : i32
    return %c0_i32, %c0_i32_0 : i32, i32
  }
  func.func @transform_2(%arg0: i32) -> (i32, i32) {
    %c0_i32 = arith.constant 0 : i32
    %c0_i32_0 = arith.constant 0 : i32
    %c0_i32_1 = arith.constant 0 : i32
    return %c0_i32, %c0_i32_0 : i32, i32
  }
  func.func @transform_3(%arg0: i32) -> (i32, i32) {
    %c0_i32 = arith.constant 0 : i32
    %c0_i32_0 = arith.constant 0 : i32
    %c0_i32_1 = arith.constant 0 : i32
    return %c0_i32, %c0_i32_0 : i32, i32
  }
  func.func @transform_4(%arg0: i32) -> (i32, i32) {
    %c0_i32 = arith.constant 0 : i32
    %c0_i32_0 = arith.constant 0 : i32
    %c0_i32_1 = arith.constant 0 : i32
    return %c0_i32, %c0_i32_0 : i32, i32
  }
  func.func @transform_5(%arg0: i32) -> (i32, i32) {
    %c0_i32 = arith.constant 0 : i32
    %c0_i32_0 = arith.constant 0 : i32
    %c0_i32_1 = arith.constant 0 : i32
    return %c0_i32, %c0_i32_0 : i32, i32
  }
  func.func @transform_6(%arg0: i32) -> (i32, i32) {
    %c0_i32 = arith.constant 0 : i32
    %c0_i32_0 = arith.constant 0 : i32
    %c0_i32_1 = arith.constant 0 : i32
    return %c0_i32, %c0_i32_0 : i32, i32
  }
  func.func @transform_7(%arg0: i32) -> (i32, i32) {
    %c0_i32 = arith.constant 0 : i32
    %c0_i32_0 = arith.constant 0 : i32
    %c0_i32_1 = arith.constant 0 : i32
    return %c0_i32, %c0_i32_0 : i32, i32
  }
  func.func @transform_8(%arg0: i32) -> (i32, i32) {
    %c0_i32 = arith.constant 0 : i32
    %c0_i32_0 = arith.constant 0 : i32
    %c0_i32_1 = arith.constant 0 : i32
    return %c0_i32, %c0_i32_0 : i32, i32
  }
  func.func @transform_9(%arg0: i32) -> (i32, i32) {
    %c0_i32 = arith.constant 0 : i32
    %c0_i32_0 = arith.constant 0 : i32
    %c0_i32_1 = arith.constant 0 : i32
    return %c0_i32, %c0_i32_0 : i32, i32
  }
}

</mosaic_0001>

<llo_original>
// kernel: cnn_forward.5
$region0: #{cnn_forward.5}
  #allocation0 [shape = 'u32[]', space=smem, size = 0x4, offset = 0x4, fixed_abs, tag = 'smem constant byte address 0x4 - core index']
  #allocation1 [shape = 'u32[72,128]{1,0:T(1,128)}', space=vmem, size = 0x9000, scoped, tag = 'internal scratch']
  %s0 = inlined_call_operand.vmem [shape: bf16[6160,75], index: 0, kind: input, shape index: {}]
  %s1 = inlined_call_operand.vmem [shape: bf16[75,128], index: 1, kind: input, shape index: {}]
  %s2 = inlined_call_operand.vmem [shape: f32[1,128], index: 2, kind: input, shape index: {}]
  %s3 = inlined_call_operand.vmem [shape: bf16[6160,128], index: 3, kind: output, shape index: {}]
  %s4 = sld [smem:[#allocation0]]
  $region45: #{cnn_forward.5} parent=0
    _
  %s6 = ssub.s32 1, %s4
  %s7 = scalar_select 0, %s6, %s4
  loop: start=0, step=1, limit=7
  $region2: #{cnn_forward.5} parent=0 // loop_pre_header
    _
  $region3: #{cnn_forward.5} parent=0 // loop_header
    %s9 = sphi 0, %s13
    %p10 = scmp.ge.s32.totalorder %s9, 7
    %s19 = sphi 0, %s21
    %s22 = sphi 0, %s19
    %s23 = sphi 0, %s22
    %s39 = sphi 0, %s23
    %s43 = sphi 0, %s43
    %s45 = sphi 0, %s43
    %s46 = sphi 0, %s45
    %s60 = sphi 0, %s46
    %s64 = sphi 0, %s64
    %s66 = sphi 0, %s64
    %s67 = sphi 0, %s66
    %s81 = sphi 0, %s67
    %s87 = sphi 0, %s89
    %s90 = sphi 0, %s87
    %s91 = sphi 0, %s90
    %s107 = sphi 0, %s91
  $region4: #{cnn_forward.5} parent=0 // loop_header_branch
    %12 = sbr.rel (%p10) target = $region8
  $region5: #{cnn_forward.5} parent=0 // loop_body
    %s14 = ssub.s32 %s9, 1
    %s15 = ssub.s32 %s9, 2
    %s16 = sadd.s32 %s9, 1
    %s17 = ssub.s32 %s9, %s16
    %p18 = scmp.eq.s32.totalorder %s17, 0
    %s20 = sadd.s32 %s19, 1
    %s21 = scalar_select %p18, %s19, %s20
    %p24 = pneg %p18
    %p25 = scmp.eq.s32.totalorder %s9, 4
    %p26 = por %p24, %p25
    %p27 = scmp.ne.s32.totalorder %s19, %s22
    %p28 = scmp.eq.s32.totalorder %s9, 0
    %p29 = por %p27, %p28
    %p30 = scmp.ne.s32.totalorder %s19, %s22
    %p31 = scmp.eq.s32.totalorder %s14, 4
    %p32 = por %p30, %p31
    %p33 = scmp.ne.s32.totalorder %s22, %s23
    %p34 = scmp.eq.s32.totalorder %s14, 0
    %p35 = por %p33, %p34
    %p36 = scmp.ne.s32.totalorder %s22, %s23
    %p37 = scmp.eq.s32.totalorder %s15, 4
    %p38 = por %p36, %p37
    %p40 = scmp.ne.s32.totalorder %s23, %s39
    %p41 = scmp.eq.s32.totalorder %s15, 0
    %p42 = por %p40, %p41
    %s44 = sadd.s32 %s43, 1
    %p47 = scmp.eq.s32.totalorder %s9, 4
    %p48 = scmp.ne.s32.totalorder %s43, %s45
    %p49 = scmp.eq.s32.totalorder %s9, 0
    %p50 = por %p48, %p49
    %p51 = scmp.ne.s32.totalorder %s43, %s45
    %p52 = scmp.eq.s32.totalorder %s14, 4
    %p53 = por %p51, %p52
    %p54 = scmp.ne.s32.totalorder %s45, %s46
    %p55 = scmp.eq.s32.totalorder %s14, 0
    %p56 = por %p54, %p55
    %p57 = scmp.ne.s32.totalorder %s45, %s46
    %p58 = scmp.eq.s32.totalorder %s15, 4
    %p59 = por %p57, %p58
    %p61 = scmp.ne.s32.totalorder %s46, %s60
    %p62 = scmp.eq.s32.totalorder %s15, 0
    %p63 = por %p61, %p62
    %s65 = sadd.s32 %s64, 1
    %p68 = scmp.eq.s32.totalorder %s9, 4
    %p69 = scmp.ne.s32.totalorder %s64, %s66
    %p70 = scmp.eq.s32.totalorder %s9, 0
    %p71 = por %p69, %p70
    %p72 = scmp.ne.s32.totalorder %s64, %s66
    %p73 = scmp.eq.s32.totalorder %s14, 4
    %p74 = por %p72, %p73
    %p75 = scmp.ne.s32.totalorder %s66, %s67
    %p76 = scmp.eq.s32.totalorder %s14, 0
    %p77 = por %p75, %p76
    %p78 = scmp.ne.s32.totalorder %s66, %s67
    %p79 = scmp.eq.s32.totalorder %s15, 4
    %p80 = por %p78, %p79
    %p82 = scmp.ne.s32.totalorder %s67, %s81
    %p83 = scmp.eq.s32.totalorder %s15, 0
    %p84 = por %p82, %p83
    %s85 = ssub.s32 %s9, %s16
    %p86 = scmp.eq.s32.totalorder %s85, 0
    %s88 = sadd.s32 %s87, 1
    %s89 = scalar_select %p86, %s87, %s88
    %p92 = pneg %p86
    %p93 = scmp.eq.s32.totalorder %s9, 4
    %p94 = por %p92, %p93
    %p95 = scmp.ne.s32.totalorder %s87, %s90
    %p96 = scmp.eq.s32.totalorder %s9, 0
    %p97 = por %p95, %p96
    %p98 = scmp.ne.s32.totalorder %s87, %s90
    %p99 = scmp.eq.s32.totalorder %s14, 4
    %p100 = por %p98, %p99
    %p101 = scmp.ne.s32.totalorder %s90, %s91
    %p102 = scmp.eq.s32.totalorder %s14, 0
    %p103 = por %p101, %p102
    %p104 = scmp.ne.s32.totalorder %s90, %s91
    %p105 = scmp.eq.s32.totalorder %s15, 4
    %p106 = por %p104, %p105
    %p108 = scmp.ne.s32.totalorder %s91, %s107
    %p109 = scmp.eq.s32.totalorder %s15, 0
    %p110 = por %p108, %p109
    %p111 = scmp.le.s32.totalorder 1, %s9
    %p112 = scmp.lt.s32.totalorder %s9, 6
    %p113 = pnand %p111, %p112
    %p114 = pneg %p113
    // Predicated region
    $region9: #{cnn_forward.5} parent=5 // pred_check
      _
    $region10: #{cnn_forward.5} parent=5 // pred_check_branch
      %116 = sbr.rel (%p113) target = $region12
    $region11: #{cnn_forward.5} parent=5 // pred_region
      %s117 = ssub.s32 %s9, 1
      // Predicated region
      $region13: #{cnn_forward.5} parent=11 // pred_check
        %p118 = pneg %p56
      $region14: #{cnn_forward.5} parent=11 // pred_check_branch
        %120 = sbr.rel (%p118) target = $region16
      $region15: #{cnn_forward.5} parent=11 // pred_region
        _
      $region16: #{cnn_forward.5} parent=11 // pred_fallthru
        _
      // Predicated region
      $region17: #{cnn_forward.5} parent=11 // pred_check
        %p121 = pneg %p77
      $region18: #{cnn_forward.5} parent=11 // pred_check_branch
        %123 = sbr.rel (%p121) target = $region20
      $region19: #{cnn_forward.5} parent=11 // pred_region
        _
      $region20: #{cnn_forward.5} parent=11 // pred_fallthru
        _
    $region12: #{cnn_forward.5} parent=5 // pred_fallthru
      _
    %p124 = scmp.lt.s32.totalorder %s9, 5
    // Predicated region
    $region21: #{cnn_forward.5} parent=5 // pred_check
      %p125 = pneg %p124
    $region22: #{cnn_forward.5} parent=5 // pred_check_branch
      %127 = sbr.rel (%p125) target = $region24
    $region23: #{cnn_forward.5} parent=5 // pred_region
      // Predicated region
      $region25: #{cnn_forward.5} parent=23 // pred_check
        %p128 = pneg %p29
      $region26: #{cnn_forward.5} parent=23 // pred_check_branch
        %130 = sbr.rel (%p128) target = $region28
      $region27: #{cnn_forward.5} parent=23 // pred_region
        %s131 = smul.u32 154, %s9
        %p132 = scmp.lt.s32.totalorder %s131, 769
        %s133 = scalar_select %p132, %s131, 769
        %s134 = smul.addr %s133, 4
        %s135 = scalar_lea.vmem %s0, %s134
        %s136 = smul.u32 154, %s9
      $region28: #{cnn_forward.5} parent=23 // pred_fallthru
        _
    $region24: #{cnn_forward.5} parent=5 // pred_fallthru
      _
    %p137 = scmp.le.s32.totalorder 1, %s9
    %p138 = scmp.lt.s32.totalorder %s9, 6
    %p139 = pnand %p137, %p138
    %p140 = pneg %p139
    // Predicated region
    $region29: #{cnn_forward.5} parent=5 // pred_check
      _
    $region30: #{cnn_forward.5} parent=5 // pred_check_branch
      %142 = sbr.rel (%p139) target = $region32
    $region31: #{cnn_forward.5} parent=5 // pred_region
      %s143 = ssub.s32 %s9, 1
      %s144 = smul.u32 154, %s14
      %p145 = scmp.lt.s32.totalorder %s144, 769
      %s146 = scalar_select %p145, %s144, 769
      %s147 = smul.addr %s146, 4
      %s148 = scalar_lea.vmem %s0, %s147
      %p149 = pneg %p35
      %p150 = pneg %p32
      %p151 = pneg %p56
      %p152 = pneg %p53
      %p153 = pneg %p77
      %p154 = pneg %p74
      %p155 = pneg %p103
      %p156 = pneg %p100
      %s157 = smul.u32 154, %s14
      %p158 = scmp.lt.s32.totalorder %s157, 769
      %s159 = scalar_select %p158, %s157, 769
      %s160 = smul.addr %s159, 4
      %s161 = scalar_lea.vmem %s3, %s160
      %s162 = smul.u32 154, %s14
      %p163 = scmp.lt.s32.totalorder %s162, 769
      %s164 = scalar_select %p163, %s162, 769
      %s165 = smul.addr %s164, 4
      %s166 = scalar_lea.vmem %s0, %s165
      %s167 = smul.u32 154, %s14
      %s168 = smul.u32 154, %s14
      %p169 = scmp.lt.s32.totalorder %s168, 769
      %s170 = scalar_select %p169, %s168, 769
      %s171 = smul.addr %s170, 4
      %s172 = scalar_lea.vmem %s3, %s171
      %s173 = smul.u32 154, %s14
      %v175 = vld [vmem:[%s166] sm:$0xf]
      %v176 = vld [vmem:[%s166 + $0x4] sm:$0xf]
      %v177 = vld [vmem:[%s166 + $0x8] sm:$0xf]
      %v178 = vld [vmem:[%s166 + $0xc] sm:$0xf]
      %v179 = vld [vmem:[%s166 + $0x10] sm:$0xf]
      %v180 = vld [vmem:[%s166 + $0x14] sm:$0xf]
      %v181 = vld [vmem:[%s166 + $0x18] sm:$0xf]
      %v182 = vld [vmem:[%s166 + $0x1c] sm:$0xf]
      %v183 = vld [vmem:[%s166 + $0x20] sm:$0xf]
      %v184 = vld [vmem:[%s166 + $0x24] sm:$0xf]
      %v185 = vld [vmem:[%s166 + $0x28] sm:$0xf]
      %v186 = vld [vmem:[%s166 + $0x2c] sm:$0xf]
      %v187 = vld [vmem:[%s166 + $0x30] sm:$0xf]
      %v188 = vld [vmem:[%s166 + $0x34] sm:$0xf]
      %v189 = vld [vmem:[%s166 + $0x38] sm:$0xf]
      %v190 = vld [vmem:[%s166 + $0x3c] sm:$0xf]
      %v191 = vld [vmem:[%s166 + $0x40] sm:$0xf]
      %v192 = vld [vmem:[%s166 + $0x44] sm:$0xf]
      %v193 = vld [vmem:[%s166 + $0x48] sm:$0xf]
      %v194 = vld [vmem:[%s166 + $0x4c] sm:$0xf]
      %v195 = vld [vmem:[%s166 + $0x50] sm:$0xf]
      %v196 = vld [vmem:[%s166 + $0x54] sm:$0xf]
      %v197 = vld [vmem:[%s166 + $0x58] sm:$0xf]
      %v198 = vld [vmem:[%s166 + $0x5c] sm:$0xf]
      %v199 = vld [vmem:[%s166 + $0x60] sm:$0xf]
      %v200 = vld [vmem:[%s166 + $0x64] sm:$0xf]
      %v201 = vld [vmem:[%s166 + $0x68] sm:$0xf]
      %v202 = vld [vmem:[%s166 + $0x6c] sm:$0xf]
      %v203 = vld [vmem:[%s166 + $0x70] sm:$0xf]
      %v204 = vld [vmem:[%s166 + $0x74] sm:$0xf]
      %v205 = vld [vmem:[%s166 + $0x78] sm:$0xf]
      %v206 = vld [vmem:[%s166 + $0x7c] sm:$0xf]
      %v207 = vld [vmem:[%s166 + $0x80] sm:$0xf]
      %v208 = vld [vmem:[%s166 + $0x84] sm:$0xf]
      %v209 = vld [vmem:[%s166 + $0x88] sm:$0xf]
      %v210 = vld [vmem:[%s166 + $0x8c] sm:$0xf]
      %v211 = vld [vmem:[%s166 + $0x90] sm:$0xf]
      %v212 = vld [vmem:[%s166 + $0x94] sm:$0xf]
      %v213 = vld [vmem:[%s166 + $0x98] sm:$0xf]
      %v214 = vld [vmem:[%s166 + $0x9c] sm:$0xf]
      %v215 = vld [vmem:[%s166 + $0xa0] sm:$0xf]
      %v216 = vld [vmem:[%s166 + $0xa4] sm:$0xf]
      %v217 = vld [vmem:[%s166 + $0xa8] sm:$0xf]
      %v218 = vld [vmem:[%s166 + $0xac] sm:$0xf]
      %v219 = vld [vmem:[%s166 + $0xb0] sm:$0xf]
      %v220 = vld [vmem:[%s166 + $0xb4] sm:$0xf]
      %v221 = vld [vmem:[%s166 + $0xb8] sm:$0xf]
      %v222 = vld [vmem:[%s166 + $0xbc] sm:$0xf]
      %v223 = vld [vmem:[%s166 + $0xc0] sm:$0xf]
      %v224 = vld [vmem:[%s166 + $0xc4] sm:$0xf]
      %v225 = vld [vmem:[%s166 + $0xc8] sm:$0xf]
      %v226 = vld [vmem:[%s166 + $0xcc] sm:$0xf]
      %v227 = vld [vmem:[%s166 + $0xd0] sm:$0xf]
      %v228 = vld [vmem:[%s166 + $0xd4] sm:$0xf]
      %v229 = vld [vmem:[%s166 + $0xd8] sm:$0xf]
      %v230 = vld [vmem:[%s166 + $0xdc] sm:$0xf]
      %v231 = vld [vmem:[%s166 + $0xe0] sm:$0xf]
      %v232 = vld [vmem:[%s166 + $0xe4] sm:$0xf]
      %v233 = vld [vmem:[%s166 + $0xe8] sm:$0xf]
      %v234 = vld [vmem:[%s166 + $0xec] sm:$0xf]
      %v235 = vld [vmem:[%s166 + $0xf0] sm:$0xf]
      %v236 = vld [vmem:[%s166 + $0xf4] sm:$0xf]
      %v237 = vld [vmem:[%s166 + $0xf8] sm:$0xf]
      %v238 = vld [vmem:[%s166 + $0xfc] sm:$0xf]
      %v239 = vld [vmem:[%s166 + $0x100] sm:$0xf]
      %v240 = vld [vmem:[%s166 + $0x104] sm:$0xf]
      %v241 = vld [vmem:[%s166 + $0x108] sm:$0xf]
      %v242 = vld [vmem:[%s166 + $0x10c] sm:$0xf]
      %v243 = vld [vmem:[%s166 + $0x110] sm:$0xf]
      %v244 = vld [vmem:[%s166 + $0x114] sm:$0xf]
      %v245 = vld [vmem:[%s166 + $0x118] sm:$0xf]
      %v246 = vld [vmem:[%s166 + $0x11c] sm:$0xf]
      %v247 = vld [vmem:[%s166 + $0x120] sm:$0xf]
      %v248 = vld [vmem:[%s166 + $0x124] sm:$0xf]
      %v249 = vld [vmem:[%s166 + $0x128] sm:$0xf]
      %v250 = vld [vmem:[%s166 + $0x12c] sm:$0xf]
      %v251 = vld [vmem:[%s166 + $0x130] sm:$0xf]
      %v252 = vld [vmem:[%s166 + $0x134] sm:$0xf]
      %v253 = vld [vmem:[%s166 + $0x138] sm:$0xf]
      %v254 = vld [vmem:[%s166 + $0x13c] sm:$0xf]
      %v255 = vld [vmem:[%s166 + $0x140] sm:$0xf]
      %v256 = vld [vmem:[%s166 + $0x144] sm:$0xf]
      %v257 = vld [vmem:[%s166 + $0x148] sm:$0xf]
      %v258 = vld [vmem:[%s166 + $0x14c] sm:$0xf]
      %v259 = vld [vmem:[%s166 + $0x150] sm:$0xf]
      %v260 = vld [vmem:[%s166 + $0x154] sm:$0xf]
      %v261 = vld [vmem:[%s166 + $0x158] sm:$0xf]
      %v262 = vld [vmem:[%s166 + $0x15c] sm:$0xf]
      %v263 = vld [vmem:[%s166 + $0x160] sm:$0xf]
      %v264 = vld [vmem:[%s166 + $0x164] sm:$0xf]
      %v265 = vld [vmem:[%s166 + $0x168] sm:$0xf]
      %v266 = vld [vmem:[%s166 + $0x16c] sm:$0xf]
      %v267 = vld [vmem:[%s166 + $0x170] sm:$0xf]
      %v268 = vld [vmem:[%s166 + $0x174] sm:$0xf]
      %v269 = vld [vmem:[%s166 + $0x178] sm:$0xf]
      %v270 = vld [vmem:[%s166 + $0x17c] sm:$0xf]
      %v271 = vld [vmem:[%s166 + $0x180] sm:$0xf]
      %v272 = vld [vmem:[%s166 + $0x184] sm:$0xf]
      %v273 = vld [vmem:[%s166 + $0x188] sm:$0xf]
      %v274 = vld [vmem:[%s166 + $0x18c] sm:$0xf]
      %v275 = vld [vmem:[%s166 + $0x190] sm:$0xf]
      %v276 = vld [vmem:[%s166 + $0x194] sm:$0xf]
      %v277 = vld [vmem:[%s166 + $0x198] sm:$0xf]
      %v278 = vld [vmem:[%s166 + $0x19c] sm:$0xf]
      %v279 = vld [vmem:[%s166 + $0x1a0] sm:$0xf]
      %v280 = vld [vmem:[%s166 + $0x1a4] sm:$0xf]
      %v281 = vld [vmem:[%s166 + $0x1a8] sm:$0xf]
      %v282 = vld [vmem:[%s166 + $0x1ac] sm:$0xf]
      %v283 = vld [vmem:[%s166 + $0x1b0] sm:$0xf]
      %v284 = vld [vmem:[%s166 + $0x1b4] sm:$0xf]
      %v285 = vld [vmem:[%s166 + $0x1b8] sm:$0xf]
      %v286 = vld [vmem:[%s166 + $0x1bc] sm:$0xf]
      %v287 = vld [vmem:[%s166 + $0x1c0] sm:$0xf]
      %v288 = vld [vmem:[%s166 + $0x1c4] sm:$0xf]
      %v289 = vld [vmem:[%s166 + $0x1c8] sm:$0xf]
      %v290 = vld [vmem:[%s166 + $0x1cc] sm:$0xf]
      %v291 = vld [vmem:[%s166 + $0x1d0] sm:$0xf]
      %v292 = vld [vmem:[%s166 + $0x1d4] sm:$0xf]
      %v293 = vld [vmem:[%s166 + $0x1d8] sm:$0xf]
      %v294 = vld [vmem:[%s166 + $0x1dc] sm:$0xf]
      %v295 = vld [vmem:[%s166 + $0x1e0] sm:$0xf]
      %v296 = vld [vmem:[%s166 + $0x1e4] sm:$0xf]
      %v297 = vld [vmem:[%s166 + $0x1e8] sm:$0xf]
      %v298 = vld [vmem:[%s166 + $0x1ec] sm:$0xf]
      %v299 = vld [vmem:[%s166 + $0x1f0] sm:$0xf]
      %v300 = vld [vmem:[%s166 + $0x1f4] sm:$0xf]
      %v301 = vld [vmem:[%s166 + $0x1f8] sm:$0xf]
      %v302 = vld [vmem:[%s166 + $0x1fc] sm:$0xf]
      %v303 = vld [vmem:[%s166 + $0x200] sm:$0xf]
      %v304 = vld [vmem:[%s166 + $0x204] sm:$0xf]
      %v305 = vld [vmem:[%s166 + $0x208] sm:$0xf]
      %v306 = vld [vmem:[%s166 + $0x20c] sm:$0xf]
      %v307 = vld [vmem:[%s166 + $0x210] sm:$0xf]
      %v308 = vld [vmem:[%s166 + $0x214] sm:$0xf]
      %v309 = vld [vmem:[%s166 + $0x218] sm:$0xf]
      %v310 = vld [vmem:[%s166 + $0x21c] sm:$0xf]
      %v311 = vld [vmem:[%s166 + $0x220] sm:$0xf]
      %v312 = vld [vmem:[%s166 + $0x224] sm:$0xf]
      %v313 = vld [vmem:[%s166 + $0x228] sm:$0xf]
      %v314 = vld [vmem:[%s166 + $0x22c] sm:$0xf]
      %v315 = vld [vmem:[%s166 + $0x230] sm:$0xf]
      %v316 = vld [vmem:[%s166 + $0x234] sm:$0xf]
      %v317 = vld [vmem:[%s166 + $0x238] sm:$0xf]
      %v318 = vld [vmem:[%s166 + $0x23c] sm:$0xf]
      %v319 = vld [vmem:[%s166 + $0x240] sm:$0xf]
      %v320 = vld [vmem:[%s166 + $0x244] sm:$0xf]
      %v321 = vld [vmem:[%s166 + $0x248] sm:$0xf]
      %v322 = vld [vmem:[%s166 + $0x24c] sm:$0xf]
      %v323 = vld [vmem:[%s166 + $0x250] sm:$0xf]
      %v324 = vld [vmem:[%s166 + $0x254] sm:$0xf]
      %v325 = vld [vmem:[%s166 + $0x258] sm:$0xf]
      %v326 = vld [vmem:[%s166 + $0x25c] sm:$0xf]
      %v327 = vld [vmem:[%s166 + $0x260] sm:$0xf]
      %v328 = vld [vmem:[%s166 + $0x264] sm:$0xf]
      %v329 = vld [vmem:[%s1] sm:$0xf]
      %v330 = vld [vmem:[%s1 + $0x4] sm:$0xf]
      %v331 = vld [vmem:[%s1 + $0x8] sm:$0xf]
      %v332 = vld [vmem:[%s1 + $0xc] sm:$0xf]
      %v333 = vld [vmem:[%s1 + $0x10] sm:$0xf]
      %v334 = vld [vmem:[%s1 + $0x14] sm:$0xf]
      %v335 = vld [vmem:[%s1 + $0x18] sm:$0xf]
      %v336 = vld [vmem:[%s1 + $0x1c] sm:$0xf]
      %v337 = vld [vmem:[%s1 + $0x20] sm:$0xf]
      %v338 = vld [vmem:[%s1 + $0x24] sm:$0x3]
      %v339 = vld [vmem:[%s2] sm:$0x1]
      %v341 = vperm.slane %v339, 0
      %v497 = vunpack.c.l.b16 %v175
      %v498 = vunpack.c.l.b16 %v176
      %v499 = vunpack.c.l.b16 %v177
      %v500 = vunpack.c.l.b16 %v178
      %v501 = vunpack.c.l.b16 %v179
      %v502 = vunpack.c.l.b16 %v180
      %v503 = vunpack.c.l.b16 %v181
      %v504 = vunpack.c.l.b16 %v182
      %v505 = vunpack.c.l.b16 %v183
      %v506 = vunpack.c.l.b16 %v184
      %v507 = vunpack.c.l.b16 %v185
      %v508 = vunpack.c.l.b16 %v186
      %v509 = vunpack.c.l.b16 %v187
      %v510 = vunpack.c.l.b16 %v188
      %v511 = vunpack.c.l.b16 %v189
      %v512 = vunpack.c.l.b16 %v190
      %v513 = vunpack.c.l.b16 %v191
      %v514 = vunpack.c.l.b16 %v192
      %v515 = vunpack.c.l.b16 %v193
      %v516 = vunpack.c.l.b16 %v194
      %v517 = vunpack.c.l.b16 %v195
      %v518 = vunpack.c.l.b16 %v196
      %v519 = vunpack.c.l.b16 %v197
      %v520 = vunpack.c.l.b16 %v198
      %v521 = vunpack.c.l.b16 %v199
      %v522 = vunpack.c.l.b16 %v200
      %v523 = vunpack.c.l.b16 %v201
      %v524 = vunpack.c.l.b16 %v202
      %v525 = vunpack.c.l.b16 %v203
      %v526 = vunpack.c.l.b16 %v204
      %v527 = vunpack.c.l.b16 %v205
      %v528 = vunpack.c.l.b16 %v206
      %v529 = vunpack.c.l.b16 %v207
      %v530 = vunpack.c.l.b16 %v208
      %v531 = vunpack.c.l.b16 %v209
      %v532 = vunpack.c.l.b16 %v210
      %v533 = vunpack.c.l.b16 %v211
      %v534 = vunpack.c.l.b16 %v212
      %v535 = vunpack.c.l.b16 %v213
      %v536 = vunpack.c.l.b16 %v214
      %v537 = vunpack.c.l.b16 %v215
      %v538 = vunpack.c.l.b16 %v216
      %v539 = vunpack.c.l.b16 %v217
      %v540 = vunpack.c.l.b16 %v218
      %v541 = vunpack.c.l.b16 %v219
      %v542 = vunpack.c.l.b16 %v220
      %v543 = vunpack.c.l.b16 %v221
      %v544 = vunpack.c.l.b16 %v222
      %v545 = vunpack.c.l.b16 %v223
      %v546 = vunpack.c.l.b16 %v224
      %v547 = vunpack.c.l.b16 %v225
      %v548 = vunpack.c.l.b16 %v226
      %v549 = vunpack.c.l.b16 %v227
      %v550 = vunpack.c.l.b16 %v228
      %v551 = vunpack.c.l.b16 %v229
      %v552 = vunpack.c.l.b16 %v230
      %v553 = vunpack.c.l.b16 %v231
      %v554 = vunpack.c.l.b16 %v232
      %v555 = vunpack.c.l.b16 %v233
      %v556 = vunpack.c.l.b16 %v234
      %v557 = vunpack.c.l.b16 %v235
      %v558 = vunpack.c.l.b16 %v236
      %v559 = vunpack.c.l.b16 %v237
      %v560 = vunpack.c.l.b16 %v238
      %v561 = vunpack.c.l.b16 %v239
      %v562 = vunpack.c.l.b16 %v240
      %v563 = vunpack.c.l.b16 %v241
      %v564 = vunpack.c.l.b16 %v242
      %v565 = vunpack.c.l.b16 %v243
      %v566 = vunpack.c.l.b16 %v244
      %v567 = vunpack.c.l.b16 %v245
      %v568 = vunpack.c.l.b16 %v246
      %v569 = vunpack.c.l.b16 %v247
      %v570 = vunpack.c.l.b16 %v248
      %v571 = vunpack.c.l.b16 %v249
      %v572 = vunpack.c.l.b16 %v250
      %v573 = vunpack.c.l.b16 %v251
      %v574 = vunpack.c.l.b16 %v252
      %v575 = vunpack.c.l.b16 %v253
      %v576 = vunpack.c.l.b16 %v254
      %v577 = vunpack.c.l.b16 %v255
      %v578 = vunpack.c.l.b16 %v256
      %v579 = vunpack.c.l.b16 %v257
      %v580 = vunpack.c.l.b16 %v258
      %v581 = vunpack.c.l.b16 %v259
      %v582 = vunpack.c.l.b16 %v260
      %v583 = vunpack.c.l.b16 %v261
      %v584 = vunpack.c.l.b16 %v262
      %v585 = vunpack.c.l.b16 %v263
      %v586 = vunpack.c.l.b16 %v264
      %v587 = vunpack.c.l.b16 %v265
      %v588 = vunpack.c.l.b16 %v266
      %v589 = vunpack.c.l.b16 %v267
      %v590 = vunpack.c.l.b16 %v268
      %v591 = vunpack.c.l.b16 %v269
      %v592 = vunpack.c.l.b16 %v270
      %v593 = vunpack.c.l.b16 %v271
      %v594 = vunpack.c.l.b16 %v272
      %v595 = vunpack.c.l.b16 %v273
      %v596 = vunpack.c.l.b16 %v274
      %v597 = vunpack.c.l.b16 %v275
      %v598 = vunpack.c.l.b16 %v276
      %v599 = vunpack.c.l.b16 %v277
      %v600 = vunpack.c.l.b16 %v278
      %v601 = vunpack.c.l.b16 %v279
      %v602 = vunpack.c.l.b16 %v280
      %v603 = vunpack.c.l.b16 %v281
      %v604 = vunpack.c.l.b16 %v282
      %v605 = vunpack.c.l.b16 %v283
      %v606 = vunpack.c.l.b16 %v284
      %v607 = vunpack.c.l.b16 %v285
      %v608 = vunpack.c.l.b16 %v286
      %v609 = vunpack.c.l.b16 %v287
      %v610 = vunpack.c.l.b16 %v288
      %v611 = vunpack.c.l.b16 %v289
      %v612 = vunpack.c.l.b16 %v290
      %v613 = vunpack.c.l.b16 %v291
      %v614 = vunpack.c.l.b16 %v292
      %v615 = vunpack.c.l.b16 %v293
      %v616 = vunpack.c.l.b16 %v294
      %v617 = vunpack.c.l.b16 %v295
      %v618 = vunpack.c.l.b16 %v296
      %v619 = vunpack.c.l.b16 %v297
      %v620 = vunpack.c.l.b16 %v298
      %v621 = vunpack.c.l.b16 %v299
      %v622 = vunpack.c.l.b16 %v300
      %v623 = vunpack.c.l.b16 %v301
      %v624 = vunpack.c.l.b16 %v302
      %v625 = vunpack.c.l.b16 %v303
      %v626 = vunpack.c.l.b16 %v304
      %v627 = vunpack.c.l.b16 %v305
      %v628 = vunpack.c.l.b16 %v306
      %v629 = vunpack.c.l.b16 %v307
      %v630 = vunpack.c.l.b16 %v308
      %v631 = vunpack.c.l.b16 %v309
      %v632 = vunpack.c.l.b16 %v310
      %v633 = vunpack.c.l.b16 %v311
      %v634 = vunpack.c.l.b16 %v312
      %v635 = vunpack.c.l.b16 %v313
      %v636 = vunpack.c.l.b16 %v314
      %v637 = vunpack.c.l.b16 %v315
      %v638 = vunpack.c.l.b16 %v316
      %v639 = vunpack.c.l.b16 %v317
      %v640 = vunpack.c.l.b16 %v318
      %v641 = vunpack.c.l.b16 %v319
      %v642 = vunpack.c.l.b16 %v320
      %v643 = vunpack.c.l.b16 %v321
      %v644 = vunpack.c.l.b16 %v322
      %v645 = vunpack.c.l.b16 %v323
      %v646 = vunpack.c.l.b16 %v324
      %v647 = vunpack.c.l.b16 %v325
      %v648 = vunpack.c.l.b16 %v326
      %v649 = vunpack.c.l.b16 %v327
      %v650 = vunpack.c.l.b16 %v328
      %v651 = vpack.c.b16 %v498, %v497
      %v652 = vpack.c.b16 %v500, %v499
      %v653 = vpack.c.b16 %v502, %v501
      %v654 = vpack.c.b16 %v504, %v503
      %v655 = vpack.c.b16 %v506, %v505
      %v656 = vpack.c.b16 %v508, %v507
      %v657 = vpack.c.b16 %v510, %v509
      %v658 = vpack.c.b16 %v512, %v511
      %v659 = vpack.c.b16 %v514, %v513
      %v660 = vpack.c.b16 %v516, %v515
      %v661 = vpack.c.b16 %v518, %v517
      %v662 = vpack.c.b16 %v520, %v519
      %v663 = vpack.c.b16 %v522, %v521
      %v664 = vpack.c.b16 %v524, %v523
      %v665 = vpack.c.b16 %v526, %v525
      %v666 = vpack.c.b16 %v528, %v527
      %v667 = vpack.c.b16 %v530, %v529
      %v668 = vpack.c.b16 %v532, %v531
      %v669 = vpack.c.b16 %v534, %v533
      %v670 = vpack.c.b16 %v536, %v535
      %v671 = vpack.c.b16 %v538, %v537
      %v672 = vpack.c.b16 %v540, %v539
      %v673 = vpack.c.b16 %v542, %v541
      %v674 = vpack.c.b16 %v544, %v543
      %v675 = vpack.c.b16 %v546, %v545
      %v676 = vpack.c.b16 %v548, %v547
      %v677 = vpack.c.b16 %v550, %v549
      %v678 = vpack.c.b16 %v552, %v551
      %v679 = vpack.c.b16 %v554, %v553
      %v680 = vpack.c.b16 %v556, %v555
      %v681 = vpack.c.b16 %v558, %v557
      %v682 = vpack.c.b16 %v560, %v559
      %v683 = vpack.c.b16 %v562, %v561
      %v684 = vpack.c.b16 %v564, %v563
      %v685 = vpack.c.b16 %v566, %v565
      %v686 = vpack.c.b16 %v568, %v567
      %v687 = vpack.c.b16 %v570, %v569
      %v688 = vpack.c.b16 %v572, %v571
      %v689 = vpack.c.b16 %v574, %v573
      %v690 = vpack.c.b16 %v576, %v575
      %v691 = vpack.c.b16 %v578, %v577
      %v692 = vpack.c.b16 %v580, %v579
      %v693 = vpack.c.b16 %v582, %v581
      %v694 = vpack.c.b16 %v584, %v583
      %v695 = vpack.c.b16 %v586, %v585
      %v696 = vpack.c.b16 %v588, %v587
      %v697 = vpack.c.b16 %v590, %v589
      %v698 = vpack.c.b16 %v592, %v591
      %v699 = vpack.c.b16 %v594, %v593
      %v700 = vpack.c.b16 %v596, %v595
      %v701 = vpack.c.b16 %v598, %v597
      %v702 = vpack.c.b16 %v600, %v599
      %v703 = vpack.c.b16 %v602, %v601
      %v704 = vpack.c.b16 %v604, %v603
      %v705 = vpack.c.b16 %v606, %v605
      %v706 = vpack.c.b16 %v608, %v607
      %v707 = vpack.c.b16 %v610, %v609
      %v708 = vpack.c.b16 %v612, %v611
      %v709 = vpack.c.b16 %v614, %v613
      %v710 = vpack.c.b16 %v616, %v615
      %v711 = vpack.c.b16 %v618, %v617
      %v712 = vpack.c.b16 %v620, %v619
      %v713 = vpack.c.b16 %v622, %v621
      %v714 = vpack.c.b16 %v624, %v623
      %v715 = vpack.c.b16 %v626, %v625
      %v716 = vpack.c.b16 %v628, %v627
      %v717 = vpack.c.b16 %v630, %v629
      %v718 = vpack.c.b16 %v632, %v631
      %v719 = vpack.c.b16 %v634, %v633
      %v720 = vpack.c.b16 %v636, %v635
      %v721 = vpack.c.b16 %v638, %v637
      %v722 = vpack.c.b16 %v640, %v639
      %v723 = vpack.c.b16 %v642, %v641
      %v724 = vpack.c.b16 %v644, %v643
      %v725 = vpack.c.b16 %v646, %v645
      %v726 = vpack.c.b16 %v648, %v647
      %v727 = vpack.c.b16 %v650, %v649
      %v738 = vunpack.c.l.b16 %v329
      %v739 = vunpack.c.l.b16 %v330
      %v740 = vunpack.c.l.b16 %v331
      %v741 = vunpack.c.l.b16 %v332
      %v742 = vunpack.c.l.b16 %v333
      %v743 = vunpack.c.l.b16 %v334
      %v744 = vunpack.c.l.b16 %v335
      %v745 = vunpack.c.l.b16 %v336
      %v746 = vunpack.c.l.b16 %v337
      %v747 = vunpack.c.l.b16 %v338
      %v748 = vpack.c.b16 %v739, %v738
      %v749 = vpack.c.b16 %v741, %v740
      %v750 = vpack.c.b16 %v743, %v742
      %v751 = vpack.c.b16 %v745, %v744
      %v752 = vpack.c.b16 %v747, %v746
      %vm757 = vcmask 613376
      %v759 = vsel %vm757, %v651, 0
      %v762 = vsel %vm757, %v652, 0
      %v765 = vsel %vm757, %v653, 0
      %v768 = vsel %vm757, %v654, 0
      %v771 = vsel %vm757, %v655, 0
      %v774 = vsel %vm757, %v656, 0
      %v777 = vsel %vm757, %v657, 0
      %v780 = vsel %vm757, %v658, 0
      %v783 = vsel %vm757, %v659, 0
      %v786 = vsel %vm757, %v660, 0
      %v789 = vsel %vm757, %v661, 0
      %v792 = vsel %vm757, %v662, 0
      %v795 = vsel %vm757, %v663, 0
      %v798 = vsel %vm757, %v664, 0
      %v801 = vsel %vm757, %v665, 0
      %v804 = vsel %vm757, %v666, 0
      %v807 = vsel %vm757, %v667, 0
      %v810 = vsel %vm757, %v668, 0
      %v813 = vsel %vm757, %v669, 0
      %v816 = vsel %vm757, %v670, 0
      %v819 = vsel %vm757, %v671, 0
      %v822 = vsel %vm757, %v672, 0
      %v825 = vsel %vm757, %v673, 0
      %v828 = vsel %vm757, %v674, 0
      %v831 = vsel %vm757, %v675, 0
      %v834 = vsel %vm757, %v676, 0
      %v837 = vsel %vm757, %v677, 0
      %v840 = vsel %vm757, %v678, 0
      %v843 = vsel %vm757, %v679, 0
      %v846 = vsel %vm757, %v680, 0
      %v849 = vsel %vm757, %v681, 0
      %v852 = vsel %vm757, %v682, 0
      %v855 = vsel %vm757, %v683, 0
      %v858 = vsel %vm757, %v684, 0
      %v861 = vsel %vm757, %v685, 0
      %v864 = vsel %vm757, %v686, 0
      %v867 = vsel %vm757, %v687, 0
      %v870 = vsel %vm757, %v688, 0
      %v873 = vsel %vm757, %v689, 0
      %v876 = vsel %vm757, %v690, 0
      %v879 = vsel %vm757, %v691, 0
      %v882 = vsel %vm757, %v692, 0
      %v885 = vsel %vm757, %v693, 0
      %v888 = vsel %vm757, %v694, 0
      %v891 = vsel %vm757, %v695, 0
      %v894 = vsel %vm757, %v696, 0
      %v897 = vsel %vm757, %v697, 0
      %v900 = vsel %vm757, %v698, 0
      %v903 = vsel %vm757, %v699, 0
      %v906 = vsel %vm757, %v700, 0
      %v909 = vsel %vm757, %v701, 0
      %v912 = vsel %vm757, %v702, 0
      %v915 = vsel %vm757, %v703, 0
      %v918 = vsel %vm757, %v704, 0
      %v921 = vsel %vm757, %v705, 0
      %v924 = vsel %vm757, %v706, 0
      %v927 = vsel %vm757, %v707, 0
      %v930 = vsel %vm757, %v708, 0
      %v933 = vsel %vm757, %v709, 0
      %v936 = vsel %vm757, %v710, 0
      %v939 = vsel %vm757, %v711, 0
      %v942 = vsel %vm757, %v712, 0
      %v945 = vsel %vm757, %v713, 0
      %v948 = vsel %vm757, %v714, 0
      %v951 = vsel %vm757, %v715, 0
      %v954 = vsel %vm757, %v716, 0
      %v957 = vsel %vm757, %v717, 0
      %v960 = vsel %vm757, %v718, 0
      %v963 = vsel %vm757, %v719, 0
      %v966 = vsel %vm757, %v720, 0
      %v969 = vsel %vm757, %v721, 0
      %v972 = vsel %vm757, %v722, 0
      %v975 = vsel %vm757, %v723, 0
      %v978 = vsel %vm757, %v724, 0
      %v981 = vsel %vm757, %v725, 0
      %v984 = vsel %vm757, %v726, 0
      %v987 = vsel %vm757, %v727, 0
      %vm989 = vcmask 1044480
      %vm990 = vcmask 1045504
      %v991 = vsel %vm989, 4294967295, 65535
      %v992 = vsel %vm990, %v991, 0
      %v994 = vand.u32 %v752, %v992
      %996 = vmatpush.bf16.msra.mxu0 0
      %997 = vmatpush.bf16.msra.mxu0 0
      %998 = vmatpush.bf16.msra.mxu0 0
      %999 = vmatpush.bf16.msra.mxu0 %v994
      %1000 = vmatpush.bf16.msra.mxu0 %v751
      %1001 = vmatpush.bf16.msra.mxu0 %v750
      %1002 = vmatpush.bf16.msra.mxu0 %v749
      %1003 = vmatpush.bf16.msra.mxu0 %v748
      %1004 = vmatmul.bf16.gmra.mxu0 %v759
      %v1005 = vpop.f32.mrf.mxu0
      %v1006 = vadd.f32 %v341, %v1005
      %v1007 = vpop.f32.mrf.mxu0
      %v1008 = vadd.f32 %v341, %v1007
      %1009 = vmatmul.bf16.gmra.mxu0 %v762
      %v1010 = vpop.f32.mrf.mxu0
      %v1011 = vadd.f32 %v341, %v1010
      %v1012 = vpop.f32.mrf.mxu0
      %v1013 = vadd.f32 %v341, %v1012
      %1014 = vmatmul.bf16.gmra.mxu0 %v765
      %v1015 = vpop.f32.mrf.mxu0
      %v1016 = vadd.f32 %v341, %v1015
      %v1017 = vpop.f32.mrf.mxu0
      %v1018 = vadd.f32 %v341, %v1017
      %1019 = vmatmul.bf16.gmra.mxu0 %v768
      %v1020 = vpop.f32.mrf.mxu0
      %v1021 = vadd.f32 %v341, %v1020
      %v1022 = vpop.f32.mrf.mxu0
      %v1023 = vadd.f32 %v341, %v1022
      %1024 = vmatmul.bf16.gmra.mxu0 %v771
      %v1025 = vpop.f32.mrf.mxu0
      %v1026 = vadd.f32 %v341, %v1025
      %v1027 = vpop.f32.mrf.mxu0
      %v1028 = vadd.f32 %v341, %v1027
      %1029 = vmatmul.bf16.gmra.mxu0 %v774
      %v1030 = vpop.f32.mrf.mxu0
      %v1031 = vadd.f32 %v341, %v1030
      %v1032 = vpop.f32.mrf.mxu0
      %v1033 = vadd.f32 %v341, %v1032
      %1034 = vmatmul.bf16.gmra.mxu0 %v777
      %v1035 = vpop.f32.mrf.mxu0
      %v1036 = vadd.f32 %v341, %v1035
      %v1037 = vpop.f32.mrf.mxu0
      %v1038 = vadd.f32 %v341, %v1037
      %1039 = vmatmul.bf16.gmra.mxu0 %v780
      %v1040 = vpop.f32.mrf.mxu0
      %v1041 = vadd.f32 %v341, %v1040
      %v1042 = vpop.f32.mrf.mxu0
      %v1043 = vadd.f32 %v341, %v1042
      %1044 = vmatmul.bf16.gmra.mxu0 %v783
      %v1045 = vpop.f32.mrf.mxu0
      %v1046 = vadd.f32 %v341, %v1045
      %v1047 = vpop.f32.mrf.mxu0
      %v1048 = vadd.f32 %v341, %v1047
      %1049 = vmatmul.bf16.gmra.mxu0 %v786
      %v1050 = vpop.f32.mrf.mxu0
      %v1051 = vadd.f32 %v341, %v1050
      %v1052 = vpop.f32.mrf.mxu0
      %v1053 = vadd.f32 %v341, %v1052
      %1054 = vmatmul.bf16.gmra.mxu0 %v789
      %v1055 = vpop.f32.mrf.mxu0
      %v1056 = vadd.f32 %v341, %v1055
      %v1057 = vpop.f32.mrf.mxu0
      %v1058 = vadd.f32 %v341, %v1057
      %1059 = vmatmul.bf16.gmra.mxu0 %v792
      %v1060 = vpop.f32.mrf.mxu0
      %v1061 = vadd.f32 %v341, %v1060
      %v1062 = vpop.f32.mrf.mxu0
      %v1063 = vadd.f32 %v341, %v1062
      %1064 = vmatmul.bf16.gmra.mxu0 %v795
      %v1065 = vpop.f32.mrf.mxu0
      %v1066 = vadd.f32 %v341, %v1065
      %v1067 = vpop.f32.mrf.mxu0
      %v1068 = vadd.f32 %v341, %v1067
      %1069 = vmatmul.bf16.gmra.mxu0 %v798
      %v1070 = vpop.f32.mrf.mxu0
      %v1071 = vadd.f32 %v341, %v1070
      %v1072 = vpop.f32.mrf.mxu0
      %v1073 = vadd.f32 %v341, %v1072
      %1074 = vmatmul.bf16.gmra.mxu0 %v801
      %v1075 = vpop.f32.mrf.mxu0
      %v1076 = vadd.f32 %v341, %v1075
      %v1077 = vpop.f32.mrf.mxu0
      %v1078 = vadd.f32 %v341, %v1077
      %1079 = vmatmul.bf16.gmra.mxu0 %v804
      %v1080 = vpop.f32.mrf.mxu0
      %v1081 = vadd.f32 %v341, %v1080
      %v1082 = vpop.f32.mrf.mxu0
      %v1083 = vadd.f32 %v341, %v1082
      %1084 = vmatmul.bf16.gmra.mxu0 %v807
      %v1085 = vpop.f32.mrf.mxu0
      %v1086 = vadd.f32 %v341, %v1085
      %v1087 = vpop.f32.mrf.mxu0
      %v1088 = vadd.f32 %v341, %v1087
      %1089 = vmatmul.bf16.gmra.mxu0 %v810
      %v1090 = vpop.f32.mrf.mxu0
      %v1091 = vadd.f32 %v341, %v1090
      %v1092 = vpop.f32.mrf.mxu0
      %v1093 = vadd.f32 %v341, %v1092
      %1094 = vmatmul.bf16.gmra.mxu0 %v813
      %v1095 = vpop.f32.mrf.mxu0
      %v1096 = vadd.f32 %v341, %v1095
      %v1097 = vpop.f32.mrf.mxu0
      %v1098 = vadd.f32 %v341, %v1097
      %1099 = vmatmul.bf16.gmra.mxu0 %v816
      %v1100 = vpop.f32.mrf.mxu0
      %v1101 = vadd.f32 %v341, %v1100
      %v1102 = vpop.f32.mrf.mxu0
      %v1103 = vadd.f32 %v341, %v1102
      %1104 = vmatmul.bf16.gmra.mxu0 %v819
      %v1105 = vpop.f32.mrf.mxu0
      %v1106 = vadd.f32 %v341, %v1105
      %v1107 = vpop.f32.mrf.mxu0
      %v1108 = vadd.f32 %v341, %v1107
      %1109 = vmatmul.bf16.gmra.mxu0 %v822
      %v1110 = vpop.f32.mrf.mxu0
      %v1111 = vadd.f32 %v341, %v1110
      %v1112 = vpop.f32.mrf.mxu0
      %v1113 = vadd.f32 %v341, %v1112
      %1114 = vmatmul.bf16.gmra.mxu0 %v825
      %v1115 = vpop.f32.mrf.mxu0
      %v1116 = vadd.f32 %v341, %v1115
      %v1117 = vpop.f32.mrf.mxu0
      %v1118 = vadd.f32 %v341, %v1117
      %1119 = vmatmul.bf16.gmra.mxu0 %v828
      %v1120 = vpop.f32.mrf.mxu0
      %v1121 = vadd.f32 %v341, %v1120
      %v1122 = vpop.f32.mrf.mxu0
      %v1123 = vadd.f32 %v341, %v1122
      %1124 = vmatmul.bf16.gmra.mxu0 %v831
      %v1125 = vpop.f32.mrf.mxu0
      %v1126 = vadd.f32 %v341, %v1125
      %v1127 = vpop.f32.mrf.mxu0
      %v1128 = vadd.f32 %v341, %v1127
      %1129 = vmatmul.bf16.gmra.mxu0 %v834
      %v1130 = vpop.f32.mrf.mxu0
      %v1131 = vadd.f32 %v341, %v1130
      %v1132 = vpop.f32.mrf.mxu0
      %v1133 = vadd.f32 %v341, %v1132
      %1134 = vmatmul.bf16.gmra.mxu0 %v837
      %v1135 = vpop.f32.mrf.mxu0
      %v1136 = vadd.f32 %v341, %v1135
      %v1137 = vpop.f32.mrf.mxu0
      %v1138 = vadd.f32 %v341, %v1137
      %1139 = vmatmul.bf16.gmra.mxu0 %v840
      %v1140 = vpop.f32.mrf.mxu0
      %v1141 = vadd.f32 %v341, %v1140
      %v1142 = vpop.f32.mrf.mxu0
      %v1143 = vadd.f32 %v341, %v1142
      %1144 = vmatmul.bf16.gmra.mxu0 %v843
      %v1145 = vpop.f32.mrf.mxu0
      %v1146 = vadd.f32 %v341, %v1145
      %v1147 = vpop.f32.mrf.mxu0
      %v1148 = vadd.f32 %v341, %v1147
      %1149 = vmatmul.bf16.gmra.mxu0 %v846
      %v1150 = vpop.f32.mrf.mxu0
      %v1151 = vadd.f32 %v341, %v1150
      %v1152 = vpop.f32.mrf.mxu0
      %v1153 = vadd.f32 %v341, %v1152
      %1154 = vmatmul.bf16.gmra.mxu0 %v849
      %v1155 = vpop.f32.mrf.mxu0
      %v1156 = vadd.f32 %v341, %v1155
      %v1157 = vpop.f32.mrf.mxu0
      %v1158 = vadd.f32 %v341, %v1157
      %1159 = vmatmul.bf16.gmra.mxu0 %v852
      %v1160 = vpop.f32.mrf.mxu0
      %v1161 = vadd.f32 %v341, %v1160
      %v1162 = vpop.f32.mrf.mxu0
      %v1163 = vadd.f32 %v341, %v1162
      %1164 = vmatmul.bf16.gmra.mxu0 %v855
      %v1165 = vpop.f32.mrf.mxu0
      %v1166 = vadd.f32 %v341, %v1165
      %v1167 = vpop.f32.mrf.mxu0
      %v1168 = vadd.f32 %v341, %v1167
      %1169 = vmatmul.bf16.gmra.mxu0 %v858
      %v1170 = vpop.f32.mrf.mxu0
      %v1171 = vadd.f32 %v341, %v1170
      %v1172 = vpop.f32.mrf.mxu0
      %v1173 = vadd.f32 %v341, %v1172
      %1174 = vmatmul.bf16.gmra.mxu0 %v861
      %v1175 = vpop.f32.mrf.mxu0
      %v1176 = vadd.f32 %v341, %v1175
      %v1177 = vpop.f32.mrf.mxu0
      %v1178 = vadd.f32 %v341, %v1177
      %1179 = vmatmul.bf16.gmra.mxu0 %v864
      %v1180 = vpop.f32.mrf.mxu0
      %v1181 = vadd.f32 %v341, %v1180
      %v1182 = vpop.f32.mrf.mxu0
      %v1183 = vadd.f32 %v341, %v1182
      %1184 = vmatmul.bf16.gmra.mxu0 %v867
      %v1185 = vpop.f32.mrf.mxu0
      %v1186 = vadd.f32 %v341, %v1185
      %v1187 = vpop.f32.mrf.mxu0
      %v1188 = vadd.f32 %v341, %v1187
      %1189 = vmatmul.bf16.gmra.mxu0 %v870
      %v1190 = vpop.f32.mrf.mxu0
      %v1191 = vadd.f32 %v341, %v1190
      %v1192 = vpop.f32.mrf.mxu0
      %v1193 = vadd.f32 %v341, %v1192
      %1194 = vmatmul.bf16.gmra.mxu0 %v873
      %v1195 = vpop.f32.mrf.mxu0
      %v1196 = vadd.f32 %v341, %v1195
      %v1197 = vpop.f32.mrf.mxu0
      %v1198 = vadd.f32 %v341, %v1197
      %1199 = vmatmul.bf16.gmra.mxu0 %v876
      %v1200 = vpop.f32.mrf.mxu0
      %v1201 = vadd.f32 %v341, %v1200
      %v1202 = vpop.f32.mrf.mxu0
      %v1203 = vadd.f32 %v341, %v1202
      %1204 = vmatmul.bf16.gmra.mxu0 %v879
      %v1205 = vpop.f32.mrf.mxu0
      %v1206 = vadd.f32 %v341, %v1205
      %v1207 = vpop.f32.mrf.mxu0
      %v1208 = vadd.f32 %v341, %v1207
      %1209 = vmatmul.bf16.gmra.mxu0 %v882
      %v1210 = vpop.f32.mrf.mxu0
      %v1211 = vadd.f32 %v341, %v1210
      %v1212 = vpop.f32.mrf.mxu0
      %v1213 = vadd.f32 %v341, %v1212
      %1214 = vmatmul.bf16.gmra.mxu0 %v885
      %v1215 = vpop.f32.mrf.mxu0
      %v1216 = vadd.f32 %v341, %v1215
      %v1217 = vpop.f32.mrf.mxu0
      %v1218 = vadd.f32 %v341, %v1217
      %1219 = vmatmul.bf16.gmra.mxu0 %v888
      %v1220 = vpop.f32.mrf.mxu0
      %v1221 = vadd.f32 %v341, %v1220
      %v1222 = vpop.f32.mrf.mxu0
      %v1223 = vadd.f32 %v341, %v1222
      %1224 = vmatmul.bf16.gmra.mxu0 %v891
      %v1225 = vpop.f32.mrf.mxu0
      %v1226 = vadd.f32 %v341, %v1225
      %v1227 = vpop.f32.mrf.mxu0
      %v1228 = vadd.f32 %v341, %v1227
      %1229 = vmatmul.bf16.gmra.mxu0 %v894
      %v1230 = vpop.f32.mrf.mxu0
      %v1231 = vadd.f32 %v341, %v1230
      %v1232 = vpop.f32.mrf.mxu0
      %v1233 = vadd.f32 %v341, %v1232
      %1234 = vmatmul.bf16.gmra.mxu0 %v897
      %v1235 = vpop.f32.mrf.mxu0
      %v1236 = vadd.f32 %v341, %v1235
      %v1237 = vpop.f32.mrf.mxu0
      %v1238 = vadd.f32 %v341, %v1237
      %1239 = vmatmul.bf16.gmra.mxu0 %v900
      %v1240 = vpop.f32.mrf.mxu0
      %v1241 = vadd.f32 %v341, %v1240
      %v1242 = vpop.f32.mrf.mxu0
      %v1243 = vadd.f32 %v341, %v1242
      %1244 = vmatmul.bf16.gmra.mxu0 %v903
      %v1245 = vpop.f32.mrf.mxu0
      %v1246 = vadd.f32 %v341, %v1245
      %v1247 = vpop.f32.mrf.mxu0
      %v1248 = vadd.f32 %v341, %v1247
      %1249 = vmatmul.bf16.gmra.mxu0 %v906
      %v1250 = vpop.f32.mrf.mxu0
      %v1251 = vadd.f32 %v341, %v1250
      %v1252 = vpop.f32.mrf.mxu0
      %v1253 = vadd.f32 %v341, %v1252
      %1254 = vmatmul.bf16.gmra.mxu0 %v909
      %v1255 = vpop.f32.mrf.mxu0
      %v1256 = vadd.f32 %v341, %v1255
      %v1257 = vpop.f32.mrf.mxu0
      %v1258 = vadd.f32 %v341, %v1257
      %1259 = vmatmul.bf16.gmra.mxu0 %v912
      %v1260 = vpop.f32.mrf.mxu0
      %v1261 = vadd.f32 %v341, %v1260
      %v1262 = vpop.f32.mrf.mxu0
      %v1263 = vadd.f32 %v341, %v1262
      %1264 = vmatmul.bf16.gmra.mxu0 %v915
      %v1265 = vpop.f32.mrf.mxu0
      %v1266 = vadd.f32 %v341, %v1265
      %v1267 = vpop.f32.mrf.mxu0
      %v1268 = vadd.f32 %v341, %v1267
      %1269 = vmatmul.bf16.gmra.mxu0 %v918
      %v1270 = vpop.f32.mrf.mxu0
      %v1271 = vadd.f32 %v341, %v1270
      %v1272 = vpop.f32.mrf.mxu0
      %v1273 = vadd.f32 %v341, %v1272
      %1274 = vmatmul.bf16.gmra.mxu0 %v921
      %v1275 = vpop.f32.mrf.mxu0
      %v1276 = vadd.f32 %v341, %v1275
      %v1277 = vpop.f32.mrf.mxu0
      %v1278 = vadd.f32 %v341, %v1277
      %1279 = vmatmul.bf16.gmra.mxu0 %v924
      %v1280 = vpop.f32.mrf.mxu0
      %v1281 = vadd.f32 %v341, %v1280
      %v1282 = vpop.f32.mrf.mxu0
      %v1283 = vadd.f32 %v341, %v1282
      %1284 = vmatmul.bf16.gmra.mxu0 %v927
      %v1285 = vpop.f32.mrf.mxu0
      %v1286 = vadd.f32 %v341, %v1285
      %v1287 = vpop.f32.mrf.mxu0
      %v1288 = vadd.f32 %v341, %v1287
      %1289 = vmatmul.bf16.gmra.mxu0 %v930
      %v1290 = vpop.f32.mrf.mxu0
      %v1291 = vadd.f32 %v341, %v1290
      %v1292 = vpop.f32.mrf.mxu0
      %v1293 = vadd.f32 %v341, %v1292
      %1294 = vmatmul.bf16.gmra.mxu0 %v933
      %v1295 = vpop.f32.mrf.mxu0
      %v1296 = vadd.f32 %v341, %v1295
      %v1297 = vpop.f32.mrf.mxu0
      %v1298 = vadd.f32 %v341, %v1297
      %1299 = vmatmul.bf16.gmra.mxu0 %v936
      %v1300 = vpop.f32.mrf.mxu0
      %v1301 = vadd.f32 %v341, %v1300
      %v1302 = vpop.f32.mrf.mxu0
      %v1303 = vadd.f32 %v341, %v1302
      %1304 = vmatmul.bf16.gmra.mxu0 %v939
      %v1305 = vpop.f32.mrf.mxu0
      %v1306 = vadd.f32 %v341, %v1305
      %v1307 = vpop.f32.mrf.mxu0
      %v1308 = vadd.f32 %v341, %v1307
      %1309 = vmatmul.bf16.gmra.mxu0 %v942
      %v1310 = vpop.f32.mrf.mxu0
      %v1311 = vadd.f32 %v341, %v1310
      %v1312 = vpop.f32.mrf.mxu0
      %v1313 = vadd.f32 %v341, %v1312
      %1314 = vmatmul.bf16.gmra.mxu0 %v945
      %v1315 = vpop.f32.mrf.mxu0
      %v1316 = vadd.f32 %v341, %v1315
      %v1317 = vpop.f32.mrf.mxu0
      %v1318 = vadd.f32 %v341, %v1317
      %1319 = vmatmul.bf16.gmra.mxu0 %v948
      %v1320 = vpop.f32.mrf.mxu0
      %v1321 = vadd.f32 %v341, %v1320
      %v1322 = vpop.f32.mrf.mxu0
      %v1323 = vadd.f32 %v341, %v1322
      %1324 = vmatmul.bf16.gmra.mxu0 %v951
      %v1325 = vpop.f32.mrf.mxu0
      %v1326 = vadd.f32 %v341, %v1325
      %v1327 = vpop.f32.mrf.mxu0
      %v1328 = vadd.f32 %v341, %v1327
      %1329 = vmatmul.bf16.gmra.mxu0 %v954
      %v1330 = vpop.f32.mrf.mxu0
      %v1331 = vadd.f32 %v341, %v1330
      %v1332 = vpop.f32.mrf.mxu0
      %v1333 = vadd.f32 %v341, %v1332
      %1334 = vmatmul.bf16.gmra.mxu0 %v957
      %v1335 = vpop.f32.mrf.mxu0
      %v1336 = vadd.f32 %v341, %v1335
      %v1337 = vpop.f32.mrf.mxu0
      %v1338 = vadd.f32 %v341, %v1337
      %1339 = vmatmul.bf16.gmra.mxu0 %v960
      %v1340 = vpop.f32.mrf.mxu0
      %v1341 = vadd.f32 %v341, %v1340
      %v1342 = vpop.f32.mrf.mxu0
      %v1343 = vadd.f32 %v341, %v1342
      %1344 = vmatmul.bf16.gmra.mxu0 %v963
      %v1345 = vpop.f32.mrf.mxu0
      %v1346 = vadd.f32 %v341, %v1345
      %v1347 = vpop.f32.mrf.mxu0
      %v1348 = vadd.f32 %v341, %v1347
      %1349 = vmatmul.bf16.gmra.mxu0 %v966
      %v1350 = vpop.f32.mrf.mxu0
      %v1351 = vadd.f32 %v341, %v1350
      %v1352 = vpop.f32.mrf.mxu0
      %v1353 = vadd.f32 %v341, %v1352
      %1354 = vmatmul.bf16.gmra.mxu0 %v969
      %v1355 = vpop.f32.mrf.mxu0
      %v1356 = vadd.f32 %v341, %v1355
      %v1357 = vpop.f32.mrf.mxu0
      %v1358 = vadd.f32 %v341, %v1357
      %1359 = vmatmul.bf16.gmra.mxu0 %v972
      %v1360 = vpop.f32.mrf.mxu0
      %v1361 = vadd.f32 %v341, %v1360
      %v1362 = vpop.f32.mrf.mxu0
      %v1363 = vadd.f32 %v341, %v1362
      %1364 = vmatmul.bf16.gmra.mxu0 %v975
      %v1365 = vpop.f32.mrf.mxu0
      %v1366 = vadd.f32 %v341, %v1365
      %v1367 = vpop.f32.mrf.mxu0
      %v1368 = vadd.f32 %v341, %v1367
      %1369 = vmatmul.bf16.gmra.mxu0 %v978
      %v1370 = vpop.f32.mrf.mxu0
      %v1371 = vadd.f32 %v341, %v1370
      %v1372 = vpop.f32.mrf.mxu0
      %v1373 = vadd.f32 %v341, %v1372
      %1374 = vmatmul.bf16.gmra.mxu0 %v981
      %v1375 = vpop.f32.mrf.mxu0
      %v1376 = vadd.f32 %v341, %v1375
      %v1377 = vpop.f32.mrf.mxu0
      %v1378 = vadd.f32 %v341, %v1377
      %1379 = vmatmul.bf16.gmra.mxu0 %v984
      %v1380 = vpop.f32.mrf.mxu0
      %v1381 = vadd.f32 %v341, %v1380
      %v1382 = vpop.f32.mrf.mxu0
      %v1383 = vadd.f32 %v341, %v1382
      %1384 = vmatmul.bf16.gmra.mxu0 %v987
      %v1385 = vpop.f32.mrf.mxu0
      %v1386 = vadd.f32 %v341, %v1385
      %v1387 = vpop.f32.mrf.mxu0
      %v1388 = vadd.f32 %v341, %v1387
      %1389 = vdwg.mxu0
      %v1390 = vmax.f32 %v1006, 0.0
      %v1391 = vmax.f32 %v1008, 0.0
      %v1392 = vmax.f32 %v1011, 0.0
      %v1393 = vmax.f32 %v1013, 0.0
      %v1394 = vmax.f32 %v1016, 0.0
      %v1395 = vmax.f32 %v1018, 0.0
      %v1396 = vmax.f32 %v1021, 0.0
      %v1397 = vmax.f32 %v1023, 0.0
      %v1398 = vmax.f32 %v1026, 0.0
      %v1399 = vmax.f32 %v1028, 0.0
      %v1400 = vmax.f32 %v1031, 0.0
      %v1401 = vmax.f32 %v1033, 0.0
      %v1402 = vmax.f32 %v1036, 0.0
      %v1403 = vmax.f32 %v1038, 0.0
      %v1404 = vmax.f32 %v1041, 0.0
      %v1405 = vmax.f32 %v1043, 0.0
      %v1406 = vmax.f32 %v1046, 0.0
      %v1407 = vmax.f32 %v1048, 0.0
      %v1408 = vmax.f32 %v1051, 0.0
      %v1409 = vmax.f32 %v1053, 0.0
      %v1410 = vmax.f32 %v1056, 0.0
      %v1411 = vmax.f32 %v1058, 0.0
      %v1412 = vmax.f32 %v1061, 0.0
      %v1413 = vmax.f32 %v1063, 0.0
      %v1414 = vmax.f32 %v1066, 0.0
      %v1415 = vmax.f32 %v1068, 0.0
      %v1416 = vmax.f32 %v1071, 0.0
      %v1417 = vmax.f32 %v1073, 0.0
      %v1418 = vmax.f32 %v1076, 0.0
      %v1419 = vmax.f32 %v1078, 0.0
      %v1420 = vmax.f32 %v1081, 0.0
      %v1421 = vmax.f32 %v1083, 0.0
      %v1422 = vmax.f32 %v1086, 0.0
      %v1423 = vmax.f32 %v1088, 0.0
      %v1424 = vmax.f32 %v1091, 0.0
      %v1425 = vmax.f32 %v1093, 0.0
      %v1426 = vmax.f32 %v1096, 0.0
      %v1427 = vmax.f32 %v1098, 0.0
      %v1428 = vmax.f32 %v1101, 0.0
      %v1429 = vmax.f32 %v1103, 0.0
      %v1430 = vmax.f32 %v1106, 0.0
      %v1431 = vmax.f32 %v1108, 0.0
      %v1432 = vmax.f32 %v1111, 0.0
      %v1433 = vmax.f32 %v1113, 0.0
      %v1434 = vmax.f32 %v1116, 0.0
      %v1435 = vmax.f32 %v1118, 0.0
      %v1436 = vmax.f32 %v1121, 0.0
      %v1437 = vmax.f32 %v1123, 0.0
      %v1438 = vmax.f32 %v1126, 0.0
      %v1439 = vmax.f32 %v1128, 0.0
      %v1440 = vmax.f32 %v1131, 0.0
      %v1441 = vmax.f32 %v1133, 0.0
      %v1442 = vmax.f32 %v1136, 0.0
      %v1443 = vmax.f32 %v1138, 0.0
      %v1444 = vmax.f32 %v1141, 0.0
      %v1445 = vmax.f32 %v1143, 0.0
      %v1446 = vmax.f32 %v1146, 0.0
      %v1447 = vmax.f32 %v1148, 0.0
      %v1448 = vmax.f32 %v1151, 0.0
      %v1449 = vmax.f32 %v1153, 0.0
      %v1450 = vmax.f32 %v1156, 0.0
      %v1451 = vmax.f32 %v1158, 0.0
      %v1452 = vmax.f32 %v1161, 0.0
      %v1453 = vmax.f32 %v1163, 0.0
      %v1454 = vmax.f32 %v1166, 0.0
      %v1455 = vmax.f32 %v1168, 0.0
      %v1456 = vmax.f32 %v1171, 0.0
      %v1457 = vmax.f32 %v1173, 0.0
      %v1458 = vmax.f32 %v1176, 0.0
      %v1459 = vmax.f32 %v1178, 0.0
      %v1460 = vmax.f32 %v1181, 0.0
      %v1461 = vmax.f32 %v1183, 0.0
      %v1462 = vmax.f32 %v1186, 0.0
      %v1463 = vmax.f32 %v1188, 0.0
      %v1464 = vmax.f32 %v1191, 0.0
      %v1465 = vmax.f32 %v1193, 0.0
      %v1466 = vmax.f32 %v1196, 0.0
      %v1467 = vmax.f32 %v1198, 0.0
      %v1468 = vmax.f32 %v1201, 0.0
      %v1469 = vmax.f32 %v1203, 0.0
      %v1470 = vmax.f32 %v1206, 0.0
      %v1471 = vmax.f32 %v1208, 0.0
      %v1472 = vmax.f32 %v1211, 0.0
      %v1473 = vmax.f32 %v1213, 0.0
      %v1474 = vmax.f32 %v1216, 0.0
      %v1475 = vmax.f32 %v1218, 0.0
      %v1476 = vmax.f32 %v1221, 0.0
      %v1477 = vmax.f32 %v1223, 0.0
      %v1478 = vmax.f32 %v1226, 0.0
      %v1479 = vmax.f32 %v1228, 0.0
      %v1480 = vmax.f32 %v1231, 0.0
      %v1481 = vmax.f32 %v1233, 0.0
      %v1482 = vmax.f32 %v1236, 0.0
      %v1483 = vmax.f32 %v1238, 0.0
      %v1484 = vmax.f32 %v1241, 0.0
      %v1485 = vmax.f32 %v1243, 0.0
      %v1486 = vmax.f32 %v1246, 0.0
      %v1487 = vmax.f32 %v1248, 0.0
      %v1488 = vmax.f32 %v1251, 0.0
      %v1489 = vmax.f32 %v1253, 0.0
      %v1490 = vmax.f32 %v1256, 0.0
      %v1491 = vmax.f32 %v1258, 0.0
      %v1492 = vmax.f32 %v1261, 0.0
      %v1493 = vmax.f32 %v1263, 0.0
      %v1494 = vmax.f32 %v1266, 0.0
      %v1495 = vmax.f32 %v1268, 0.0
      %v1496 = vmax.f32 %v1271, 0.0
      %v1497 = vmax.f32 %v1273, 0.0
      %v1498 = vmax.f32 %v1276, 0.0
      %v1499 = vmax.f32 %v1278, 0.0
      %v1500 = vmax.f32 %v1281, 0.0
      %v1501 = vmax.f32 %v1283, 0.0
      %v1502 = vmax.f32 %v1286, 0.0
      %v1503 = vmax.f32 %v1288, 0.0
      %v1504 = vmax.f32 %v1291, 0.0
      %v1505 = vmax.f32 %v1293, 0.0
      %v1506 = vmax.f32 %v1296, 0.0
      %v1507 = vmax.f32 %v1298, 0.0
      %v1508 = vmax.f32 %v1301, 0.0
      %v1509 = vmax.f32 %v1303, 0.0
      %v1510 = vmax.f32 %v1306, 0.0
      %v1511 = vmax.f32 %v1308, 0.0
      %v1512 = vmax.f32 %v1311, 0.0
      %v1513 = vmax.f32 %v1313, 0.0
      %v1514 = vmax.f32 %v1316, 0.0
      %v1515 = vmax.f32 %v1318, 0.0
      %v1516 = vmax.f32 %v1321, 0.0
      %v1517 = vmax.f32 %v1323, 0.0
      %v1518 = vmax.f32 %v1326, 0.0
      %v1519 = vmax.f32 %v1328, 0.0
      %v1520 = vmax.f32 %v1331, 0.0
      %v1521 = vmax.f32 %v1333, 0.0
      %v1522 = vmax.f32 %v1336, 0.0
      %v1523 = vmax.f32 %v1338, 0.0
      %v1524 = vmax.f32 %v1341, 0.0
      %v1525 = vmax.f32 %v1343, 0.0
      %v1526 = vmax.f32 %v1346, 0.0
      %v1527 = vmax.f32 %v1348, 0.0
      %v1528 = vmax.f32 %v1351, 0.0
      %v1529 = vmax.f32 %v1353, 0.0
      %v1530 = vmax.f32 %v1356, 0.0
      %v1531 = vmax.f32 %v1358, 0.0
      %v1532 = vmax.f32 %v1361, 0.0
      %v1533 = vmax.f32 %v1363, 0.0
      %v1534 = vmax.f32 %v1366, 0.0
      %v1535 = vmax.f32 %v1368, 0.0
      %v1536 = vmax.f32 %v1371, 0.0
      %v1537 = vmax.f32 %v1373, 0.0
      %v1538 = vmax.f32 %v1376, 0.0
      %v1539 = vmax.f32 %v1378, 0.0
      %v1540 = vmax.f32 %v1381, 0.0
      %v1541 = vmax.f32 %v1383, 0.0
      %v1542 = vmax.f32 %v1386, 0.0
      %v1543 = vmax.f32 %v1388, 0.0
      %v1544 = vpack.c.bf16 %v1390, %v1390
      %v1545 = vpack.c.bf16 %v1391, %v1391
      %v1546 = vpack.c.bf16 %v1392, %v1392
      %v1547 = vpack.c.bf16 %v1393, %v1393
      %v1548 = vpack.c.bf16 %v1394, %v1394
      %v1549 = vpack.c.bf16 %v1395, %v1395
      %v1550 = vpack.c.bf16 %v1396, %v1396
      %v1551 = vpack.c.bf16 %v1397, %v1397
      %v1552 = vpack.c.bf16 %v1398, %v1398
      %v1553 = vpack.c.bf16 %v1399, %v1399
      %v1554 = vpack.c.bf16 %v1400, %v1400
      %v1555 = vpack.c.bf16 %v1401, %v1401
      %v1556 = vpack.c.bf16 %v1402, %v1402
      %v1557 = vpack.c.bf16 %v1403, %v1403
      %v1558 = vpack.c.bf16 %v1404, %v1404
      %v1559 = vpack.c.bf16 %v1405, %v1405
      %v1560 = vpack.c.bf16 %v1406, %v1406
      %v1561 = vpack.c.bf16 %v1407, %v1407
      %v1562 = vpack.c.bf16 %v1408, %v1408
      %v1563 = vpack.c.bf16 %v1409, %v1409
      %v1564 = vpack.c.bf16 %v1410, %v1410
      %v1565 = vpack.c.bf16 %v1411, %v1411
      %v1566 = vpack.c.bf16 %v1412, %v1412
      %v1567 = vpack.c.bf16 %v1413, %v1413
      %v1568 = vpack.c.bf16 %v1414, %v1414
      %v1569 = vpack.c.bf16 %v1415, %v1415
      %v1570 = vpack.c.bf16 %v1416, %v1416
      %v1571 = vpack.c.bf16 %v1417, %v1417
      %v1572 = vpack.c.bf16 %v1418, %v1418
      %v1573 = vpack.c.bf16 %v1419, %v1419
      %v1574 = vpack.c.bf16 %v1420, %v1420
      %v1575 = vpack.c.bf16 %v1421, %v1421
      %v1576 = vpack.c.bf16 %v1422, %v1422
      %v1577 = vpack.c.bf16 %v1423, %v1423
      %v1578 = vpack.c.bf16 %v1424, %v1424
      %v1579 = vpack.c.bf16 %v1425, %v1425
      %v1580 = vpack.c.bf16 %v1426, %v1426
      %v1581 = vpack.c.bf16 %v1427, %v1427
      %v1582 = vpack.c.bf16 %v1428, %v1428
      %v1583 = vpack.c.bf16 %v1429, %v1429
      %v1584 = vpack.c.bf16 %v1430, %v1430
      %v1585 = vpack.c.bf16 %v1431, %v1431
      %v1586 = vpack.c.bf16 %v1432, %v1432
      %v1587 = vpack.c.bf16 %v1433, %v1433
      %v1588 = vpack.c.bf16 %v1434, %v1434
      %v1589 = vpack.c.bf16 %v1435, %v1435
      %v1590 = vpack.c.bf16 %v1436, %v1436
      %v1591 = vpack.c.bf16 %v1437, %v1437
      %v1592 = vpack.c.bf16 %v1438, %v1438
      %v1593 = vpack.c.bf16 %v1439, %v1439
      %v1594 = vpack.c.bf16 %v1440, %v1440
      %v1595 = vpack.c.bf16 %v1441, %v1441
      %v1596 = vpack.c.bf16 %v1442, %v1442
      %v1597 = vpack.c.bf16 %v1443, %v1443
      %v1598 = vpack.c.bf16 %v1444, %v1444
      %v1599 = vpack.c.bf16 %v1445, %v1445
      %v1600 = vpack.c.bf16 %v1446, %v1446
      %v1601 = vpack.c.bf16 %v1447, %v1447
      %v1602 = vpack.c.bf16 %v1448, %v1448
      %v1603 = vpack.c.bf16 %v1449, %v1449
      %v1604 = vpack.c.bf16 %v1450, %v1450
      %v1605 = vpack.c.bf16 %v1451, %v1451
      %v1606 = vpack.c.bf16 %v1452, %v1452
      %v1607 = vpack.c.bf16 %v1453, %v1453
      %v1608 = vpack.c.bf16 %v1454, %v1454
      %v1609 = vpack.c.bf16 %v1455, %v1455
      %v1610 = vpack.c.bf16 %v1456, %v1456
      %v1611 = vpack.c.bf16 %v1457, %v1457
      %v1612 = vpack.c.bf16 %v1458, %v1458
      %v1613 = vpack.c.bf16 %v1459, %v1459
      %v1614 = vpack.c.bf16 %v1460, %v1460
      %v1615 = vpack.c.bf16 %v1461, %v1461
      %v1616 = vpack.c.bf16 %v1462, %v1462
      %v1617 = vpack.c.bf16 %v1463, %v1463
      %v1618 = vpack.c.bf16 %v1464, %v1464
      %v1619 = vpack.c.bf16 %v1465, %v1465
      %v1620 = vpack.c.bf16 %v1466, %v1466
      %v1621 = vpack.c.bf16 %v1467, %v1467
      %v1622 = vpack.c.bf16 %v1468, %v1468
      %v1623 = vpack.c.bf16 %v1469, %v1469
      %v1624 = vpack.c.bf16 %v1470, %v1470
      %v1625 = vpack.c.bf16 %v1471, %v1471
      %v1626 = vpack.c.bf16 %v1472, %v1472
      %v1627 = vpack.c.bf16 %v1473, %v1473
      %v1628 = vpack.c.bf16 %v1474, %v1474
      %v1629 = vpack.c.bf16 %v1475, %v1475
      %v1630 = vpack.c.bf16 %v1476, %v1476
      %v1631 = vpack.c.bf16 %v1477, %v1477
      %v1632 = vpack.c.bf16 %v1478, %v1478
      %v1633 = vpack.c.bf16 %v1479, %v1479
      %v1634 = vpack.c.bf16 %v1480, %v1480
      %v1635 = vpack.c.bf16 %v1481, %v1481
      %v1636 = vpack.c.bf16 %v1482, %v1482
      %v1637 = vpack.c.bf16 %v1483, %v1483
      %v1638 = vpack.c.bf16 %v1484, %v1484
      %v1639 = vpack.c.bf16 %v1485, %v1485
      %v1640 = vpack.c.bf16 %v1486, %v1486
      %v1641 = vpack.c.bf16 %v1487, %v1487
      %v1642 = vpack.c.bf16 %v1488, %v1488
      %v1643 = vpack.c.bf16 %v1489, %v1489
      %v1644 = vpack.c.bf16 %v1490, %v1490
      %v1645 = vpack.c.bf16 %v1491, %v1491
      %v1646 = vpack.c.bf16 %v1492, %v1492
      %v1647 = vpack.c.bf16 %v1493, %v1493
      %v1648 = vpack.c.bf16 %v1494, %v1494
      %v1649 = vpack.c.bf16 %v1495, %v1495
      %v1650 = vpack.c.bf16 %v1496, %v1496
      %v1651 = vpack.c.bf16 %v1497, %v1497
      %v1652 = vpack.c.bf16 %v1498, %v1498
      %v1653 = vpack.c.bf16 %v1499, %v1499
      %v1654 = vpack.c.bf16 %v1500, %v1500
      %v1655 = vpack.c.bf16 %v1501, %v1501
      %v1656 = vpack.c.bf16 %v1502, %v1502
      %v1657 = vpack.c.bf16 %v1503, %v1503
      %v1658 = vpack.c.bf16 %v1504, %v1504
      %v1659 = vpack.c.bf16 %v1505, %v1505
      %v1660 = vpack.c.bf16 %v1506, %v1506
      %v1661 = vpack.c.bf16 %v1507, %v1507
      %v1662 = vpack.c.bf16 %v1508, %v1508
      %v1663 = vpack.c.bf16 %v1509, %v1509
      %v1664 = vpack.c.bf16 %v1510, %v1510
      %v1665 = vpack.c.bf16 %v1511, %v1511
      %v1666 = vpack.c.bf16 %v1512, %v1512
      %v1667 = vpack.c.bf16 %v1513, %v1513
      %v1668 = vpack.c.bf16 %v1514, %v1514
      %v1669 = vpack.c.bf16 %v1515, %v1515
      %v1670 = vpack.c.bf16 %v1516, %v1516
      %v1671 = vpack.c.bf16 %v1517, %v1517
      %v1672 = vpack.c.bf16 %v1518, %v1518
      %v1673 = vpack.c.bf16 %v1519, %v1519
      %v1674 = vpack.c.bf16 %v1520, %v1520
      %v1675 = vpack.c.bf16 %v1521, %v1521
      %v1676 = vpack.c.bf16 %v1522, %v1522
      %v1677 = vpack.c.bf16 %v1523, %v1523
      %v1678 = vpack.c.bf16 %v1524, %v1524
      %v1679 = vpack.c.bf16 %v1525, %v1525
      %v1680 = vpack.c.bf16 %v1526, %v1526
      %v1681 = vpack.c.bf16 %v1527, %v1527
      %v1682 = vpack.c.bf16 %v1528, %v1528
      %v1683 = vpack.c.bf16 %v1529, %v1529
      %v1684 = vpack.c.bf16 %v1530, %v1530
      %v1685 = vpack.c.bf16 %v1531, %v1531
      %v1686 = vpack.c.bf16 %v1532, %v1532
      %v1687 = vpack.c.bf16 %v1533, %v1533
      %v1688 = vpack.c.bf16 %v1534, %v1534
      %v1689 = vpack.c.bf16 %v1535, %v1535
      %v1690 = vpack.c.bf16 %v1536, %v1536
      %v1691 = vpack.c.bf16 %v1537, %v1537
      %v1692 = vpack.c.bf16 %v1538, %v1538
      %v1693 = vpack.c.bf16 %v1539, %v1539
      %v1694 = vpack.c.bf16 %v1540, %v1540
      %v1695 = vpack.c.bf16 %v1541, %v1541
      %v1696 = vpack.c.bf16 %v1542, %v1542
      %v1697 = vpack.c.bf16 %v1543, %v1543
      %1698 = vst [vmem:[%s172] sm:$0xf] %v1544
      %1699 = vst [vmem:[%s172 + $0x4] sm:$0xf] %v1545
      %1700 = vst [vmem:[%s172 + $0x8] sm:$0xf] %v1546
      %1701 = vst [vmem:[%s172 + $0xc] sm:$0xf] %v1547
      %1702 = vst [vmem:[%s172 + $0x10] sm:$0xf] %v1548
      %1703 = vst [vmem:[%s172 + $0x14] sm:$0xf] %v1549
      %1704 = vst [vmem:[%s172 + $0x18] sm:$0xf] %v1550
      %1705 = vst [vmem:[%s172 + $0x1c] sm:$0xf] %v1551
      %1706 = vst [vmem:[%s172 + $0x20] sm:$0xf] %v1552
      %1707 = vst [vmem:[%s172 + $0x24] sm:$0xf] %v1553
      %1708 = vst [vmem:[%s172 + $0x28] sm:$0xf] %v1554
      %1709 = vst [vmem:[%s172 + $0x2c] sm:$0xf] %v1555
      %1710 = vst [vmem:[%s172 + $0x30] sm:$0xf] %v1556
      %1711 = vst [vmem:[%s172 + $0x34] sm:$0xf] %v1557
      %1712 = vst [vmem:[%s172 + $0x38] sm:$0xf] %v1558
      %1713 = vst [vmem:[%s172 + $0x3c] sm:$0xf] %v1559
      %1714 = vst [vmem:[%s172 + $0x40] sm:$0xf] %v1560
      %1715 = vst [vmem:[%s172 + $0x44] sm:$0xf] %v1561
      %1716 = vst [vmem:[%s172 + $0x48] sm:$0xf] %v1562
      %1717 = vst [vmem:[%s172 + $0x4c] sm:$0xf] %v1563
      %1718 = vst [vmem:[%s172 + $0x50] sm:$0xf] %v1564
      %1719 = vst [vmem:[%s172 + $0x54] sm:$0xf] %v1565
      %1720 = vst [vmem:[%s172 + $0x58] sm:$0xf] %v1566
      %1721 = vst [vmem:[%s172 + $0x5c] sm:$0xf] %v1567
      %1722 = vst [vmem:[%s172 + $0x60] sm:$0xf] %v1568
      %1723 = vst [vmem:[%s172 + $0x64] sm:$0xf] %v1569
      %1724 = vst [vmem:[%s172 + $0x68] sm:$0xf] %v1570
      %1725 = vst [vmem:[%s172 + $0x6c] sm:$0xf] %v1571
      %1726 = vst [vmem:[%s172 + $0x70] sm:$0xf] %v1572
      %1727 = vst [vmem:[%s172 + $0x74] sm:$0xf] %v1573
      %1728 = vst [vmem:[%s172 + $0x78] sm:$0xf] %v1574
      %1729 = vst [vmem:[%s172 + $0x7c] sm:$0xf] %v1575
      %1730 = vst [vmem:[%s172 + $0x80] sm:$0xf] %v1576
      %1731 = vst [vmem:[%s172 + $0x84] sm:$0xf] %v1577
      %1732 = vst [vmem:[%s172 + $0x88] sm:$0xf] %v1578
      %1733 = vst [vmem:[%s172 + $0x8c] sm:$0xf] %v1579
      %1734 = vst [vmem:[%s172 + $0x90] sm:$0xf] %v1580
      %1735 = vst [vmem:[%s172 + $0x94] sm:$0xf] %v1581
      %1736 = vst [vmem:[%s172 + $0x98] sm:$0xf] %v1582
      %1737 = vst [vmem:[%s172 + $0x9c] sm:$0xf] %v1583
      %1738 = vst [vmem:[%s172 + $0xa0] sm:$0xf] %v1584
      %1739 = vst [vmem:[%s172 + $0xa4] sm:$0xf] %v1585
      %1740 = vst [vmem:[%s172 + $0xa8] sm:$0xf] %v1586
      %1741 = vst [vmem:[%s172 + $0xac] sm:$0xf] %v1587
      %1742 = vst [vmem:[%s172 + $0xb0] sm:$0xf] %v1588
      %1743 = vst [vmem:[%s172 + $0xb4] sm:$0xf] %v1589
      %1744 = vst [vmem:[%s172 + $0xb8] sm:$0xf] %v1590
      %1745 = vst [vmem:[%s172 + $0xbc] sm:$0xf] %v1591
      %1746 = vst [vmem:[%s172 + $0xc0] sm:$0xf] %v1592
      %1747 = vst [vmem:[%s172 + $0xc4] sm:$0xf] %v1593
      %1748 = vst [vmem:[%s172 + $0xc8] sm:$0xf] %v1594
      %1749 = vst [vmem:[%s172 + $0xcc] sm:$0xf] %v1595
      %1750 = vst [vmem:[%s172 + $0xd0] sm:$0xf] %v1596
      %1751 = vst [vmem:[%s172 + $0xd4] sm:$0xf] %v1597
      %1752 = vst [vmem:[%s172 + $0xd8] sm:$0xf] %v1598
      %1753 = vst [vmem:[%s172 + $0xdc] sm:$0xf] %v1599
      %1754 = vst [vmem:[%s172 + $0xe0] sm:$0xf] %v1600
      %1755 = vst [vmem:[%s172 + $0xe4] sm:$0xf] %v1601
      %1756 = vst [vmem:[%s172 + $0xe8] sm:$0xf] %v1602
      %1757 = vst [vmem:[%s172 + $0xec] sm:$0xf] %v1603
      %1758 = vst [vmem:[%s172 + $0xf0] sm:$0xf] %v1604
      %1759 = vst [vmem:[%s172 + $0xf4] sm:$0xf] %v1605
      %1760 = vst [vmem:[%s172 + $0xf8] sm:$0xf] %v1606
      %1761 = vst [vmem:[%s172 + $0xfc] sm:$0xf] %v1607
      %1762 = vst [vmem:[%s172 + $0x100] sm:$0xf] %v1608
      %1763 = vst [vmem:[%s172 + $0x104] sm:$0xf] %v1609
      %1764 = vst [vmem:[%s172 + $0x108] sm:$0xf] %v1610
      %1765 = vst [vmem:[%s172 + $0x10c] sm:$0xf] %v1611
      %1766 = vst [vmem:[%s172 + $0x110] sm:$0xf] %v1612
      %1767 = vst [vmem:[%s172 + $0x114] sm:$0xf] %v1613
      %1768 = vst [vmem:[%s172 + $0x118] sm:$0xf] %v1614
      %1769 = vst [vmem:[%s172 + $0x11c] sm:$0xf] %v1615
      %1770 = vst [vmem:[%s172 + $0x120] sm:$0xf] %v1616
      %1771 = vst [vmem:[%s172 + $0x124] sm:$0xf] %v1617
      %1772 = vst [vmem:[%s172 + $0x128] sm:$0xf] %v1618
      %1773 = vst [vmem:[%s172 + $0x12c] sm:$0xf] %v1619
      %1774 = vst [vmem:[%s172 + $0x130] sm:$0xf] %v1620
      %1775 = vst [vmem:[%s172 + $0x134] sm:$0xf] %v1621
      %1776 = vst [vmem:[%s172 + $0x138] sm:$0xf] %v1622
      %1777 = vst [vmem:[%s172 + $0x13c] sm:$0xf] %v1623
      %1778 = vst [vmem:[%s172 + $0x140] sm:$0xf] %v1624
      %1779 = vst [vmem:[%s172 + $0x144] sm:$0xf] %v1625
      %1780 = vst [vmem:[%s172 + $0x148] sm:$0xf] %v1626
      %1781 = vst [vmem:[%s172 + $0x14c] sm:$0xf] %v1627
      %1782 = vst [vmem:[%s172 + $0x150] sm:$0xf] %v1628
      %1783 = vst [vmem:[%s172 + $0x154] sm:$0xf] %v1629
      %1784 = vst [vmem:[%s172 + $0x158] sm:$0xf] %v1630
      %1785 = vst [vmem:[%s172 + $0x15c] sm:$0xf] %v1631
      %1786 = vst [vmem:[%s172 + $0x160] sm:$0xf] %v1632
      %1787 = vst [vmem:[%s172 + $0x164] sm:$0xf] %v1633
      %1788 = vst [vmem:[%s172 + $0x168] sm:$0xf] %v1634
      %1789 = vst [vmem:[%s172 + $0x16c] sm:$0xf] %v1635
      %1790 = vst [vmem:[%s172 + $0x170] sm:$0xf] %v1636
      %1791 = vst [vmem:[%s172 + $0x174] sm:$0xf] %v1637
      %1792 = vst [vmem:[%s172 + $0x178] sm:$0xf] %v1638
      %1793 = vst [vmem:[%s172 + $0x17c] sm:$0xf] %v1639
      %1794 = vst [vmem:[%s172 + $0x180] sm:$0xf] %v1640
      %1795 = vst [vmem:[%s172 + $0x184] sm:$0xf] %v1641
      %1796 = vst [vmem:[%s172 + $0x188] sm:$0xf] %v1642
      %1797 = vst [vmem:[%s172 + $0x18c] sm:$0xf] %v1643
      %1798 = vst [vmem:[%s172 + $0x190] sm:$0xf] %v1644
      %1799 = vst [vmem:[%s172 + $0x194] sm:$0xf] %v1645
      %1800 = vst [vmem:[%s172 + $0x198] sm:$0xf] %v1646
      %1801 = vst [vmem:[%s172 + $0x19c] sm:$0xf] %v1647
      %1802 = vst [vmem:[%s172 + $0x1a0] sm:$0xf] %v1648
      %1803 = vst [vmem:[%s172 + $0x1a4] sm:$0xf] %v1649
      %1804 = vst [vmem:[%s172 + $0x1a8] sm:$0xf] %v1650
      %1805 = vst [vmem:[%s172 + $0x1ac] sm:$0xf] %v1651
      %1806 = vst [vmem:[%s172 + $0x1b0] sm:$0xf] %v1652
      %1807 = vst [vmem:[%s172 + $0x1b4] sm:$0xf] %v1653
      %1808 = vst [vmem:[%s172 + $0x1b8] sm:$0xf] %v1654
      %1809 = vst [vmem:[%s172 + $0x1bc] sm:$0xf] %v1655
      %1810 = vst [vmem:[%s172 + $0x1c0] sm:$0xf] %v1656
      %1811 = vst [vmem:[%s172 + $0x1c4] sm:$0xf] %v1657
      %1812 = vst [vmem:[%s172 + $0x1c8] sm:$0xf] %v1658
      %1813 = vst [vmem:[%s172 + $0x1cc] sm:$0xf] %v1659
      %1814 = vst [vmem:[%s172 + $0x1d0] sm:$0xf] %v1660
      %1815 = vst [vmem:[%s172 + $0x1d4] sm:$0xf] %v1661
      %1816 = vst [vmem:[%s172 + $0x1d8] sm:$0xf] %v1662
      %1817 = vst [vmem:[%s172 + $0x1dc] sm:$0xf] %v1663
      %1818 = vst [vmem:[%s172 + $0x1e0] sm:$0xf] %v1664
      %1819 = vst [vmem:[%s172 + $0x1e4] sm:$0xf] %v1665
      %1820 = vst [vmem:[%s172 + $0x1e8] sm:$0xf] %v1666
      %1821 = vst [vmem:[%s172 + $0x1ec] sm:$0xf] %v1667
      %1822 = vst [vmem:[%s172 + $0x1f0] sm:$0xf] %v1668
      %1823 = vst [vmem:[%s172 + $0x1f4] sm:$0xf] %v1669
      %1824 = vst [vmem:[%s172 + $0x1f8] sm:$0xf] %v1670
      %1825 = vst [vmem:[%s172 + $0x1fc] sm:$0xf] %v1671
      %1826 = vst [vmem:[%s172 + $0x200] sm:$0xf] %v1672
      %1827 = vst [vmem:[%s172 + $0x204] sm:$0xf] %v1673
      %1828 = vst [vmem:[%s172 + $0x208] sm:$0xf] %v1674
      %1829 = vst [vmem:[%s172 + $0x20c] sm:$0xf] %v1675
      %1830 = vst [vmem:[%s172 + $0x210] sm:$0xf] %v1676
      %1831 = vst [vmem:[%s172 + $0x214] sm:$0xf] %v1677
      %1832 = vst [vmem:[%s172 + $0x218] sm:$0xf] %v1678
      %1833 = vst [vmem:[%s172 + $0x21c] sm:$0xf] %v1679
      %1834 = vst [vmem:[%s172 + $0x220] sm:$0xf] %v1680
      %1835 = vst [vmem:[%s172 + $0x224] sm:$0xf] %v1681
      %1836 = vst [vmem:[%s172 + $0x228] sm:$0xf] %v1682
      %1837 = vst [vmem:[%s172 + $0x22c] sm:$0xf] %v1683
      %1838 = vst [vmem:[%s172 + $0x230] sm:$0xf] %v1684
      %1839 = vst [vmem:[%s172 + $0x234] sm:$0xf] %v1685
      %1840 = vst [vmem:[%s172 + $0x238] sm:$0xf] %v1686
      %1841 = vst [vmem:[%s172 + $0x23c] sm:$0xf] %v1687
      %1842 = vst [vmem:[%s172 + $0x240] sm:$0xf] %v1688
      %1843 = vst [vmem:[%s172 + $0x244] sm:$0xf] %v1689
      %1844 = vst [vmem:[%s172 + $0x248] sm:$0xf] %v1690
      %1845 = vst [vmem:[%s172 + $0x24c] sm:$0xf] %v1691
      %1846 = vst [vmem:[%s172 + $0x250] sm:$0xf] %v1692
      %1847 = vst [vmem:[%s172 + $0x254] sm:$0xf] %v1693
      %1848 = vst [vmem:[%s172 + $0x258] sm:$0xf] %v1694
      %1849 = vst [vmem:[%s172 + $0x25c] sm:$0xf] %v1695
      %1850 = vst [vmem:[%s172 + $0x260] sm:$0xf] %v1696
      %1851 = vst [vmem:[%s172 + $0x264] sm:$0xf] %v1697
      %s1852 = smul.u32 154, %s14
      %p1853 = scmp.lt.s32.totalorder %s1852, 769
      %s1854 = scalar_select %p1853, %s1852, 769
      %s1855 = smul.addr %s1854, 4
      %s1856 = scalar_lea.vmem %s3, %s1855
      // Predicated region
      $region33: #{cnn_forward.5} parent=31 // pred_check
        %p1857 = pneg %p100
      $region34: #{cnn_forward.5} parent=31 // pred_check_branch
        %1859 = sbr.rel (%p1857) target = $region36
      $region35: #{cnn_forward.5} parent=31 // pred_region
        %s1860 = smul.u32 154, %s14
      $region36: #{cnn_forward.5} parent=31 // pred_fallthru
        _
    $region32: #{cnn_forward.5} parent=5 // pred_fallthru
      _
    %p1861 = scmp.le.s32.totalorder 2, %s9
    // Predicated region
    $region37: #{cnn_forward.5} parent=5 // pred_check
      %p1862 = pneg %p1861
    $region38: #{cnn_forward.5} parent=5 // pred_check_branch
      %1864 = sbr.rel (%p1862) target = $region40
    $region39: #{cnn_forward.5} parent=5 // pred_region
      %s1865 = ssub.s32 %s9, 2
      // Predicated region
      $region41: #{cnn_forward.5} parent=39 // pred_check
        %p1866 = pneg %p106
      $region42: #{cnn_forward.5} parent=39 // pred_check_branch
        %1868 = sbr.rel (%p1866) target = $region44
      $region43: #{cnn_forward.5} parent=39 // pred_region
        %s1869 = smul.u32 154, %s15
        %p1870 = scmp.lt.s32.totalorder %s1869, 769
        %s1871 = scalar_select %p1870, %s1869, 769
        %s1872 = smul.addr %s1871, 4
        %s1873 = scalar_lea.vmem %s3, %s1872
      $region44: #{cnn_forward.5} parent=39 // pred_fallthru
        _
    $region40: #{cnn_forward.5} parent=5 // pred_fallthru
      _
  $region6: #{cnn_forward.5} parent=0 // loop_footer
    %s13 = sadd.s32 1, %s9
  $region7: #{cnn_forward.5} parent=0 // loop_footer_branch
    %8 = sbr.rel target = $region3
  $region8: #{cnn_forward.5} parent=0 // loop_exit
    _

// kernel: cnn_forward.6
$region0: #{cnn_forward.6}
  #allocation0 [shape = 'u32[]', space=smem, size = 0x4, offset = 0x4, fixed_abs, tag = 'smem constant byte address 0x4 - core index']
  #allocation1 [shape = 'u32[72,128]{1,0:T(1,128)}', space=vmem, size = 0x9000, scoped, tag = 'internal scratch']
  %s0 = inlined_call_operand.vmem [shape: bf16[2,28,2,28,256], index: 0, kind: input, shape index: {}]
  %s1 = inlined_call_operand.vmem [shape: bf16[2,28,28,128], index: 1, kind: output, shape index: {}]
  %s2 = sld [smem:[#allocation0]]
  $region37: #{cnn_forward.6} parent=0
    _
  %s4 = ssub.s32 1, %s2
  %s5 = scalar_select 0, %s4, %s2
  loop: start=0, step=1, limit=4
  $region2: #{cnn_forward.6} parent=0 // loop_pre_header
    _
  $region3: #{cnn_forward.6} parent=0 // loop_header
    %s7 = sphi 0, %s11
    %p8 = scmp.ge.s32.totalorder %s7, 4
    %s17 = sphi 0, %s19
    %s20 = sphi 0, %s17
    %s21 = sphi 0, %s20
    %s37 = sphi 0, %s21
    %s43 = sphi 0, %s45
    %s46 = sphi 0, %s43
    %s47 = sphi 0, %s46
    %s63 = sphi 0, %s47
  $region4: #{cnn_forward.6} parent=0 // loop_header_branch
    %10 = sbr.rel (%p8) target = $region8
  $region5: #{cnn_forward.6} parent=0 // loop_body
    %s12 = ssub.s32 %s7, 1
    %s13 = ssub.s32 %s7, 2
    %s14 = sadd.s32 %s7, 1
    %s15 = ssub.s32 %s7, %s14
    %p16 = scmp.eq.s32.totalorder %s15, 0
    %s18 = sadd.s32 %s17, 1
    %s19 = scalar_select %p16, %s17, %s18
    %p22 = pneg %p16
    %p23 = scmp.eq.s32.totalorder %s7, 1
    %p24 = por %p22, %p23
    %p25 = scmp.ne.s32.totalorder %s17, %s20
    %p26 = scmp.eq.s32.totalorder %s7, 0
    %p27 = por %p25, %p26
    %p28 = scmp.ne.s32.totalorder %s17, %s20
    %p29 = scmp.eq.s32.totalorder %s12, 1
    %p30 = por %p28, %p29
    %p31 = scmp.ne.s32.totalorder %s20, %s21
    %p32 = scmp.eq.s32.totalorder %s12, 0
    %p33 = por %p31, %p32
    %p34 = scmp.ne.s32.totalorder %s20, %s21
    %p35 = scmp.eq.s32.totalorder %s13, 1
    %p36 = por %p34, %p35
    %p38 = scmp.ne.s32.totalorder %s21, %s37
    %p39 = scmp.eq.s32.totalorder %s13, 0
    %p40 = por %p38, %p39
    %s41 = ssub.s32 %s7, %s14
    %p42 = scmp.eq.s32.totalorder %s41, 0
    %s44 = sadd.s32 %s43, 1
    %s45 = scalar_select %p42, %s43, %s44
    %p48 = pneg %p42
    %p49 = scmp.eq.s32.totalorder %s7, 1
    %p50 = por %p48, %p49
    %p51 = scmp.ne.s32.totalorder %s43, %s46
    %p52 = scmp.eq.s32.totalorder %s7, 0
    %p53 = por %p51, %p52
    %p54 = scmp.ne.s32.totalorder %s43, %s46
    %p55 = scmp.eq.s32.totalorder %s12, 1
    %p56 = por %p54, %p55
    %p57 = scmp.ne.s32.totalorder %s46, %s47
    %p58 = scmp.eq.s32.totalorder %s12, 0
    %p59 = por %p57, %p58
    %p60 = scmp.ne.s32.totalorder %s46, %s47
    %p61 = scmp.eq.s32.totalorder %s13, 1
    %p62 = por %p60, %p61
    %p64 = scmp.ne.s32.totalorder %s47, %s63
    %p65 = scmp.eq.s32.totalorder %s13, 0
    %p66 = por %p64, %p65
    %p67 = scmp.le.s32.totalorder 1, %s7
    %p68 = scmp.lt.s32.totalorder %s7, 3
    %p69 = pnand %p67, %p68
    %p70 = pneg %p69
    // Predicated region
    $region9: #{cnn_forward.6} parent=5 // pred_check
      _
    $region10: #{cnn_forward.6} parent=5 // pred_check_branch
      %72 = sbr.rel (%p69) target = $region12
    $region11: #{cnn_forward.6} parent=5 // pred_region
      %s73 = ssub.s32 %s7, 1
    $region12: #{cnn_forward.6} parent=5 // pred_fallthru
      _
    %p74 = scmp.lt.s32.totalorder %s7, 2
    // Predicated region
    $region13: #{cnn_forward.6} parent=5 // pred_check
      %p75 = pneg %p74
    $region14: #{cnn_forward.6} parent=5 // pred_check_branch
      %77 = sbr.rel (%p75) target = $region16
    $region15: #{cnn_forward.6} parent=5 // pred_region
      // Predicated region
      $region17: #{cnn_forward.6} parent=15 // pred_check
        %p78 = pneg %p27
      $region18: #{cnn_forward.6} parent=15 // pred_check_branch
        %80 = sbr.rel (%p78) target = $region20
      $region19: #{cnn_forward.6} parent=15 // pred_region
        %p81 = scmp.lt.s32.totalorder %s7, 1
        %s82 = scalar_select %p81, %s7, 1
        %s83 = smul.addr %s82, 448
        %s84 = smul.addr %s83, 4
        %s85 = scalar_lea.vmem %s0, %s84
      $region20: #{cnn_forward.6} parent=15 // pred_fallthru
        _
    $region16: #{cnn_forward.6} parent=5 // pred_fallthru
      _
    %p86 = scmp.le.s32.totalorder 1, %s7
    %p87 = scmp.lt.s32.totalorder %s7, 3
    %p88 = pnand %p86, %p87
    %p89 = pneg %p88
    // Predicated region
    $region21: #{cnn_forward.6} parent=5 // pred_check
      _
    $region22: #{cnn_forward.6} parent=5 // pred_check_branch
      %91 = sbr.rel (%p88) target = $region24
    $region23: #{cnn_forward.6} parent=5 // pred_region
      %s92 = ssub.s32 %s7, 1
      %p93 = scmp.lt.s32.totalorder %s12, 1
      %s94 = scalar_select %p93, %s12, 1
      %s95 = smul.addr %s94, 448
      %s96 = smul.addr %s95, 4
      %s97 = scalar_lea.vmem %s0, %s96
      %p98 = pneg %p33
      %p99 = pneg %p30
      %p100 = pneg %p59
      %p101 = pneg %p56
      %p102 = scmp.lt.s32.totalorder %s12, 1
      %s103 = scalar_select %p102, %s12, 1
      %s104 = smul.addr %s103, 112
      %s105 = smul.addr %s104, 4
      %s106 = scalar_lea.vmem %s1, %s105
      %p107 = scmp.lt.s32.totalorder %s12, 1
      %s108 = scalar_select %p107, %s12, 1
      %s109 = smul.addr %s108, 448
      %s110 = smul.addr %s109, 4
      %s111 = scalar_lea.vmem %s0, %s110
      %p112 = scmp.lt.s32.totalorder %s12, 1
      %s113 = scalar_select %p112, %s12, 1
      %s114 = smul.addr %s113, 112
      %s115 = smul.addr %s114, 4
      %s116 = scalar_lea.vmem %s1, %s115
      %v117 = vld [vmem:[%s111] sm:$0xff]
      %v118 = vld [vmem:[%s111 + $0x8] sm:$0xff]
      %v119 = vld [vmem:[%s111 + $0x10] sm:$0xff]
      %v120 = vld [vmem:[%s111 + $0x18] sm:$0x33]
      %v121 = vld [vmem:[%s111 + $0x20] sm:$0xff]
      %v122 = vld [vmem:[%s111 + $0x28] sm:$0xff]
      %v123 = vld [vmem:[%s111 + $0x30] sm:$0xff]
      %v124 = vld [vmem:[%s111 + $0x38] sm:$0x33]
      %v125 = vld [vmem:[%s111 + $0x40] sm:$0xff]
      %v126 = vld [vmem:[%s111 + $0x48] sm:$0xff]
      %v127 = vld [vmem:[%s111 + $0x50] sm:$0xff]
      %v128 = vld [vmem:[%s111 + $0x58] sm:$0x33]
      %v129 = vld [vmem:[%s111 + $0x60] sm:$0xff]
      %v130 = vld [vmem:[%s111 + $0x68] sm:$0xff]
      %v131 = vld [vmem:[%s111 + $0x70] sm:$0xff]
      %v132 = vld [vmem:[%s111 + $0x78] sm:$0x33]
      %v133 = vld [vmem:[%s111 + $0x80] sm:$0xff]
      %v134 = vld [vmem:[%s111 + $0x88] sm:$0xff]
      %v135 = vld [vmem:[%s111 + $0x90] sm:$0xff]
      %v136 = vld [vmem:[%s111 + $0x98] sm:$0x33]
      %v137 = vld [vmem:[%s111 + $0xa0] sm:$0xff]
      %v138 = vld [vmem:[%s111 + $0xa8] sm:$0xff]
      %v139 = vld [vmem:[%s111 + $0xb0] sm:$0xff]
      %v140 = vld [vmem:[%s111 + $0xb8] sm:$0x33]
      %v141 = vld [vmem:[%s111 + $0xc0] sm:$0xff]
      %v142 = vld [vmem:[%s111 + $0xc8] sm:$0xff]
      %v143 = vld [vmem:[%s111 + $0xd0] sm:$0xff]
      %v144 = vld [vmem:[%s111 + $0xd8] sm:$0x33]
      %v145 = vld [vmem:[%s111 + $0xe0] sm:$0xff]
      %v146 = vld [vmem:[%s111 + $0xe8] sm:$0xff]
      %v147 = vld [vmem:[%s111 + $0xf0] sm:$0xff]
      %v148 = vld [vmem:[%s111 + $0xf8] sm:$0x33]
      %v149 = vld [vmem:[%s111 + $0x100] sm:$0xff]
      %v150 = vld [vmem:[%s111 + $0x108] sm:$0xff]
      %v151 = vld [vmem:[%s111 + $0x110] sm:$0xff]
      %v152 = vld [vmem:[%s111 + $0x118] sm:$0x33]
      %v153 = vld [vmem:[%s111 + $0x120] sm:$0xff]
      %v154 = vld [vmem:[%s111 + $0x128] sm:$0xff]
      %v155 = vld [vmem:[%s111 + $0x130] sm:$0xff]
      %v156 = vld [vmem:[%s111 + $0x138] sm:$0x33]
      %v157 = vld [vmem:[%s111 + $0x140] sm:$0xff]
      %v158 = vld [vmem:[%s111 + $0x148] sm:$0xff]
      %v159 = vld [vmem:[%s111 + $0x150] sm:$0xff]
      %v160 = vld [vmem:[%s111 + $0x158] sm:$0x33]
      %v161 = vld [vmem:[%s111 + $0x160] sm:$0xff]
      %v162 = vld [vmem:[%s111 + $0x168] sm:$0xff]
      %v163 = vld [vmem:[%s111 + $0x170] sm:$0xff]
      %v164 = vld [vmem:[%s111 + $0x178] sm:$0x33]
      %v165 = vld [vmem:[%s111 + $0x180] sm:$0xff]
      %v166 = vld [vmem:[%s111 + $0x188] sm:$0xff]
      %v167 = vld [vmem:[%s111 + $0x190] sm:$0xff]
      %v168 = vld [vmem:[%s111 + $0x198] sm:$0x33]
      %v169 = vld [vmem:[%s111 + $0x1a0] sm:$0xff]
      %v170 = vld [vmem:[%s111 + $0x1a8] sm:$0xff]
      %v171 = vld [vmem:[%s111 + $0x1b0] sm:$0xff]
      %v172 = vld [vmem:[%s111 + $0x1b8] sm:$0x33]
      %v173 = vld [vmem:[%s111 + $0x1c0] sm:$0xff]
      %v174 = vld [vmem:[%s111 + $0x1c8] sm:$0xff]
      %v175 = vld [vmem:[%s111 + $0x1d0] sm:$0xff]
      %v176 = vld [vmem:[%s111 + $0x1d8] sm:$0x33]
      %v177 = vld [vmem:[%s111 + $0x1e0] sm:$0xff]
      %v178 = vld [vmem:[%s111 + $0x1e8] sm:$0xff]
      %v179 = vld [vmem:[%s111 + $0x1f0] sm:$0xff]
      %v180 = vld [vmem:[%s111 + $0x1f8] sm:$0x33]
      %v181 = vld [vmem:[%s111 + $0x200] sm:$0xff]
      %v182 = vld [vmem:[%s111 + $0x208] sm:$0xff]
      %v183 = vld [vmem:[%s111 + $0x210] sm:$0xff]
      %v184 = vld [vmem:[%s111 + $0x218] sm:$0x33]
      %v185 = vld [vmem:[%s111 + $0x220] sm:$0xff]
      %v186 = vld [vmem:[%s111 + $0x228] sm:$0xff]
      %v187 = vld [vmem:[%s111 + $0x230] sm:$0xff]
      %v188 = vld [vmem:[%s111 + $0x238] sm:$0x33]
      %v189 = vld [vmem:[%s111 + $0x240] sm:$0xff]
      %v190 = vld [vmem:[%s111 + $0x248] sm:$0xff]
      %v191 = vld [vmem:[%s111 + $0x250] sm:$0xff]
      %v192 = vld [vmem:[%s111 + $0x258] sm:$0x33]
      %v193 = vld [vmem:[%s111 + $0x260] sm:$0xff]
      %v194 = vld [vmem:[%s111 + $0x268] sm:$0xff]
      %v195 = vld [vmem:[%s111 + $0x270] sm:$0xff]
      %v196 = vld [vmem:[%s111 + $0x278] sm:$0x33]
      %v197 = vld [vmem:[%s111 + $0x280] sm:$0xff]
      %v198 = vld [vmem:[%s111 + $0x288] sm:$0xff]
      %v199 = vld [vmem:[%s111 + $0x290] sm:$0xff]
      %v200 = vld [vmem:[%s111 + $0x298] sm:$0x33]
      %v201 = vld [vmem:[%s111 + $0x2a0] sm:$0xff]
      %v202 = vld [vmem:[%s111 + $0x2a8] sm:$0xff]
      %v203 = vld [vmem:[%s111 + $0x2b0] sm:$0xff]
      %v204 = vld [vmem:[%s111 + $0x2b8] sm:$0x33]
      %v205 = vld [vmem:[%s111 + $0x2c0] sm:$0xff]
      %v206 = vld [vmem:[%s111 + $0x2c8] sm:$0xff]
      %v207 = vld [vmem:[%s111 + $0x2d0] sm:$0xff]
      %v208 = vld [vmem:[%s111 + $0x2d8] sm:$0x33]
      %v209 = vld [vmem:[%s111 + $0x2e0] sm:$0xff]
      %v210 = vld [vmem:[%s111 + $0x2e8] sm:$0xff]
      %v211 = vld [vmem:[%s111 + $0x2f0] sm:$0xff]
      %v212 = vld [vmem:[%s111 + $0x2f8] sm:$0x33]
      %v213 = vld [vmem:[%s111 + $0x300] sm:$0xff]
      %v214 = vld [vmem:[%s111 + $0x308] sm:$0xff]
      %v215 = vld [vmem:[%s111 + $0x310] sm:$0xff]
      %v216 = vld [vmem:[%s111 + $0x318] sm:$0x33]
      %v217 = vld [vmem:[%s111 + $0x320] sm:$0xff]
      %v218 = vld [vmem:[%s111 + $0x328] sm:$0xff]
      %v219 = vld [vmem:[%s111 + $0x330] sm:$0xff]
      %v220 = vld [vmem:[%s111 + $0x338] sm:$0x33]
      %v221 = vld [vmem:[%s111 + $0x340] sm:$0xff]
      %v222 = vld [vmem:[%s111 + $0x348] sm:$0xff]
      %v223 = vld [vmem:[%s111 + $0x350] sm:$0xff]
      %v224 = vld [vmem:[%s111 + $0x358] sm:$0x33]
      %v225 = vld [vmem:[%s111 + $0x360] sm:$0xff]
      %v226 = vld [vmem:[%s111 + $0x368] sm:$0xff]
      %v227 = vld [vmem:[%s111 + $0x370] sm:$0xff]
      %v228 = vld [vmem:[%s111 + $0x378] sm:$0x33]
      %v229 = vld [vmem:[%s111 + $0x380] sm:$0xff]
      %v230 = vld [vmem:[%s111 + $0x388] sm:$0xff]
      %v231 = vld [vmem:[%s111 + $0x390] sm:$0xff]
      %v232 = vld [vmem:[%s111 + $0x398] sm:$0x33]
      %v233 = vld [vmem:[%s111 + $0x3a0] sm:$0xff]
      %v234 = vld [vmem:[%s111 + $0x3a8] sm:$0xff]
      %v235 = vld [vmem:[%s111 + $0x3b0] sm:$0xff]
      %v236 = vld [vmem:[%s111 + $0x3b8] sm:$0x33]
      %v237 = vld [vmem:[%s111 + $0x3c0] sm:$0xff]
      %v238 = vld [vmem:[%s111 + $0x3c8] sm:$0xff]
      %v239 = vld [vmem:[%s111 + $0x3d0] sm:$0xff]
      %v240 = vld [vmem:[%s111 + $0x3d8] sm:$0x33]
      %v241 = vld [vmem:[%s111 + $0x3e0] sm:$0xff]
      %v242 = vld [vmem:[%s111 + $0x3e8] sm:$0xff]
      %v243 = vld [vmem:[%s111 + $0x3f0] sm:$0xff]
      %v244 = vld [vmem:[%s111 + $0x3f8] sm:$0x33]
      %v245 = vld [vmem:[%s111 + $0x400] sm:$0xff]
      %v246 = vld [vmem:[%s111 + $0x408] sm:$0xff]
      %v247 = vld [vmem:[%s111 + $0x410] sm:$0xff]
      %v248 = vld [vmem:[%s111 + $0x418] sm:$0x33]
      %v249 = vld [vmem:[%s111 + $0x420] sm:$0xff]
      %v250 = vld [vmem:[%s111 + $0x428] sm:$0xff]
      %v251 = vld [vmem:[%s111 + $0x430] sm:$0xff]
      %v252 = vld [vmem:[%s111 + $0x438] sm:$0x33]
      %v253 = vld [vmem:[%s111 + $0x440] sm:$0xff]
      %v254 = vld [vmem:[%s111 + $0x448] sm:$0xff]
      %v255 = vld [vmem:[%s111 + $0x450] sm:$0xff]
      %v256 = vld [vmem:[%s111 + $0x458] sm:$0x33]
      %v257 = vld [vmem:[%s111 + $0x460] sm:$0xff]
      %v258 = vld [vmem:[%s111 + $0x468] sm:$0xff]
      %v259 = vld [vmem:[%s111 + $0x470] sm:$0xff]
      %v260 = vld [vmem:[%s111 + $0x478] sm:$0x33]
      %v261 = vld [vmem:[%s111 + $0x480] sm:$0xff]
      %v262 = vld [vmem:[%s111 + $0x488] sm:$0xff]
      %v263 = vld [vmem:[%s111 + $0x490] sm:$0xff]
      %v264 = vld [vmem:[%s111 + $0x498] sm:$0x33]
      %v265 = vld [vmem:[%s111 + $0x4a0] sm:$0xff]
      %v266 = vld [vmem:[%s111 + $0x4a8] sm:$0xff]
      %v267 = vld [vmem:[%s111 + $0x4b0] sm:$0xff]
      %v268 = vld [vmem:[%s111 + $0x4b8] sm:$0x33]
      %v269 = vld [vmem:[%s111 + $0x4c0] sm:$0xff]
      %v270 = vld [vmem:[%s111 + $0x4c8] sm:$0xff]
      %v271 = vld [vmem:[%s111 + $0x4d0] sm:$0xff]
      %v272 = vld [vmem:[%s111 + $0x4d8] sm:$0x33]
      %v273 = vld [vmem:[%s111 + $0x4e0] sm:$0xff]
      %v274 = vld [vmem:[%s111 + $0x4e8] sm:$0xff]
      %v275 = vld [vmem:[%s111 + $0x4f0] sm:$0xff]
      %v276 = vld [vmem:[%s111 + $0x4f8] sm:$0x33]
      %v277 = vld [vmem:[%s111 + $0x500] sm:$0xff]
      %v278 = vld [vmem:[%s111 + $0x508] sm:$0xff]
      %v279 = vld [vmem:[%s111 + $0x510] sm:$0xff]
      %v280 = vld [vmem:[%s111 + $0x518] sm:$0x33]
      %v281 = vld [vmem:[%s111 + $0x520] sm:$0xff]
      %v282 = vld [vmem:[%s111 + $0x528] sm:$0xff]
      %v283 = vld [vmem:[%s111 + $0x530] sm:$0xff]
      %v284 = vld [vmem:[%s111 + $0x538] sm:$0x33]
      %v285 = vld [vmem:[%s111 + $0x540] sm:$0xff]
      %v286 = vld [vmem:[%s111 + $0x548] sm:$0xff]
      %v287 = vld [vmem:[%s111 + $0x550] sm:$0xff]
      %v288 = vld [vmem:[%s111 + $0x558] sm:$0x33]
      %v289 = vld [vmem:[%s111 + $0x560] sm:$0xff]
      %v290 = vld [vmem:[%s111 + $0x568] sm:$0xff]
      %v291 = vld [vmem:[%s111 + $0x570] sm:$0xff]
      %v292 = vld [vmem:[%s111 + $0x578] sm:$0x33]
      %v293 = vld [vmem:[%s111 + $0x580] sm:$0xff]
      %v294 = vld [vmem:[%s111 + $0x588] sm:$0xff]
      %v295 = vld [vmem:[%s111 + $0x590] sm:$0xff]
      %v296 = vld [vmem:[%s111 + $0x598] sm:$0x33]
      %v297 = vld [vmem:[%s111 + $0x5a0] sm:$0xff]
      %v298 = vld [vmem:[%s111 + $0x5a8] sm:$0xff]
      %v299 = vld [vmem:[%s111 + $0x5b0] sm:$0xff]
      %v300 = vld [vmem:[%s111 + $0x5b8] sm:$0x33]
      %v301 = vld [vmem:[%s111 + $0x5c0] sm:$0xff]
      %v302 = vld [vmem:[%s111 + $0x5c8] sm:$0xff]
      %v303 = vld [vmem:[%s111 + $0x5d0] sm:$0xff]
      %v304 = vld [vmem:[%s111 + $0x5d8] sm:$0x33]
      %v305 = vld [vmem:[%s111 + $0x5e0] sm:$0xff]
      %v306 = vld [vmem:[%s111 + $0x5e8] sm:$0xff]
      %v307 = vld [vmem:[%s111 + $0x5f0] sm:$0xff]
      %v308 = vld [vmem:[%s111 + $0x5f8] sm:$0x33]
      %v309 = vld [vmem:[%s111 + $0x600] sm:$0xff]
      %v310 = vld [vmem:[%s111 + $0x608] sm:$0xff]
      %v311 = vld [vmem:[%s111 + $0x610] sm:$0xff]
      %v312 = vld [vmem:[%s111 + $0x618] sm:$0x33]
      %v313 = vld [vmem:[%s111 + $0x620] sm:$0xff]
      %v314 = vld [vmem:[%s111 + $0x628] sm:$0xff]
      %v315 = vld [vmem:[%s111 + $0x630] sm:$0xff]
      %v316 = vld [vmem:[%s111 + $0x638] sm:$0x33]
      %v317 = vld [vmem:[%s111 + $0x640] sm:$0xff]
      %v318 = vld [vmem:[%s111 + $0x648] sm:$0xff]
      %v319 = vld [vmem:[%s111 + $0x650] sm:$0xff]
      %v320 = vld [vmem:[%s111 + $0x658] sm:$0x33]
      %v321 = vld [vmem:[%s111 + $0x660] sm:$0xff]
      %v322 = vld [vmem:[%s111 + $0x668] sm:$0xff]
      %v323 = vld [vmem:[%s111 + $0x670] sm:$0xff]
      %v324 = vld [vmem:[%s111 + $0x678] sm:$0x33]
      %v325 = vld [vmem:[%s111 + $0x680] sm:$0xff]
      %v326 = vld [vmem:[%s111 + $0x688] sm:$0xff]
      %v327 = vld [vmem:[%s111 + $0x690] sm:$0xff]
      %v328 = vld [vmem:[%s111 + $0x698] sm:$0x33]
      %v329 = vld [vmem:[%s111 + $0x6a0] sm:$0xff]
      %v330 = vld [vmem:[%s111 + $0x6a8] sm:$0xff]
      %v331 = vld [vmem:[%s111 + $0x6b0] sm:$0xff]
      %v332 = vld [vmem:[%s111 + $0x6b8] sm:$0x33]
      %v333 = vld [vmem:[%s111 + $0x6c0] sm:$0xff]
      %v334 = vld [vmem:[%s111 + $0x6c8] sm:$0xff]
      %v335 = vld [vmem:[%s111 + $0x6d0] sm:$0xff]
      %v336 = vld [vmem:[%s111 + $0x6d8] sm:$0x33]
      %v337 = vld [vmem:[%s111 + $0x6e0] sm:$0xff]
      %v338 = vld [vmem:[%s111 + $0x6e8] sm:$0xff]
      %v339 = vld [vmem:[%s111 + $0x6f0] sm:$0xff]
      %v340 = vld [vmem:[%s111 + $0x6f8] sm:$0x33]
      %v341 = vunpack.c.l.bf16 %v117
      %v342 = vunpack.c.h.bf16 %v117
      %v343 = vunpack.c.l.bf16 %v118
      %v344 = vunpack.c.h.bf16 %v118
      %v345 = vunpack.c.l.bf16 %v119
      %v346 = vunpack.c.h.bf16 %v119
      %v347 = vunpack.c.l.bf16 %v120
      %v348 = vunpack.c.h.bf16 %v120
      %v349 = vunpack.c.l.bf16 %v125
      %v350 = vunpack.c.h.bf16 %v125
      %v351 = vunpack.c.l.bf16 %v126
      %v352 = vunpack.c.h.bf16 %v126
      %v353 = vunpack.c.l.bf16 %v127
      %v354 = vunpack.c.h.bf16 %v127
      %v355 = vunpack.c.l.bf16 %v128
      %v356 = vunpack.c.h.bf16 %v128
      %v357 = vunpack.c.l.bf16 %v133
      %v358 = vunpack.c.h.bf16 %v133
      %v359 = vunpack.c.l.bf16 %v134
      %v360 = vunpack.c.h.bf16 %v134
      %v361 = vunpack.c.l.bf16 %v135
      %v362 = vunpack.c.h.bf16 %v135
      %v363 = vunpack.c.l.bf16 %v136
      %v364 = vunpack.c.h.bf16 %v136
      %v365 = vunpack.c.l.bf16 %v141
      %v366 = vunpack.c.h.bf16 %v141
      %v367 = vunpack.c.l.bf16 %v142
      %v368 = vunpack.c.h.bf16 %v142
      %v369 = vunpack.c.l.bf16 %v143
      %v370 = vunpack.c.h.bf16 %v143
      %v371 = vunpack.c.l.bf16 %v144
      %v372 = vunpack.c.h.bf16 %v144
      %v373 = vunpack.c.l.bf16 %v149
      %v374 = vunpack.c.h.bf16 %v149
      %v375 = vunpack.c.l.bf16 %v150
      %v376 = vunpack.c.h.bf16 %v150
      %v377 = vunpack.c.l.bf16 %v151
      %v378 = vunpack.c.h.bf16 %v151
      %v379 = vunpack.c.l.bf16 %v152
      %v380 = vunpack.c.h.bf16 %v152
      %v381 = vunpack.c.l.bf16 %v157
      %v382 = vunpack.c.h.bf16 %v157
      %v383 = vunpack.c.l.bf16 %v158
      %v384 = vunpack.c.h.bf16 %v158
      %v385 = vunpack.c.l.bf16 %v159
      %v386 = vunpack.c.h.bf16 %v159
      %v387 = vunpack.c.l.bf16 %v160
      %v388 = vunpack.c.h.bf16 %v160
      %v389 = vunpack.c.l.bf16 %v165
      %v390 = vunpack.c.h.bf16 %v165
      %v391 = vunpack.c.l.bf16 %v166
      %v392 = vunpack.c.h.bf16 %v166
      %v393 = vunpack.c.l.bf16 %v167
      %v394 = vunpack.c.h.bf16 %v167
      %v395 = vunpack.c.l.bf16 %v168
      %v396 = vunpack.c.h.bf16 %v168
      %v397 = vunpack.c.l.bf16 %v173
      %v398 = vunpack.c.h.bf16 %v173
      %v399 = vunpack.c.l.bf16 %v174
      %v400 = vunpack.c.h.bf16 %v174
      %v401 = vunpack.c.l.bf16 %v175
      %v402 = vunpack.c.h.bf16 %v175
      %v403 = vunpack.c.l.bf16 %v176
      %v404 = vunpack.c.h.bf16 %v176
      %v405 = vunpack.c.l.bf16 %v181
      %v406 = vunpack.c.h.bf16 %v181
      %v407 = vunpack.c.l.bf16 %v182
      %v408 = vunpack.c.h.bf16 %v182
      %v409 = vunpack.c.l.bf16 %v183
      %v410 = vunpack.c.h.bf16 %v183
      %v411 = vunpack.c.l.bf16 %v184
      %v412 = vunpack.c.h.bf16 %v184
      %v413 = vunpack.c.l.bf16 %v189
      %v414 = vunpack.c.h.bf16 %v189
      %v415 = vunpack.c.l.bf16 %v190
      %v416 = vunpack.c.h.bf16 %v190
      %v417 = vunpack.c.l.bf16 %v191
      %v418 = vunpack.c.h.bf16 %v191
      %v419 = vunpack.c.l.bf16 %v192
      %v420 = vunpack.c.h.bf16 %v192
      %v421 = vunpack.c.l.bf16 %v197
      %v422 = vunpack.c.h.bf16 %v197
      %v423 = vunpack.c.l.bf16 %v198
      %v424 = vunpack.c.h.bf16 %v198
      %v425 = vunpack.c.l.bf16 %v199
      %v426 = vunpack.c.h.bf16 %v199
      %v427 = vunpack.c.l.bf16 %v200
      %v428 = vunpack.c.h.bf16 %v200
      %v429 = vunpack.c.l.bf16 %v205
      %v430 = vunpack.c.h.bf16 %v205
      %v431 = vunpack.c.l.bf16 %v206
      %v432 = vunpack.c.h.bf16 %v206
      %v433 = vunpack.c.l.bf16 %v207
      %v434 = vunpack.c.h.bf16 %v207
      %v435 = vunpack.c.l.bf16 %v208
      %v436 = vunpack.c.h.bf16 %v208
      %v437 = vunpack.c.l.bf16 %v213
      %v438 = vunpack.c.h.bf16 %v213
      %v439 = vunpack.c.l.bf16 %v214
      %v440 = vunpack.c.h.bf16 %v214
      %v441 = vunpack.c.l.bf16 %v215
      %v442 = vunpack.c.h.bf16 %v215
      %v443 = vunpack.c.l.bf16 %v216
      %v444 = vunpack.c.h.bf16 %v216
      %v445 = vunpack.c.l.bf16 %v221
      %v446 = vunpack.c.h.bf16 %v221
      %v447 = vunpack.c.l.bf16 %v222
      %v448 = vunpack.c.h.bf16 %v222
      %v449 = vunpack.c.l.bf16 %v223
      %v450 = vunpack.c.h.bf16 %v223
      %v451 = vunpack.c.l.bf16 %v224
      %v452 = vunpack.c.h.bf16 %v224
      %v453 = vunpack.c.l.bf16 %v229
      %v454 = vunpack.c.h.bf16 %v229
      %v455 = vunpack.c.l.bf16 %v230
      %v456 = vunpack.c.h.bf16 %v230
      %v457 = vunpack.c.l.bf16 %v231
      %v458 = vunpack.c.h.bf16 %v231
      %v459 = vunpack.c.l.bf16 %v232
      %v460 = vunpack.c.h.bf16 %v232
      %v461 = vunpack.c.l.bf16 %v237
      %v462 = vunpack.c.h.bf16 %v237
      %v463 = vunpack.c.l.bf16 %v238
      %v464 = vunpack.c.h.bf16 %v238
      %v465 = vunpack.c.l.bf16 %v239
      %v466 = vunpack.c.h.bf16 %v239
      %v467 = vunpack.c.l.bf16 %v240
      %v468 = vunpack.c.h.bf16 %v240
      %v469 = vunpack.c.l.bf16 %v245
      %v470 = vunpack.c.h.bf16 %v245
      %v471 = vunpack.c.l.bf16 %v246
      %v472 = vunpack.c.h.bf16 %v246
      %v473 = vunpack.c.l.bf16 %v247
      %v474 = vunpack.c.h.bf16 %v247
      %v475 = vunpack.c.l.bf16 %v248
      %v476 = vunpack.c.h.bf16 %v248
      %v477 = vunpack.c.l.bf16 %v253
      %v478 = vunpack.c.h.bf16 %v253
      %v479 = vunpack.c.l.bf16 %v254
      %v480 = vunpack.c.h.bf16 %v254
      %v481 = vunpack.c.l.bf16 %v255
      %v482 = vunpack.c.h.bf16 %v255
      %v483 = vunpack.c.l.bf16 %v256
      %v484 = vunpack.c.h.bf16 %v256
      %v485 = vunpack.c.l.bf16 %v261
      %v486 = vunpack.c.h.bf16 %v261
      %v487 = vunpack.c.l.bf16 %v262
      %v488 = vunpack.c.h.bf16 %v262
      %v489 = vunpack.c.l.bf16 %v263
      %v490 = vunpack.c.h.bf16 %v263
      %v491 = vunpack.c.l.bf16 %v264
      %v492 = vunpack.c.h.bf16 %v264
      %v493 = vunpack.c.l.bf16 %v269
      %v494 = vunpack.c.h.bf16 %v269
      %v495 = vunpack.c.l.bf16 %v270
      %v496 = vunpack.c.h.bf16 %v270
      %v497 = vunpack.c.l.bf16 %v271
      %v498 = vunpack.c.h.bf16 %v271
      %v499 = vunpack.c.l.bf16 %v272
      %v500 = vunpack.c.h.bf16 %v272
      %v501 = vunpack.c.l.bf16 %v277
      %v502 = vunpack.c.h.bf16 %v277
      %v503 = vunpack.c.l.bf16 %v278
      %v504 = vunpack.c.h.bf16 %v278
      %v505 = vunpack.c.l.bf16 %v279
      %v506 = vunpack.c.h.bf16 %v279
      %v507 = vunpack.c.l.bf16 %v280
      %v508 = vunpack.c.h.bf16 %v280
      %v509 = vunpack.c.l.bf16 %v285
      %v510 = vunpack.c.h.bf16 %v285
      %v511 = vunpack.c.l.bf16 %v286
      %v512 = vunpack.c.h.bf16 %v286
      %v513 = vunpack.c.l.bf16 %v287
      %v514 = vunpack.c.h.bf16 %v287
      %v515 = vunpack.c.l.bf16 %v288
      %v516 = vunpack.c.h.bf16 %v288
      %v517 = vunpack.c.l.bf16 %v293
      %v518 = vunpack.c.h.bf16 %v293
      %v519 = vunpack.c.l.bf16 %v294
      %v520 = vunpack.c.h.bf16 %v294
      %v521 = vunpack.c.l.bf16 %v295
      %v522 = vunpack.c.h.bf16 %v295
      %v523 = vunpack.c.l.bf16 %v296
      %v524 = vunpack.c.h.bf16 %v296
      %v525 = vunpack.c.l.bf16 %v301
      %v526 = vunpack.c.h.bf16 %v301
      %v527 = vunpack.c.l.bf16 %v302
      %v528 = vunpack.c.h.bf16 %v302
      %v529 = vunpack.c.l.bf16 %v303
      %v530 = vunpack.c.h.bf16 %v303
      %v531 = vunpack.c.l.bf16 %v304
      %v532 = vunpack.c.h.bf16 %v304
      %v533 = vunpack.c.l.bf16 %v309
      %v534 = vunpack.c.h.bf16 %v309
      %v535 = vunpack.c.l.bf16 %v310
      %v536 = vunpack.c.h.bf16 %v310
      %v537 = vunpack.c.l.bf16 %v311
      %v538 = vunpack.c.h.bf16 %v311
      %v539 = vunpack.c.l.bf16 %v312
      %v540 = vunpack.c.h.bf16 %v312
      %v541 = vunpack.c.l.bf16 %v317
      %v542 = vunpack.c.h.bf16 %v317
      %v543 = vunpack.c.l.bf16 %v318
      %v544 = vunpack.c.h.bf16 %v318
      %v545 = vunpack.c.l.bf16 %v319
      %v546 = vunpack.c.h.bf16 %v319
      %v547 = vunpack.c.l.bf16 %v320
      %v548 = vunpack.c.h.bf16 %v320
      %v549 = vunpack.c.l.bf16 %v325
      %v550 = vunpack.c.h.bf16 %v325
      %v551 = vunpack.c.l.bf16 %v326
      %v552 = vunpack.c.h.bf16 %v326
      %v553 = vunpack.c.l.bf16 %v327
      %v554 = vunpack.c.h.bf16 %v327
      %v555 = vunpack.c.l.bf16 %v328
      %v556 = vunpack.c.h.bf16 %v328
      %v557 = vunpack.c.l.bf16 %v333
      %v558 = vunpack.c.h.bf16 %v333
      %v559 = vunpack.c.l.bf16 %v334
      %v560 = vunpack.c.h.bf16 %v334
      %v561 = vunpack.c.l.bf16 %v335
      %v562 = vunpack.c.h.bf16 %v335
      %v563 = vunpack.c.l.bf16 %v336
      %v564 = vunpack.c.h.bf16 %v336
      %v565 = vunpack.c.l.bf16 %v121
      %v566 = vunpack.c.h.bf16 %v121
      %v567 = vunpack.c.l.bf16 %v122
      %v568 = vunpack.c.h.bf16 %v122
      %v569 = vunpack.c.l.bf16 %v123
      %v570 = vunpack.c.h.bf16 %v123
      %v571 = vunpack.c.l.bf16 %v124
      %v572 = vunpack.c.h.bf16 %v124
      %v573 = vunpack.c.l.bf16 %v129
      %v574 = vunpack.c.h.bf16 %v129
      %v575 = vunpack.c.l.bf16 %v130
      %v576 = vunpack.c.h.bf16 %v130
      %v577 = vunpack.c.l.bf16 %v131
      %v578 = vunpack.c.h.bf16 %v131
      %v579 = vunpack.c.l.bf16 %v132
      %v580 = vunpack.c.h.bf16 %v132
      %v581 = vunpack.c.l.bf16 %v137
      %v582 = vunpack.c.h.bf16 %v137
      %v583 = vunpack.c.l.bf16 %v138
      %v584 = vunpack.c.h.bf16 %v138
      %v585 = vunpack.c.l.bf16 %v139
      %v586 = vunpack.c.h.bf16 %v139
      %v587 = vunpack.c.l.bf16 %v140
      %v588 = vunpack.c.h.bf16 %v140
      %v589 = vunpack.c.l.bf16 %v145
      %v590 = vunpack.c.h.bf16 %v145
      %v591 = vunpack.c.l.bf16 %v146
      %v592 = vunpack.c.h.bf16 %v146
      %v593 = vunpack.c.l.bf16 %v147
      %v594 = vunpack.c.h.bf16 %v147
      %v595 = vunpack.c.l.bf16 %v148
      %v596 = vunpack.c.h.bf16 %v148
      %v597 = vunpack.c.l.bf16 %v153
      %v598 = vunpack.c.h.bf16 %v153
      %v599 = vunpack.c.l.bf16 %v154
      %v600 = vunpack.c.h.bf16 %v154
      %v601 = vunpack.c.l.bf16 %v155
      %v602 = vunpack.c.h.bf16 %v155
      %v603 = vunpack.c.l.bf16 %v156
      %v604 = vunpack.c.h.bf16 %v156
      %v605 = vunpack.c.l.bf16 %v161
      %v606 = vunpack.c.h.bf16 %v161
      %v607 = vunpack.c.l.bf16 %v162
      %v608 = vunpack.c.h.bf16 %v162
      %v609 = vunpack.c.l.bf16 %v163
      %v610 = vunpack.c.h.bf16 %v163
      %v611 = vunpack.c.l.bf16 %v164
      %v612 = vunpack.c.h.bf16 %v164
      %v613 = vunpack.c.l.bf16 %v169
      %v614 = vunpack.c.h.bf16 %v169
      %v615 = vunpack.c.l.bf16 %v170
      %v616 = vunpack.c.h.bf16 %v170
      %v617 = vunpack.c.l.bf16 %v171
      %v618 = vunpack.c.h.bf16 %v171
      %v619 = vunpack.c.l.bf16 %v172
      %v620 = vunpack.c.h.bf16 %v172
      %v621 = vunpack.c.l.bf16 %v177
      %v622 = vunpack.c.h.bf16 %v177
      %v623 = vunpack.c.l.bf16 %v178
      %v624 = vunpack.c.h.bf16 %v178
      %v625 = vunpack.c.l.bf16 %v179
      %v626 = vunpack.c.h.bf16 %v179
      %v627 = vunpack.c.l.bf16 %v180
      %v628 = vunpack.c.h.bf16 %v180
      %v629 = vunpack.c.l.bf16 %v185
      %v630 = vunpack.c.h.bf16 %v185
      %v631 = vunpack.c.l.bf16 %v186
      %v632 = vunpack.c.h.bf16 %v186
      %v633 = vunpack.c.l.bf16 %v187
      %v634 = vunpack.c.h.bf16 %v187
      %v635 = vunpack.c.l.bf16 %v188
      %v636 = vunpack.c.h.bf16 %v188
      %v637 = vunpack.c.l.bf16 %v193
      %v638 = vunpack.c.h.bf16 %v193
      %v639 = vunpack.c.l.bf16 %v194
      %v640 = vunpack.c.h.bf16 %v194
      %v641 = vunpack.c.l.bf16 %v195
      %v642 = vunpack.c.h.bf16 %v195
      %v643 = vunpack.c.l.bf16 %v196
      %v644 = vunpack.c.h.bf16 %v196
      %v645 = vunpack.c.l.bf16 %v201
      %v646 = vunpack.c.h.bf16 %v201
      %v647 = vunpack.c.l.bf16 %v202
      %v648 = vunpack.c.h.bf16 %v202
      %v649 = vunpack.c.l.bf16 %v203
      %v650 = vunpack.c.h.bf16 %v203
      %v651 = vunpack.c.l.bf16 %v204
      %v652 = vunpack.c.h.bf16 %v204
      %v653 = vunpack.c.l.bf16 %v209
      %v654 = vunpack.c.h.bf16 %v209
      %v655 = vunpack.c.l.bf16 %v210
      %v656 = vunpack.c.h.bf16 %v210
      %v657 = vunpack.c.l.bf16 %v211
      %v658 = vunpack.c.h.bf16 %v211
      %v659 = vunpack.c.l.bf16 %v212
      %v660 = vunpack.c.h.bf16 %v212
      %v661 = vunpack.c.l.bf16 %v217
      %v662 = vunpack.c.h.bf16 %v217
      %v663 = vunpack.c.l.bf16 %v218
      %v664 = vunpack.c.h.bf16 %v218
      %v665 = vunpack.c.l.bf16 %v219
      %v666 = vunpack.c.h.bf16 %v219
      %v667 = vunpack.c.l.bf16 %v220
      %v668 = vunpack.c.h.bf16 %v220
      %v669 = vunpack.c.l.bf16 %v225
      %v670 = vunpack.c.h.bf16 %v225
      %v671 = vunpack.c.l.bf16 %v226
      %v672 = vunpack.c.h.bf16 %v226
      %v673 = vunpack.c.l.bf16 %v227
      %v674 = vunpack.c.h.bf16 %v227
      %v675 = vunpack.c.l.bf16 %v228
      %v676 = vunpack.c.h.bf16 %v228
      %v677 = vunpack.c.l.bf16 %v233
      %v678 = vunpack.c.h.bf16 %v233
      %v679 = vunpack.c.l.bf16 %v234
      %v680 = vunpack.c.h.bf16 %v234
      %v681 = vunpack.c.l.bf16 %v235
      %v682 = vunpack.c.h.bf16 %v235
      %v683 = vunpack.c.l.bf16 %v236
      %v684 = vunpack.c.h.bf16 %v236
      %v685 = vunpack.c.l.bf16 %v241
      %v686 = vunpack.c.h.bf16 %v241
      %v687 = vunpack.c.l.bf16 %v242
      %v688 = vunpack.c.h.bf16 %v242
      %v689 = vunpack.c.l.bf16 %v243
      %v690 = vunpack.c.h.bf16 %v243
      %v691 = vunpack.c.l.bf16 %v244
      %v692 = vunpack.c.h.bf16 %v244
      %v693 = vunpack.c.l.bf16 %v249
      %v694 = vunpack.c.h.bf16 %v249
      %v695 = vunpack.c.l.bf16 %v250
      %v696 = vunpack.c.h.bf16 %v250
      %v697 = vunpack.c.l.bf16 %v251
      %v698 = vunpack.c.h.bf16 %v251
      %v699 = vunpack.c.l.bf16 %v252
      %v700 = vunpack.c.h.bf16 %v252
      %v701 = vunpack.c.l.bf16 %v257
      %v702 = vunpack.c.h.bf16 %v257
      %v703 = vunpack.c.l.bf16 %v258
      %v704 = vunpack.c.h.bf16 %v258
      %v705 = vunpack.c.l.bf16 %v259
      %v706 = vunpack.c.h.bf16 %v259
      %v707 = vunpack.c.l.bf16 %v260
      %v708 = vunpack.c.h.bf16 %v260
      %v709 = vunpack.c.l.bf16 %v265
      %v710 = vunpack.c.h.bf16 %v265
      %v711 = vunpack.c.l.bf16 %v266
      %v712 = vunpack.c.h.bf16 %v266
      %v713 = vunpack.c.l.bf16 %v267
      %v714 = vunpack.c.h.bf16 %v267
      %v715 = vunpack.c.l.bf16 %v268
      %v716 = vunpack.c.h.bf16 %v268
      %v717 = vunpack.c.l.bf16 %v273
      %v718 = vunpack.c.h.bf16 %v273
      %v719 = vunpack.c.l.bf16 %v274
      %v720 = vunpack.c.h.bf16 %v274
      %v721 = vunpack.c.l.bf16 %v275
      %v722 = vunpack.c.h.bf16 %v275
      %v723 = vunpack.c.l.bf16 %v276
      %v724 = vunpack.c.h.bf16 %v276
      %v725 = vunpack.c.l.bf16 %v281
      %v726 = vunpack.c.h.bf16 %v281
      %v727 = vunpack.c.l.bf16 %v282
      %v728 = vunpack.c.h.bf16 %v282
      %v729 = vunpack.c.l.bf16 %v283
      %v730 = vunpack.c.h.bf16 %v283
      %v731 = vunpack.c.l.bf16 %v284
      %v732 = vunpack.c.h.bf16 %v284
      %v733 = vunpack.c.l.bf16 %v289
      %v734 = vunpack.c.h.bf16 %v289
      %v735 = vunpack.c.l.bf16 %v290
      %v736 = vunpack.c.h.bf16 %v290
      %v737 = vunpack.c.l.bf16 %v291
      %v738 = vunpack.c.h.bf16 %v291
      %v739 = vunpack.c.l.bf16 %v292
      %v740 = vunpack.c.h.bf16 %v292
      %v741 = vunpack.c.l.bf16 %v297
      %v742 = vunpack.c.h.bf16 %v297
      %v743 = vunpack.c.l.bf16 %v298
      %v744 = vunpack.c.h.bf16 %v298
      %v745 = vunpack.c.l.bf16 %v299
      %v746 = vunpack.c.h.bf16 %v299
      %v747 = vunpack.c.l.bf16 %v300
      %v748 = vunpack.c.h.bf16 %v300
      %v749 = vunpack.c.l.bf16 %v305
      %v750 = vunpack.c.h.bf16 %v305
      %v751 = vunpack.c.l.bf16 %v306
      %v752 = vunpack.c.h.bf16 %v306
      %v753 = vunpack.c.l.bf16 %v307
      %v754 = vunpack.c.h.bf16 %v307
      %v755 = vunpack.c.l.bf16 %v308
      %v756 = vunpack.c.h.bf16 %v308
      %v757 = vunpack.c.l.bf16 %v313
      %v758 = vunpack.c.h.bf16 %v313
      %v759 = vunpack.c.l.bf16 %v314
      %v760 = vunpack.c.h.bf16 %v314
      %v761 = vunpack.c.l.bf16 %v315
      %v762 = vunpack.c.h.bf16 %v315
      %v763 = vunpack.c.l.bf16 %v316
      %v764 = vunpack.c.h.bf16 %v316
      %v765 = vunpack.c.l.bf16 %v321
      %v766 = vunpack.c.h.bf16 %v321
      %v767 = vunpack.c.l.bf16 %v322
      %v768 = vunpack.c.h.bf16 %v322
      %v769 = vunpack.c.l.bf16 %v323
      %v770 = vunpack.c.h.bf16 %v323
      %v771 = vunpack.c.l.bf16 %v324
      %v772 = vunpack.c.h.bf16 %v324
      %v773 = vunpack.c.l.bf16 %v329
      %v774 = vunpack.c.h.bf16 %v329
      %v775 = vunpack.c.l.bf16 %v330
      %v776 = vunpack.c.h.bf16 %v330
      %v777 = vunpack.c.l.bf16 %v331
      %v778 = vunpack.c.h.bf16 %v331
      %v779 = vunpack.c.l.bf16 %v332
      %v780 = vunpack.c.h.bf16 %v332
      %v781 = vunpack.c.l.bf16 %v337
      %v782 = vunpack.c.h.bf16 %v337
      %v783 = vunpack.c.l.bf16 %v338
      %v784 = vunpack.c.h.bf16 %v338
      %v785 = vunpack.c.l.bf16 %v339
      %v786 = vunpack.c.h.bf16 %v339
      %v787 = vunpack.c.l.bf16 %v340
      %v788 = vunpack.c.h.bf16 %v340
      %v789 = vmax.f32 %v341, %v565
      %v790 = vmax.f32 %v342, %v566
      %v791 = vmax.f32 %v343, %v567
      %v792 = vmax.f32 %v344, %v568
      %v793 = vmax.f32 %v345, %v569
      %v794 = vmax.f32 %v346, %v570
      %v795 = vmax.f32 %v347, %v571
      %v796 = vmax.f32 %v348, %v572
      %v797 = vmax.f32 %v349, %v573
      %v798 = vmax.f32 %v350, %v574
      %v799 = vmax.f32 %v351, %v575
      %v800 = vmax.f32 %v352, %v576
      %v801 = vmax.f32 %v353, %v577
      %v802 = vmax.f32 %v354, %v578
      %v803 = vmax.f32 %v355, %v579
      %v804 = vmax.f32 %v356, %v580
      %v805 = vmax.f32 %v357, %v581
      %v806 = vmax.f32 %v358, %v582
      %v807 = vmax.f32 %v359, %v583
      %v808 = vmax.f32 %v360, %v584
      %v809 = vmax.f32 %v361, %v585
      %v810 = vmax.f32 %v362, %v586
      %v811 = vmax.f32 %v363, %v587
      %v812 = vmax.f32 %v364, %v588
      %v813 = vmax.f32 %v365, %v589
      %v814 = vmax.f32 %v366, %v590
      %v815 = vmax.f32 %v367, %v591
      %v816 = vmax.f32 %v368, %v592
      %v817 = vmax.f32 %v369, %v593
      %v818 = vmax.f32 %v370, %v594
      %v819 = vmax.f32 %v371, %v595
      %v820 = vmax.f32 %v372, %v596
      %v821 = vmax.f32 %v373, %v597
      %v822 = vmax.f32 %v374, %v598
      %v823 = vmax.f32 %v375, %v599
      %v824 = vmax.f32 %v376, %v600
      %v825 = vmax.f32 %v377, %v601
      %v826 = vmax.f32 %v378, %v602
      %v827 = vmax.f32 %v379, %v603
      %v828 = vmax.f32 %v380, %v604
      %v829 = vmax.f32 %v381, %v605
      %v830 = vmax.f32 %v382, %v606
      %v831 = vmax.f32 %v383, %v607
      %v832 = vmax.f32 %v384, %v608
      %v833 = vmax.f32 %v385, %v609
      %v834 = vmax.f32 %v386, %v610
      %v835 = vmax.f32 %v387, %v611
      %v836 = vmax.f32 %v388, %v612
      %v837 = vmax.f32 %v389, %v613
      %v838 = vmax.f32 %v390, %v614
      %v839 = vmax.f32 %v391, %v615
      %v840 = vmax.f32 %v392, %v616
      %v841 = vmax.f32 %v393, %v617
      %v842 = vmax.f32 %v394, %v618
      %v843 = vmax.f32 %v395, %v619
      %v844 = vmax.f32 %v396, %v620
      %v845 = vmax.f32 %v397, %v621
      %v846 = vmax.f32 %v398, %v622
      %v847 = vmax.f32 %v399, %v623
      %v848 = vmax.f32 %v400, %v624
      %v849 = vmax.f32 %v401, %v625
      %v850 = vmax.f32 %v402, %v626
      %v851 = vmax.f32 %v403, %v627
      %v852 = vmax.f32 %v404, %v628
      %v853 = vmax.f32 %v405, %v629
      %v854 = vmax.f32 %v406, %v630
      %v855 = vmax.f32 %v407, %v631
      %v856 = vmax.f32 %v408, %v632
      %v857 = vmax.f32 %v409, %v633
      %v858 = vmax.f32 %v410, %v634
      %v859 = vmax.f32 %v411, %v635
      %v860 = vmax.f32 %v412, %v636
      %v861 = vmax.f32 %v413, %v637
      %v862 = vmax.f32 %v414, %v638
      %v863 = vmax.f32 %v415, %v639
      %v864 = vmax.f32 %v416, %v640
      %v865 = vmax.f32 %v417, %v641
      %v866 = vmax.f32 %v418, %v642
      %v867 = vmax.f32 %v419, %v643
      %v868 = vmax.f32 %v420, %v644
      %v869 = vmax.f32 %v421, %v645
      %v870 = vmax.f32 %v422, %v646
      %v871 = vmax.f32 %v423, %v647
      %v872 = vmax.f32 %v424, %v648
      %v873 = vmax.f32 %v425, %v649
      %v874 = vmax.f32 %v426, %v650
      %v875 = vmax.f32 %v427, %v651
      %v876 = vmax.f32 %v428, %v652
      %v877 = vmax.f32 %v429, %v653
      %v878 = vmax.f32 %v430, %v654
      %v879 = vmax.f32 %v431, %v655
      %v880 = vmax.f32 %v432, %v656
      %v881 = vmax.f32 %v433, %v657
      %v882 = vmax.f32 %v434, %v658
      %v883 = vmax.f32 %v435, %v659
      %v884 = vmax.f32 %v436, %v660
      %v885 = vmax.f32 %v437, %v661
      %v886 = vmax.f32 %v438, %v662
      %v887 = vmax.f32 %v439, %v663
      %v888 = vmax.f32 %v440, %v664
      %v889 = vmax.f32 %v441, %v665
      %v890 = vmax.f32 %v442, %v666
      %v891 = vmax.f32 %v443, %v667
      %v892 = vmax.f32 %v444, %v668
      %v893 = vmax.f32 %v445, %v669
      %v894 = vmax.f32 %v446, %v670
      %v895 = vmax.f32 %v447, %v671
      %v896 = vmax.f32 %v448, %v672
      %v897 = vmax.f32 %v449, %v673
      %v898 = vmax.f32 %v450, %v674
      %v899 = vmax.f32 %v451, %v675
      %v900 = vmax.f32 %v452, %v676
      %v901 = vmax.f32 %v453, %v677
      %v902 = vmax.f32 %v454, %v678
      %v903 = vmax.f32 %v455, %v679
      %v904 = vmax.f32 %v456, %v680
      %v905 = vmax.f32 %v457, %v681
      %v906 = vmax.f32 %v458, %v682
      %v907 = vmax.f32 %v459, %v683
      %v908 = vmax.f32 %v460, %v684
      %v909 = vmax.f32 %v461, %v685
      %v910 = vmax.f32 %v462, %v686
      %v911 = vmax.f32 %v463, %v687
      %v912 = vmax.f32 %v464, %v688
      %v913 = vmax.f32 %v465, %v689
      %v914 = vmax.f32 %v466, %v690
      %v915 = vmax.f32 %v467, %v691
      %v916 = vmax.f32 %v468, %v692
      %v917 = vmax.f32 %v469, %v693
      %v918 = vmax.f32 %v470, %v694
      %v919 = vmax.f32 %v471, %v695
      %v920 = vmax.f32 %v472, %v696
      %v921 = vmax.f32 %v473, %v697
      %v922 = vmax.f32 %v474, %v698
      %v923 = vmax.f32 %v475, %v699
      %v924 = vmax.f32 %v476, %v700
      %v925 = vmax.f32 %v477, %v701
      %v926 = vmax.f32 %v478, %v702
      %v927 = vmax.f32 %v479, %v703
      %v928 = vmax.f32 %v480, %v704
      %v929 = vmax.f32 %v481, %v705
      %v930 = vmax.f32 %v482, %v706
      %v931 = vmax.f32 %v483, %v707
      %v932 = vmax.f32 %v484, %v708
      %v933 = vmax.f32 %v485, %v709
      %v934 = vmax.f32 %v486, %v710
      %v935 = vmax.f32 %v487, %v711
      %v936 = vmax.f32 %v488, %v712
      %v937 = vmax.f32 %v489, %v713
      %v938 = vmax.f32 %v490, %v714
      %v939 = vmax.f32 %v491, %v715
      %v940 = vmax.f32 %v492, %v716
      %v941 = vmax.f32 %v493, %v717
      %v942 = vmax.f32 %v494, %v718
      %v943 = vmax.f32 %v495, %v719
      %v944 = vmax.f32 %v496, %v720
      %v945 = vmax.f32 %v497, %v721
      %v946 = vmax.f32 %v498, %v722
      %v947 = vmax.f32 %v499, %v723
      %v948 = vmax.f32 %v500, %v724
      %v949 = vmax.f32 %v501, %v725
      %v950 = vmax.f32 %v502, %v726
      %v951 = vmax.f32 %v503, %v727
      %v952 = vmax.f32 %v504, %v728
      %v953 = vmax.f32 %v505, %v729
      %v954 = vmax.f32 %v506, %v730
      %v955 = vmax.f32 %v507, %v731
      %v956 = vmax.f32 %v508, %v732
      %v957 = vmax.f32 %v509, %v733
      %v958 = vmax.f32 %v510, %v734
      %v959 = vmax.f32 %v511, %v735
      %v960 = vmax.f32 %v512, %v736
      %v961 = vmax.f32 %v513, %v737
      %v962 = vmax.f32 %v514, %v738
      %v963 = vmax.f32 %v515, %v739
      %v964 = vmax.f32 %v516, %v740
      %v965 = vmax.f32 %v517, %v741
      %v966 = vmax.f32 %v518, %v742
      %v967 = vmax.f32 %v519, %v743
      %v968 = vmax.f32 %v520, %v744
      %v969 = vmax.f32 %v521, %v745
      %v970 = vmax.f32 %v522, %v746
      %v971 = vmax.f32 %v523, %v747
      %v972 = vmax.f32 %v524, %v748
      %v973 = vmax.f32 %v525, %v749
      %v974 = vmax.f32 %v526, %v750
      %v975 = vmax.f32 %v527, %v751
      %v976 = vmax.f32 %v528, %v752
      %v977 = vmax.f32 %v529, %v753
      %v978 = vmax.f32 %v530, %v754
      %v979 = vmax.f32 %v531, %v755
      %v980 = vmax.f32 %v532, %v756
      %v981 = vmax.f32 %v533, %v757
      %v982 = vmax.f32 %v534, %v758
      %v983 = vmax.f32 %v535, %v759
      %v984 = vmax.f32 %v536, %v760
      %v985 = vmax.f32 %v537, %v761
      %v986 = vmax.f32 %v538, %v762
      %v987 = vmax.f32 %v539, %v763
      %v988 = vmax.f32 %v540, %v764
      %v989 = vmax.f32 %v541, %v765
      %v990 = vmax.f32 %v542, %v766
      %v991 = vmax.f32 %v543, %v767
      %v992 = vmax.f32 %v544, %v768
      %v993 = vmax.f32 %v545, %v769
      %v994 = vmax.f32 %v546, %v770
      %v995 = vmax.f32 %v547, %v771
      %v996 = vmax.f32 %v548, %v772
      %v997 = vmax.f32 %v549, %v773
      %v998 = vmax.f32 %v550, %v774
      %v999 = vmax.f32 %v551, %v775
      %v1000 = vmax.f32 %v552, %v776
      %v1001 = vmax.f32 %v553, %v777
      %v1002 = vmax.f32 %v554, %v778
      %v1003 = vmax.f32 %v555, %v779
      %v1004 = vmax.f32 %v556, %v780
      %v1005 = vmax.f32 %v557, %v781
      %v1006 = vmax.f32 %v558, %v782
      %v1007 = vmax.f32 %v559, %v783
      %v1008 = vmax.f32 %v560, %v784
      %v1009 = vmax.f32 %v561, %v785
      %v1010 = vmax.f32 %v562, %v786
      %v1011 = vmax.f32 %v563, %v787
      %v1012 = vmax.f32 %v564, %v788
      %v1013 = vpack.c.bf16 %v790, %v789
      %v1014 = vpack.c.bf16 %v792, %v791
      %v1015 = vpack.c.bf16 %v794, %v793
      %v1016 = vpack.c.bf16 %v796, %v795
      %v1017 = vpack.c.bf16 %v798, %v797
      %v1018 = vpack.c.bf16 %v800, %v799
      %v1019 = vpack.c.bf16 %v802, %v801
      %v1020 = vpack.c.bf16 %v804, %v803
      %v1021 = vpack.c.bf16 %v806, %v805
      %v1022 = vpack.c.bf16 %v808, %v807
      %v1023 = vpack.c.bf16 %v810, %v809
      %v1024 = vpack.c.bf16 %v812, %v811
      %v1025 = vpack.c.bf16 %v814, %v813
      %v1026 = vpack.c.bf16 %v816, %v815
      %v1027 = vpack.c.bf16 %v818, %v817
      %v1028 = vpack.c.bf16 %v820, %v819
      %v1029 = vpack.c.bf16 %v822, %v821
      %v1030 = vpack.c.bf16 %v824, %v823
      %v1031 = vpack.c.bf16 %v826, %v825
      %v1032 = vpack.c.bf16 %v828, %v827
      %v1033 = vpack.c.bf16 %v830, %v829
      %v1034 = vpack.c.bf16 %v832, %v831
      %v1035 = vpack.c.bf16 %v834, %v833
      %v1036 = vpack.c.bf16 %v836, %v835
      %v1037 = vpack.c.bf16 %v838, %v837
      %v1038 = vpack.c.bf16 %v840, %v839
      %v1039 = vpack.c.bf16 %v842, %v841
      %v1040 = vpack.c.bf16 %v844, %v843
      %v1041 = vpack.c.bf16 %v846, %v845
      %v1042 = vpack.c.bf16 %v848, %v847
      %v1043 = vpack.c.bf16 %v850, %v849
      %v1044 = vpack.c.bf16 %v852, %v851
      %v1045 = vpack.c.bf16 %v854, %v853
      %v1046 = vpack.c.bf16 %v856, %v855
      %v1047 = vpack.c.bf16 %v858, %v857
      %v1048 = vpack.c.bf16 %v860, %v859
      %v1049 = vpack.c.bf16 %v862, %v861
      %v1050 = vpack.c.bf16 %v864, %v863
      %v1051 = vpack.c.bf16 %v866, %v865
      %v1052 = vpack.c.bf16 %v868, %v867
      %v1053 = vpack.c.bf16 %v870, %v869
      %v1054 = vpack.c.bf16 %v872, %v871
      %v1055 = vpack.c.bf16 %v874, %v873
      %v1056 = vpack.c.bf16 %v876, %v875
      %v1057 = vpack.c.bf16 %v878, %v877
      %v1058 = vpack.c.bf16 %v880, %v879
      %v1059 = vpack.c.bf16 %v882, %v881
      %v1060 = vpack.c.bf16 %v884, %v883
      %v1061 = vpack.c.bf16 %v886, %v885
      %v1062 = vpack.c.bf16 %v888, %v887
      %v1063 = vpack.c.bf16 %v890, %v889
      %v1064 = vpack.c.bf16 %v892, %v891
      %v1065 = vpack.c.bf16 %v894, %v893
      %v1066 = vpack.c.bf16 %v896, %v895
      %v1067 = vpack.c.bf16 %v898, %v897
      %v1068 = vpack.c.bf16 %v900, %v899
      %v1069 = vpack.c.bf16 %v902, %v901
      %v1070 = vpack.c.bf16 %v904, %v903
      %v1071 = vpack.c.bf16 %v906, %v905
      %v1072 = vpack.c.bf16 %v908, %v907
      %v1073 = vpack.c.bf16 %v910, %v909
      %v1074 = vpack.c.bf16 %v912, %v911
      %v1075 = vpack.c.bf16 %v914, %v913
      %v1076 = vpack.c.bf16 %v916, %v915
      %v1077 = vpack.c.bf16 %v918, %v917
      %v1078 = vpack.c.bf16 %v920, %v919
      %v1079 = vpack.c.bf16 %v922, %v921
      %v1080 = vpack.c.bf16 %v924, %v923
      %v1081 = vpack.c.bf16 %v926, %v925
      %v1082 = vpack.c.bf16 %v928, %v927
      %v1083 = vpack.c.bf16 %v930, %v929
      %v1084 = vpack.c.bf16 %v932, %v931
      %v1085 = vpack.c.bf16 %v934, %v933
      %v1086 = vpack.c.bf16 %v936, %v935
      %v1087 = vpack.c.bf16 %v938, %v937
      %v1088 = vpack.c.bf16 %v940, %v939
      %v1089 = vpack.c.bf16 %v942, %v941
      %v1090 = vpack.c.bf16 %v944, %v943
      %v1091 = vpack.c.bf16 %v946, %v945
      %v1092 = vpack.c.bf16 %v948, %v947
      %v1093 = vpack.c.bf16 %v950, %v949
      %v1094 = vpack.c.bf16 %v952, %v951
      %v1095 = vpack.c.bf16 %v954, %v953
      %v1096 = vpack.c.bf16 %v956, %v955
      %v1097 = vpack.c.bf16 %v958, %v957
      %v1098 = vpack.c.bf16 %v960, %v959
      %v1099 = vpack.c.bf16 %v962, %v961
      %v1100 = vpack.c.bf16 %v964, %v963
      %v1101 = vpack.c.bf16 %v966, %v965
      %v1102 = vpack.c.bf16 %v968, %v967
      %v1103 = vpack.c.bf16 %v970, %v969
      %v1104 = vpack.c.bf16 %v972, %v971
      %v1105 = vpack.c.bf16 %v974, %v973
      %v1106 = vpack.c.bf16 %v976, %v975
      %v1107 = vpack.c.bf16 %v978, %v977
      %v1108 = vpack.c.bf16 %v980, %v979
      %v1109 = vpack.c.bf16 %v982, %v981
      %v1110 = vpack.c.bf16 %v984, %v983
      %v1111 = vpack.c.bf16 %v986, %v985
      %v1112 = vpack.c.bf16 %v988, %v987
      %v1113 = vpack.c.bf16 %v990, %v989
      %v1114 = vpack.c.bf16 %v992, %v991
      %v1115 = vpack.c.bf16 %v994, %v993
      %v1116 = vpack.c.bf16 %v996, %v995
      %v1117 = vpack.c.bf16 %v998, %v997
      %v1118 = vpack.c.bf16 %v1000, %v999
      %v1119 = vpack.c.bf16 %v1002, %v1001
      %v1120 = vpack.c.bf16 %v1004, %v1003
      %v1121 = vpack.c.bf16 %v1006, %v1005
      %v1122 = vpack.c.bf16 %v1008, %v1007
      %v1123 = vpack.c.bf16 %v1010, %v1009
      %v1124 = vpack.c.bf16 %v1012, %v1011
      %v1125 = vunpack.c.l.bf16 %v1013
      %v1126 = vunpack.c.l.bf16 %v1014
      %v1127 = vunpack.c.l.bf16 %v1015
      %v1128 = vunpack.c.l.bf16 %v1016
      %v1129 = vunpack.c.l.bf16 %v1017
      %v1130 = vunpack.c.l.bf16 %v1018
      %v1131 = vunpack.c.l.bf16 %v1019
      %v1132 = vunpack.c.l.bf16 %v1020
      %v1133 = vunpack.c.l.bf16 %v1021
      %v1134 = vunpack.c.l.bf16 %v1022
      %v1135 = vunpack.c.l.bf16 %v1023
      %v1136 = vunpack.c.l.bf16 %v1024
      %v1137 = vunpack.c.l.bf16 %v1025
      %v1138 = vunpack.c.l.bf16 %v1026
      %v1139 = vunpack.c.l.bf16 %v1027
      %v1140 = vunpack.c.l.bf16 %v1028
      %v1141 = vunpack.c.l.bf16 %v1029
      %v1142 = vunpack.c.l.bf16 %v1030
      %v1143 = vunpack.c.l.bf16 %v1031
      %v1144 = vunpack.c.l.bf16 %v1032
      %v1145 = vunpack.c.l.bf16 %v1033
      %v1146 = vunpack.c.l.bf16 %v1034
      %v1147 = vunpack.c.l.bf16 %v1035
      %v1148 = vunpack.c.l.bf16 %v1036
      %v1149 = vunpack.c.l.bf16 %v1037
      %v1150 = vunpack.c.l.bf16 %v1038
      %v1151 = vunpack.c.l.bf16 %v1039
      %v1152 = vunpack.c.l.bf16 %v1040
      %v1153 = vunpack.c.l.bf16 %v1041
      %v1154 = vunpack.c.l.bf16 %v1042
      %v1155 = vunpack.c.l.bf16 %v1043
      %v1156 = vunpack.c.l.bf16 %v1044
      %v1157 = vunpack.c.l.bf16 %v1045
      %v1158 = vunpack.c.l.bf16 %v1046
      %v1159 = vunpack.c.l.bf16 %v1047
      %v1160 = vunpack.c.l.bf16 %v1048
      %v1161 = vunpack.c.l.bf16 %v1049
      %v1162 = vunpack.c.l.bf16 %v1050
      %v1163 = vunpack.c.l.bf16 %v1051
      %v1164 = vunpack.c.l.bf16 %v1052
      %v1165 = vunpack.c.l.bf16 %v1053
      %v1166 = vunpack.c.l.bf16 %v1054
      %v1167 = vunpack.c.l.bf16 %v1055
      %v1168 = vunpack.c.l.bf16 %v1056
      %v1169 = vunpack.c.l.bf16 %v1057
      %v1170 = vunpack.c.l.bf16 %v1058
      %v1171 = vunpack.c.l.bf16 %v1059
      %v1172 = vunpack.c.l.bf16 %v1060
      %v1173 = vunpack.c.l.bf16 %v1061
      %v1174 = vunpack.c.l.bf16 %v1062
      %v1175 = vunpack.c.l.bf16 %v1063
      %v1176 = vunpack.c.l.bf16 %v1064
      %v1177 = vunpack.c.l.bf16 %v1065
      %v1178 = vunpack.c.l.bf16 %v1066
      %v1179 = vunpack.c.l.bf16 %v1067
      %v1180 = vunpack.c.l.bf16 %v1068
      %v1181 = vunpack.c.l.bf16 %v1069
      %v1182 = vunpack.c.l.bf16 %v1070
      %v1183 = vunpack.c.l.bf16 %v1071
      %v1184 = vunpack.c.l.bf16 %v1072
      %v1185 = vunpack.c.l.bf16 %v1073
      %v1186 = vunpack.c.l.bf16 %v1074
      %v1187 = vunpack.c.l.bf16 %v1075
      %v1188 = vunpack.c.l.bf16 %v1076
      %v1189 = vunpack.c.l.bf16 %v1077
      %v1190 = vunpack.c.l.bf16 %v1078
      %v1191 = vunpack.c.l.bf16 %v1079
      %v1192 = vunpack.c.l.bf16 %v1080
      %v1193 = vunpack.c.l.bf16 %v1081
      %v1194 = vunpack.c.l.bf16 %v1082
      %v1195 = vunpack.c.l.bf16 %v1083
      %v1196 = vunpack.c.l.bf16 %v1084
      %v1197 = vunpack.c.l.bf16 %v1085
      %v1198 = vunpack.c.l.bf16 %v1086
      %v1199 = vunpack.c.l.bf16 %v1087
      %v1200 = vunpack.c.l.bf16 %v1088
      %v1201 = vunpack.c.l.bf16 %v1089
      %v1202 = vunpack.c.l.bf16 %v1090
      %v1203 = vunpack.c.l.bf16 %v1091
      %v1204 = vunpack.c.l.bf16 %v1092
      %v1205 = vunpack.c.l.bf16 %v1093
      %v1206 = vunpack.c.l.bf16 %v1094
      %v1207 = vunpack.c.l.bf16 %v1095
      %v1208 = vunpack.c.l.bf16 %v1096
      %v1209 = vunpack.c.l.bf16 %v1097
      %v1210 = vunpack.c.l.bf16 %v1098
      %v1211 = vunpack.c.l.bf16 %v1099
      %v1212 = vunpack.c.l.bf16 %v1100
      %v1213 = vunpack.c.l.bf16 %v1101
      %v1214 = vunpack.c.l.bf16 %v1102
      %v1215 = vunpack.c.l.bf16 %v1103
      %v1216 = vunpack.c.l.bf16 %v1104
      %v1217 = vunpack.c.l.bf16 %v1105
      %v1218 = vunpack.c.l.bf16 %v1106
      %v1219 = vunpack.c.l.bf16 %v1107
      %v1220 = vunpack.c.l.bf16 %v1108
      %v1221 = vunpack.c.l.bf16 %v1109
      %v1222 = vunpack.c.l.bf16 %v1110
      %v1223 = vunpack.c.l.bf16 %v1111
      %v1224 = vunpack.c.l.bf16 %v1112
      %v1225 = vunpack.c.l.bf16 %v1113
      %v1226 = vunpack.c.l.bf16 %v1114
      %v1227 = vunpack.c.l.bf16 %v1115
      %v1228 = vunpack.c.l.bf16 %v1116
      %v1229 = vunpack.c.l.bf16 %v1117
      %v1230 = vunpack.c.l.bf16 %v1118
      %v1231 = vunpack.c.l.bf16 %v1119
      %v1232 = vunpack.c.l.bf16 %v1120
      %v1233 = vunpack.c.l.bf16 %v1121
      %v1234 = vunpack.c.l.bf16 %v1122
      %v1235 = vunpack.c.l.bf16 %v1123
      %v1236 = vunpack.c.l.bf16 %v1124
      %v1349 = vrot.slane %v1013, 4
      %v1350 = vrot.slane %v1014, 4
      %v1351 = vrot.slane %v1015, 4
      %v1352 = vrot.slane %v1016, 4
      %v1353 = vrot.slane %v1017, 4
      %v1354 = vrot.slane %v1018, 4
      %v1355 = vrot.slane %v1019, 4
      %v1356 = vrot.slane %v1020, 4
      %v1357 = vrot.slane %v1021, 4
      %v1358 = vrot.slane %v1022, 4
      %v1359 = vrot.slane %v1023, 4
      %v1360 = vrot.slane %v1024, 4
      %v1361 = vrot.slane %v1025, 4
      %v1362 = vrot.slane %v1026, 4
      %v1363 = vrot.slane %v1027, 4
      %v1364 = vrot.slane %v1028, 4
      %v1365 = vrot.slane %v1029, 4
      %v1366 = vrot.slane %v1030, 4
      %v1367 = vrot.slane %v1031, 4
      %v1368 = vrot.slane %v1032, 4
      %v1369 = vrot.slane %v1033, 4
      %v1370 = vrot.slane %v1034, 4
      %v1371 = vrot.slane %v1035, 4
      %v1372 = vrot.slane %v1036, 4
      %v1373 = vrot.slane %v1037, 4
      %v1374 = vrot.slane %v1038, 4
      %v1375 = vrot.slane %v1039, 4
      %v1376 = vrot.slane %v1040, 4
      %v1377 = vrot.slane %v1041, 4
      %v1378 = vrot.slane %v1042, 4
      %v1379 = vrot.slane %v1043, 4
      %v1380 = vrot.slane %v1044, 4
      %v1381 = vrot.slane %v1045, 4
      %v1382 = vrot.slane %v1046, 4
      %v1383 = vrot.slane %v1047, 4
      %v1384 = vrot.slane %v1048, 4
      %v1385 = vrot.slane %v1049, 4
      %v1386 = vrot.slane %v1050, 4
      %v1387 = vrot.slane %v1051, 4
      %v1388 = vrot.slane %v1052, 4
      %v1389 = vrot.slane %v1053, 4
      %v1390 = vrot.slane %v1054, 4
      %v1391 = vrot.slane %v1055, 4
      %v1392 = vrot.slane %v1056, 4
      %v1393 = vrot.slane %v1057, 4
      %v1394 = vrot.slane %v1058, 4
      %v1395 = vrot.slane %v1059, 4
      %v1396 = vrot.slane %v1060, 4
      %v1397 = vrot.slane %v1061, 4
      %v1398 = vrot.slane %v1062, 4
      %v1399 = vrot.slane %v1063, 4
      %v1400 = vrot.slane %v1064, 4
      %v1401 = vrot.slane %v1065, 4
      %v1402 = vrot.slane %v1066, 4
      %v1403 = vrot.slane %v1067, 4
      %v1404 = vrot.slane %v1068, 4
      %v1405 = vrot.slane %v1069, 4
      %v1406 = vrot.slane %v1070, 4
      %v1407 = vrot.slane %v1071, 4
      %v1408 = vrot.slane %v1072, 4
      %v1409 = vrot.slane %v1073, 4
      %v1410 = vrot.slane %v1074, 4
      %v1411 = vrot.slane %v1075, 4
      %v1412 = vrot.slane %v1076, 4
      %v1413 = vrot.slane %v1077, 4
      %v1414 = vrot.slane %v1078, 4
      %v1415 = vrot.slane %v1079, 4
      %v1416 = vrot.slane %v1080, 4
      %v1417 = vrot.slane %v1081, 4
      %v1418 = vrot.slane %v1082, 4
      %v1419 = vrot.slane %v1083, 4
      %v1420 = vrot.slane %v1084, 4
      %v1421 = vrot.slane %v1085, 4
      %v1422 = vrot.slane %v1086, 4
      %v1423 = vrot.slane %v1087, 4
      %v1424 = vrot.slane %v1088, 4
      %v1425 = vrot.slane %v1089, 4
      %v1426 = vrot.slane %v1090, 4
      %v1427 = vrot.slane %v1091, 4
      %v1428 = vrot.slane %v1092, 4
      %v1429 = vrot.slane %v1093, 4
      %v1430 = vrot.slane %v1094, 4
      %v1431 = vrot.slane %v1095, 4
      %v1432 = vrot.slane %v1096, 4
      %v1433 = vrot.slane %v1097, 4
      %v1434 = vrot.slane %v1098, 4
      %v1435 = vrot.slane %v1099, 4
      %v1436 = vrot.slane %v1100, 4
      %v1437 = vrot.slane %v1101, 4
      %v1438 = vrot.slane %v1102, 4
      %v1439 = vrot.slane %v1103, 4
      %v1440 = vrot.slane %v1104, 4
      %v1441 = vrot.slane %v1105, 4
      %v1442 = vrot.slane %v1106, 4
      %v1443 = vrot.slane %v1107, 4
      %v1444 = vrot.slane %v1108, 4
      %v1445 = vrot.slane %v1109, 4
      %v1446 = vrot.slane %v1110, 4
      %v1447 = vrot.slane %v1111, 4
      %v1448 = vrot.slane %v1112, 4
      %v1449 = vrot.slane %v1113, 4
      %v1450 = vrot.slane %v1114, 4
      %v1451 = vrot.slane %v1115, 4
      %v1452 = vrot.slane %v1116, 4
      %v1453 = vrot.slane %v1117, 4
      %v1454 = vrot.slane %v1118, 4
      %v1455 = vrot.slane %v1119, 4
      %v1456 = vrot.slane %v1120, 4
      %v1457 = vrot.slane %v1121, 4
      %v1458 = vrot.slane %v1122, 4
      %v1459 = vrot.slane %v1123, 4
      %v1460 = vrot.slane %v1124, 4
      %v1573 = vunpack.c.l.bf16 %v1349
      %v1574 = vunpack.c.l.bf16 %v1350
      %v1575 = vunpack.c.l.bf16 %v1351
      %v1576 = vunpack.c.l.bf16 %v1352
      %v1577 = vunpack.c.l.bf16 %v1353
      %v1578 = vunpack.c.l.bf16 %v1354
      %v1579 = vunpack.c.l.bf16 %v1355
      %v1580 = vunpack.c.l.bf16 %v1356
      %v1581 = vunpack.c.l.bf16 %v1357
      %v1582 = vunpack.c.l.bf16 %v1358
      %v1583 = vunpack.c.l.bf16 %v1359
      %v1584 = vunpack.c.l.bf16 %v1360
      %v1585 = vunpack.c.l.bf16 %v1361
      %v1586 = vunpack.c.l.bf16 %v1362
      %v1587 = vunpack.c.l.bf16 %v1363
      %v1588 = vunpack.c.l.bf16 %v1364
      %v1589 = vunpack.c.l.bf16 %v1365
      %v1590 = vunpack.c.l.bf16 %v1366
      %v1591 = vunpack.c.l.bf16 %v1367
      %v1592 = vunpack.c.l.bf16 %v1368
      %v1593 = vunpack.c.l.bf16 %v1369
      %v1594 = vunpack.c.l.bf16 %v1370
      %v1595 = vunpack.c.l.bf16 %v1371
      %v1596 = vunpack.c.l.bf16 %v1372
      %v1597 = vunpack.c.l.bf16 %v1373
      %v1598 = vunpack.c.l.bf16 %v1374
      %v1599 = vunpack.c.l.bf16 %v1375
      %v1600 = vunpack.c.l.bf16 %v1376
      %v1601 = vunpack.c.l.bf16 %v1377
      %v1602 = vunpack.c.l.bf16 %v1378
      %v1603 = vunpack.c.l.bf16 %v1379
      %v1604 = vunpack.c.l.bf16 %v1380
      %v1605 = vunpack.c.l.bf16 %v1381
      %v1606 = vunpack.c.l.bf16 %v1382
      %v1607 = vunpack.c.l.bf16 %v1383
      %v1608 = vunpack.c.l.bf16 %v1384
      %v1609 = vunpack.c.l.bf16 %v1385
      %v1610 = vunpack.c.l.bf16 %v1386
      %v1611 = vunpack.c.l.bf16 %v1387
      %v1612 = vunpack.c.l.bf16 %v1388
      %v1613 = vunpack.c.l.bf16 %v1389
      %v1614 = vunpack.c.l.bf16 %v1390
      %v1615 = vunpack.c.l.bf16 %v1391
      %v1616 = vunpack.c.l.bf16 %v1392
      %v1617 = vunpack.c.l.bf16 %v1393
      %v1618 = vunpack.c.l.bf16 %v1394
      %v1619 = vunpack.c.l.bf16 %v1395
      %v1620 = vunpack.c.l.bf16 %v1396
      %v1621 = vunpack.c.l.bf16 %v1397
      %v1622 = vunpack.c.l.bf16 %v1398
      %v1623 = vunpack.c.l.bf16 %v1399
      %v1624 = vunpack.c.l.bf16 %v1400
      %v1625 = vunpack.c.l.bf16 %v1401
      %v1626 = vunpack.c.l.bf16 %v1402
      %v1627 = vunpack.c.l.bf16 %v1403
      %v1628 = vunpack.c.l.bf16 %v1404
      %v1629 = vunpack.c.l.bf16 %v1405
      %v1630 = vunpack.c.l.bf16 %v1406
      %v1631 = vunpack.c.l.bf16 %v1407
      %v1632 = vunpack.c.l.bf16 %v1408
      %v1633 = vunpack.c.l.bf16 %v1409
      %v1634 = vunpack.c.l.bf16 %v1410
      %v1635 = vunpack.c.l.bf16 %v1411
      %v1636 = vunpack.c.l.bf16 %v1412
      %v1637 = vunpack.c.l.bf16 %v1413
      %v1638 = vunpack.c.l.bf16 %v1414
      %v1639 = vunpack.c.l.bf16 %v1415
      %v1640 = vunpack.c.l.bf16 %v1416
      %v1641 = vunpack.c.l.bf16 %v1417
      %v1642 = vunpack.c.l.bf16 %v1418
      %v1643 = vunpack.c.l.bf16 %v1419
      %v1644 = vunpack.c.l.bf16 %v1420
      %v1645 = vunpack.c.l.bf16 %v1421
      %v1646 = vunpack.c.l.bf16 %v1422
      %v1647 = vunpack.c.l.bf16 %v1423
      %v1648 = vunpack.c.l.bf16 %v1424
      %v1649 = vunpack.c.l.bf16 %v1425
      %v1650 = vunpack.c.l.bf16 %v1426
      %v1651 = vunpack.c.l.bf16 %v1427
      %v1652 = vunpack.c.l.bf16 %v1428
      %v1653 = vunpack.c.l.bf16 %v1429
      %v1654 = vunpack.c.l.bf16 %v1430
      %v1655 = vunpack.c.l.bf16 %v1431
      %v1656 = vunpack.c.l.bf16 %v1432
      %v1657 = vunpack.c.l.bf16 %v1433
      %v1658 = vunpack.c.l.bf16 %v1434
      %v1659 = vunpack.c.l.bf16 %v1435
      %v1660 = vunpack.c.l.bf16 %v1436
      %v1661 = vunpack.c.l.bf16 %v1437
      %v1662 = vunpack.c.l.bf16 %v1438
      %v1663 = vunpack.c.l.bf16 %v1439
      %v1664 = vunpack.c.l.bf16 %v1440
      %v1665 = vunpack.c.l.bf16 %v1441
      %v1666 = vunpack.c.l.bf16 %v1442
      %v1667 = vunpack.c.l.bf16 %v1443
      %v1668 = vunpack.c.l.bf16 %v1444
      %v1669 = vunpack.c.l.bf16 %v1445
      %v1670 = vunpack.c.l.bf16 %v1446
      %v1671 = vunpack.c.l.bf16 %v1447
      %v1672 = vunpack.c.l.bf16 %v1448
      %v1673 = vunpack.c.l.bf16 %v1449
      %v1674 = vunpack.c.l.bf16 %v1450
      %v1675 = vunpack.c.l.bf16 %v1451
      %v1676 = vunpack.c.l.bf16 %v1452
      %v1677 = vunpack.c.l.bf16 %v1453
      %v1678 = vunpack.c.l.bf16 %v1454
      %v1679 = vunpack.c.l.bf16 %v1455
      %v1680 = vunpack.c.l.bf16 %v1456
      %v1681 = vunpack.c.l.bf16 %v1457
      %v1682 = vunpack.c.l.bf16 %v1458
      %v1683 = vunpack.c.l.bf16 %v1459
      %v1684 = vunpack.c.l.bf16 %v1460
      %v1685 = vmax.f32 %v1125, %v1573
      %v1686 = vmax.f32 %v1126, %v1574
      %v1687 = vmax.f32 %v1127, %v1575
      %v1688 = vmax.f32 %v1128, %v1576
      %v1689 = vmax.f32 %v1129, %v1577
      %v1690 = vmax.f32 %v1130, %v1578
      %v1691 = vmax.f32 %v1131, %v1579
      %v1692 = vmax.f32 %v1132, %v1580
      %v1693 = vmax.f32 %v1133, %v1581
      %v1694 = vmax.f32 %v1134, %v1582
      %v1695 = vmax.f32 %v1135, %v1583
      %v1696 = vmax.f32 %v1136, %v1584
      %v1697 = vmax.f32 %v1137, %v1585
      %v1698 = vmax.f32 %v1138, %v1586
      %v1699 = vmax.f32 %v1139, %v1587
      %v1700 = vmax.f32 %v1140, %v1588
      %v1701 = vmax.f32 %v1141, %v1589
      %v1702 = vmax.f32 %v1142, %v1590
      %v1703 = vmax.f32 %v1143, %v1591
      %v1704 = vmax.f32 %v1144, %v1592
      %v1705 = vmax.f32 %v1145, %v1593
      %v1706 = vmax.f32 %v1146, %v1594
      %v1707 = vmax.f32 %v1147, %v1595
      %v1708 = vmax.f32 %v1148, %v1596
      %v1709 = vmax.f32 %v1149, %v1597
      %v1710 = vmax.f32 %v1150, %v1598
      %v1711 = vmax.f32 %v1151, %v1599
      %v1712 = vmax.f32 %v1152, %v1600
      %v1713 = vmax.f32 %v1153, %v1601
      %v1714 = vmax.f32 %v1154, %v1602
      %v1715 = vmax.f32 %v1155, %v1603
      %v1716 = vmax.f32 %v1156, %v1604
      %v1717 = vmax.f32 %v1157, %v1605
      %v1718 = vmax.f32 %v1158, %v1606
      %v1719 = vmax.f32 %v1159, %v1607
      %v1720 = vmax.f32 %v1160, %v1608
      %v1721 = vmax.f32 %v1161, %v1609
      %v1722 = vmax.f32 %v1162, %v1610
      %v1723 = vmax.f32 %v1163, %v1611
      %v1724 = vmax.f32 %v1164, %v1612
      %v1725 = vmax.f32 %v1165, %v1613
      %v1726 = vmax.f32 %v1166, %v1614
      %v1727 = vmax.f32 %v1167, %v1615
      %v1728 = vmax.f32 %v1168, %v1616
      %v1729 = vmax.f32 %v1169, %v1617
      %v1730 = vmax.f32 %v1170, %v1618
      %v1731 = vmax.f32 %v1171, %v1619
      %v1732 = vmax.f32 %v1172, %v1620
      %v1733 = vmax.f32 %v1173, %v1621
      %v1734 = vmax.f32 %v1174, %v1622
      %v1735 = vmax.f32 %v1175, %v1623
      %v1736 = vmax.f32 %v1176, %v1624
      %v1737 = vmax.f32 %v1177, %v1625
      %v1738 = vmax.f32 %v1178, %v1626
      %v1739 = vmax.f32 %v1179, %v1627
      %v1740 = vmax.f32 %v1180, %v1628
      %v1741 = vmax.f32 %v1181, %v1629
      %v1742 = vmax.f32 %v1182, %v1630
      %v1743 = vmax.f32 %v1183, %v1631
      %v1744 = vmax.f32 %v1184, %v1632
      %v1745 = vmax.f32 %v1185, %v1633
      %v1746 = vmax.f32 %v1186, %v1634
      %v1747 = vmax.f32 %v1187, %v1635
      %v1748 = vmax.f32 %v1188, %v1636
      %v1749 = vmax.f32 %v1189, %v1637
      %v1750 = vmax.f32 %v1190, %v1638
      %v1751 = vmax.f32 %v1191, %v1639
      %v1752 = vmax.f32 %v1192, %v1640
      %v1753 = vmax.f32 %v1193, %v1641
      %v1754 = vmax.f32 %v1194, %v1642
      %v1755 = vmax.f32 %v1195, %v1643
      %v1756 = vmax.f32 %v1196, %v1644
      %v1757 = vmax.f32 %v1197, %v1645
      %v1758 = vmax.f32 %v1198, %v1646
      %v1759 = vmax.f32 %v1199, %v1647
      %v1760 = vmax.f32 %v1200, %v1648
      %v1761 = vmax.f32 %v1201, %v1649
      %v1762 = vmax.f32 %v1202, %v1650
      %v1763 = vmax.f32 %v1203, %v1651
      %v1764 = vmax.f32 %v1204, %v1652
      %v1765 = vmax.f32 %v1205, %v1653
      %v1766 = vmax.f32 %v1206, %v1654
      %v1767 = vmax.f32 %v1207, %v1655
      %v1768 = vmax.f32 %v1208, %v1656
      %v1769 = vmax.f32 %v1209, %v1657
      %v1770 = vmax.f32 %v1210, %v1658
      %v1771 = vmax.f32 %v1211, %v1659
      %v1772 = vmax.f32 %v1212, %v1660
      %v1773 = vmax.f32 %v1213, %v1661
      %v1774 = vmax.f32 %v1214, %v1662
      %v1775 = vmax.f32 %v1215, %v1663
      %v1776 = vmax.f32 %v1216, %v1664
      %v1777 = vmax.f32 %v1217, %v1665
      %v1778 = vmax.f32 %v1218, %v1666
      %v1779 = vmax.f32 %v1219, %v1667
      %v1780 = vmax.f32 %v1220, %v1668
      %v1781 = vmax.f32 %v1221, %v1669
      %v1782 = vmax.f32 %v1222, %v1670
      %v1783 = vmax.f32 %v1223, %v1671
      %v1784 = vmax.f32 %v1224, %v1672
      %v1785 = vmax.f32 %v1225, %v1673
      %v1786 = vmax.f32 %v1226, %v1674
      %v1787 = vmax.f32 %v1227, %v1675
      %v1788 = vmax.f32 %v1228, %v1676
      %v1789 = vmax.f32 %v1229, %v1677
      %v1790 = vmax.f32 %v1230, %v1678
      %v1791 = vmax.f32 %v1231, %v1679
      %v1792 = vmax.f32 %v1232, %v1680
      %v1793 = vmax.f32 %v1233, %v1681
      %v1794 = vmax.f32 %v1234, %v1682
      %v1795 = vmax.f32 %v1235, %v1683
      %v1796 = vmax.f32 %v1236, %v1684
      %v1797 = vpack.c.bf16 %v1685, %v1685
      %v1798 = vpack.c.bf16 %v1686, %v1686
      %v1799 = vpack.c.bf16 %v1687, %v1687
      %v1800 = vpack.c.bf16 %v1688, %v1688
      %v1801 = vpack.c.bf16 %v1689, %v1689
      %v1802 = vpack.c.bf16 %v1690, %v1690
      %v1803 = vpack.c.bf16 %v1691, %v1691
      %v1804 = vpack.c.bf16 %v1692, %v1692
      %v1805 = vpack.c.bf16 %v1693, %v1693
      %v1806 = vpack.c.bf16 %v1694, %v1694
      %v1807 = vpack.c.bf16 %v1695, %v1695
      %v1808 = vpack.c.bf16 %v1696, %v1696
      %v1809 = vpack.c.bf16 %v1697, %v1697
      %v1810 = vpack.c.bf16 %v1698, %v1698
      %v1811 = vpack.c.bf16 %v1699, %v1699
      %v1812 = vpack.c.bf16 %v1700, %v1700
      %v1813 = vpack.c.bf16 %v1701, %v1701
      %v1814 = vpack.c.bf16 %v1702, %v1702
      %v1815 = vpack.c.bf16 %v1703, %v1703
      %v1816 = vpack.c.bf16 %v1704, %v1704
      %v1817 = vpack.c.bf16 %v1705, %v1705
      %v1818 = vpack.c.bf16 %v1706, %v1706
      %v1819 = vpack.c.bf16 %v1707, %v1707
      %v1820 = vpack.c.bf16 %v1708, %v1708
      %v1821 = vpack.c.bf16 %v1709, %v1709
      %v1822 = vpack.c.bf16 %v1710, %v1710
      %v1823 = vpack.c.bf16 %v1711, %v1711
      %v1824 = vpack.c.bf16 %v1712, %v1712
      %v1825 = vpack.c.bf16 %v1713, %v1713
      %v1826 = vpack.c.bf16 %v1714, %v1714
      %v1827 = vpack.c.bf16 %v1715, %v1715
      %v1828 = vpack.c.bf16 %v1716, %v1716
      %v1829 = vpack.c.bf16 %v1717, %v1717
      %v1830 = vpack.c.bf16 %v1718, %v1718
      %v1831 = vpack.c.bf16 %v1719, %v1719
      %v1832 = vpack.c.bf16 %v1720, %v1720
      %v1833 = vpack.c.bf16 %v1721, %v1721
      %v1834 = vpack.c.bf16 %v1722, %v1722
      %v1835 = vpack.c.bf16 %v1723, %v1723
      %v1836 = vpack.c.bf16 %v1724, %v1724
      %v1837 = vpack.c.bf16 %v1725, %v1725
      %v1838 = vpack.c.bf16 %v1726, %v1726
      %v1839 = vpack.c.bf16 %v1727, %v1727
      %v1840 = vpack.c.bf16 %v1728, %v1728
      %v1841 = vpack.c.bf16 %v1729, %v1729
      %v1842 = vpack.c.bf16 %v1730, %v1730
      %v1843 = vpack.c.bf16 %v1731, %v1731
      %v1844 = vpack.c.bf16 %v1732, %v1732
      %v1845 = vpack.c.bf16 %v1733, %v1733
      %v1846 = vpack.c.bf16 %v1734, %v1734
      %v1847 = vpack.c.bf16 %v1735, %v1735
      %v1848 = vpack.c.bf16 %v1736, %v1736
      %v1849 = vpack.c.bf16 %v1737, %v1737
      %v1850 = vpack.c.bf16 %v1738, %v1738
      %v1851 = vpack.c.bf16 %v1739, %v1739
      %v1852 = vpack.c.bf16 %v1740, %v1740
      %v1853 = vpack.c.bf16 %v1741, %v1741
      %v1854 = vpack.c.bf16 %v1742, %v1742
      %v1855 = vpack.c.bf16 %v1743, %v1743
      %v1856 = vpack.c.bf16 %v1744, %v1744
      %v1857 = vpack.c.bf16 %v1745, %v1745
      %v1858 = vpack.c.bf16 %v1746, %v1746
      %v1859 = vpack.c.bf16 %v1747, %v1747
      %v1860 = vpack.c.bf16 %v1748, %v1748
      %v1861 = vpack.c.bf16 %v1749, %v1749
      %v1862 = vpack.c.bf16 %v1750, %v1750
      %v1863 = vpack.c.bf16 %v1751, %v1751
      %v1864 = vpack.c.bf16 %v1752, %v1752
      %v1865 = vpack.c.bf16 %v1753, %v1753
      %v1866 = vpack.c.bf16 %v1754, %v1754
      %v1867 = vpack.c.bf16 %v1755, %v1755
      %v1868 = vpack.c.bf16 %v1756, %v1756
      %v1869 = vpack.c.bf16 %v1757, %v1757
      %v1870 = vpack.c.bf16 %v1758, %v1758
      %v1871 = vpack.c.bf16 %v1759, %v1759
      %v1872 = vpack.c.bf16 %v1760, %v1760
      %v1873 = vpack.c.bf16 %v1761, %v1761
      %v1874 = vpack.c.bf16 %v1762, %v1762
      %v1875 = vpack.c.bf16 %v1763, %v1763
      %v1876 = vpack.c.bf16 %v1764, %v1764
      %v1877 = vpack.c.bf16 %v1765, %v1765
      %v1878 = vpack.c.bf16 %v1766, %v1766
      %v1879 = vpack.c.bf16 %v1767, %v1767
      %v1880 = vpack.c.bf16 %v1768, %v1768
      %v1881 = vpack.c.bf16 %v1769, %v1769
      %v1882 = vpack.c.bf16 %v1770, %v1770
      %v1883 = vpack.c.bf16 %v1771, %v1771
      %v1884 = vpack.c.bf16 %v1772, %v1772
      %v1885 = vpack.c.bf16 %v1773, %v1773
      %v1886 = vpack.c.bf16 %v1774, %v1774
      %v1887 = vpack.c.bf16 %v1775, %v1775
      %v1888 = vpack.c.bf16 %v1776, %v1776
      %v1889 = vpack.c.bf16 %v1777, %v1777
      %v1890 = vpack.c.bf16 %v1778, %v1778
      %v1891 = vpack.c.bf16 %v1779, %v1779
      %v1892 = vpack.c.bf16 %v1780, %v1780
      %v1893 = vpack.c.bf16 %v1781, %v1781
      %v1894 = vpack.c.bf16 %v1782, %v1782
      %v1895 = vpack.c.bf16 %v1783, %v1783
      %v1896 = vpack.c.bf16 %v1784, %v1784
      %v1897 = vpack.c.bf16 %v1785, %v1785
      %v1898 = vpack.c.bf16 %v1786, %v1786
      %v1899 = vpack.c.bf16 %v1787, %v1787
      %v1900 = vpack.c.bf16 %v1788, %v1788
      %v1901 = vpack.c.bf16 %v1789, %v1789
      %v1902 = vpack.c.bf16 %v1790, %v1790
      %v1903 = vpack.c.bf16 %v1791, %v1791
      %v1904 = vpack.c.bf16 %v1792, %v1792
      %v1905 = vpack.c.bf16 %v1793, %v1793
      %v1906 = vpack.c.bf16 %v1794, %v1794
      %v1907 = vpack.c.bf16 %v1795, %v1795
      %v1908 = vpack.c.bf16 %v1796, %v1796
      %1909 = vst [vmem:[%s116] sm:$0xf] %v1797
      %1910 = vst [vmem:[%s116 + $0x4] sm:$0xf] %v1798
      %1911 = vst [vmem:[%s116 + $0x8] sm:$0xf] %v1799
      %1912 = vst [vmem:[%s116 + $0xc] sm:$0x3] %v1800
      %1913 = vst [vmem:[%s116 + $0x10] sm:$0xf] %v1801
      %1914 = vst [vmem:[%s116 + $0x14] sm:$0xf] %v1802
      %1915 = vst [vmem:[%s116 + $0x18] sm:$0xf] %v1803
      %1916 = vst [vmem:[%s116 + $0x1c] sm:$0x3] %v1804
      %1917 = vst [vmem:[%s116 + $0x20] sm:$0xf] %v1805
      %1918 = vst [vmem:[%s116 + $0x24] sm:$0xf] %v1806
      %1919 = vst [vmem:[%s116 + $0x28] sm:$0xf] %v1807
      %1920 = vst [vmem:[%s116 + $0x2c] sm:$0x3] %v1808
      %1921 = vst [vmem:[%s116 + $0x30] sm:$0xf] %v1809
      %1922 = vst [vmem:[%s116 + $0x34] sm:$0xf] %v1810
      %1923 = vst [vmem:[%s116 + $0x38] sm:$0xf] %v1811
      %1924 = vst [vmem:[%s116 + $0x3c] sm:$0x3] %v1812
      %1925 = vst [vmem:[%s116 + $0x40] sm:$0xf] %v1813
      %1926 = vst [vmem:[%s116 + $0x44] sm:$0xf] %v1814
      %1927 = vst [vmem:[%s116 + $0x48] sm:$0xf] %v1815
      %1928 = vst [vmem:[%s116 + $0x4c] sm:$0x3] %v1816
      %1929 = vst [vmem:[%s116 + $0x50] sm:$0xf] %v1817
      %1930 = vst [vmem:[%s116 + $0x54] sm:$0xf] %v1818
      %1931 = vst [vmem:[%s116 + $0x58] sm:$0xf] %v1819
      %1932 = vst [vmem:[%s116 + $0x5c] sm:$0x3] %v1820
      %1933 = vst [vmem:[%s116 + $0x60] sm:$0xf] %v1821
      %1934 = vst [vmem:[%s116 + $0x64] sm:$0xf] %v1822
      %1935 = vst [vmem:[%s116 + $0x68] sm:$0xf] %v1823
      %1936 = vst [vmem:[%s116 + $0x6c] sm:$0x3] %v1824
      %1937 = vst [vmem:[%s116 + $0x70] sm:$0xf] %v1825
      %1938 = vst [vmem:[%s116 + $0x74] sm:$0xf] %v1826
      %1939 = vst [vmem:[%s116 + $0x78] sm:$0xf] %v1827
      %1940 = vst [vmem:[%s116 + $0x7c] sm:$0x3] %v1828
      %1941 = vst [vmem:[%s116 + $0x80] sm:$0xf] %v1829
      %1942 = vst [vmem:[%s116 + $0x84] sm:$0xf] %v1830
      %1943 = vst [vmem:[%s116 + $0x88] sm:$0xf] %v1831
      %1944 = vst [vmem:[%s116 + $0x8c] sm:$0x3] %v1832
      %1945 = vst [vmem:[%s116 + $0x90] sm:$0xf] %v1833
      %1946 = vst [vmem:[%s116 + $0x94] sm:$0xf] %v1834
      %1947 = vst [vmem:[%s116 + $0x98] sm:$0xf] %v1835
      %1948 = vst [vmem:[%s116 + $0x9c] sm:$0x3] %v1836
      %1949 = vst [vmem:[%s116 + $0xa0] sm:$0xf] %v1837
      %1950 = vst [vmem:[%s116 + $0xa4] sm:$0xf] %v1838
      %1951 = vst [vmem:[%s116 + $0xa8] sm:$0xf] %v1839
      %1952 = vst [vmem:[%s116 + $0xac] sm:$0x3] %v1840
      %1953 = vst [vmem:[%s116 + $0xb0] sm:$0xf] %v1841
      %1954 = vst [vmem:[%s116 + $0xb4] sm:$0xf] %v1842
      %1955 = vst [vmem:[%s116 + $0xb8] sm:$0xf] %v1843
      %1956 = vst [vmem:[%s116 + $0xbc] sm:$0x3] %v1844
      %1957 = vst [vmem:[%s116 + $0xc0] sm:$0xf] %v1845
      %1958 = vst [vmem:[%s116 + $0xc4] sm:$0xf] %v1846
      %1959 = vst [vmem:[%s116 + $0xc8] sm:$0xf] %v1847
      %1960 = vst [vmem:[%s116 + $0xcc] sm:$0x3] %v1848
      %1961 = vst [vmem:[%s116 + $0xd0] sm:$0xf] %v1849
      %1962 = vst [vmem:[%s116 + $0xd4] sm:$0xf] %v1850
      %1963 = vst [vmem:[%s116 + $0xd8] sm:$0xf] %v1851
      %1964 = vst [vmem:[%s116 + $0xdc] sm:$0x3] %v1852
      %1965 = vst [vmem:[%s116 + $0xe0] sm:$0xf] %v1853
      %1966 = vst [vmem:[%s116 + $0xe4] sm:$0xf] %v1854
      %1967 = vst [vmem:[%s116 + $0xe8] sm:$0xf] %v1855
      %1968 = vst [vmem:[%s116 + $0xec] sm:$0x3] %v1856
      %1969 = vst [vmem:[%s116 + $0xf0] sm:$0xf] %v1857
      %1970 = vst [vmem:[%s116 + $0xf4] sm:$0xf] %v1858
      %1971 = vst [vmem:[%s116 + $0xf8] sm:$0xf] %v1859
      %1972 = vst [vmem:[%s116 + $0xfc] sm:$0x3] %v1860
      %1973 = vst [vmem:[%s116 + $0x100] sm:$0xf] %v1861
      %1974 = vst [vmem:[%s116 + $0x104] sm:$0xf] %v1862
      %1975 = vst [vmem:[%s116 + $0x108] sm:$0xf] %v1863
      %1976 = vst [vmem:[%s116 + $0x10c] sm:$0x3] %v1864
      %1977 = vst [vmem:[%s116 + $0x110] sm:$0xf] %v1865
      %1978 = vst [vmem:[%s116 + $0x114] sm:$0xf] %v1866
      %1979 = vst [vmem:[%s116 + $0x118] sm:$0xf] %v1867
      %1980 = vst [vmem:[%s116 + $0x11c] sm:$0x3] %v1868
      %1981 = vst [vmem:[%s116 + $0x120] sm:$0xf] %v1869
      %1982 = vst [vmem:[%s116 + $0x124] sm:$0xf] %v1870
      %1983 = vst [vmem:[%s116 + $0x128] sm:$0xf] %v1871
      %1984 = vst [vmem:[%s116 + $0x12c] sm:$0x3] %v1872
      %1985 = vst [vmem:[%s116 + $0x130] sm:$0xf] %v1873
      %1986 = vst [vmem:[%s116 + $0x134] sm:$0xf] %v1874
      %1987 = vst [vmem:[%s116 + $0x138] sm:$0xf] %v1875
      %1988 = vst [vmem:[%s116 + $0x13c] sm:$0x3] %v1876
      %1989 = vst [vmem:[%s116 + $0x140] sm:$0xf] %v1877
      %1990 = vst [vmem:[%s116 + $0x144] sm:$0xf] %v1878
      %1991 = vst [vmem:[%s116 + $0x148] sm:$0xf] %v1879
      %1992 = vst [vmem:[%s116 + $0x14c] sm:$0x3] %v1880
      %1993 = vst [vmem:[%s116 + $0x150] sm:$0xf] %v1881
      %1994 = vst [vmem:[%s116 + $0x154] sm:$0xf] %v1882
      %1995 = vst [vmem:[%s116 + $0x158] sm:$0xf] %v1883
      %1996 = vst [vmem:[%s116 + $0x15c] sm:$0x3] %v1884
      %1997 = vst [vmem:[%s116 + $0x160] sm:$0xf] %v1885
      %1998 = vst [vmem:[%s116 + $0x164] sm:$0xf] %v1886
      %1999 = vst [vmem:[%s116 + $0x168] sm:$0xf] %v1887
      %2000 = vst [vmem:[%s116 + $0x16c] sm:$0x3] %v1888
      %2001 = vst [vmem:[%s116 + $0x170] sm:$0xf] %v1889
      %2002 = vst [vmem:[%s116 + $0x174] sm:$0xf] %v1890
      %2003 = vst [vmem:[%s116 + $0x178] sm:$0xf] %v1891
      %2004 = vst [vmem:[%s116 + $0x17c] sm:$0x3] %v1892
      %2005 = vst [vmem:[%s116 + $0x180] sm:$0xf] %v1893
      %2006 = vst [vmem:[%s116 + $0x184] sm:$0xf] %v1894
      %2007 = vst [vmem:[%s116 + $0x188] sm:$0xf] %v1895
      %2008 = vst [vmem:[%s116 + $0x18c] sm:$0x3] %v1896
      %2009 = vst [vmem:[%s116 + $0x190] sm:$0xf] %v1897
      %2010 = vst [vmem:[%s116 + $0x194] sm:$0xf] %v1898
      %2011 = vst [vmem:[%s116 + $0x198] sm:$0xf] %v1899
      %2012 = vst [vmem:[%s116 + $0x19c] sm:$0x3] %v1900
      %2013 = vst [vmem:[%s116 + $0x1a0] sm:$0xf] %v1901
      %2014 = vst [vmem:[%s116 + $0x1a4] sm:$0xf] %v1902
      %2015 = vst [vmem:[%s116 + $0x1a8] sm:$0xf] %v1903
      %2016 = vst [vmem:[%s116 + $0x1ac] sm:$0x3] %v1904
      %2017 = vst [vmem:[%s116 + $0x1b0] sm:$0xf] %v1905
      %2018 = vst [vmem:[%s116 + $0x1b4] sm:$0xf] %v1906
      %2019 = vst [vmem:[%s116 + $0x1b8] sm:$0xf] %v1907
      %2020 = vst [vmem:[%s116 + $0x1bc] sm:$0x3] %v1908
      %p2021 = scmp.lt.s32.totalorder %s12, 1
      %s2022 = scalar_select %p2021, %s12, 1
      %s2023 = smul.addr %s2022, 112
      %s2024 = smul.addr %s2023, 4
      %s2025 = scalar_lea.vmem %s1, %s2024
      // Predicated region
      $region25: #{cnn_forward.6} parent=23 // pred_check
        %p2026 = pneg %p56
      $region26: #{cnn_forward.6} parent=23 // pred_check_branch
        %2028 = sbr.rel (%p2026) target = $region28
      $region27: #{cnn_forward.6} parent=23 // pred_region
        _
      $region28: #{cnn_forward.6} parent=23 // pred_fallthru
        _
    $region24: #{cnn_forward.6} parent=5 // pred_fallthru
      _
    %p2029 = scmp.le.s32.totalorder 2, %s7
    // Predicated region
    $region29: #{cnn_forward.6} parent=5 // pred_check
      %p2030 = pneg %p2029
    $region30: #{cnn_forward.6} parent=5 // pred_check_branch
      %2032 = sbr.rel (%p2030) target = $region32
    $region31: #{cnn_forward.6} parent=5 // pred_region
      %s2033 = ssub.s32 %s7, 2
      // Predicated region
      $region33: #{cnn_forward.6} parent=31 // pred_check
        %p2034 = pneg %p62
      $region34: #{cnn_forward.6} parent=31 // pred_check_branch
        %2036 = sbr.rel (%p2034) target = $region36
      $region35: #{cnn_forward.6} parent=31 // pred_region
        %p2037 = scmp.lt.s32.totalorder %s13, 1
        %s2038 = scalar_select %p2037, %s13, 1
        %s2039 = smul.addr %s2038, 112
        %s2040 = smul.addr %s2039, 4
        %s2041 = scalar_lea.vmem %s1, %s2040
      $region36: #{cnn_forward.6} parent=31 // pred_fallthru
        _
    $region32: #{cnn_forward.6} parent=5 // pred_fallthru
      _
  $region6: #{cnn_forward.6} parent=0 // loop_footer
    %s11 = sadd.s32 1, %s7
  $region7: #{cnn_forward.6} parent=0 // loop_footer_branch
    %6 = sbr.rel target = $region3
  $region8: #{cnn_forward.6} parent=0 // loop_exit
    _

// kernel: cnn_forward.7
$region0: #{cnn_forward.7}
  #allocation0 [shape = 'u32[]', space=smem, size = 0x4, offset = 0x4, fixed_abs, tag = 'smem constant byte address 0x4 - core index']
  #allocation1 [shape = 'u32[72,128]{1,0:T(1,128)}', space=vmem, size = 0x9000, scoped, tag = 'internal scratch']
  %s0 = inlined_call_operand.vmem [shape: bf16[384,1152], index: 0, kind: input, shape index: {}]
  %s1 = inlined_call_operand.vmem [shape: bf16[1152,128], index: 1, kind: input, shape index: {}]
  %s2 = inlined_call_operand.vmem [shape: f32[1,128], index: 2, kind: input, shape index: {}]
  %s3 = inlined_call_operand.vmem [shape: bf16[384,128], index: 3, kind: output, shape index: {}]
  %s4 = sld [smem:[#allocation0]]
  $region45: #{cnn_forward.7} parent=0
    _
  %s6 = ssub.s32 1, %s4
  %s7 = scalar_select 0, %s6, %s4
  loop: start=0, step=1, limit=4
  $region2: #{cnn_forward.7} parent=0 // loop_pre_header
    _
  $region3: #{cnn_forward.7} parent=0 // loop_header
    %s9 = sphi 0, %s13
    %p10 = scmp.ge.s32.totalorder %s9, 4
    %s19 = sphi 0, %s21
    %s22 = sphi 0, %s19
    %s23 = sphi 0, %s22
    %s39 = sphi 0, %s23
    %s43 = sphi 0, %s43
    %s45 = sphi 0, %s43
    %s46 = sphi 0, %s45
    %s60 = sphi 0, %s46
    %s64 = sphi 0, %s64
    %s66 = sphi 0, %s64
    %s67 = sphi 0, %s66
    %s81 = sphi 0, %s67
    %s87 = sphi 0, %s89
    %s90 = sphi 0, %s87
    %s91 = sphi 0, %s90
    %s107 = sphi 0, %s91
  $region4: #{cnn_forward.7} parent=0 // loop_header_branch
    %12 = sbr.rel (%p10) target = $region8
  $region5: #{cnn_forward.7} parent=0 // loop_body
    %s14 = ssub.s32 %s9, 1
    %s15 = ssub.s32 %s9, 2
    %s16 = sadd.s32 %s9, 1
    %s17 = ssub.s32 %s9, %s16
    %p18 = scmp.eq.s32.totalorder %s17, 0
    %s20 = sadd.s32 %s19, 1
    %s21 = scalar_select %p18, %s19, %s20
    %p24 = pneg %p18
    %p25 = scmp.eq.s32.totalorder %s9, 1
    %p26 = por %p24, %p25
    %p27 = scmp.ne.s32.totalorder %s19, %s22
    %p28 = scmp.eq.s32.totalorder %s9, 0
    %p29 = por %p27, %p28
    %p30 = scmp.ne.s32.totalorder %s19, %s22
    %p31 = scmp.eq.s32.totalorder %s14, 1
    %p32 = por %p30, %p31
    %p33 = scmp.ne.s32.totalorder %s22, %s23
    %p34 = scmp.eq.s32.totalorder %s14, 0
    %p35 = por %p33, %p34
    %p36 = scmp.ne.s32.totalorder %s22, %s23
    %p37 = scmp.eq.s32.totalorder %s15, 1
    %p38 = por %p36, %p37
    %p40 = scmp.ne.s32.totalorder %s23, %s39
    %p41 = scmp.eq.s32.totalorder %s15, 0
    %p42 = por %p40, %p41
    %s44 = sadd.s32 %s43, 1
    %p47 = scmp.eq.s32.totalorder %s9, 1
    %p48 = scmp.ne.s32.totalorder %s43, %s45
    %p49 = scmp.eq.s32.totalorder %s9, 0
    %p50 = por %p48, %p49
    %p51 = scmp.ne.s32.totalorder %s43, %s45
    %p52 = scmp.eq.s32.totalorder %s14, 1
    %p53 = por %p51, %p52
    %p54 = scmp.ne.s32.totalorder %s45, %s46
    %p55 = scmp.eq.s32.totalorder %s14, 0
    %p56 = por %p54, %p55
    %p57 = scmp.ne.s32.totalorder %s45, %s46
    %p58 = scmp.eq.s32.totalorder %s15, 1
    %p59 = por %p57, %p58
    %p61 = scmp.ne.s32.totalorder %s46, %s60
    %p62 = scmp.eq.s32.totalorder %s15, 0
    %p63 = por %p61, %p62
    %s65 = sadd.s32 %s64, 1
    %p68 = scmp.eq.s32.totalorder %s9, 1
    %p69 = scmp.ne.s32.totalorder %s64, %s66
    %p70 = scmp.eq.s32.totalorder %s9, 0
    %p71 = por %p69, %p70
    %p72 = scmp.ne.s32.totalorder %s64, %s66
    %p73 = scmp.eq.s32.totalorder %s14, 1
    %p74 = por %p72, %p73
    %p75 = scmp.ne.s32.totalorder %s66, %s67
    %p76 = scmp.eq.s32.totalorder %s14, 0
    %p77 = por %p75, %p76
    %p78 = scmp.ne.s32.totalorder %s66, %s67
    %p79 = scmp.eq.s32.totalorder %s15, 1
    %p80 = por %p78, %p79
    %p82 = scmp.ne.s32.totalorder %s67, %s81
    %p83 = scmp.eq.s32.totalorder %s15, 0
    %p84 = por %p82, %p83
    %s85 = ssub.s32 %s9, %s16
    %p86 = scmp.eq.s32.totalorder %s85, 0
    %s88 = sadd.s32 %s87, 1
    %s89 = scalar_select %p86, %s87, %s88
    %p92 = pneg %p86
    %p93 = scmp.eq.s32.totalorder %s9, 1
    %p94 = por %p92, %p93
    %p95 = scmp.ne.s32.totalorder %s87, %s90
    %p96 = scmp.eq.s32.totalorder %s9, 0
    %p97 = por %p95, %p96
    %p98 = scmp.ne.s32.totalorder %s87, %s90
    %p99 = scmp.eq.s32.totalorder %s14, 1
    %p100 = por %p98, %p99
    %p101 = scmp.ne.s32.totalorder %s90, %s91
    %p102 = scmp.eq.s32.totalorder %s14, 0
    %p103 = por %p101, %p102
    %p104 = scmp.ne.s32.totalorder %s90, %s91
    %p105 = scmp.eq.s32.totalorder %s15, 1
    %p106 = por %p104, %p105
    %p108 = scmp.ne.s32.totalorder %s91, %s107
    %p109 = scmp.eq.s32.totalorder %s15, 0
    %p110 = por %p108, %p109
    %p111 = scmp.le.s32.totalorder 1, %s9
    %p112 = scmp.lt.s32.totalorder %s9, 3
    %p113 = pnand %p111, %p112
    %p114 = pneg %p113
    // Predicated region
    $region9: #{cnn_forward.7} parent=5 // pred_check
      _
    $region10: #{cnn_forward.7} parent=5 // pred_check_branch
      %116 = sbr.rel (%p113) target = $region12
    $region11: #{cnn_forward.7} parent=5 // pred_region
      %s117 = ssub.s32 %s9, 1
      // Predicated region
      $region13: #{cnn_forward.7} parent=11 // pred_check
        %p118 = pneg %p56
      $region14: #{cnn_forward.7} parent=11 // pred_check_branch
        %120 = sbr.rel (%p118) target = $region16
      $region15: #{cnn_forward.7} parent=11 // pred_region
        _
      $region16: #{cnn_forward.7} parent=11 // pred_fallthru
        _
      // Predicated region
      $region17: #{cnn_forward.7} parent=11 // pred_check
        %p121 = pneg %p77
      $region18: #{cnn_forward.7} parent=11 // pred_check_branch
        %123 = sbr.rel (%p121) target = $region20
      $region19: #{cnn_forward.7} parent=11 // pred_region
        _
      $region20: #{cnn_forward.7} parent=11 // pred_fallthru
        _
    $region12: #{cnn_forward.7} parent=5 // pred_fallthru
      _
    %p124 = scmp.lt.s32.totalorder %s9, 2
    // Predicated region
    $region21: #{cnn_forward.7} parent=5 // pred_check
      %p125 = pneg %p124
    $region22: #{cnn_forward.7} parent=5 // pred_check_branch
      %127 = sbr.rel (%p125) target = $region24
    $region23: #{cnn_forward.7} parent=5 // pred_region
      // Predicated region
      $region25: #{cnn_forward.7} parent=23 // pred_check
        %p128 = pneg %p29
      $region26: #{cnn_forward.7} parent=23 // pred_check_branch
        %130 = sbr.rel (%p128) target = $region28
      $region27: #{cnn_forward.7} parent=23 // pred_region
        %s131 = smul.u32 24, %s9
        %p132 = scmp.lt.s32.totalorder %s131, 47
        %s133 = scalar_select %p132, %s131, 47
        %s134 = smul.addr %s133, 9
        %s135 = smul.addr %s134, 4
        %s136 = scalar_lea.vmem %s0, %s135
        %s137 = smul.u32 24, %s9
      $region28: #{cnn_forward.7} parent=23 // pred_fallthru
        _
    $region24: #{cnn_forward.7} parent=5 // pred_fallthru
      _
    %p138 = scmp.le.s32.totalorder 1, %s9
    %p139 = scmp.lt.s32.totalorder %s9, 3
    %p140 = pnand %p138, %p139
    %p141 = pneg %p140
    // Predicated region
    $region29: #{cnn_forward.7} parent=5 // pred_check
      _
    $region30: #{cnn_forward.7} parent=5 // pred_check_branch
      %143 = sbr.rel (%p140) target = $region32
    $region31: #{cnn_forward.7} parent=5 // pred_region
      %s144 = ssub.s32 %s9, 1
      %s145 = smul.u32 24, %s14
      %p146 = scmp.lt.s32.totalorder %s145, 47
      %s147 = scalar_select %p146, %s145, 47
      %s148 = smul.addr %s147, 9
      %s149 = smul.addr %s148, 4
      %s150 = scalar_lea.vmem %s0, %s149
      %p151 = pneg %p35
      %p152 = pneg %p32
      %p153 = pneg %p56
      %p154 = pneg %p53
      %p155 = pneg %p77
      %p156 = pneg %p74
      %p157 = pneg %p103
      %p158 = pneg %p100
      %s159 = smul.u32 24, %s14
      %p160 = scmp.lt.s32.totalorder %s159, 47
      %s161 = scalar_select %p160, %s159, 47
      %s162 = smul.addr %s161, 4
      %s163 = scalar_lea.vmem %s3, %s162
      %s164 = smul.u32 24, %s14
      %p165 = scmp.lt.s32.totalorder %s164, 47
      %s166 = scalar_select %p165, %s164, 47
      %s167 = smul.addr %s166, 9
      %s168 = smul.addr %s167, 4
      %s169 = scalar_lea.vmem %s0, %s168
      %s170 = smul.u32 24, %s14
      %s171 = smul.u32 24, %s14
      %p172 = scmp.lt.s32.totalorder %s171, 47
      %s173 = scalar_select %p172, %s171, 47
      %s174 = smul.addr %s173, 4
      %s175 = scalar_lea.vmem %s3, %s174
      %s176 = smul.u32 24, %s14
      %v177 = vld [vmem:[%s169] sm:$0xff]
      %v178 = vld [vmem:[%s169 + $0x8] sm:$0xff]
      %v179 = vld [vmem:[%s169 + $0x10] sm:$0xff]
      %v180 = vld [vmem:[%s169 + $0x18] sm:$0xff]
      %v181 = vld [vmem:[%s169 + $0x20] sm:$0xf]
      %v182 = vld [vmem:[%s169 + $0x24] sm:$0xff]
      %v183 = vld [vmem:[%s169 + $0x2c] sm:$0xff]
      %v184 = vld [vmem:[%s169 + $0x34] sm:$0xff]
      %v185 = vld [vmem:[%s169 + $0x3c] sm:$0xff]
      %v186 = vld [vmem:[%s169 + $0x44] sm:$0xf]
      %v187 = vld [vmem:[%s169 + $0x48] sm:$0xff]
      %v188 = vld [vmem:[%s169 + $0x50] sm:$0xff]
      %v189 = vld [vmem:[%s169 + $0x58] sm:$0xff]
      %v190 = vld [vmem:[%s169 + $0x60] sm:$0xff]
      %v191 = vld [vmem:[%s169 + $0x68] sm:$0xf]
      %v192 = vld [vmem:[%s169 + $0x6c] sm:$0xff]
      %v193 = vld [vmem:[%s169 + $0x74] sm:$0xff]
      %v194 = vld [vmem:[%s169 + $0x7c] sm:$0xff]
      %v195 = vld [vmem:[%s169 + $0x84] sm:$0xff]
      %v196 = vld [vmem:[%s169 + $0x8c] sm:$0xf]
      %v197 = vld [vmem:[%s169 + $0x90] sm:$0xff]
      %v198 = vld [vmem:[%s169 + $0x98] sm:$0xff]
      %v199 = vld [vmem:[%s169 + $0xa0] sm:$0xff]
      %v200 = vld [vmem:[%s169 + $0xa8] sm:$0xff]
      %v201 = vld [vmem:[%s169 + $0xb0] sm:$0xf]
      %v202 = vld [vmem:[%s169 + $0xb4] sm:$0xff]
      %v203 = vld [vmem:[%s169 + $0xbc] sm:$0xff]
      %v204 = vld [vmem:[%s169 + $0xc4] sm:$0xff]
      %v205 = vld [vmem:[%s169 + $0xcc] sm:$0xff]
      %v206 = vld [vmem:[%s169 + $0xd4] sm:$0xf]
      %v207 = vld [vmem:[%s169 + $0xd8] sm:$0xff]
      %v208 = vld [vmem:[%s169 + $0xe0] sm:$0xff]
      %v209 = vld [vmem:[%s169 + $0xe8] sm:$0xff]
      %v210 = vld [vmem:[%s169 + $0xf0] sm:$0xff]
      %v211 = vld [vmem:[%s169 + $0xf8] sm:$0xf]
      %v212 = vld [vmem:[%s169 + $0xfc] sm:$0xff]
      %v213 = vld [vmem:[%s169 + $0x104] sm:$0xff]
      %v214 = vld [vmem:[%s169 + $0x10c] sm:$0xff]
      %v215 = vld [vmem:[%s169 + $0x114] sm:$0xff]
      %v216 = vld [vmem:[%s169 + $0x11c] sm:$0xf]
      %v217 = vld [vmem:[%s169 + $0x120] sm:$0xff]
      %v218 = vld [vmem:[%s169 + $0x128] sm:$0xff]
      %v219 = vld [vmem:[%s169 + $0x130] sm:$0xff]
      %v220 = vld [vmem:[%s169 + $0x138] sm:$0xff]
      %v221 = vld [vmem:[%s169 + $0x140] sm:$0xf]
      %v222 = vld [vmem:[%s169 + $0x144] sm:$0xff]
      %v223 = vld [vmem:[%s169 + $0x14c] sm:$0xff]
      %v224 = vld [vmem:[%s169 + $0x154] sm:$0xff]
      %v225 = vld [vmem:[%s169 + $0x15c] sm:$0xff]
      %v226 = vld [vmem:[%s169 + $0x164] sm:$0xf]
      %v227 = vld [vmem:[%s169 + $0x168] sm:$0xff]
      %v228 = vld [vmem:[%s169 + $0x170] sm:$0xff]
      %v229 = vld [vmem:[%s169 + $0x178] sm:$0xff]
      %v230 = vld [vmem:[%s169 + $0x180] sm:$0xff]
      %v231 = vld [vmem:[%s169 + $0x188] sm:$0xf]
      %v232 = vld [vmem:[%s169 + $0x18c] sm:$0xff]
      %v233 = vld [vmem:[%s169 + $0x194] sm:$0xff]
      %v234 = vld [vmem:[%s169 + $0x19c] sm:$0xff]
      %v235 = vld [vmem:[%s169 + $0x1a4] sm:$0xff]
      %v236 = vld [vmem:[%s169 + $0x1ac] sm:$0xf]
      %v237 = vld [vmem:[%s169 + $0x1b0] sm:$0xff]
      %v238 = vld [vmem:[%s169 + $0x1b8] sm:$0xff]
      %v239 = vld [vmem:[%s169 + $0x1c0] sm:$0xff]
      %v240 = vld [vmem:[%s169 + $0x1c8] sm:$0xff]
      %v241 = vld [vmem:[%s169 + $0x1d0] sm:$0xf]
      %v242 = vld [vmem:[%s169 + $0x1d4] sm:$0xff]
      %v243 = vld [vmem:[%s169 + $0x1dc] sm:$0xff]
      %v244 = vld [vmem:[%s169 + $0x1e4] sm:$0xff]
      %v245 = vld [vmem:[%s169 + $0x1ec] sm:$0xff]
      %v246 = vld [vmem:[%s169 + $0x1f4] sm:$0xf]
      %v247 = vld [vmem:[%s169 + $0x1f8] sm:$0xff]
      %v248 = vld [vmem:[%s169 + $0x200] sm:$0xff]
      %v249 = vld [vmem:[%s169 + $0x208] sm:$0xff]
      %v250 = vld [vmem:[%s169 + $0x210] sm:$0xff]
      %v251 = vld [vmem:[%s169 + $0x218] sm:$0xf]
      %v252 = vld [vmem:[%s169 + $0x21c] sm:$0xff]
      %v253 = vld [vmem:[%s169 + $0x224] sm:$0xff]
      %v254 = vld [vmem:[%s169 + $0x22c] sm:$0xff]
      %v255 = vld [vmem:[%s169 + $0x234] sm:$0xff]
      %v256 = vld [vmem:[%s169 + $0x23c] sm:$0xf]
      %v257 = vld [vmem:[%s169 + $0x240] sm:$0xff]
      %v258 = vld [vmem:[%s169 + $0x248] sm:$0xff]
      %v259 = vld [vmem:[%s169 + $0x250] sm:$0xff]
      %v260 = vld [vmem:[%s169 + $0x258] sm:$0xff]
      %v261 = vld [vmem:[%s169 + $0x260] sm:$0xf]
      %v262 = vld [vmem:[%s169 + $0x264] sm:$0xff]
      %v263 = vld [vmem:[%s169 + $0x26c] sm:$0xff]
      %v264 = vld [vmem:[%s169 + $0x274] sm:$0xff]
      %v265 = vld [vmem:[%s169 + $0x27c] sm:$0xff]
      %v266 = vld [vmem:[%s169 + $0x284] sm:$0xf]
      %v267 = vld [vmem:[%s169 + $0x288] sm:$0xff]
      %v268 = vld [vmem:[%s169 + $0x290] sm:$0xff]
      %v269 = vld [vmem:[%s169 + $0x298] sm:$0xff]
      %v270 = vld [vmem:[%s169 + $0x2a0] sm:$0xff]
      %v271 = vld [vmem:[%s169 + $0x2a8] sm:$0xf]
      %v272 = vld [vmem:[%s169 + $0x2ac] sm:$0xff]
      %v273 = vld [vmem:[%s169 + $0x2b4] sm:$0xff]
      %v274 = vld [vmem:[%s169 + $0x2bc] sm:$0xff]
      %v275 = vld [vmem:[%s169 + $0x2c4] sm:$0xff]
      %v276 = vld [vmem:[%s169 + $0x2cc] sm:$0xf]
      %v277 = vld [vmem:[%s169 + $0x2d0] sm:$0xff]
      %v278 = vld [vmem:[%s169 + $0x2d8] sm:$0xff]
      %v279 = vld [vmem:[%s169 + $0x2e0] sm:$0xff]
      %v280 = vld [vmem:[%s169 + $0x2e8] sm:$0xff]
      %v281 = vld [vmem:[%s169 + $0x2f0] sm:$0xf]
      %v282 = vld [vmem:[%s169 + $0x2f4] sm:$0xff]
      %v283 = vld [vmem:[%s169 + $0x2fc] sm:$0xff]
      %v284 = vld [vmem:[%s169 + $0x304] sm:$0xff]
      %v285 = vld [vmem:[%s169 + $0x30c] sm:$0xff]
      %v286 = vld [vmem:[%s169 + $0x314] sm:$0xf]
      %v287 = vld [vmem:[%s169 + $0x318] sm:$0xff]
      %v288 = vld [vmem:[%s169 + $0x320] sm:$0xff]
      %v289 = vld [vmem:[%s169 + $0x328] sm:$0xff]
      %v290 = vld [vmem:[%s169 + $0x330] sm:$0xff]
      %v291 = vld [vmem:[%s169 + $0x338] sm:$0xf]
      %v292 = vld [vmem:[%s169 + $0x33c] sm:$0xff]
      %v293 = vld [vmem:[%s169 + $0x344] sm:$0xff]
      %v294 = vld [vmem:[%s169 + $0x34c] sm:$0xff]
      %v295 = vld [vmem:[%s169 + $0x354] sm:$0xff]
      %v296 = vld [vmem:[%s169 + $0x35c] sm:$0xf]
      %v297 = vld [vmem:[%s1] sm:$0xf]
      %v298 = vld [vmem:[%s1 + $0x4] sm:$0xf]
      %v299 = vld [vmem:[%s1 + $0x8] sm:$0xf]
      %v300 = vld [vmem:[%s1 + $0xc] sm:$0xf]
      %v301 = vld [vmem:[%s1 + $0x10] sm:$0xf]
      %v302 = vld [vmem:[%s1 + $0x14] sm:$0xf]
      %v303 = vld [vmem:[%s1 + $0x18] sm:$0xf]
      %v304 = vld [vmem:[%s1 + $0x1c] sm:$0xf]
      %v305 = vld [vmem:[%s1 + $0x20] sm:$0xf]
      %v306 = vld [vmem:[%s1 + $0x24] sm:$0xf]
      %v307 = vld [vmem:[%s1 + $0x28] sm:$0xf]
      %v308 = vld [vmem:[%s1 + $0x2c] sm:$0xf]
      %v309 = vld [vmem:[%s1 + $0x30] sm:$0xf]
      %v310 = vld [vmem:[%s1 + $0x34] sm:$0xf]
      %v311 = vld [vmem:[%s1 + $0x38] sm:$0xf]
      %v312 = vld [vmem:[%s1 + $0x3c] sm:$0xf]
      %v313 = vld [vmem:[%s1 + $0x40] sm:$0xf]
      %v314 = vld [vmem:[%s1 + $0x44] sm:$0xf]
      %v315 = vld [vmem:[%s1 + $0x48] sm:$0xf]
      %v316 = vld [vmem:[%s1 + $0x4c] sm:$0xf]
      %v317 = vld [vmem:[%s1 + $0x50] sm:$0xf]
      %v318 = vld [vmem:[%s1 + $0x54] sm:$0xf]
      %v319 = vld [vmem:[%s1 + $0x58] sm:$0xf]
      %v320 = vld [vmem:[%s1 + $0x5c] sm:$0xf]
      %v321 = vld [vmem:[%s1 + $0x60] sm:$0xf]
      %v322 = vld [vmem:[%s1 + $0x64] sm:$0xf]
      %v323 = vld [vmem:[%s1 + $0x68] sm:$0xf]
      %v324 = vld [vmem:[%s1 + $0x6c] sm:$0xf]
      %v325 = vld [vmem:[%s1 + $0x70] sm:$0xf]
      %v326 = vld [vmem:[%s1 + $0x74] sm:$0xf]
      %v327 = vld [vmem:[%s1 + $0x78] sm:$0xf]
      %v328 = vld [vmem:[%s1 + $0x7c] sm:$0xf]
      %v329 = vld [vmem:[%s1 + $0x80] sm:$0xf]
      %v330 = vld [vmem:[%s1 + $0x84] sm:$0xf]
      %v331 = vld [vmem:[%s1 + $0x88] sm:$0xf]
      %v332 = vld [vmem:[%s1 + $0x8c] sm:$0xf]
      %v333 = vld [vmem:[%s1 + $0x90] sm:$0xf]
      %v334 = vld [vmem:[%s1 + $0x94] sm:$0xf]
      %v335 = vld [vmem:[%s1 + $0x98] sm:$0xf]
      %v336 = vld [vmem:[%s1 + $0x9c] sm:$0xf]
      %v337 = vld [vmem:[%s1 + $0xa0] sm:$0xf]
      %v338 = vld [vmem:[%s1 + $0xa4] sm:$0xf]
      %v339 = vld [vmem:[%s1 + $0xa8] sm:$0xf]
      %v340 = vld [vmem:[%s1 + $0xac] sm:$0xf]
      %v341 = vld [vmem:[%s1 + $0xb0] sm:$0xf]
      %v342 = vld [vmem:[%s1 + $0xb4] sm:$0xf]
      %v343 = vld [vmem:[%s1 + $0xb8] sm:$0xf]
      %v344 = vld [vmem:[%s1 + $0xbc] sm:$0xf]
      %v345 = vld [vmem:[%s1 + $0xc0] sm:$0xf]
      %v346 = vld [vmem:[%s1 + $0xc4] sm:$0xf]
      %v347 = vld [vmem:[%s1 + $0xc8] sm:$0xf]
      %v348 = vld [vmem:[%s1 + $0xcc] sm:$0xf]
      %v349 = vld [vmem:[%s1 + $0xd0] sm:$0xf]
      %v350 = vld [vmem:[%s1 + $0xd4] sm:$0xf]
      %v351 = vld [vmem:[%s1 + $0xd8] sm:$0xf]
      %v352 = vld [vmem:[%s1 + $0xdc] sm:$0xf]
      %v353 = vld [vmem:[%s1 + $0xe0] sm:$0xf]
      %v354 = vld [vmem:[%s1 + $0xe4] sm:$0xf]
      %v355 = vld [vmem:[%s1 + $0xe8] sm:$0xf]
      %v356 = vld [vmem:[%s1 + $0xec] sm:$0xf]
      %v357 = vld [vmem:[%s1 + $0xf0] sm:$0xf]
      %v358 = vld [vmem:[%s1 + $0xf4] sm:$0xf]
      %v359 = vld [vmem:[%s1 + $0xf8] sm:$0xf]
      %v360 = vld [vmem:[%s1 + $0xfc] sm:$0xf]
      %v361 = vld [vmem:[%s1 + $0x100] sm:$0xf]
      %v362 = vld [vmem:[%s1 + $0x104] sm:$0xf]
      %v363 = vld [vmem:[%s1 + $0x108] sm:$0xf]
      %v364 = vld [vmem:[%s1 + $0x10c] sm:$0xf]
      %v365 = vld [vmem:[%s1 + $0x110] sm:$0xf]
      %v366 = vld [vmem:[%s1 + $0x114] sm:$0xf]
      %v367 = vld [vmem:[%s1 + $0x118] sm:$0xf]
      %v368 = vld [vmem:[%s1 + $0x11c] sm:$0xf]
      %v369 = vld [vmem:[%s1 + $0x120] sm:$0xf]
      %v370 = vld [vmem:[%s1 + $0x124] sm:$0xf]
      %v371 = vld [vmem:[%s1 + $0x128] sm:$0xf]
      %v372 = vld [vmem:[%s1 + $0x12c] sm:$0xf]
      %v373 = vld [vmem:[%s1 + $0x130] sm:$0xf]
      %v374 = vld [vmem:[%s1 + $0x134] sm:$0xf]
      %v375 = vld [vmem:[%s1 + $0x138] sm:$0xf]
      %v376 = vld [vmem:[%s1 + $0x13c] sm:$0xf]
      %v377 = vld [vmem:[%s1 + $0x140] sm:$0xf]
      %v378 = vld [vmem:[%s1 + $0x144] sm:$0xf]
      %v379 = vld [vmem:[%s1 + $0x148] sm:$0xf]
      %v380 = vld [vmem:[%s1 + $0x14c] sm:$0xf]
      %v381 = vld [vmem:[%s1 + $0x150] sm:$0xf]
      %v382 = vld [vmem:[%s1 + $0x154] sm:$0xf]
      %v383 = vld [vmem:[%s1 + $0x158] sm:$0xf]
      %v384 = vld [vmem:[%s1 + $0x15c] sm:$0xf]
      %v385 = vld [vmem:[%s1 + $0x160] sm:$0xf]
      %v386 = vld [vmem:[%s1 + $0x164] sm:$0xf]
      %v387 = vld [vmem:[%s1 + $0x168] sm:$0xf]
      %v388 = vld [vmem:[%s1 + $0x16c] sm:$0xf]
      %v389 = vld [vmem:[%s1 + $0x170] sm:$0xf]
      %v390 = vld [vmem:[%s1 + $0x174] sm:$0xf]
      %v391 = vld [vmem:[%s1 + $0x178] sm:$0xf]
      %v392 = vld [vmem:[%s1 + $0x17c] sm:$0xf]
      %v393 = vld [vmem:[%s1 + $0x180] sm:$0xf]
      %v394 = vld [vmem:[%s1 + $0x184] sm:$0xf]
      %v395 = vld [vmem:[%s1 + $0x188] sm:$0xf]
      %v396 = vld [vmem:[%s1 + $0x18c] sm:$0xf]
      %v397 = vld [vmem:[%s1 + $0x190] sm:$0xf]
      %v398 = vld [vmem:[%s1 + $0x194] sm:$0xf]
      %v399 = vld [vmem:[%s1 + $0x198] sm:$0xf]
      %v400 = vld [vmem:[%s1 + $0x19c] sm:$0xf]
      %v401 = vld [vmem:[%s1 + $0x1a0] sm:$0xf]
      %v402 = vld [vmem:[%s1 + $0x1a4] sm:$0xf]
      %v403 = vld [vmem:[%s1 + $0x1a8] sm:$0xf]
      %v404 = vld [vmem:[%s1 + $0x1ac] sm:$0xf]
      %v405 = vld [vmem:[%s1 + $0x1b0] sm:$0xf]
      %v406 = vld [vmem:[%s1 + $0x1b4] sm:$0xf]
      %v407 = vld [vmem:[%s1 + $0x1b8] sm:$0xf]
      %v408 = vld [vmem:[%s1 + $0x1bc] sm:$0xf]
      %v409 = vld [vmem:[%s1 + $0x1c0] sm:$0xf]
      %v410 = vld [vmem:[%s1 + $0x1c4] sm:$0xf]
      %v411 = vld [vmem:[%s1 + $0x1c8] sm:$0xf]
      %v412 = vld [vmem:[%s1 + $0x1cc] sm:$0xf]
      %v413 = vld [vmem:[%s1 + $0x1d0] sm:$0xf]
      %v414 = vld [vmem:[%s1 + $0x1d4] sm:$0xf]
      %v415 = vld [vmem:[%s1 + $0x1d8] sm:$0xf]
      %v416 = vld [vmem:[%s1 + $0x1dc] sm:$0xf]
      %v417 = vld [vmem:[%s1 + $0x1e0] sm:$0xf]
      %v418 = vld [vmem:[%s1 + $0x1e4] sm:$0xf]
      %v419 = vld [vmem:[%s1 + $0x1e8] sm:$0xf]
      %v420 = vld [vmem:[%s1 + $0x1ec] sm:$0xf]
      %v421 = vld [vmem:[%s1 + $0x1f0] sm:$0xf]
      %v422 = vld [vmem:[%s1 + $0x1f4] sm:$0xf]
      %v423 = vld [vmem:[%s1 + $0x1f8] sm:$0xf]
      %v424 = vld [vmem:[%s1 + $0x1fc] sm:$0xf]
      %v425 = vld [vmem:[%s1 + $0x200] sm:$0xf]
      %v426 = vld [vmem:[%s1 + $0x204] sm:$0xf]
      %v427 = vld [vmem:[%s1 + $0x208] sm:$0xf]
      %v428 = vld [vmem:[%s1 + $0x20c] sm:$0xf]
      %v429 = vld [vmem:[%s1 + $0x210] sm:$0xf]
      %v430 = vld [vmem:[%s1 + $0x214] sm:$0xf]
      %v431 = vld [vmem:[%s1 + $0x218] sm:$0xf]
      %v432 = vld [vmem:[%s1 + $0x21c] sm:$0xf]
      %v433 = vld [vmem:[%s1 + $0x220] sm:$0xf]
      %v434 = vld [vmem:[%s1 + $0x224] sm:$0xf]
      %v435 = vld [vmem:[%s1 + $0x228] sm:$0xf]
      %v436 = vld [vmem:[%s1 + $0x22c] sm:$0xf]
      %v437 = vld [vmem:[%s1 + $0x230] sm:$0xf]
      %v438 = vld [vmem:[%s1 + $0x234] sm:$0xf]
      %v439 = vld [vmem:[%s1 + $0x238] sm:$0xf]
      %v440 = vld [vmem:[%s1 + $0x23c] sm:$0xf]
      %v441 = vld [vmem:[%s2] sm:$0x1]
      %v443 = vperm.slane %v441, 0
      %v565 = vunpack.c.l.b16 %v177
      %v566 = vunpack.c.h.b16 %v177
      %v567 = vunpack.c.l.b16 %v178
      %v568 = vunpack.c.h.b16 %v178
      %v569 = vunpack.c.l.b16 %v179
      %v570 = vunpack.c.h.b16 %v179
      %v571 = vunpack.c.l.b16 %v180
      %v572 = vunpack.c.h.b16 %v180
      %v573 = vunpack.c.l.b16 %v181
      %v574 = vunpack.c.l.b16 %v182
      %v575 = vunpack.c.h.b16 %v182
      %v576 = vunpack.c.l.b16 %v183
      %v577 = vunpack.c.h.b16 %v183
      %v578 = vunpack.c.l.b16 %v184
      %v579 = vunpack.c.h.b16 %v184
      %v580 = vunpack.c.l.b16 %v185
      %v581 = vunpack.c.h.b16 %v185
      %v582 = vunpack.c.l.b16 %v186
      %v583 = vunpack.c.l.b16 %v187
      %v584 = vunpack.c.h.b16 %v187
      %v585 = vunpack.c.l.b16 %v188
      %v586 = vunpack.c.h.b16 %v188
      %v587 = vunpack.c.l.b16 %v189
      %v588 = vunpack.c.h.b16 %v189
      %v589 = vunpack.c.l.b16 %v190
      %v590 = vunpack.c.h.b16 %v190
      %v591 = vunpack.c.l.b16 %v191
      %v592 = vunpack.c.l.b16 %v192
      %v593 = vunpack.c.h.b16 %v192
      %v594 = vunpack.c.l.b16 %v193
      %v595 = vunpack.c.h.b16 %v193
      %v596 = vunpack.c.l.b16 %v194
      %v597 = vunpack.c.h.b16 %v194
      %v598 = vunpack.c.l.b16 %v195
      %v599 = vunpack.c.h.b16 %v195
      %v600 = vunpack.c.l.b16 %v196
      %v601 = vunpack.c.l.b16 %v197
      %v602 = vunpack.c.h.b16 %v197
      %v603 = vunpack.c.l.b16 %v198
      %v604 = vunpack.c.h.b16 %v198
      %v605 = vunpack.c.l.b16 %v199
      %v606 = vunpack.c.h.b16 %v199
      %v607 = vunpack.c.l.b16 %v200
      %v608 = vunpack.c.h.b16 %v200
      %v609 = vunpack.c.l.b16 %v201
      %v610 = vunpack.c.l.b16 %v202
      %v611 = vunpack.c.h.b16 %v202
      %v612 = vunpack.c.l.b16 %v203
      %v613 = vunpack.c.h.b16 %v203
      %v614 = vunpack.c.l.b16 %v204
      %v615 = vunpack.c.h.b16 %v204
      %v616 = vunpack.c.l.b16 %v205
      %v617 = vunpack.c.h.b16 %v205
      %v618 = vunpack.c.l.b16 %v206
      %v619 = vunpack.c.l.b16 %v207
      %v620 = vunpack.c.h.b16 %v207
      %v621 = vunpack.c.l.b16 %v208
      %v622 = vunpack.c.h.b16 %v208
      %v623 = vunpack.c.l.b16 %v209
      %v624 = vunpack.c.h.b16 %v209
      %v625 = vunpack.c.l.b16 %v210
      %v626 = vunpack.c.h.b16 %v210
      %v627 = vunpack.c.l.b16 %v211
      %v628 = vunpack.c.l.b16 %v212
      %v629 = vunpack.c.h.b16 %v212
      %v630 = vunpack.c.l.b16 %v213
      %v631 = vunpack.c.h.b16 %v213
      %v632 = vunpack.c.l.b16 %v214
      %v633 = vunpack.c.h.b16 %v214
      %v634 = vunpack.c.l.b16 %v215
      %v635 = vunpack.c.h.b16 %v215
      %v636 = vunpack.c.l.b16 %v216
      %v637 = vunpack.c.l.b16 %v217
      %v638 = vunpack.c.h.b16 %v217
      %v639 = vunpack.c.l.b16 %v218
      %v640 = vunpack.c.h.b16 %v218
      %v641 = vunpack.c.l.b16 %v219
      %v642 = vunpack.c.h.b16 %v219
      %v643 = vunpack.c.l.b16 %v220
      %v644 = vunpack.c.h.b16 %v220
      %v645 = vunpack.c.l.b16 %v221
      %v646 = vunpack.c.l.b16 %v222
      %v647 = vunpack.c.h.b16 %v222
      %v648 = vunpack.c.l.b16 %v223
      %v649 = vunpack.c.h.b16 %v223
      %v650 = vunpack.c.l.b16 %v224
      %v651 = vunpack.c.h.b16 %v224
      %v652 = vunpack.c.l.b16 %v225
      %v653 = vunpack.c.h.b16 %v225
      %v654 = vunpack.c.l.b16 %v226
      %v655 = vunpack.c.l.b16 %v227
      %v656 = vunpack.c.h.b16 %v227
      %v657 = vunpack.c.l.b16 %v228
      %v658 = vunpack.c.h.b16 %v228
      %v659 = vunpack.c.l.b16 %v229
      %v660 = vunpack.c.h.b16 %v229
      %v661 = vunpack.c.l.b16 %v230
      %v662 = vunpack.c.h.b16 %v230
      %v663 = vunpack.c.l.b16 %v231
      %v664 = vunpack.c.l.b16 %v232
      %v665 = vunpack.c.h.b16 %v232
      %v666 = vunpack.c.l.b16 %v233
      %v667 = vunpack.c.h.b16 %v233
      %v668 = vunpack.c.l.b16 %v234
      %v669 = vunpack.c.h.b16 %v234
      %v670 = vunpack.c.l.b16 %v235
      %v671 = vunpack.c.h.b16 %v235
      %v672 = vunpack.c.l.b16 %v236
      %v673 = vunpack.c.l.b16 %v237
      %v674 = vunpack.c.h.b16 %v237
      %v675 = vunpack.c.l.b16 %v238
      %v676 = vunpack.c.h.b16 %v238
      %v677 = vunpack.c.l.b16 %v239
      %v678 = vunpack.c.h.b16 %v239
      %v679 = vunpack.c.l.b16 %v240
      %v680 = vunpack.c.h.b16 %v240
      %v681 = vunpack.c.l.b16 %v241
      %v682 = vunpack.c.l.b16 %v242
      %v683 = vunpack.c.h.b16 %v242
      %v684 = vunpack.c.l.b16 %v243
      %v685 = vunpack.c.h.b16 %v243
      %v686 = vunpack.c.l.b16 %v244
      %v687 = vunpack.c.h.b16 %v244
      %v688 = vunpack.c.l.b16 %v245
      %v689 = vunpack.c.h.b16 %v245
      %v690 = vunpack.c.l.b16 %v246
      %v691 = vunpack.c.l.b16 %v247
      %v692 = vunpack.c.h.b16 %v247
      %v693 = vunpack.c.l.b16 %v248
      %v694 = vunpack.c.h.b16 %v248
      %v695 = vunpack.c.l.b16 %v249
      %v696 = vunpack.c.h.b16 %v249
      %v697 = vunpack.c.l.b16 %v250
      %v698 = vunpack.c.h.b16 %v250
      %v699 = vunpack.c.l.b16 %v251
      %v700 = vunpack.c.l.b16 %v252
      %v701 = vunpack.c.h.b16 %v252
      %v702 = vunpack.c.l.b16 %v253
      %v703 = vunpack.c.h.b16 %v253
      %v704 = vunpack.c.l.b16 %v254
      %v705 = vunpack.c.h.b16 %v254
      %v706 = vunpack.c.l.b16 %v255
      %v707 = vunpack.c.h.b16 %v255
      %v708 = vunpack.c.l.b16 %v256
      %v709 = vunpack.c.l.b16 %v257
      %v710 = vunpack.c.h.b16 %v257
      %v711 = vunpack.c.l.b16 %v258
      %v712 = vunpack.c.h.b16 %v258
      %v713 = vunpack.c.l.b16 %v259
      %v714 = vunpack.c.h.b16 %v259
      %v715 = vunpack.c.l.b16 %v260
      %v716 = vunpack.c.h.b16 %v260
      %v717 = vunpack.c.l.b16 %v261
      %v718 = vunpack.c.l.b16 %v262
      %v719 = vunpack.c.h.b16 %v262
      %v720 = vunpack.c.l.b16 %v263
      %v721 = vunpack.c.h.b16 %v263
      %v722 = vunpack.c.l.b16 %v264
      %v723 = vunpack.c.h.b16 %v264
      %v724 = vunpack.c.l.b16 %v265
      %v725 = vunpack.c.h.b16 %v265
      %v726 = vunpack.c.l.b16 %v266
      %v727 = vunpack.c.l.b16 %v267
      %v728 = vunpack.c.h.b16 %v267
      %v729 = vunpack.c.l.b16 %v268
      %v730 = vunpack.c.h.b16 %v268
      %v731 = vunpack.c.l.b16 %v269
      %v732 = vunpack.c.h.b16 %v269
      %v733 = vunpack.c.l.b16 %v270
      %v734 = vunpack.c.h.b16 %v270
      %v735 = vunpack.c.l.b16 %v271
      %v736 = vunpack.c.l.b16 %v272
      %v737 = vunpack.c.h.b16 %v272
      %v738 = vunpack.c.l.b16 %v273
      %v739 = vunpack.c.h.b16 %v273
      %v740 = vunpack.c.l.b16 %v274
      %v741 = vunpack.c.h.b16 %v274
      %v742 = vunpack.c.l.b16 %v275
      %v743 = vunpack.c.h.b16 %v275
      %v744 = vunpack.c.l.b16 %v276
      %v745 = vunpack.c.l.b16 %v277
      %v746 = vunpack.c.h.b16 %v277
      %v747 = vunpack.c.l.b16 %v278
      %v748 = vunpack.c.h.b16 %v278
      %v749 = vunpack.c.l.b16 %v279
      %v750 = vunpack.c.h.b16 %v279
      %v751 = vunpack.c.l.b16 %v280
      %v752 = vunpack.c.h.b16 %v280
      %v753 = vunpack.c.l.b16 %v281
      %v754 = vunpack.c.l.b16 %v282
      %v755 = vunpack.c.h.b16 %v282
      %v756 = vunpack.c.l.b16 %v283
      %v757 = vunpack.c.h.b16 %v283
      %v758 = vunpack.c.l.b16 %v284
      %v759 = vunpack.c.h.b16 %v284
      %v760 = vunpack.c.l.b16 %v285
      %v761 = vunpack.c.h.b16 %v285
      %v762 = vunpack.c.l.b16 %v286
      %v763 = vunpack.c.l.b16 %v287
      %v764 = vunpack.c.h.b16 %v287
      %v765 = vunpack.c.l.b16 %v288
      %v766 = vunpack.c.h.b16 %v288
      %v767 = vunpack.c.l.b16 %v289
      %v768 = vunpack.c.h.b16 %v289
      %v769 = vunpack.c.l.b16 %v290
      %v770 = vunpack.c.h.b16 %v290
      %v771 = vunpack.c.l.b16 %v291
      %v772 = vunpack.c.l.b16 %v292
      %v773 = vunpack.c.h.b16 %v292
      %v774 = vunpack.c.l.b16 %v293
      %v775 = vunpack.c.h.b16 %v293
      %v776 = vunpack.c.l.b16 %v294
      %v777 = vunpack.c.h.b16 %v294
      %v778 = vunpack.c.l.b16 %v295
      %v779 = vunpack.c.h.b16 %v295
      %v780 = vunpack.c.l.b16 %v296
      %v781 = vpack.c.b16 %v574, %v565
      %v782 = vpack.c.b16 %v575, %v566
      %v783 = vpack.c.b16 %v576, %v567
      %v784 = vpack.c.b16 %v577, %v568
      %v785 = vpack.c.b16 %v578, %v569
      %v786 = vpack.c.b16 %v579, %v570
      %v787 = vpack.c.b16 %v580, %v571
      %v788 = vpack.c.b16 %v581, %v572
      %v789 = vpack.c.b16 %v582, %v573
      %v790 = vpack.c.b16 %v592, %v583
      %v791 = vpack.c.b16 %v593, %v584
      %v792 = vpack.c.b16 %v594, %v585
      %v793 = vpack.c.b16 %v595, %v586
      %v794 = vpack.c.b16 %v596, %v587
      %v795 = vpack.c.b16 %v597, %v588
      %v796 = vpack.c.b16 %v598, %v589
      %v797 = vpack.c.b16 %v599, %v590
      %v798 = vpack.c.b16 %v600, %v591
      %v799 = vpack.c.b16 %v610, %v601
      %v800 = vpack.c.b16 %v611, %v602
      %v801 = vpack.c.b16 %v612, %v603
      %v802 = vpack.c.b16 %v613, %v604
      %v803 = vpack.c.b16 %v614, %v605
      %v804 = vpack.c.b16 %v615, %v606
      %v805 = vpack.c.b16 %v616, %v607
      %v806 = vpack.c.b16 %v617, %v608
      %v807 = vpack.c.b16 %v618, %v609
      %v808 = vpack.c.b16 %v628, %v619
      %v809 = vpack.c.b16 %v629, %v620
      %v810 = vpack.c.b16 %v630, %v621
      %v811 = vpack.c.b16 %v631, %v622
      %v812 = vpack.c.b16 %v632, %v623
      %v813 = vpack.c.b16 %v633, %v624
      %v814 = vpack.c.b16 %v634, %v625
      %v815 = vpack.c.b16 %v635, %v626
      %v816 = vpack.c.b16 %v636, %v627
      %v817 = vpack.c.b16 %v646, %v637
      %v818 = vpack.c.b16 %v647, %v638
      %v819 = vpack.c.b16 %v648, %v639
      %v820 = vpack.c.b16 %v649, %v640
      %v821 = vpack.c.b16 %v650, %v641
      %v822 = vpack.c.b16 %v651, %v642
      %v823 = vpack.c.b16 %v652, %v643
      %v824 = vpack.c.b16 %v653, %v644
      %v825 = vpack.c.b16 %v654, %v645
      %v826 = vpack.c.b16 %v664, %v655
      %v827 = vpack.c.b16 %v665, %v656
      %v828 = vpack.c.b16 %v666, %v657
      %v829 = vpack.c.b16 %v667, %v658
      %v830 = vpack.c.b16 %v668, %v659
      %v831 = vpack.c.b16 %v669, %v660
      %v832 = vpack.c.b16 %v670, %v661
      %v833 = vpack.c.b16 %v671, %v662
      %v834 = vpack.c.b16 %v672, %v663
      %v835 = vpack.c.b16 %v682, %v673
      %v836 = vpack.c.b16 %v683, %v674
      %v837 = vpack.c.b16 %v684, %v675
      %v838 = vpack.c.b16 %v685, %v676
      %v839 = vpack.c.b16 %v686, %v677
      %v840 = vpack.c.b16 %v687, %v678
      %v841 = vpack.c.b16 %v688, %v679
      %v842 = vpack.c.b16 %v689, %v680
      %v843 = vpack.c.b16 %v690, %v681
      %v844 = vpack.c.b16 %v700, %v691
      %v845 = vpack.c.b16 %v701, %v692
      %v846 = vpack.c.b16 %v702, %v693
      %v847 = vpack.c.b16 %v703, %v694
      %v848 = vpack.c.b16 %v704, %v695
      %v849 = vpack.c.b16 %v705, %v696
      %v850 = vpack.c.b16 %v706, %v697
      %v851 = vpack.c.b16 %v707, %v698
      %v852 = vpack.c.b16 %v708, %v699
      %v853 = vpack.c.b16 %v718, %v709
      %v854 = vpack.c.b16 %v719, %v710
      %v855 = vpack.c.b16 %v720, %v711
      %v856 = vpack.c.b16 %v721, %v712
      %v857 = vpack.c.b16 %v722, %v713
      %v858 = vpack.c.b16 %v723, %v714
      %v859 = vpack.c.b16 %v724, %v715
      %v860 = vpack.c.b16 %v725, %v716
      %v861 = vpack.c.b16 %v726, %v717
      %v862 = vpack.c.b16 %v736, %v727
      %v863 = vpack.c.b16 %v737, %v728
      %v864 = vpack.c.b16 %v738, %v729
      %v865 = vpack.c.b16 %v739, %v730
      %v866 = vpack.c.b16 %v740, %v731
      %v867 = vpack.c.b16 %v741, %v732
      %v868 = vpack.c.b16 %v742, %v733
      %v869 = vpack.c.b16 %v743, %v734
      %v870 = vpack.c.b16 %v744, %v735
      %v871 = vpack.c.b16 %v754, %v745
      %v872 = vpack.c.b16 %v755, %v746
      %v873 = vpack.c.b16 %v756, %v747
      %v874 = vpack.c.b16 %v757, %v748
      %v875 = vpack.c.b16 %v758, %v749
      %v876 = vpack.c.b16 %v759, %v750
      %v877 = vpack.c.b16 %v760, %v751
      %v878 = vpack.c.b16 %v761, %v752
      %v879 = vpack.c.b16 %v762, %v753
      %v880 = vpack.c.b16 %v772, %v763
      %v881 = vpack.c.b16 %v773, %v764
      %v882 = vpack.c.b16 %v774, %v765
      %v883 = vpack.c.b16 %v775, %v766
      %v884 = vpack.c.b16 %v776, %v767
      %v885 = vpack.c.b16 %v777, %v768
      %v886 = vpack.c.b16 %v778, %v769
      %v887 = vpack.c.b16 %v779, %v770
      %v888 = vpack.c.b16 %v780, %v771
      %v1141 = vunpack.c.l.b16 %v297
      %v1142 = vunpack.c.l.b16 %v298
      %v1143 = vunpack.c.l.b16 %v299
      %v1144 = vunpack.c.l.b16 %v300
      %v1145 = vunpack.c.l.b16 %v301
      %v1146 = vunpack.c.l.b16 %v302
      %v1147 = vunpack.c.l.b16 %v303
      %v1148 = vunpack.c.l.b16 %v304
      %v1149 = vunpack.c.l.b16 %v305
      %v1150 = vunpack.c.l.b16 %v306
      %v1151 = vunpack.c.l.b16 %v307
      %v1152 = vunpack.c.l.b16 %v308
      %v1153 = vunpack.c.l.b16 %v309
      %v1154 = vunpack.c.l.b16 %v310
      %v1155 = vunpack.c.l.b16 %v311
      %v1156 = vunpack.c.l.b16 %v312
      %v1157 = vunpack.c.l.b16 %v313
      %v1158 = vunpack.c.l.b16 %v314
      %v1159 = vunpack.c.l.b16 %v315
      %v1160 = vunpack.c.l.b16 %v316
      %v1161 = vunpack.c.l.b16 %v317
      %v1162 = vunpack.c.l.b16 %v318
      %v1163 = vunpack.c.l.b16 %v319
      %v1164 = vunpack.c.l.b16 %v320
      %v1165 = vunpack.c.l.b16 %v321
      %v1166 = vunpack.c.l.b16 %v322
      %v1167 = vunpack.c.l.b16 %v323
      %v1168 = vunpack.c.l.b16 %v324
      %v1169 = vunpack.c.l.b16 %v325
      %v1170 = vunpack.c.l.b16 %v326
      %v1171 = vunpack.c.l.b16 %v327
      %v1172 = vunpack.c.l.b16 %v328
      %v1173 = vunpack.c.l.b16 %v329
      %v1174 = vunpack.c.l.b16 %v330
      %v1175 = vunpack.c.l.b16 %v331
      %v1176 = vunpack.c.l.b16 %v332
      %v1177 = vunpack.c.l.b16 %v333
      %v1178 = vunpack.c.l.b16 %v334
      %v1179 = vunpack.c.l.b16 %v335
      %v1180 = vunpack.c.l.b16 %v336
      %v1181 = vunpack.c.l.b16 %v337
      %v1182 = vunpack.c.l.b16 %v338
      %v1183 = vunpack.c.l.b16 %v339
      %v1184 = vunpack.c.l.b16 %v340
      %v1185 = vunpack.c.l.b16 %v341
      %v1186 = vunpack.c.l.b16 %v342
      %v1187 = vunpack.c.l.b16 %v343
      %v1188 = vunpack.c.l.b16 %v344
      %v1189 = vunpack.c.l.b16 %v345
      %v1190 = vunpack.c.l.b16 %v346
      %v1191 = vunpack.c.l.b16 %v347
      %v1192 = vunpack.c.l.b16 %v348
      %v1193 = vunpack.c.l.b16 %v349
      %v1194 = vunpack.c.l.b16 %v350
      %v1195 = vunpack.c.l.b16 %v351
      %v1196 = vunpack.c.l.b16 %v352
      %v1197 = vunpack.c.l.b16 %v353
      %v1198 = vunpack.c.l.b16 %v354
      %v1199 = vunpack.c.l.b16 %v355
      %v1200 = vunpack.c.l.b16 %v356
      %v1201 = vunpack.c.l.b16 %v357
      %v1202 = vunpack.c.l.b16 %v358
      %v1203 = vunpack.c.l.b16 %v359
      %v1204 = vunpack.c.l.b16 %v360
      %v1205 = vunpack.c.l.b16 %v361
      %v1206 = vunpack.c.l.b16 %v362
      %v1207 = vunpack.c.l.b16 %v363
      %v1208 = vunpack.c.l.b16 %v364
      %v1209 = vunpack.c.l.b16 %v365
      %v1210 = vunpack.c.l.b16 %v366
      %v1211 = vunpack.c.l.b16 %v367
      %v1212 = vunpack.c.l.b16 %v368
      %v1213 = vunpack.c.l.b16 %v369
      %v1214 = vunpack.c.l.b16 %v370
      %v1215 = vunpack.c.l.b16 %v371
      %v1216 = vunpack.c.l.b16 %v372
      %v1217 = vunpack.c.l.b16 %v373
      %v1218 = vunpack.c.l.b16 %v374
      %v1219 = vunpack.c.l.b16 %v375
      %v1220 = vunpack.c.l.b16 %v376
      %v1221 = vunpack.c.l.b16 %v377
      %v1222 = vunpack.c.l.b16 %v378
      %v1223 = vunpack.c.l.b16 %v379
      %v1224 = vunpack.c.l.b16 %v380
      %v1225 = vunpack.c.l.b16 %v381
      %v1226 = vunpack.c.l.b16 %v382
      %v1227 = vunpack.c.l.b16 %v383
      %v1228 = vunpack.c.l.b16 %v384
      %v1229 = vunpack.c.l.b16 %v385
      %v1230 = vunpack.c.l.b16 %v386
      %v1231 = vunpack.c.l.b16 %v387
      %v1232 = vunpack.c.l.b16 %v388
      %v1233 = vunpack.c.l.b16 %v389
      %v1234 = vunpack.c.l.b16 %v390
      %v1235 = vunpack.c.l.b16 %v391
      %v1236 = vunpack.c.l.b16 %v392
      %v1237 = vunpack.c.l.b16 %v393
      %v1238 = vunpack.c.l.b16 %v394
      %v1239 = vunpack.c.l.b16 %v395
      %v1240 = vunpack.c.l.b16 %v396
      %v1241 = vunpack.c.l.b16 %v397
      %v1242 = vunpack.c.l.b16 %v398
      %v1243 = vunpack.c.l.b16 %v399
      %v1244 = vunpack.c.l.b16 %v400
      %v1245 = vunpack.c.l.b16 %v401
      %v1246 = vunpack.c.l.b16 %v402
      %v1247 = vunpack.c.l.b16 %v403
      %v1248 = vunpack.c.l.b16 %v404
      %v1249 = vunpack.c.l.b16 %v405
      %v1250 = vunpack.c.l.b16 %v406
      %v1251 = vunpack.c.l.b16 %v407
      %v1252 = vunpack.c.l.b16 %v408
      %v1253 = vunpack.c.l.b16 %v409
      %v1254 = vunpack.c.l.b16 %v410
      %v1255 = vunpack.c.l.b16 %v411
      %v1256 = vunpack.c.l.b16 %v412
      %v1257 = vunpack.c.l.b16 %v413
      %v1258 = vunpack.c.l.b16 %v414
      %v1259 = vunpack.c.l.b16 %v415
      %v1260 = vunpack.c.l.b16 %v416
      %v1261 = vunpack.c.l.b16 %v417
      %v1262 = vunpack.c.l.b16 %v418
      %v1263 = vunpack.c.l.b16 %v419
      %v1264 = vunpack.c.l.b16 %v420
      %v1265 = vunpack.c.l.b16 %v421
      %v1266 = vunpack.c.l.b16 %v422
      %v1267 = vunpack.c.l.b16 %v423
      %v1268 = vunpack.c.l.b16 %v424
      %v1269 = vunpack.c.l.b16 %v425
      %v1270 = vunpack.c.l.b16 %v426
      %v1271 = vunpack.c.l.b16 %v427
      %v1272 = vunpack.c.l.b16 %v428
      %v1273 = vunpack.c.l.b16 %v429
      %v1274 = vunpack.c.l.b16 %v430
      %v1275 = vunpack.c.l.b16 %v431
      %v1276 = vunpack.c.l.b16 %v432
      %v1277 = vunpack.c.l.b16 %v433
      %v1278 = vunpack.c.l.b16 %v434
      %v1279 = vunpack.c.l.b16 %v435
      %v1280 = vunpack.c.l.b16 %v436
      %v1281 = vunpack.c.l.b16 %v437
      %v1282 = vunpack.c.l.b16 %v438
      %v1283 = vunpack.c.l.b16 %v439
      %v1284 = vunpack.c.l.b16 %v440
      %v1285 = vpack.c.b16 %v1142, %v1141
      %v1286 = vpack.c.b16 %v1144, %v1143
      %v1287 = vpack.c.b16 %v1146, %v1145
      %v1288 = vpack.c.b16 %v1148, %v1147
      %v1289 = vpack.c.b16 %v1150, %v1149
      %v1290 = vpack.c.b16 %v1152, %v1151
      %v1291 = vpack.c.b16 %v1154, %v1153
      %v1292 = vpack.c.b16 %v1156, %v1155
      %v1293 = vpack.c.b16 %v1158, %v1157
      %v1294 = vpack.c.b16 %v1160, %v1159
      %v1295 = vpack.c.b16 %v1162, %v1161
      %v1296 = vpack.c.b16 %v1164, %v1163
      %v1297 = vpack.c.b16 %v1166, %v1165
      %v1298 = vpack.c.b16 %v1168, %v1167
      %v1299 = vpack.c.b16 %v1170, %v1169
      %v1300 = vpack.c.b16 %v1172, %v1171
      %v1301 = vpack.c.b16 %v1174, %v1173
      %v1302 = vpack.c.b16 %v1176, %v1175
      %v1303 = vpack.c.b16 %v1178, %v1177
      %v1304 = vpack.c.b16 %v1180, %v1179
      %v1305 = vpack.c.b16 %v1182, %v1181
      %v1306 = vpack.c.b16 %v1184, %v1183
      %v1307 = vpack.c.b16 %v1186, %v1185
      %v1308 = vpack.c.b16 %v1188, %v1187
      %v1309 = vpack.c.b16 %v1190, %v1189
      %v1310 = vpack.c.b16 %v1192, %v1191
      %v1311 = vpack.c.b16 %v1194, %v1193
      %v1312 = vpack.c.b16 %v1196, %v1195
      %v1313 = vpack.c.b16 %v1198, %v1197
      %v1314 = vpack.c.b16 %v1200, %v1199
      %v1315 = vpack.c.b16 %v1202, %v1201
      %v1316 = vpack.c.b16 %v1204, %v1203
      %v1317 = vpack.c.b16 %v1206, %v1205
      %v1318 = vpack.c.b16 %v1208, %v1207
      %v1319 = vpack.c.b16 %v1210, %v1209
      %v1320 = vpack.c.b16 %v1212, %v1211
      %v1321 = vpack.c.b16 %v1214, %v1213
      %v1322 = vpack.c.b16 %v1216, %v1215
      %v1323 = vpack.c.b16 %v1218, %v1217
      %v1324 = vpack.c.b16 %v1220, %v1219
      %v1325 = vpack.c.b16 %v1222, %v1221
      %v1326 = vpack.c.b16 %v1224, %v1223
      %v1327 = vpack.c.b16 %v1226, %v1225
      %v1328 = vpack.c.b16 %v1228, %v1227
      %v1329 = vpack.c.b16 %v1230, %v1229
      %v1330 = vpack.c.b16 %v1232, %v1231
      %v1331 = vpack.c.b16 %v1234, %v1233
      %v1332 = vpack.c.b16 %v1236, %v1235
      %v1333 = vpack.c.b16 %v1238, %v1237
      %v1334 = vpack.c.b16 %v1240, %v1239
      %v1335 = vpack.c.b16 %v1242, %v1241
      %v1336 = vpack.c.b16 %v1244, %v1243
      %v1337 = vpack.c.b16 %v1246, %v1245
      %v1338 = vpack.c.b16 %v1248, %v1247
      %v1339 = vpack.c.b16 %v1250, %v1249
      %v1340 = vpack.c.b16 %v1252, %v1251
      %v1341 = vpack.c.b16 %v1254, %v1253
      %v1342 = vpack.c.b16 %v1256, %v1255
      %v1343 = vpack.c.b16 %v1258, %v1257
      %v1344 = vpack.c.b16 %v1260, %v1259
      %v1345 = vpack.c.b16 %v1262, %v1261
      %v1346 = vpack.c.b16 %v1264, %v1263
      %v1347 = vpack.c.b16 %v1266, %v1265
      %v1348 = vpack.c.b16 %v1268, %v1267
      %v1349 = vpack.c.b16 %v1270, %v1269
      %v1350 = vpack.c.b16 %v1272, %v1271
      %v1351 = vpack.c.b16 %v1274, %v1273
      %v1352 = vpack.c.b16 %v1276, %v1275
      %v1353 = vpack.c.b16 %v1278, %v1277
      %v1354 = vpack.c.b16 %v1280, %v1279
      %v1355 = vpack.c.b16 %v1282, %v1281
      %v1356 = vpack.c.b16 %v1284, %v1283
      %1429 = vmatpush.bf16.msra.mxu0 %v1292
      %1430 = vmatpush.bf16.msra.mxu0 %v1291
      %1431 = vmatpush.bf16.msra.mxu0 %v1290
      %1432 = vmatpush.bf16.msra.mxu0 %v1289
      %1433 = vmatpush.bf16.msra.mxu0 %v1288
      %1434 = vmatpush.bf16.msra.mxu0 %v1287
      %1435 = vmatpush.bf16.msra.mxu0 %v1286
      %1436 = vmatpush.bf16.msra.mxu0 %v1285
      %1437 = vmatmul.bf16.gmra.mxu0 %v781
      %v1438 = vpop.f32.mrf.mxu0
      %v1439 = vadd.f32 %v443, %v1438
      %v1440 = vpop.f32.mrf.mxu0
      %v1441 = vadd.f32 %v443, %v1440
      %1442 = vmatmul.bf16.gmra.mxu0 %v790
      %v1443 = vpop.f32.mrf.mxu0
      %v1444 = vadd.f32 %v443, %v1443
      %v1445 = vpop.f32.mrf.mxu0
      %v1446 = vadd.f32 %v443, %v1445
      %1447 = vmatmul.bf16.gmra.mxu0 %v799
      %v1448 = vpop.f32.mrf.mxu0
      %v1449 = vadd.f32 %v443, %v1448
      %v1450 = vpop.f32.mrf.mxu0
      %v1451 = vadd.f32 %v443, %v1450
      %1452 = vmatmul.bf16.gmra.mxu0 %v808
      %v1453 = vpop.f32.mrf.mxu0
      %v1454 = vadd.f32 %v443, %v1453
      %v1455 = vpop.f32.mrf.mxu0
      %v1456 = vadd.f32 %v443, %v1455
      %1457 = vmatmul.bf16.gmra.mxu0 %v817
      %v1458 = vpop.f32.mrf.mxu0
      %v1459 = vadd.f32 %v443, %v1458
      %v1460 = vpop.f32.mrf.mxu0
      %v1461 = vadd.f32 %v443, %v1460
      %1462 = vmatmul.bf16.gmra.mxu0 %v826
      %v1463 = vpop.f32.mrf.mxu0
      %v1464 = vadd.f32 %v443, %v1463
      %v1465 = vpop.f32.mrf.mxu0
      %v1466 = vadd.f32 %v443, %v1465
      %1467 = vmatmul.bf16.gmra.mxu0 %v835
      %v1468 = vpop.f32.mrf.mxu0
      %v1469 = vadd.f32 %v443, %v1468
      %v1470 = vpop.f32.mrf.mxu0
      %v1471 = vadd.f32 %v443, %v1470
      %1472 = vmatmul.bf16.gmra.mxu0 %v844
      %v1473 = vpop.f32.mrf.mxu0
      %v1474 = vadd.f32 %v443, %v1473
      %v1475 = vpop.f32.mrf.mxu0
      %v1476 = vadd.f32 %v443, %v1475
      %1477 = vmatmul.bf16.gmra.mxu0 %v853
      %v1478 = vpop.f32.mrf.mxu0
      %v1479 = vadd.f32 %v443, %v1478
      %v1480 = vpop.f32.mrf.mxu0
      %v1481 = vadd.f32 %v443, %v1480
      %1482 = vmatmul.bf16.gmra.mxu0 %v862
      %v1483 = vpop.f32.mrf.mxu0
      %v1484 = vadd.f32 %v443, %v1483
      %v1485 = vpop.f32.mrf.mxu0
      %v1486 = vadd.f32 %v443, %v1485
      %1487 = vmatmul.bf16.gmra.mxu0 %v871
      %v1488 = vpop.f32.mrf.mxu0
      %v1489 = vadd.f32 %v443, %v1488
      %v1490 = vpop.f32.mrf.mxu0
      %v1491 = vadd.f32 %v443, %v1490
      %1492 = vmatmul.bf16.gmra.mxu0 %v880
      %v1493 = vpop.f32.mrf.mxu0
      %v1494 = vadd.f32 %v443, %v1493
      %v1495 = vpop.f32.mrf.mxu0
      %v1496 = vadd.f32 %v443, %v1495
      %1497 = vdwg.mxu0
      %1498 = vmatpush.bf16.msra.mxu0 %v1300
      %1499 = vmatpush.bf16.msra.mxu0 %v1299
      %1500 = vmatpush.bf16.msra.mxu0 %v1298
      %1501 = vmatpush.bf16.msra.mxu0 %v1297
      %1502 = vmatpush.bf16.msra.mxu0 %v1296
      %1503 = vmatpush.bf16.msra.mxu0 %v1295
      %1504 = vmatpush.bf16.msra.mxu0 %v1294
      %1505 = vmatpush.bf16.msra.mxu0 %v1293
      %1506 = vmatmul.bf16.gmra.mxu0 %v782
      %v1507 = vpop.f32.mrf.mxu0
      %v1508 = vadd.f32 %v1439, %v1507
      %v1509 = vpop.f32.mrf.mxu0
      %v1510 = vadd.f32 %v1441, %v1509
      %1511 = vmatmul.bf16.gmra.mxu0 %v791
      %v1512 = vpop.f32.mrf.mxu0
      %v1513 = vadd.f32 %v1444, %v1512
      %v1514 = vpop.f32.mrf.mxu0
      %v1515 = vadd.f32 %v1446, %v1514
      %1516 = vmatmul.bf16.gmra.mxu0 %v800
      %v1517 = vpop.f32.mrf.mxu0
      %v1518 = vadd.f32 %v1449, %v1517
      %v1519 = vpop.f32.mrf.mxu0
      %v1520 = vadd.f32 %v1451, %v1519
      %1521 = vmatmul.bf16.gmra.mxu0 %v809
      %v1522 = vpop.f32.mrf.mxu0
      %v1523 = vadd.f32 %v1454, %v1522
      %v1524 = vpop.f32.mrf.mxu0
      %v1525 = vadd.f32 %v1456, %v1524
      %1526 = vmatmul.bf16.gmra.mxu0 %v818
      %v1527 = vpop.f32.mrf.mxu0
      %v1528 = vadd.f32 %v1459, %v1527
      %v1529 = vpop.f32.mrf.mxu0
      %v1530 = vadd.f32 %v1461, %v1529
      %1531 = vmatmul.bf16.gmra.mxu0 %v827
      %v1532 = vpop.f32.mrf.mxu0
      %v1533 = vadd.f32 %v1464, %v1532
      %v1534 = vpop.f32.mrf.mxu0
      %v1535 = vadd.f32 %v1466, %v1534
      %1536 = vmatmul.bf16.gmra.mxu0 %v836
      %v1537 = vpop.f32.mrf.mxu0
      %v1538 = vadd.f32 %v1469, %v1537
      %v1539 = vpop.f32.mrf.mxu0
      %v1540 = vadd.f32 %v1471, %v1539
      %1541 = vmatmul.bf16.gmra.mxu0 %v845
      %v1542 = vpop.f32.mrf.mxu0
      %v1543 = vadd.f32 %v1474, %v1542
      %v1544 = vpop.f32.mrf.mxu0
      %v1545 = vadd.f32 %v1476, %v1544
      %1546 = vmatmul.bf16.gmra.mxu0 %v854
      %v1547 = vpop.f32.mrf.mxu0
      %v1548 = vadd.f32 %v1479, %v1547
      %v1549 = vpop.f32.mrf.mxu0
      %v1550 = vadd.f32 %v1481, %v1549
      %1551 = vmatmul.bf16.gmra.mxu0 %v863
      %v1552 = vpop.f32.mrf.mxu0
      %v1553 = vadd.f32 %v1484, %v1552
      %v1554 = vpop.f32.mrf.mxu0
      %v1555 = vadd.f32 %v1486, %v1554
      %1556 = vmatmul.bf16.gmra.mxu0 %v872
      %v1557 = vpop.f32.mrf.mxu0
      %v1558 = vadd.f32 %v1489, %v1557
      %v1559 = vpop.f32.mrf.mxu0
      %v1560 = vadd.f32 %v1491, %v1559
      %1561 = vmatmul.bf16.gmra.mxu0 %v881
      %v1562 = vpop.f32.mrf.mxu0
      %v1563 = vadd.f32 %v1494, %v1562
      %v1564 = vpop.f32.mrf.mxu0
      %v1565 = vadd.f32 %v1496, %v1564
      %1566 = vdwg.mxu0
      %1567 = vmatpush.bf16.msra.mxu0 %v1308
      %1568 = vmatpush.bf16.msra.mxu0 %v1307
      %1569 = vmatpush.bf16.msra.mxu0 %v1306
      %1570 = vmatpush.bf16.msra.mxu0 %v1305
      %1571 = vmatpush.bf16.msra.mxu0 %v1304
      %1572 = vmatpush.bf16.msra.mxu0 %v1303
      %1573 = vmatpush.bf16.msra.mxu0 %v1302
      %1574 = vmatpush.bf16.msra.mxu0 %v1301
      %1575 = vmatmul.bf16.gmra.mxu0 %v783
      %v1576 = vpop.f32.mrf.mxu0
      %v1577 = vadd.f32 %v1508, %v1576
      %v1578 = vpop.f32.mrf.mxu0
      %v1579 = vadd.f32 %v1510, %v1578
      %1580 = vmatmul.bf16.gmra.mxu0 %v792
      %v1581 = vpop.f32.mrf.mxu0
      %v1582 = vadd.f32 %v1513, %v1581
      %v1583 = vpop.f32.mrf.mxu0
      %v1584 = vadd.f32 %v1515, %v1583
      %1585 = vmatmul.bf16.gmra.mxu0 %v801
      %v1586 = vpop.f32.mrf.mxu0
      %v1587 = vadd.f32 %v1518, %v1586
      %v1588 = vpop.f32.mrf.mxu0
      %v1589 = vadd.f32 %v1520, %v1588
      %1590 = vmatmul.bf16.gmra.mxu0 %v810
      %v1591 = vpop.f32.mrf.mxu0
      %v1592 = vadd.f32 %v1523, %v1591
      %v1593 = vpop.f32.mrf.mxu0
      %v1594 = vadd.f32 %v1525, %v1593
      %1595 = vmatmul.bf16.gmra.mxu0 %v819
      %v1596 = vpop.f32.mrf.mxu0
      %v1597 = vadd.f32 %v1528, %v1596
      %v1598 = vpop.f32.mrf.mxu0
      %v1599 = vadd.f32 %v1530, %v1598
      %1600 = vmatmul.bf16.gmra.mxu0 %v828
      %v1601 = vpop.f32.mrf.mxu0
      %v1602 = vadd.f32 %v1533, %v1601
      %v1603 = vpop.f32.mrf.mxu0
      %v1604 = vadd.f32 %v1535, %v1603
      %1605 = vmatmul.bf16.gmra.mxu0 %v837
      %v1606 = vpop.f32.mrf.mxu0
      %v1607 = vadd.f32 %v1538, %v1606
      %v1608 = vpop.f32.mrf.mxu0
      %v1609 = vadd.f32 %v1540, %v1608
      %1610 = vmatmul.bf16.gmra.mxu0 %v846
      %v1611 = vpop.f32.mrf.mxu0
      %v1612 = vadd.f32 %v1543, %v1611
      %v1613 = vpop.f32.mrf.mxu0
      %v1614 = vadd.f32 %v1545, %v1613
      %1615 = vmatmul.bf16.gmra.mxu0 %v855
      %v1616 = vpop.f32.mrf.mxu0
      %v1617 = vadd.f32 %v1548, %v1616
      %v1618 = vpop.f32.mrf.mxu0
      %v1619 = vadd.f32 %v1550, %v1618
      %1620 = vmatmul.bf16.gmra.mxu0 %v864
      %v1621 = vpop.f32.mrf.mxu0
      %v1622 = vadd.f32 %v1553, %v1621
      %v1623 = vpop.f32.mrf.mxu0
      %v1624 = vadd.f32 %v1555, %v1623
      %1625 = vmatmul.bf16.gmra.mxu0 %v873
      %v1626 = vpop.f32.mrf.mxu0
      %v1627 = vadd.f32 %v1558, %v1626
      %v1628 = vpop.f32.mrf.mxu0
      %v1629 = vadd.f32 %v1560, %v1628
      %1630 = vmatmul.bf16.gmra.mxu0 %v882
      %v1631 = vpop.f32.mrf.mxu0
      %v1632 = vadd.f32 %v1563, %v1631
      %v1633 = vpop.f32.mrf.mxu0
      %v1634 = vadd.f32 %v1565, %v1633
      %1635 = vdwg.mxu0
      %1636 = vmatpush.bf16.msra.mxu0 %v1316
      %1637 = vmatpush.bf16.msra.mxu0 %v1315
      %1638 = vmatpush.bf16.msra.mxu0 %v1314
      %1639 = vmatpush.bf16.msra.mxu0 %v1313
      %1640 = vmatpush.bf16.msra.mxu0 %v1312
      %1641 = vmatpush.bf16.msra.mxu0 %v1311
      %1642 = vmatpush.bf16.msra.mxu0 %v1310
      %1643 = vmatpush.bf16.msra.mxu0 %v1309
      %1644 = vmatmul.bf16.gmra.mxu0 %v784
      %v1645 = vpop.f32.mrf.mxu0
      %v1646 = vadd.f32 %v1577, %v1645
      %v1647 = vpop.f32.mrf.mxu0
      %v1648 = vadd.f32 %v1579, %v1647
      %1649 = vmatmul.bf16.gmra.mxu0 %v793
      %v1650 = vpop.f32.mrf.mxu0
      %v1651 = vadd.f32 %v1582, %v1650
      %v1652 = vpop.f32.mrf.mxu0
      %v1653 = vadd.f32 %v1584, %v1652
      %1654 = vmatmul.bf16.gmra.mxu0 %v802
      %v1655 = vpop.f32.mrf.mxu0
      %v1656 = vadd.f32 %v1587, %v1655
      %v1657 = vpop.f32.mrf.mxu0
      %v1658 = vadd.f32 %v1589, %v1657
      %1659 = vmatmul.bf16.gmra.mxu0 %v811
      %v1660 = vpop.f32.mrf.mxu0
      %v1661 = vadd.f32 %v1592, %v1660
      %v1662 = vpop.f32.mrf.mxu0
      %v1663 = vadd.f32 %v1594, %v1662
      %1664 = vmatmul.bf16.gmra.mxu0 %v820
      %v1665 = vpop.f32.mrf.mxu0
      %v1666 = vadd.f32 %v1597, %v1665
      %v1667 = vpop.f32.mrf.mxu0
      %v1668 = vadd.f32 %v1599, %v1667
      %1669 = vmatmul.bf16.gmra.mxu0 %v829
      %v1670 = vpop.f32.mrf.mxu0
      %v1671 = vadd.f32 %v1602, %v1670
      %v1672 = vpop.f32.mrf.mxu0
      %v1673 = vadd.f32 %v1604, %v1672
      %1674 = vmatmul.bf16.gmra.mxu0 %v838
      %v1675 = vpop.f32.mrf.mxu0
      %v1676 = vadd.f32 %v1607, %v1675
      %v1677 = vpop.f32.mrf.mxu0
      %v1678 = vadd.f32 %v1609, %v1677
      %1679 = vmatmul.bf16.gmra.mxu0 %v847
      %v1680 = vpop.f32.mrf.mxu0
      %v1681 = vadd.f32 %v1612, %v1680
      %v1682 = vpop.f32.mrf.mxu0
      %v1683 = vadd.f32 %v1614, %v1682
      %1684 = vmatmul.bf16.gmra.mxu0 %v856
      %v1685 = vpop.f32.mrf.mxu0
      %v1686 = vadd.f32 %v1617, %v1685
      %v1687 = vpop.f32.mrf.mxu0
      %v1688 = vadd.f32 %v1619, %v1687
      %1689 = vmatmul.bf16.gmra.mxu0 %v865
      %v1690 = vpop.f32.mrf.mxu0
      %v1691 = vadd.f32 %v1622, %v1690
      %v1692 = vpop.f32.mrf.mxu0
      %v1693 = vadd.f32 %v1624, %v1692
      %1694 = vmatmul.bf16.gmra.mxu0 %v874
      %v1695 = vpop.f32.mrf.mxu0
      %v1696 = vadd.f32 %v1627, %v1695
      %v1697 = vpop.f32.mrf.mxu0
      %v1698 = vadd.f32 %v1629, %v1697
      %1699 = vmatmul.bf16.gmra.mxu0 %v883
      %v1700 = vpop.f32.mrf.mxu0
      %v1701 = vadd.f32 %v1632, %v1700
      %v1702 = vpop.f32.mrf.mxu0
      %v1703 = vadd.f32 %v1634, %v1702
      %1704 = vdwg.mxu0
      %1705 = vmatpush.bf16.msra.mxu0 %v1324
      %1706 = vmatpush.bf16.msra.mxu0 %v1323
      %1707 = vmatpush.bf16.msra.mxu0 %v1322
      %1708 = vmatpush.bf16.msra.mxu0 %v1321
      %1709 = vmatpush.bf16.msra.mxu0 %v1320
      %1710 = vmatpush.bf16.msra.mxu0 %v1319
      %1711 = vmatpush.bf16.msra.mxu0 %v1318
      %1712 = vmatpush.bf16.msra.mxu0 %v1317
      %1713 = vmatmul.bf16.gmra.mxu0 %v785
      %v1714 = vpop.f32.mrf.mxu0
      %v1715 = vadd.f32 %v1646, %v1714
      %v1716 = vpop.f32.mrf.mxu0
      %v1717 = vadd.f32 %v1648, %v1716
      %1718 = vmatmul.bf16.gmra.mxu0 %v794
      %v1719 = vpop.f32.mrf.mxu0
      %v1720 = vadd.f32 %v1651, %v1719
      %v1721 = vpop.f32.mrf.mxu0
      %v1722 = vadd.f32 %v1653, %v1721
      %1723 = vmatmul.bf16.gmra.mxu0 %v803
      %v1724 = vpop.f32.mrf.mxu0
      %v1725 = vadd.f32 %v1656, %v1724
      %v1726 = vpop.f32.mrf.mxu0
      %v1727 = vadd.f32 %v1658, %v1726
      %1728 = vmatmul.bf16.gmra.mxu0 %v812
      %v1729 = vpop.f32.mrf.mxu0
      %v1730 = vadd.f32 %v1661, %v1729
      %v1731 = vpop.f32.mrf.mxu0
      %v1732 = vadd.f32 %v1663, %v1731
      %1733 = vmatmul.bf16.gmra.mxu0 %v821
      %v1734 = vpop.f32.mrf.mxu0
      %v1735 = vadd.f32 %v1666, %v1734
      %v1736 = vpop.f32.mrf.mxu0
      %v1737 = vadd.f32 %v1668, %v1736
      %1738 = vmatmul.bf16.gmra.mxu0 %v830
      %v1739 = vpop.f32.mrf.mxu0
      %v1740 = vadd.f32 %v1671, %v1739
      %v1741 = vpop.f32.mrf.mxu0
      %v1742 = vadd.f32 %v1673, %v1741
      %1743 = vmatmul.bf16.gmra.mxu0 %v839
      %v1744 = vpop.f32.mrf.mxu0
      %v1745 = vadd.f32 %v1676, %v1744
      %v1746 = vpop.f32.mrf.mxu0
      %v1747 = vadd.f32 %v1678, %v1746
      %1748 = vmatmul.bf16.gmra.mxu0 %v848
      %v1749 = vpop.f32.mrf.mxu0
      %v1750 = vadd.f32 %v1681, %v1749
      %v1751 = vpop.f32.mrf.mxu0
      %v1752 = vadd.f32 %v1683, %v1751
      %1753 = vmatmul.bf16.gmra.mxu0 %v857
      %v1754 = vpop.f32.mrf.mxu0
      %v1755 = vadd.f32 %v1686, %v1754
      %v1756 = vpop.f32.mrf.mxu0
      %v1757 = vadd.f32 %v1688, %v1756
      %1758 = vmatmul.bf16.gmra.mxu0 %v866
      %v1759 = vpop.f32.mrf.mxu0
      %v1760 = vadd.f32 %v1691, %v1759
      %v1761 = vpop.f32.mrf.mxu0
      %v1762 = vadd.f32 %v1693, %v1761
      %1763 = vmatmul.bf16.gmra.mxu0 %v875
      %v1764 = vpop.f32.mrf.mxu0
      %v1765 = vadd.f32 %v1696, %v1764
      %v1766 = vpop.f32.mrf.mxu0
      %v1767 = vadd.f32 %v1698, %v1766
      %1768 = vmatmul.bf16.gmra.mxu0 %v884
      %v1769 = vpop.f32.mrf.mxu0
      %v1770 = vadd.f32 %v1701, %v1769
      %v1771 = vpop.f32.mrf.mxu0
      %v1772 = vadd.f32 %v1703, %v1771
      %1773 = vdwg.mxu0
      %1774 = vmatpush.bf16.msra.mxu0 %v1332
      %1775 = vmatpush.bf16.msra.mxu0 %v1331
      %1776 = vmatpush.bf16.msra.mxu0 %v1330
      %1777 = vmatpush.bf16.msra.mxu0 %v1329
      %1778 = vmatpush.bf16.msra.mxu0 %v1328
      %1779 = vmatpush.bf16.msra.mxu0 %v1327
      %1780 = vmatpush.bf16.msra.mxu0 %v1326
      %1781 = vmatpush.bf16.msra.mxu0 %v1325
      %1782 = vmatmul.bf16.gmra.mxu0 %v786
      %v1783 = vpop.f32.mrf.mxu0
      %v1784 = vadd.f32 %v1715, %v1783
      %v1785 = vpop.f32.mrf.mxu0
      %v1786 = vadd.f32 %v1717, %v1785
      %1787 = vmatmul.bf16.gmra.mxu0 %v795
      %v1788 = vpop.f32.mrf.mxu0
      %v1789 = vadd.f32 %v1720, %v1788
      %v1790 = vpop.f32.mrf.mxu0
      %v1791 = vadd.f32 %v1722, %v1790
      %1792 = vmatmul.bf16.gmra.mxu0 %v804
      %v1793 = vpop.f32.mrf.mxu0
      %v1794 = vadd.f32 %v1725, %v1793
      %v1795 = vpop.f32.mrf.mxu0
      %v1796 = vadd.f32 %v1727, %v1795
      %1797 = vmatmul.bf16.gmra.mxu0 %v813
      %v1798 = vpop.f32.mrf.mxu0
      %v1799 = vadd.f32 %v1730, %v1798
      %v1800 = vpop.f32.mrf.mxu0
      %v1801 = vadd.f32 %v1732, %v1800
      %1802 = vmatmul.bf16.gmra.mxu0 %v822
      %v1803 = vpop.f32.mrf.mxu0
      %v1804 = vadd.f32 %v1735, %v1803
      %v1805 = vpop.f32.mrf.mxu0
      %v1806 = vadd.f32 %v1737, %v1805
      %1807 = vmatmul.bf16.gmra.mxu0 %v831
      %v1808 = vpop.f32.mrf.mxu0
      %v1809 = vadd.f32 %v1740, %v1808
      %v1810 = vpop.f32.mrf.mxu0
      %v1811 = vadd.f32 %v1742, %v1810
      %1812 = vmatmul.bf16.gmra.mxu0 %v840
      %v1813 = vpop.f32.mrf.mxu0
      %v1814 = vadd.f32 %v1745, %v1813
      %v1815 = vpop.f32.mrf.mxu0
      %v1816 = vadd.f32 %v1747, %v1815
      %1817 = vmatmul.bf16.gmra.mxu0 %v849
      %v1818 = vpop.f32.mrf.mxu0
      %v1819 = vadd.f32 %v1750, %v1818
      %v1820 = vpop.f32.mrf.mxu0
      %v1821 = vadd.f32 %v1752, %v1820
      %1822 = vmatmul.bf16.gmra.mxu0 %v858
      %v1823 = vpop.f32.mrf.mxu0
      %v1824 = vadd.f32 %v1755, %v1823
      %v1825 = vpop.f32.mrf.mxu0
      %v1826 = vadd.f32 %v1757, %v1825
      %1827 = vmatmul.bf16.gmra.mxu0 %v867
      %v1828 = vpop.f32.mrf.mxu0
      %v1829 = vadd.f32 %v1760, %v1828
      %v1830 = vpop.f32.mrf.mxu0
      %v1831 = vadd.f32 %v1762, %v1830
      %1832 = vmatmul.bf16.gmra.mxu0 %v876
      %v1833 = vpop.f32.mrf.mxu0
      %v1834 = vadd.f32 %v1765, %v1833
      %v1835 = vpop.f32.mrf.mxu0
      %v1836 = vadd.f32 %v1767, %v1835
      %1837 = vmatmul.bf16.gmra.mxu0 %v885
      %v1838 = vpop.f32.mrf.mxu0
      %v1839 = vadd.f32 %v1770, %v1838
      %v1840 = vpop.f32.mrf.mxu0
      %v1841 = vadd.f32 %v1772, %v1840
      %1842 = vdwg.mxu0
      %1843 = vmatpush.bf16.msra.mxu0 %v1340
      %1844 = vmatpush.bf16.msra.mxu0 %v1339
      %1845 = vmatpush.bf16.msra.mxu0 %v1338
      %1846 = vmatpush.bf16.msra.mxu0 %v1337
      %1847 = vmatpush.bf16.msra.mxu0 %v1336
      %1848 = vmatpush.bf16.msra.mxu0 %v1335
      %1849 = vmatpush.bf16.msra.mxu0 %v1334
      %1850 = vmatpush.bf16.msra.mxu0 %v1333
      %1851 = vmatmul.bf16.gmra.mxu0 %v787
      %v1852 = vpop.f32.mrf.mxu0
      %v1853 = vadd.f32 %v1784, %v1852
      %v1854 = vpop.f32.mrf.mxu0
      %v1855 = vadd.f32 %v1786, %v1854
      %1856 = vmatmul.bf16.gmra.mxu0 %v796
      %v1857 = vpop.f32.mrf.mxu0
      %v1858 = vadd.f32 %v1789, %v1857
      %v1859 = vpop.f32.mrf.mxu0
      %v1860 = vadd.f32 %v1791, %v1859
      %1861 = vmatmul.bf16.gmra.mxu0 %v805
      %v1862 = vpop.f32.mrf.mxu0
      %v1863 = vadd.f32 %v1794, %v1862
      %v1864 = vpop.f32.mrf.mxu0
      %v1865 = vadd.f32 %v1796, %v1864
      %1866 = vmatmul.bf16.gmra.mxu0 %v814
      %v1867 = vpop.f32.mrf.mxu0
      %v1868 = vadd.f32 %v1799, %v1867
      %v1869 = vpop.f32.mrf.mxu0
      %v1870 = vadd.f32 %v1801, %v1869
      %1871 = vmatmul.bf16.gmra.mxu0 %v823
      %v1872 = vpop.f32.mrf.mxu0
      %v1873 = vadd.f32 %v1804, %v1872
      %v1874 = vpop.f32.mrf.mxu0
      %v1875 = vadd.f32 %v1806, %v1874
      %1876 = vmatmul.bf16.gmra.mxu0 %v832
      %v1877 = vpop.f32.mrf.mxu0
      %v1878 = vadd.f32 %v1809, %v1877
      %v1879 = vpop.f32.mrf.mxu0
      %v1880 = vadd.f32 %v1811, %v1879
      %1881 = vmatmul.bf16.gmra.mxu0 %v841
      %v1882 = vpop.f32.mrf.mxu0
      %v1883 = vadd.f32 %v1814, %v1882
      %v1884 = vpop.f32.mrf.mxu0
      %v1885 = vadd.f32 %v1816, %v1884
      %1886 = vmatmul.bf16.gmra.mxu0 %v850
      %v1887 = vpop.f32.mrf.mxu0
      %v1888 = vadd.f32 %v1819, %v1887
      %v1889 = vpop.f32.mrf.mxu0
      %v1890 = vadd.f32 %v1821, %v1889
      %1891 = vmatmul.bf16.gmra.mxu0 %v859
      %v1892 = vpop.f32.mrf.mxu0
      %v1893 = vadd.f32 %v1824, %v1892
      %v1894 = vpop.f32.mrf.mxu0
      %v1895 = vadd.f32 %v1826, %v1894
      %1896 = vmatmul.bf16.gmra.mxu0 %v868
      %v1897 = vpop.f32.mrf.mxu0
      %v1898 = vadd.f32 %v1829, %v1897
      %v1899 = vpop.f32.mrf.mxu0
      %v1900 = vadd.f32 %v1831, %v1899
      %1901 = vmatmul.bf16.gmra.mxu0 %v877
      %v1902 = vpop.f32.mrf.mxu0
      %v1903 = vadd.f32 %v1834, %v1902
      %v1904 = vpop.f32.mrf.mxu0
      %v1905 = vadd.f32 %v1836, %v1904
      %1906 = vmatmul.bf16.gmra.mxu0 %v886
      %v1907 = vpop.f32.mrf.mxu0
      %v1908 = vadd.f32 %v1839, %v1907
      %v1909 = vpop.f32.mrf.mxu0
      %v1910 = vadd.f32 %v1841, %v1909
      %1911 = vdwg.mxu0
      %1912 = vmatpush.bf16.msra.mxu0 %v1348
      %1913 = vmatpush.bf16.msra.mxu0 %v1347
      %1914 = vmatpush.bf16.msra.mxu0 %v1346
      %1915 = vmatpush.bf16.msra.mxu0 %v1345
      %1916 = vmatpush.bf16.msra.mxu0 %v1344
      %1917 = vmatpush.bf16.msra.mxu0 %v1343
      %1918 = vmatpush.bf16.msra.mxu0 %v1342
      %1919 = vmatpush.bf16.msra.mxu0 %v1341
      %1920 = vmatmul.bf16.gmra.mxu0 %v788
      %v1921 = vpop.f32.mrf.mxu0
      %v1922 = vadd.f32 %v1853, %v1921
      %v1923 = vpop.f32.mrf.mxu0
      %v1924 = vadd.f32 %v1855, %v1923
      %1925 = vmatmul.bf16.gmra.mxu0 %v797
      %v1926 = vpop.f32.mrf.mxu0
      %v1927 = vadd.f32 %v1858, %v1926
      %v1928 = vpop.f32.mrf.mxu0
      %v1929 = vadd.f32 %v1860, %v1928
      %1930 = vmatmul.bf16.gmra.mxu0 %v806
      %v1931 = vpop.f32.mrf.mxu0
      %v1932 = vadd.f32 %v1863, %v1931
      %v1933 = vpop.f32.mrf.mxu0
      %v1934 = vadd.f32 %v1865, %v1933
      %1935 = vmatmul.bf16.gmra.mxu0 %v815
      %v1936 = vpop.f32.mrf.mxu0
      %v1937 = vadd.f32 %v1868, %v1936
      %v1938 = vpop.f32.mrf.mxu0
      %v1939 = vadd.f32 %v1870, %v1938
      %1940 = vmatmul.bf16.gmra.mxu0 %v824
      %v1941 = vpop.f32.mrf.mxu0
      %v1942 = vadd.f32 %v1873, %v1941
      %v1943 = vpop.f32.mrf.mxu0
      %v1944 = vadd.f32 %v1875, %v1943
      %1945 = vmatmul.bf16.gmra.mxu0 %v833
      %v1946 = vpop.f32.mrf.mxu0
      %v1947 = vadd.f32 %v1878, %v1946
      %v1948 = vpop.f32.mrf.mxu0
      %v1949 = vadd.f32 %v1880, %v1948
      %1950 = vmatmul.bf16.gmra.mxu0 %v842
      %v1951 = vpop.f32.mrf.mxu0
      %v1952 = vadd.f32 %v1883, %v1951
      %v1953 = vpop.f32.mrf.mxu0
      %v1954 = vadd.f32 %v1885, %v1953
      %1955 = vmatmul.bf16.gmra.mxu0 %v851
      %v1956 = vpop.f32.mrf.mxu0
      %v1957 = vadd.f32 %v1888, %v1956
      %v1958 = vpop.f32.mrf.mxu0
      %v1959 = vadd.f32 %v1890, %v1958
      %1960 = vmatmul.bf16.gmra.mxu0 %v860
      %v1961 = vpop.f32.mrf.mxu0
      %v1962 = vadd.f32 %v1893, %v1961
      %v1963 = vpop.f32.mrf.mxu0
      %v1964 = vadd.f32 %v1895, %v1963
      %1965 = vmatmul.bf16.gmra.mxu0 %v869
      %v1966 = vpop.f32.mrf.mxu0
      %v1967 = vadd.f32 %v1898, %v1966
      %v1968 = vpop.f32.mrf.mxu0
      %v1969 = vadd.f32 %v1900, %v1968
      %1970 = vmatmul.bf16.gmra.mxu0 %v878
      %v1971 = vpop.f32.mrf.mxu0
      %v1972 = vadd.f32 %v1903, %v1971
      %v1973 = vpop.f32.mrf.mxu0
      %v1974 = vadd.f32 %v1905, %v1973
      %1975 = vmatmul.bf16.gmra.mxu0 %v887
      %v1976 = vpop.f32.mrf.mxu0
      %v1977 = vadd.f32 %v1908, %v1976
      %v1978 = vpop.f32.mrf.mxu0
      %v1979 = vadd.f32 %v1910, %v1978
      %1980 = vdwg.mxu0
      %1981 = vmatpush.bf16.msra.mxu0 %v1356
      %1982 = vmatpush.bf16.msra.mxu0 %v1355
      %1983 = vmatpush.bf16.msra.mxu0 %v1354
      %1984 = vmatpush.bf16.msra.mxu0 %v1353
      %1985 = vmatpush.bf16.msra.mxu0 %v1352
      %1986 = vmatpush.bf16.msra.mxu0 %v1351
      %1987 = vmatpush.bf16.msra.mxu0 %v1350
      %1988 = vmatpush.bf16.msra.mxu0 %v1349
      %1989 = vmatmul.bf16.gmra.mxu0 %v789
      %v1990 = vpop.f32.mrf.mxu0
      %v1991 = vadd.f32 %v1922, %v1990
      %v1992 = vpop.f32.mrf.mxu0
      %v1993 = vadd.f32 %v1924, %v1992
      %1994 = vmatmul.bf16.gmra.mxu0 %v798
      %v1995 = vpop.f32.mrf.mxu0
      %v1996 = vadd.f32 %v1927, %v1995
      %v1997 = vpop.f32.mrf.mxu0
      %v1998 = vadd.f32 %v1929, %v1997
      %1999 = vmatmul.bf16.gmra.mxu0 %v807
      %v2000 = vpop.f32.mrf.mxu0
      %v2001 = vadd.f32 %v1932, %v2000
      %v2002 = vpop.f32.mrf.mxu0
      %v2003 = vadd.f32 %v1934, %v2002
      %2004 = vmatmul.bf16.gmra.mxu0 %v816
      %v2005 = vpop.f32.mrf.mxu0
      %v2006 = vadd.f32 %v1937, %v2005
      %v2007 = vpop.f32.mrf.mxu0
      %v2008 = vadd.f32 %v1939, %v2007
      %2009 = vmatmul.bf16.gmra.mxu0 %v825
      %v2010 = vpop.f32.mrf.mxu0
      %v2011 = vadd.f32 %v1942, %v2010
      %v2012 = vpop.f32.mrf.mxu0
      %v2013 = vadd.f32 %v1944, %v2012
      %2014 = vmatmul.bf16.gmra.mxu0 %v834
      %v2015 = vpop.f32.mrf.mxu0
      %v2016 = vadd.f32 %v1947, %v2015
      %v2017 = vpop.f32.mrf.mxu0
      %v2018 = vadd.f32 %v1949, %v2017
      %2019 = vmatmul.bf16.gmra.mxu0 %v843
      %v2020 = vpop.f32.mrf.mxu0
      %v2021 = vadd.f32 %v1952, %v2020
      %v2022 = vpop.f32.mrf.mxu0
      %v2023 = vadd.f32 %v1954, %v2022
      %2024 = vmatmul.bf16.gmra.mxu0 %v852
      %v2025 = vpop.f32.mrf.mxu0
      %v2026 = vadd.f32 %v1957, %v2025
      %v2027 = vpop.f32.mrf.mxu0
      %v2028 = vadd.f32 %v1959, %v2027
      %2029 = vmatmul.bf16.gmra.mxu0 %v861
      %v2030 = vpop.f32.mrf.mxu0
      %v2031 = vadd.f32 %v1962, %v2030
      %v2032 = vpop.f32.mrf.mxu0
      %v2033 = vadd.f32 %v1964, %v2032
      %2034 = vmatmul.bf16.gmra.mxu0 %v870
      %v2035 = vpop.f32.mrf.mxu0
      %v2036 = vadd.f32 %v1967, %v2035
      %v2037 = vpop.f32.mrf.mxu0
      %v2038 = vadd.f32 %v1969, %v2037
      %2039 = vmatmul.bf16.gmra.mxu0 %v879
      %v2040 = vpop.f32.mrf.mxu0
      %v2041 = vadd.f32 %v1972, %v2040
      %v2042 = vpop.f32.mrf.mxu0
      %v2043 = vadd.f32 %v1974, %v2042
      %2044 = vmatmul.bf16.gmra.mxu0 %v888
      %v2045 = vpop.f32.mrf.mxu0
      %v2046 = vadd.f32 %v1977, %v2045
      %v2047 = vpop.f32.mrf.mxu0
      %v2048 = vadd.f32 %v1979, %v2047
      %2049 = vdwg.mxu0
      %v2050 = vmax.f32 %v1991, 0.0
      %v2051 = vmax.f32 %v1993, 0.0
      %v2052 = vmax.f32 %v1996, 0.0
      %v2053 = vmax.f32 %v1998, 0.0
      %v2054 = vmax.f32 %v2001, 0.0
      %v2055 = vmax.f32 %v2003, 0.0
      %v2056 = vmax.f32 %v2006, 0.0
      %v2057 = vmax.f32 %v2008, 0.0
      %v2058 = vmax.f32 %v2011, 0.0
      %v2059 = vmax.f32 %v2013, 0.0
      %v2060 = vmax.f32 %v2016, 0.0
      %v2061 = vmax.f32 %v2018, 0.0
      %v2062 = vmax.f32 %v2021, 0.0
      %v2063 = vmax.f32 %v2023, 0.0
      %v2064 = vmax.f32 %v2026, 0.0
      %v2065 = vmax.f32 %v2028, 0.0
      %v2066 = vmax.f32 %v2031, 0.0
      %v2067 = vmax.f32 %v2033, 0.0
      %v2068 = vmax.f32 %v2036, 0.0
      %v2069 = vmax.f32 %v2038, 0.0
      %v2070 = vmax.f32 %v2041, 0.0
      %v2071 = vmax.f32 %v2043, 0.0
      %v2072 = vmax.f32 %v2046, 0.0
      %v2073 = vmax.f32 %v2048, 0.0
      %v2074 = vpack.c.bf16 %v2050, %v2050
      %v2075 = vpack.c.bf16 %v2051, %v2051
      %v2076 = vpack.c.bf16 %v2052, %v2052
      %v2077 = vpack.c.bf16 %v2053, %v2053
      %v2078 = vpack.c.bf16 %v2054, %v2054
      %v2079 = vpack.c.bf16 %v2055, %v2055
      %v2080 = vpack.c.bf16 %v2056, %v2056
      %v2081 = vpack.c.bf16 %v2057, %v2057
      %v2082 = vpack.c.bf16 %v2058, %v2058
      %v2083 = vpack.c.bf16 %v2059, %v2059
      %v2084 = vpack.c.bf16 %v2060, %v2060
      %v2085 = vpack.c.bf16 %v2061, %v2061
      %v2086 = vpack.c.bf16 %v2062, %v2062
      %v2087 = vpack.c.bf16 %v2063, %v2063
      %v2088 = vpack.c.bf16 %v2064, %v2064
      %v2089 = vpack.c.bf16 %v2065, %v2065
      %v2090 = vpack.c.bf16 %v2066, %v2066
      %v2091 = vpack.c.bf16 %v2067, %v2067
      %v2092 = vpack.c.bf16 %v2068, %v2068
      %v2093 = vpack.c.bf16 %v2069, %v2069
      %v2094 = vpack.c.bf16 %v2070, %v2070
      %v2095 = vpack.c.bf16 %v2071, %v2071
      %v2096 = vpack.c.bf16 %v2072, %v2072
      %v2097 = vpack.c.bf16 %v2073, %v2073
      %2098 = vst [vmem:[%s175] sm:$0xf] %v2074
      %2099 = vst [vmem:[%s175 + $0x4] sm:$0xf] %v2075
      %2100 = vst [vmem:[%s175 + $0x8] sm:$0xf] %v2076
      %2101 = vst [vmem:[%s175 + $0xc] sm:$0xf] %v2077
      %2102 = vst [vmem:[%s175 + $0x10] sm:$0xf] %v2078
      %2103 = vst [vmem:[%s175 + $0x14] sm:$0xf] %v2079
      %2104 = vst [vmem:[%s175 + $0x18] sm:$0xf] %v2080
      %2105 = vst [vmem:[%s175 + $0x1c] sm:$0xf] %v2081
      %2106 = vst [vmem:[%s175 + $0x20] sm:$0xf] %v2082
      %2107 = vst [vmem:[%s175 + $0x24] sm:$0xf] %v2083
      %2108 = vst [vmem:[%s175 + $0x28] sm:$0xf] %v2084
      %2109 = vst [vmem:[%s175 + $0x2c] sm:$0xf] %v2085
      %2110 = vst [vmem:[%s175 + $0x30] sm:$0xf] %v2086
      %2111 = vst [vmem:[%s175 + $0x34] sm:$0xf] %v2087
      %2112 = vst [vmem:[%s175 + $0x38] sm:$0xf] %v2088
      %2113 = vst [vmem:[%s175 + $0x3c] sm:$0xf] %v2089
      %2114 = vst [vmem:[%s175 + $0x40] sm:$0xf] %v2090
      %2115 = vst [vmem:[%s175 + $0x44] sm:$0xf] %v2091
      %2116 = vst [vmem:[%s175 + $0x48] sm:$0xf] %v2092
      %2117 = vst [vmem:[%s175 + $0x4c] sm:$0xf] %v2093
      %2118 = vst [vmem:[%s175 + $0x50] sm:$0xf] %v2094
      %2119 = vst [vmem:[%s175 + $0x54] sm:$0xf] %v2095
      %2120 = vst [vmem:[%s175 + $0x58] sm:$0xf] %v2096
      %2121 = vst [vmem:[%s175 + $0x5c] sm:$0xf] %v2097
      %s2122 = smul.u32 24, %s14
      %p2123 = scmp.lt.s32.totalorder %s2122, 47
      %s2124 = scalar_select %p2123, %s2122, 47
      %s2125 = smul.addr %s2124, 4
      %s2126 = scalar_lea.vmem %s3, %s2125
      // Predicated region
      $region33: #{cnn_forward.7} parent=31 // pred_check
        %p2127 = pneg %p100
      $region34: #{cnn_forward.7} parent=31 // pred_check_branch
        %2129 = sbr.rel (%p2127) target = $region36
      $region35: #{cnn_forward.7} parent=31 // pred_region
        %s2130 = smul.u32 24, %s14
      $region36: #{cnn_forward.7} parent=31 // pred_fallthru
        _
    $region32: #{cnn_forward.7} parent=5 // pred_fallthru
      _
    %p2131 = scmp.le.s32.totalorder 2, %s9
    // Predicated region
    $region37: #{cnn_forward.7} parent=5 // pred_check
      %p2132 = pneg %p2131
    $region38: #{cnn_forward.7} parent=5 // pred_check_branch
      %2134 = sbr.rel (%p2132) target = $region40
    $region39: #{cnn_forward.7} parent=5 // pred_region
      %s2135 = ssub.s32 %s9, 2
      // Predicated region
      $region41: #{cnn_forward.7} parent=39 // pred_check
        %p2136 = pneg %p106
      $region42: #{cnn_forward.7} parent=39 // pred_check_branch
        %2138 = sbr.rel (%p2136) target = $region44
      $region43: #{cnn_forward.7} parent=39 // pred_region
        %s2139 = smul.u32 24, %s15
        %p2140 = scmp.lt.s32.totalorder %s2139, 47
        %s2141 = scalar_select %p2140, %s2139, 47
        %s2142 = smul.addr %s2141, 4
        %s2143 = scalar_lea.vmem %s3, %s2142
      $region44: #{cnn_forward.7} parent=39 // pred_fallthru
        _
    $region40: #{cnn_forward.7} parent=5 // pred_fallthru
      _
  $region6: #{cnn_forward.7} parent=0 // loop_footer
    %s13 = sadd.s32 1, %s9
  $region7: #{cnn_forward.7} parent=0 // loop_footer_branch
    %8 = sbr.rel target = $region3
  $region8: #{cnn_forward.7} parent=0 // loop_exit
    _

// kernel: cnn_forward.8
$region0: #{cnn_forward.8}
  #allocation0 [shape = 'u32[]', space=smem, size = 0x4, offset = 0x4, fixed_abs, tag = 'smem constant byte address 0x4 - core index']
  #allocation1 [shape = 'u32[72,128]{1,0:T(1,128)}', space=vmem, size = 0x9000, scoped, tag = 'internal scratch']
  %s0 = inlined_call_operand.vmem [shape: bf16[2,7,2,7,256], index: 0, kind: input, shape index: {}]
  %s1 = inlined_call_operand.vmem [shape: bf16[2,7,7,128], index: 1, kind: output, shape index: {}]
  %s2 = sld [smem:[#allocation0]]
  $region37: #{cnn_forward.8} parent=0
    _
  %s4 = ssub.s32 1, %s2
  %s5 = scalar_select 0, %s4, %s2
  loop: start=0, step=1, limit=4
  $region2: #{cnn_forward.8} parent=0 // loop_pre_header
    _
  $region3: #{cnn_forward.8} parent=0 // loop_header
    %s7 = sphi 0, %s11
    %p8 = scmp.ge.s32.totalorder %s7, 4
    %s17 = sphi 0, %s19
    %s20 = sphi 0, %s17
    %s21 = sphi 0, %s20
    %s37 = sphi 0, %s21
    %s43 = sphi 0, %s45
    %s46 = sphi 0, %s43
    %s47 = sphi 0, %s46
    %s63 = sphi 0, %s47
  $region4: #{cnn_forward.8} parent=0 // loop_header_branch
    %10 = sbr.rel (%p8) target = $region8
  $region5: #{cnn_forward.8} parent=0 // loop_body
    %s12 = ssub.s32 %s7, 1
    %s13 = ssub.s32 %s7, 2
    %s14 = sadd.s32 %s7, 1
    %s15 = ssub.s32 %s7, %s14
    %p16 = scmp.eq.s32.totalorder %s15, 0
    %s18 = sadd.s32 %s17, 1
    %s19 = scalar_select %p16, %s17, %s18
    %p22 = pneg %p16
    %p23 = scmp.eq.s32.totalorder %s7, 1
    %p24 = por %p22, %p23
    %p25 = scmp.ne.s32.totalorder %s17, %s20
    %p26 = scmp.eq.s32.totalorder %s7, 0
    %p27 = por %p25, %p26
    %p28 = scmp.ne.s32.totalorder %s17, %s20
    %p29 = scmp.eq.s32.totalorder %s12, 1
    %p30 = por %p28, %p29
    %p31 = scmp.ne.s32.totalorder %s20, %s21
    %p32 = scmp.eq.s32.totalorder %s12, 0
    %p33 = por %p31, %p32
    %p34 = scmp.ne.s32.totalorder %s20, %s21
    %p35 = scmp.eq.s32.totalorder %s13, 1
    %p36 = por %p34, %p35
    %p38 = scmp.ne.s32.totalorder %s21, %s37
    %p39 = scmp.eq.s32.totalorder %s13, 0
    %p40 = por %p38, %p39
    %s41 = ssub.s32 %s7, %s14
    %p42 = scmp.eq.s32.totalorder %s41, 0
    %s44 = sadd.s32 %s43, 1
    %s45 = scalar_select %p42, %s43, %s44
    %p48 = pneg %p42
    %p49 = scmp.eq.s32.totalorder %s7, 1
    %p50 = por %p48, %p49
    %p51 = scmp.ne.s32.totalorder %s43, %s46
    %p52 = scmp.eq.s32.totalorder %s7, 0
    %p53 = por %p51, %p52
    %p54 = scmp.ne.s32.totalorder %s43, %s46
    %p55 = scmp.eq.s32.totalorder %s12, 1
    %p56 = por %p54, %p55
    %p57 = scmp.ne.s32.totalorder %s46, %s47
    %p58 = scmp.eq.s32.totalorder %s12, 0
    %p59 = por %p57, %p58
    %p60 = scmp.ne.s32.totalorder %s46, %s47
    %p61 = scmp.eq.s32.totalorder %s13, 1
    %p62 = por %p60, %p61
    %p64 = scmp.ne.s32.totalorder %s47, %s63
    %p65 = scmp.eq.s32.totalorder %s13, 0
    %p66 = por %p64, %p65
    %p67 = scmp.le.s32.totalorder 1, %s7
    %p68 = scmp.lt.s32.totalorder %s7, 3
    %p69 = pnand %p67, %p68
    %p70 = pneg %p69
    // Predicated region
    $region9: #{cnn_forward.8} parent=5 // pred_check
      _
    $region10: #{cnn_forward.8} parent=5 // pred_check_branch
      %72 = sbr.rel (%p69) target = $region12
    $region11: #{cnn_forward.8} parent=5 // pred_region
      %s73 = ssub.s32 %s7, 1
    $region12: #{cnn_forward.8} parent=5 // pred_fallthru
      _
    %p74 = scmp.lt.s32.totalorder %s7, 2
    // Predicated region
    $region13: #{cnn_forward.8} parent=5 // pred_check
      %p75 = pneg %p74
    $region14: #{cnn_forward.8} parent=5 // pred_check_branch
      %77 = sbr.rel (%p75) target = $region16
    $region15: #{cnn_forward.8} parent=5 // pred_region
      // Predicated region
      $region17: #{cnn_forward.8} parent=15 // pred_check
        %p78 = pneg %p27
      $region18: #{cnn_forward.8} parent=15 // pred_check_branch
        %80 = sbr.rel (%p78) target = $region20
      $region19: #{cnn_forward.8} parent=15 // pred_region
        %p81 = scmp.lt.s32.totalorder %s7, 1
        %s82 = scalar_select %p81, %s7, 1
        %s83 = smul.addr %s82, 28
        %s84 = smul.addr %s83, 4
        %s85 = scalar_lea.vmem %s0, %s84
      $region20: #{cnn_forward.8} parent=15 // pred_fallthru
        _
    $region16: #{cnn_forward.8} parent=5 // pred_fallthru
      _
    %p86 = scmp.le.s32.totalorder 1, %s7
    %p87 = scmp.lt.s32.totalorder %s7, 3
    %p88 = pnand %p86, %p87
    %p89 = pneg %p88
    // Predicated region
    $region21: #{cnn_forward.8} parent=5 // pred_check
      _
    $region22: #{cnn_forward.8} parent=5 // pred_check_branch
      %91 = sbr.rel (%p88) target = $region24
    $region23: #{cnn_forward.8} parent=5 // pred_region
      %s92 = ssub.s32 %s7, 1
      %p93 = scmp.lt.s32.totalorder %s12, 1
      %s94 = scalar_select %p93, %s12, 1
      %s95 = smul.addr %s94, 28
      %s96 = smul.addr %s95, 4
      %s97 = scalar_lea.vmem %s0, %s96
      %p98 = pneg %p33
      %p99 = pneg %p30
      %p100 = pneg %p59
      %p101 = pneg %p56
      %p102 = scmp.lt.s32.totalorder %s12, 1
      %s103 = scalar_select %p102, %s12, 1
      %s104 = smul.addr %s103, 7
      %s105 = smul.addr %s104, 4
      %s106 = scalar_lea.vmem %s1, %s105
      %p107 = scmp.lt.s32.totalorder %s12, 1
      %s108 = scalar_select %p107, %s12, 1
      %s109 = smul.addr %s108, 28
      %s110 = smul.addr %s109, 4
      %s111 = scalar_lea.vmem %s0, %s110
      %p112 = scmp.lt.s32.totalorder %s12, 1
      %s113 = scalar_select %p112, %s12, 1
      %s114 = smul.addr %s113, 7
      %s115 = smul.addr %s114, 4
      %s116 = scalar_lea.vmem %s1, %s115
      %v117 = vld [vmem:[%s111] sm:$0xff]
      %v118 = vld [vmem:[%s111 + $0x8] sm:$0xff]
      %v119 = vld [vmem:[%s111 + $0x10] sm:$0xff]
      %v120 = vld [vmem:[%s111 + $0x18] sm:$0xff]
      %v121 = vld [vmem:[%s111 + $0x20] sm:$0xff]
      %v122 = vld [vmem:[%s111 + $0x28] sm:$0xff]
      %v123 = vld [vmem:[%s111 + $0x30] sm:$0xff]
      %v124 = vld [vmem:[%s111 + $0x38] sm:$0xff]
      %v125 = vld [vmem:[%s111 + $0x40] sm:$0xff]
      %v126 = vld [vmem:[%s111 + $0x48] sm:$0xff]
      %v127 = vld [vmem:[%s111 + $0x50] sm:$0xff]
      %v128 = vld [vmem:[%s111 + $0x58] sm:$0xff]
      %v129 = vld [vmem:[%s111 + $0x60] sm:$0xff]
      %v130 = vld [vmem:[%s111 + $0x68] sm:$0xff]
      %v131 = vunpack.c.l.bf16 %v117
      %v132 = vunpack.c.h.bf16 %v117
      %v133 = vunpack.c.l.bf16 %v119
      %v134 = vunpack.c.h.bf16 %v119
      %v135 = vunpack.c.l.bf16 %v121
      %v136 = vunpack.c.h.bf16 %v121
      %v137 = vunpack.c.l.bf16 %v123
      %v138 = vunpack.c.h.bf16 %v123
      %v139 = vunpack.c.l.bf16 %v125
      %v140 = vunpack.c.h.bf16 %v125
      %v141 = vunpack.c.l.bf16 %v127
      %v142 = vunpack.c.h.bf16 %v127
      %v143 = vunpack.c.l.bf16 %v129
      %v144 = vunpack.c.h.bf16 %v129
      %v145 = vunpack.c.l.bf16 %v118
      %v146 = vunpack.c.h.bf16 %v118
      %v147 = vunpack.c.l.bf16 %v120
      %v148 = vunpack.c.h.bf16 %v120
      %v149 = vunpack.c.l.bf16 %v122
      %v150 = vunpack.c.h.bf16 %v122
      %v151 = vunpack.c.l.bf16 %v124
      %v152 = vunpack.c.h.bf16 %v124
      %v153 = vunpack.c.l.bf16 %v126
      %v154 = vunpack.c.h.bf16 %v126
      %v155 = vunpack.c.l.bf16 %v128
      %v156 = vunpack.c.h.bf16 %v128
      %v157 = vunpack.c.l.bf16 %v130
      %v158 = vunpack.c.h.bf16 %v130
      %v159 = vmax.f32 %v131, %v145
      %v160 = vmax.f32 %v132, %v146
      %v161 = vmax.f32 %v133, %v147
      %v162 = vmax.f32 %v134, %v148
      %v163 = vmax.f32 %v135, %v149
      %v164 = vmax.f32 %v136, %v150
      %v165 = vmax.f32 %v137, %v151
      %v166 = vmax.f32 %v138, %v152
      %v167 = vmax.f32 %v139, %v153
      %v168 = vmax.f32 %v140, %v154
      %v169 = vmax.f32 %v141, %v155
      %v170 = vmax.f32 %v142, %v156
      %v171 = vmax.f32 %v143, %v157
      %v172 = vmax.f32 %v144, %v158
      %v173 = vpack.c.bf16 %v160, %v159
      %v174 = vpack.c.bf16 %v162, %v161
      %v175 = vpack.c.bf16 %v164, %v163
      %v176 = vpack.c.bf16 %v166, %v165
      %v177 = vpack.c.bf16 %v168, %v167
      %v178 = vpack.c.bf16 %v170, %v169
      %v179 = vpack.c.bf16 %v172, %v171
      %v180 = vunpack.c.l.bf16 %v173
      %v181 = vunpack.c.l.bf16 %v174
      %v182 = vunpack.c.l.bf16 %v175
      %v183 = vunpack.c.l.bf16 %v176
      %v184 = vunpack.c.l.bf16 %v177
      %v185 = vunpack.c.l.bf16 %v178
      %v186 = vunpack.c.l.bf16 %v179
      %v194 = vrot.slane %v173, 4
      %v195 = vrot.slane %v174, 4
      %v196 = vrot.slane %v175, 4
      %v197 = vrot.slane %v176, 4
      %v198 = vrot.slane %v177, 4
      %v199 = vrot.slane %v178, 4
      %v200 = vrot.slane %v179, 4
      %v208 = vunpack.c.l.bf16 %v194
      %v209 = vunpack.c.l.bf16 %v195
      %v210 = vunpack.c.l.bf16 %v196
      %v211 = vunpack.c.l.bf16 %v197
      %v212 = vunpack.c.l.bf16 %v198
      %v213 = vunpack.c.l.bf16 %v199
      %v214 = vunpack.c.l.bf16 %v200
      %v215 = vmax.f32 %v180, %v208
      %v216 = vmax.f32 %v181, %v209
      %v217 = vmax.f32 %v182, %v210
      %v218 = vmax.f32 %v183, %v211
      %v219 = vmax.f32 %v184, %v212
      %v220 = vmax.f32 %v185, %v213
      %v221 = vmax.f32 %v186, %v214
      %v222 = vpack.c.bf16 %v215, %v215
      %v223 = vpack.c.bf16 %v216, %v216
      %v224 = vpack.c.bf16 %v217, %v217
      %v225 = vpack.c.bf16 %v218, %v218
      %v226 = vpack.c.bf16 %v219, %v219
      %v227 = vpack.c.bf16 %v220, %v220
      %v228 = vpack.c.bf16 %v221, %v221
      %vm229 = vcmask 1043456
      %vm230 = vsmask.f32 3328
      %vm231 = vmand %vm229, %vm230
      %v232 = vld [vmem:[%s116] sm:$0xf]
      %v233 = vsel %vm231, %v222, %v232
      %234 = vst [vmem:[%s116] sm:$0xf] %v233
      %v235 = vld [vmem:[%s116 + $0x4] sm:$0xf]
      %v236 = vsel %vm231, %v223, %v235
      %237 = vst [vmem:[%s116 + $0x4] sm:$0xf] %v236
      %v238 = vld [vmem:[%s116 + $0x8] sm:$0xf]
      %v239 = vsel %vm231, %v224, %v238
      %240 = vst [vmem:[%s116 + $0x8] sm:$0xf] %v239
      %v241 = vld [vmem:[%s116 + $0xc] sm:$0xf]
      %v242 = vsel %vm231, %v225, %v241
      %243 = vst [vmem:[%s116 + $0xc] sm:$0xf] %v242
      %v244 = vld [vmem:[%s116 + $0x10] sm:$0xf]
      %v245 = vsel %vm231, %v226, %v244
      %246 = vst [vmem:[%s116 + $0x10] sm:$0xf] %v245
      %v247 = vld [vmem:[%s116 + $0x14] sm:$0xf]
      %v248 = vsel %vm231, %v227, %v247
      %249 = vst [vmem:[%s116 + $0x14] sm:$0xf] %v248
      %v250 = vld [vmem:[%s116 + $0x18] sm:$0xf]
      %v251 = vsel %vm231, %v228, %v250
      %252 = vst [vmem:[%s116 + $0x18] sm:$0xf] %v251
      %p253 = scmp.lt.s32.totalorder %s12, 1
      %s254 = scalar_select %p253, %s12, 1
      %s255 = smul.addr %s254, 7
      %s256 = smul.addr %s255, 4
      %s257 = scalar_lea.vmem %s1, %s256
      // Predicated region
      $region25: #{cnn_forward.8} parent=23 // pred_check
        %p258 = pneg %p56
      $region26: #{cnn_forward.8} parent=23 // pred_check_branch
        %260 = sbr.rel (%p258) target = $region28
      $region27: #{cnn_forward.8} parent=23 // pred_region
        _
      $region28: #{cnn_forward.8} parent=23 // pred_fallthru
        _
    $region24: #{cnn_forward.8} parent=5 // pred_fallthru
      _
    %p261 = scmp.le.s32.totalorder 2, %s7
    // Predicated region
    $region29: #{cnn_forward.8} parent=5 // pred_check
      %p262 = pneg %p261
    $region30: #{cnn_forward.8} parent=5 // pred_check_branch
      %264 = sbr.rel (%p262) target = $region32
    $region31: #{cnn_forward.8} parent=5 // pred_region
      %s265 = ssub.s32 %s7, 2
      // Predicated region
      $region33: #{cnn_forward.8} parent=31 // pred_check
        %p266 = pneg %p62
      $region34: #{cnn_forward.8} parent=31 // pred_check_branch
        %268 = sbr.rel (%p266) target = $region36
      $region35: #{cnn_forward.8} parent=31 // pred_region
        %p269 = scmp.lt.s32.totalorder %s13, 1
        %s270 = scalar_select %p269, %s13, 1
        %s271 = smul.addr %s270, 7
        %s272 = smul.addr %s271, 4
        %s273 = scalar_lea.vmem %s1, %s272
      $region36: #{cnn_forward.8} parent=31 // pred_fallthru
        _
    $region32: #{cnn_forward.8} parent=5 // pred_fallthru
      _
  $region6: #{cnn_forward.8} parent=0 // loop_footer
    %s11 = sadd.s32 1, %s7
  $region7: #{cnn_forward.8} parent=0 // loop_footer_branch
    %6 = sbr.rel target = $region3
  $region8: #{cnn_forward.8} parent=0 // loop_exit
    _

// kernel: cnn_forward.9
$region0: #{cnn_forward.9}
  #allocation0 [shape = 'u32[]', space=smem, size = 0x4, offset = 0x4, fixed_abs, tag = 'smem constant byte address 0x4 - core index']
  #allocation1 [shape = 'u32[72,128]{1,0:T(1,128)}', space=vmem, size = 0x9000, scoped, tag = 'internal scratch']
  %s0 = inlined_call_operand.vmem [shape: bf16[24,1152], index: 0, kind: input, shape index: {}]
  %s1 = inlined_call_operand.vmem [shape: bf16[1152,128], index: 1, kind: input, shape index: {}]
  %s2 = inlined_call_operand.vmem [shape: f32[1,128], index: 2, kind: input, shape index: {}]
  %s3 = inlined_call_operand.vmem [shape: bf16[768,768], index: 3, kind: input, shape index: {}]
  %s4 = inlined_call_operand.vmem [shape: f32[1,768], index: 4, kind: input, shape index: {}]
  %s5 = inlined_call_operand.vmem [shape: bf16[768,512], index: 5, kind: input, shape index: {}]
  %s6 = inlined_call_operand.vmem [shape: f32[1,512], index: 6, kind: input, shape index: {}]
  %s7 = inlined_call_operand.vmem [shape: bf16[512,13], index: 7, kind: input, shape index: {}]
  %s8 = inlined_call_operand.vmem [shape: f32[1,13], index: 8, kind: input, shape index: {}]
  %s9 = inlined_call_operand.hbm [shape: f32[2,13], index: 9, kind: output, shape index: {}]
  %s10 = sld [smem:[#allocation0]]
  $region46: #{cnn_forward.9} parent=0
    _
  %s12 = ssub.s32 1, %s10
  %s13 = scalar_select 0, %s12, %s10
  $region1: #{cnn_forward.9} parent=0
    #allocation2 [shape = 'u8[1024]{0}', space=vmem, size = 0x400, scoped, tag = 'output window, operand 0, single buffered']
    #allocation3 [shape = 's32[1]{0}', space=sflag, size = 0x4, scoped, tag = 'scoped memory for cnn_forward.9']
    %14 = vsyncpa [#allocation3], 0
    // Predicated region
    $region2: #{cnn_forward.9} parent=1 // pred_check
      _
    $region3: #{cnn_forward.9} parent=1 // pred_check_branch
      %16 = sbr.rel (0) target = $region5
    $region4: #{cnn_forward.9} parent=1 // pred_region
      _
    $region5: #{cnn_forward.9} parent=1 // pred_fallthru
      _
    // Predicated region
    $region6: #{cnn_forward.9} parent=1 // pred_check
      _
    $region7: #{cnn_forward.9} parent=1 // pred_check_branch
      %18 = sbr.rel (0) target = $region9
    $region8: #{cnn_forward.9} parent=1 // pred_region
      _
    $region9: #{cnn_forward.9} parent=1 // pred_fallthru
      _
    // Predicated region
    $region10: #{cnn_forward.9} parent=1 // pred_check
      _
    $region11: #{cnn_forward.9} parent=1 // pred_check_branch
      %20 = sbr.rel (0) target = $region13
    $region12: #{cnn_forward.9} parent=1 // pred_region
      _
    $region13: #{cnn_forward.9} parent=1 // pred_fallthru
      _
    // Predicated region
    $region14: #{cnn_forward.9} parent=1 // pred_check
      _
    $region15: #{cnn_forward.9} parent=1 // pred_check_branch
      %22 = sbr.rel (0) target = $region17
    $region16: #{cnn_forward.9} parent=1 // pred_region
      _
    $region17: #{cnn_forward.9} parent=1 // pred_fallthru
      _
    // Predicated region
    $region18: #{cnn_forward.9} parent=1 // pred_check
      _
    $region19: #{cnn_forward.9} parent=1 // pred_check_branch
      %24 = sbr.rel (0) target = $region21
    $region20: #{cnn_forward.9} parent=1 // pred_region
      _
    $region21: #{cnn_forward.9} parent=1 // pred_fallthru
      _
    // Predicated region
    $region22: #{cnn_forward.9} parent=1 // pred_check
      _
    $region23: #{cnn_forward.9} parent=1 // pred_check_branch
      %26 = sbr.rel (0) target = $region25
    $region24: #{cnn_forward.9} parent=1 // pred_region
      _
    $region25: #{cnn_forward.9} parent=1 // pred_fallthru
      _
    // Predicated region
    $region26: #{cnn_forward.9} parent=1 // pred_check
      _
    $region27: #{cnn_forward.9} parent=1 // pred_check_branch
      %28 = sbr.rel (0) target = $region29
    $region28: #{cnn_forward.9} parent=1 // pred_region
      _
    $region29: #{cnn_forward.9} parent=1 // pred_fallthru
      _
    // Predicated region
    $region30: #{cnn_forward.9} parent=1 // pred_check
      _
    $region31: #{cnn_forward.9} parent=1 // pred_check_branch
      %30 = sbr.rel (0) target = $region33
    $region32: #{cnn_forward.9} parent=1 // pred_region
      _
    $region33: #{cnn_forward.9} parent=1 // pred_fallthru
      _
    // Predicated region
    $region34: #{cnn_forward.9} parent=1 // pred_check
      _
    $region35: #{cnn_forward.9} parent=1 // pred_check_branch
      %32 = sbr.rel (0) target = $region37
    $region36: #{cnn_forward.9} parent=1 // pred_region
      _
    $region37: #{cnn_forward.9} parent=1 // pred_fallthru
      _
    %v33 = vld [vmem:[%s0] sm:$0xff]
    %v34 = vld [vmem:[%s0 + $0x8] sm:$0xff]
    %v35 = vld [vmem:[%s0 + $0x10] sm:$0xff]
    %v36 = vld [vmem:[%s0 + $0x18] sm:$0xff]
    %v37 = vld [vmem:[%s0 + $0x20] sm:$0xf]
    %v38 = vld [vmem:[%s0 + $0x24] sm:$0xff]
    %v39 = vld [vmem:[%s0 + $0x2c] sm:$0xff]
    %v40 = vld [vmem:[%s0 + $0x34] sm:$0xff]
    %v41 = vld [vmem:[%s0 + $0x3c] sm:$0xff]
    %v42 = vld [vmem:[%s0 + $0x44] sm:$0xf]
    %v43 = vld [vmem:[%s0 + $0x48] sm:$0xff]
    %v44 = vld [vmem:[%s0 + $0x50] sm:$0xff]
    %v45 = vld [vmem:[%s0 + $0x58] sm:$0xff]
    %v46 = vld [vmem:[%s0 + $0x60] sm:$0xff]
    %v47 = vld [vmem:[%s0 + $0x68] sm:$0xf]
    %v48 = vld [vmem:[%s1] sm:$0xf]
    %v49 = vld [vmem:[%s1 + $0x4] sm:$0xf]
    %v50 = vld [vmem:[%s1 + $0x8] sm:$0xf]
    %v51 = vld [vmem:[%s1 + $0xc] sm:$0xf]
    %v52 = vld [vmem:[%s1 + $0x10] sm:$0xf]
    %v53 = vld [vmem:[%s1 + $0x14] sm:$0xf]
    %v54 = vld [vmem:[%s1 + $0x18] sm:$0xf]
    %v55 = vld [vmem:[%s1 + $0x1c] sm:$0xf]
    %v56 = vld [vmem:[%s1 + $0x20] sm:$0xf]
    %v57 = vld [vmem:[%s1 + $0x24] sm:$0xf]
    %v58 = vld [vmem:[%s1 + $0x28] sm:$0xf]
    %v59 = vld [vmem:[%s1 + $0x2c] sm:$0xf]
    %v60 = vld [vmem:[%s1 + $0x30] sm:$0xf]
    %v61 = vld [vmem:[%s1 + $0x34] sm:$0xf]
    %v62 = vld [vmem:[%s1 + $0x38] sm:$0xf]
    %v63 = vld [vmem:[%s1 + $0x3c] sm:$0xf]
    %v64 = vld [vmem:[%s1 + $0x40] sm:$0xf]
    %v65 = vld [vmem:[%s1 + $0x44] sm:$0xf]
    %v66 = vld [vmem:[%s1 + $0x48] sm:$0xf]
    %v67 = vld [vmem:[%s1 + $0x4c] sm:$0xf]
    %v68 = vld [vmem:[%s1 + $0x50] sm:$0xf]
    %v69 = vld [vmem:[%s1 + $0x54] sm:$0xf]
    %v70 = vld [vmem:[%s1 + $0x58] sm:$0xf]
    %v71 = vld [vmem:[%s1 + $0x5c] sm:$0xf]
    %v72 = vld [vmem:[%s1 + $0x60] sm:$0xf]
    %v73 = vld [vmem:[%s1 + $0x64] sm:$0xf]
    %v74 = vld [vmem:[%s1 + $0x68] sm:$0xf]
    %v75 = vld [vmem:[%s1 + $0x6c] sm:$0xf]
    %v76 = vld [vmem:[%s1 + $0x70] sm:$0xf]
    %v77 = vld [vmem:[%s1 + $0x74] sm:$0xf]
    %v78 = vld [vmem:[%s1 + $0x78] sm:$0xf]
    %v79 = vld [vmem:[%s1 + $0x7c] sm:$0xf]
    %v80 = vld [vmem:[%s1 + $0x80] sm:$0xf]
    %v81 = vld [vmem:[%s1 + $0x84] sm:$0xf]
    %v82 = vld [vmem:[%s1 + $0x88] sm:$0xf]
    %v83 = vld [vmem:[%s1 + $0x8c] sm:$0xf]
    %v84 = vld [vmem:[%s1 + $0x90] sm:$0xf]
    %v85 = vld [vmem:[%s1 + $0x94] sm:$0xf]
    %v86 = vld [vmem:[%s1 + $0x98] sm:$0xf]
    %v87 = vld [vmem:[%s1 + $0x9c] sm:$0xf]
    %v88 = vld [vmem:[%s1 + $0xa0] sm:$0xf]
    %v89 = vld [vmem:[%s1 + $0xa4] sm:$0xf]
    %v90 = vld [vmem:[%s1 + $0xa8] sm:$0xf]
    %v91 = vld [vmem:[%s1 + $0xac] sm:$0xf]
    %v92 = vld [vmem:[%s1 + $0xb0] sm:$0xf]
    %v93 = vld [vmem:[%s1 + $0xb4] sm:$0xf]
    %v94 = vld [vmem:[%s1 + $0xb8] sm:$0xf]
    %v95 = vld [vmem:[%s1 + $0xbc] sm:$0xf]
    %v96 = vld [vmem:[%s1 + $0xc0] sm:$0xf]
    %v97 = vld [vmem:[%s1 + $0xc4] sm:$0xf]
    %v98 = vld [vmem:[%s1 + $0xc8] sm:$0xf]
    %v99 = vld [vmem:[%s1 + $0xcc] sm:$0xf]
    %v100 = vld [vmem:[%s1 + $0xd0] sm:$0xf]
    %v101 = vld [vmem:[%s1 + $0xd4] sm:$0xf]
    %v102 = vld [vmem:[%s1 + $0xd8] sm:$0xf]
    %v103 = vld [vmem:[%s1 + $0xdc] sm:$0xf]
    %v104 = vld [vmem:[%s1 + $0xe0] sm:$0xf]
    %v105 = vld [vmem:[%s1 + $0xe4] sm:$0xf]
    %v106 = vld [vmem:[%s1 + $0xe8] sm:$0xf]
    %v107 = vld [vmem:[%s1 + $0xec] sm:$0xf]
    %v108 = vld [vmem:[%s1 + $0xf0] sm:$0xf]
    %v109 = vld [vmem:[%s1 + $0xf4] sm:$0xf]
    %v110 = vld [vmem:[%s1 + $0xf8] sm:$0xf]
    %v111 = vld [vmem:[%s1 + $0xfc] sm:$0xf]
    %v112 = vld [vmem:[%s1 + $0x100] sm:$0xf]
    %v113 = vld [vmem:[%s1 + $0x104] sm:$0xf]
    %v114 = vld [vmem:[%s1 + $0x108] sm:$0xf]
    %v115 = vld [vmem:[%s1 + $0x10c] sm:$0xf]
    %v116 = vld [vmem:[%s1 + $0x110] sm:$0xf]
    %v117 = vld [vmem:[%s1 + $0x114] sm:$0xf]
    %v118 = vld [vmem:[%s1 + $0x118] sm:$0xf]
    %v119 = vld [vmem:[%s1 + $0x11c] sm:$0xf]
    %v120 = vld [vmem:[%s1 + $0x120] sm:$0xf]
    %v121 = vld [vmem:[%s1 + $0x124] sm:$0xf]
    %v122 = vld [vmem:[%s1 + $0x128] sm:$0xf]
    %v123 = vld [vmem:[%s1 + $0x12c] sm:$0xf]
    %v124 = vld [vmem:[%s1 + $0x130] sm:$0xf]
    %v125 = vld [vmem:[%s1 + $0x134] sm:$0xf]
    %v126 = vld [vmem:[%s1 + $0x138] sm:$0xf]
    %v127 = vld [vmem:[%s1 + $0x13c] sm:$0xf]
    %v128 = vld [vmem:[%s1 + $0x140] sm:$0xf]
    %v129 = vld [vmem:[%s1 + $0x144] sm:$0xf]
    %v130 = vld [vmem:[%s1 + $0x148] sm:$0xf]
    %v131 = vld [vmem:[%s1 + $0x14c] sm:$0xf]
    %v132 = vld [vmem:[%s1 + $0x150] sm:$0xf]
    %v133 = vld [vmem:[%s1 + $0x154] sm:$0xf]
    %v134 = vld [vmem:[%s1 + $0x158] sm:$0xf]
    %v135 = vld [vmem:[%s1 + $0x15c] sm:$0xf]
    %v136 = vld [vmem:[%s1 + $0x160] sm:$0xf]
    %v137 = vld [vmem:[%s1 + $0x164] sm:$0xf]
    %v138 = vld [vmem:[%s1 + $0x168] sm:$0xf]
    %v139 = vld [vmem:[%s1 + $0x16c] sm:$0xf]
    %v140 = vld [vmem:[%s1 + $0x170] sm:$0xf]
    %v141 = vld [vmem:[%s1 + $0x174] sm:$0xf]
    %v142 = vld [vmem:[%s1 + $0x178] sm:$0xf]
    %v143 = vld [vmem:[%s1 + $0x17c] sm:$0xf]
    %v144 = vld [vmem:[%s1 + $0x180] sm:$0xf]
    %v145 = vld [vmem:[%s1 + $0x184] sm:$0xf]
    %v146 = vld [vmem:[%s1 + $0x188] sm:$0xf]
    %v147 = vld [vmem:[%s1 + $0x18c] sm:$0xf]
    %v148 = vld [vmem:[%s1 + $0x190] sm:$0xf]
    %v149 = vld [vmem:[%s1 + $0x194] sm:$0xf]
    %v150 = vld [vmem:[%s1 + $0x198] sm:$0xf]
    %v151 = vld [vmem:[%s1 + $0x19c] sm:$0xf]
    %v152 = vld [vmem:[%s1 + $0x1a0] sm:$0xf]
    %v153 = vld [vmem:[%s1 + $0x1a4] sm:$0xf]
    %v154 = vld [vmem:[%s1 + $0x1a8] sm:$0xf]
    %v155 = vld [vmem:[%s1 + $0x1ac] sm:$0xf]
    %v156 = vld [vmem:[%s1 + $0x1b0] sm:$0xf]
    %v157 = vld [vmem:[%s1 + $0x1b4] sm:$0xf]
    %v158 = vld [vmem:[%s1 + $0x1b8] sm:$0xf]
    %v159 = vld [vmem:[%s1 + $0x1bc] sm:$0xf]
    %v160 = vld [vmem:[%s1 + $0x1c0] sm:$0xf]
    %v161 = vld [vmem:[%s1 + $0x1c4] sm:$0xf]
    %v162 = vld [vmem:[%s1 + $0x1c8] sm:$0xf]
    %v163 = vld [vmem:[%s1 + $0x1cc] sm:$0xf]
    %v164 = vld [vmem:[%s1 + $0x1d0] sm:$0xf]
    %v165 = vld [vmem:[%s1 + $0x1d4] sm:$0xf]
    %v166 = vld [vmem:[%s1 + $0x1d8] sm:$0xf]
    %v167 = vld [vmem:[%s1 + $0x1dc] sm:$0xf]
    %v168 = vld [vmem:[%s1 + $0x1e0] sm:$0xf]
    %v169 = vld [vmem:[%s1 + $0x1e4] sm:$0xf]
    %v170 = vld [vmem:[%s1 + $0x1e8] sm:$0xf]
    %v171 = vld [vmem:[%s1 + $0x1ec] sm:$0xf]
    %v172 = vld [vmem:[%s1 + $0x1f0] sm:$0xf]
    %v173 = vld [vmem:[%s1 + $0x1f4] sm:$0xf]
    %v174 = vld [vmem:[%s1 + $0x1f8] sm:$0xf]
    %v175 = vld [vmem:[%s1 + $0x1fc] sm:$0xf]
    %v176 = vld [vmem:[%s1 + $0x200] sm:$0xf]
    %v177 = vld [vmem:[%s1 + $0x204] sm:$0xf]
    %v178 = vld [vmem:[%s1 + $0x208] sm:$0xf]
    %v179 = vld [vmem:[%s1 + $0x20c] sm:$0xf]
    %v180 = vld [vmem:[%s1 + $0x210] sm:$0xf]
    %v181 = vld [vmem:[%s1 + $0x214] sm:$0xf]
    %v182 = vld [vmem:[%s1 + $0x218] sm:$0xf]
    %v183 = vld [vmem:[%s1 + $0x21c] sm:$0xf]
    %v184 = vld [vmem:[%s1 + $0x220] sm:$0xf]
    %v185 = vld [vmem:[%s1 + $0x224] sm:$0xf]
    %v186 = vld [vmem:[%s1 + $0x228] sm:$0xf]
    %v187 = vld [vmem:[%s1 + $0x22c] sm:$0xf]
    %v188 = vld [vmem:[%s1 + $0x230] sm:$0xf]
    %v189 = vld [vmem:[%s1 + $0x234] sm:$0xf]
    %v190 = vld [vmem:[%s1 + $0x238] sm:$0xf]
    %v191 = vld [vmem:[%s1 + $0x23c] sm:$0xf]
    %v192 = vld [vmem:[%s2] sm:$0x1]
    %v194 = vperm.slane %v192, 0
    %v211 = vunpack.c.l.b16 %v33
    %v212 = vunpack.c.h.b16 %v33
    %v213 = vunpack.c.l.b16 %v34
    %v214 = vunpack.c.h.b16 %v34
    %v215 = vunpack.c.l.b16 %v35
    %v216 = vunpack.c.h.b16 %v35
    %v217 = vunpack.c.l.b16 %v36
    %v218 = vunpack.c.h.b16 %v36
    %v219 = vunpack.c.l.b16 %v37
    %v220 = vunpack.c.l.b16 %v38
    %v221 = vunpack.c.h.b16 %v38
    %v222 = vunpack.c.l.b16 %v39
    %v223 = vunpack.c.h.b16 %v39
    %v224 = vunpack.c.l.b16 %v40
    %v225 = vunpack.c.h.b16 %v40
    %v226 = vunpack.c.l.b16 %v41
    %v227 = vunpack.c.h.b16 %v41
    %v228 = vunpack.c.l.b16 %v42
    %v229 = vunpack.c.l.b16 %v43
    %v230 = vunpack.c.h.b16 %v43
    %v231 = vunpack.c.l.b16 %v44
    %v232 = vunpack.c.h.b16 %v44
    %v233 = vunpack.c.l.b16 %v45
    %v234 = vunpack.c.h.b16 %v45
    %v235 = vunpack.c.l.b16 %v46
    %v236 = vunpack.c.h.b16 %v46
    %v237 = vunpack.c.l.b16 %v47
    %v238 = vpack.c.b16 %v220, %v211
    %v239 = vpack.c.b16 %v221, %v212
    %v240 = vpack.c.b16 %v222, %v213
    %v241 = vpack.c.b16 %v223, %v214
    %v242 = vpack.c.b16 %v224, %v215
    %v243 = vpack.c.b16 %v225, %v216
    %v244 = vpack.c.b16 %v226, %v217
    %v245 = vpack.c.b16 %v227, %v218
    %v246 = vpack.c.b16 %v228, %v219
    %v247 = vpack.c.b16 %v229, %v229
    %v248 = vpack.c.b16 %v230, %v230
    %v249 = vpack.c.b16 %v231, %v231
    %v250 = vpack.c.b16 %v232, %v232
    %v251 = vpack.c.b16 %v233, %v233
    %v252 = vpack.c.b16 %v234, %v234
    %v253 = vpack.c.b16 %v235, %v235
    %v254 = vpack.c.b16 %v236, %v236
    %v255 = vpack.c.b16 %v237, %v237
    %v418 = vunpack.c.l.b16 %v48
    %v419 = vunpack.c.l.b16 %v49
    %v420 = vunpack.c.l.b16 %v50
    %v421 = vunpack.c.l.b16 %v51
    %v422 = vunpack.c.l.b16 %v52
    %v423 = vunpack.c.l.b16 %v53
    %v424 = vunpack.c.l.b16 %v54
    %v425 = vunpack.c.l.b16 %v55
    %v426 = vunpack.c.l.b16 %v56
    %v427 = vunpack.c.l.b16 %v57
    %v428 = vunpack.c.l.b16 %v58
    %v429 = vunpack.c.l.b16 %v59
    %v430 = vunpack.c.l.b16 %v60
    %v431 = vunpack.c.l.b16 %v61
    %v432 = vunpack.c.l.b16 %v62
    %v433 = vunpack.c.l.b16 %v63
    %v434 = vunpack.c.l.b16 %v64
    %v435 = vunpack.c.l.b16 %v65
    %v436 = vunpack.c.l.b16 %v66
    %v437 = vunpack.c.l.b16 %v67
    %v438 = vunpack.c.l.b16 %v68
    %v439 = vunpack.c.l.b16 %v69
    %v440 = vunpack.c.l.b16 %v70
    %v441 = vunpack.c.l.b16 %v71
    %v442 = vunpack.c.l.b16 %v72
    %v443 = vunpack.c.l.b16 %v73
    %v444 = vunpack.c.l.b16 %v74
    %v445 = vunpack.c.l.b16 %v75
    %v446 = vunpack.c.l.b16 %v76
    %v447 = vunpack.c.l.b16 %v77
    %v448 = vunpack.c.l.b16 %v78
    %v449 = vunpack.c.l.b16 %v79
    %v450 = vunpack.c.l.b16 %v80
    %v451 = vunpack.c.l.b16 %v81
    %v452 = vunpack.c.l.b16 %v82
    %v453 = vunpack.c.l.b16 %v83
    %v454 = vunpack.c.l.b16 %v84
    %v455 = vunpack.c.l.b16 %v85
    %v456 = vunpack.c.l.b16 %v86
    %v457 = vunpack.c.l.b16 %v87
    %v458 = vunpack.c.l.b16 %v88
    %v459 = vunpack.c.l.b16 %v89
    %v460 = vunpack.c.l.b16 %v90
    %v461 = vunpack.c.l.b16 %v91
    %v462 = vunpack.c.l.b16 %v92
    %v463 = vunpack.c.l.b16 %v93
    %v464 = vunpack.c.l.b16 %v94
    %v465 = vunpack.c.l.b16 %v95
    %v466 = vunpack.c.l.b16 %v96
    %v467 = vunpack.c.l.b16 %v97
    %v468 = vunpack.c.l.b16 %v98
    %v469 = vunpack.c.l.b16 %v99
    %v470 = vunpack.c.l.b16 %v100
    %v471 = vunpack.c.l.b16 %v101
    %v472 = vunpack.c.l.b16 %v102
    %v473 = vunpack.c.l.b16 %v103
    %v474 = vunpack.c.l.b16 %v104
    %v475 = vunpack.c.l.b16 %v105
    %v476 = vunpack.c.l.b16 %v106
    %v477 = vunpack.c.l.b16 %v107
    %v478 = vunpack.c.l.b16 %v108
    %v479 = vunpack.c.l.b16 %v109
    %v480 = vunpack.c.l.b16 %v110
    %v481 = vunpack.c.l.b16 %v111
    %v482 = vunpack.c.l.b16 %v112
    %v483 = vunpack.c.l.b16 %v113
    %v484 = vunpack.c.l.b16 %v114
    %v485 = vunpack.c.l.b16 %v115
    %v486 = vunpack.c.l.b16 %v116
    %v487 = vunpack.c.l.b16 %v117
    %v488 = vunpack.c.l.b16 %v118
    %v489 = vunpack.c.l.b16 %v119
    %v490 = vunpack.c.l.b16 %v120
    %v491 = vunpack.c.l.b16 %v121
    %v492 = vunpack.c.l.b16 %v122
    %v493 = vunpack.c.l.b16 %v123
    %v494 = vunpack.c.l.b16 %v124
    %v495 = vunpack.c.l.b16 %v125
    %v496 = vunpack.c.l.b16 %v126
    %v497 = vunpack.c.l.b16 %v127
    %v498 = vunpack.c.l.b16 %v128
    %v499 = vunpack.c.l.b16 %v129
    %v500 = vunpack.c.l.b16 %v130
    %v501 = vunpack.c.l.b16 %v131
    %v502 = vunpack.c.l.b16 %v132
    %v503 = vunpack.c.l.b16 %v133
    %v504 = vunpack.c.l.b16 %v134
    %v505 = vunpack.c.l.b16 %v135
    %v506 = vunpack.c.l.b16 %v136
    %v507 = vunpack.c.l.b16 %v137
    %v508 = vunpack.c.l.b16 %v138
    %v509 = vunpack.c.l.b16 %v139
    %v510 = vunpack.c.l.b16 %v140
    %v511 = vunpack.c.l.b16 %v141
    %v512 = vunpack.c.l.b16 %v142
    %v513 = vunpack.c.l.b16 %v143
    %v514 = vunpack.c.l.b16 %v144
    %v515 = vunpack.c.l.b16 %v145
    %v516 = vunpack.c.l.b16 %v146
    %v517 = vunpack.c.l.b16 %v147
    %v518 = vunpack.c.l.b16 %v148
    %v519 = vunpack.c.l.b16 %v149
    %v520 = vunpack.c.l.b16 %v150
    %v521 = vunpack.c.l.b16 %v151
    %v522 = vunpack.c.l.b16 %v152
    %v523 = vunpack.c.l.b16 %v153
    %v524 = vunpack.c.l.b16 %v154
    %v525 = vunpack.c.l.b16 %v155
    %v526 = vunpack.c.l.b16 %v156
    %v527 = vunpack.c.l.b16 %v157
    %v528 = vunpack.c.l.b16 %v158
    %v529 = vunpack.c.l.b16 %v159
    %v530 = vunpack.c.l.b16 %v160
    %v531 = vunpack.c.l.b16 %v161
    %v532 = vunpack.c.l.b16 %v162
    %v533 = vunpack.c.l.b16 %v163
    %v534 = vunpack.c.l.b16 %v164
    %v535 = vunpack.c.l.b16 %v165
    %v536 = vunpack.c.l.b16 %v166
    %v537 = vunpack.c.l.b16 %v167
    %v538 = vunpack.c.l.b16 %v168
    %v539 = vunpack.c.l.b16 %v169
    %v540 = vunpack.c.l.b16 %v170
    %v541 = vunpack.c.l.b16 %v171
    %v542 = vunpack.c.l.b16 %v172
    %v543 = vunpack.c.l.b16 %v173
    %v544 = vunpack.c.l.b16 %v174
    %v545 = vunpack.c.l.b16 %v175
    %v546 = vunpack.c.l.b16 %v176
    %v547 = vunpack.c.l.b16 %v177
    %v548 = vunpack.c.l.b16 %v178
    %v549 = vunpack.c.l.b16 %v179
    %v550 = vunpack.c.l.b16 %v180
    %v551 = vunpack.c.l.b16 %v181
    %v552 = vunpack.c.l.b16 %v182
    %v553 = vunpack.c.l.b16 %v183
    %v554 = vunpack.c.l.b16 %v184
    %v555 = vunpack.c.l.b16 %v185
    %v556 = vunpack.c.l.b16 %v186
    %v557 = vunpack.c.l.b16 %v187
    %v558 = vunpack.c.l.b16 %v188
    %v559 = vunpack.c.l.b16 %v189
    %v560 = vunpack.c.l.b16 %v190
    %v561 = vunpack.c.l.b16 %v191
    %v562 = vpack.c.b16 %v419, %v418
    %v563 = vpack.c.b16 %v421, %v420
    %v564 = vpack.c.b16 %v423, %v422
    %v565 = vpack.c.b16 %v425, %v424
    %v566 = vpack.c.b16 %v427, %v426
    %v567 = vpack.c.b16 %v429, %v428
    %v568 = vpack.c.b16 %v431, %v430
    %v569 = vpack.c.b16 %v433, %v432
    %v570 = vpack.c.b16 %v435, %v434
    %v571 = vpack.c.b16 %v437, %v436
    %v572 = vpack.c.b16 %v439, %v438
    %v573 = vpack.c.b16 %v441, %v440
    %v574 = vpack.c.b16 %v443, %v442
    %v575 = vpack.c.b16 %v445, %v444
    %v576 = vpack.c.b16 %v447, %v446
    %v577 = vpack.c.b16 %v449, %v448
    %v578 = vpack.c.b16 %v451, %v450
    %v579 = vpack.c.b16 %v453, %v452
    %v580 = vpack.c.b16 %v455, %v454
    %v581 = vpack.c.b16 %v457, %v456
    %v582 = vpack.c.b16 %v459, %v458
    %v583 = vpack.c.b16 %v461, %v460
    %v584 = vpack.c.b16 %v463, %v462
    %v585 = vpack.c.b16 %v465, %v464
    %v586 = vpack.c.b16 %v467, %v466
    %v587 = vpack.c.b16 %v469, %v468
    %v588 = vpack.c.b16 %v471, %v470
    %v589 = vpack.c.b16 %v473, %v472
    %v590 = vpack.c.b16 %v475, %v474
    %v591 = vpack.c.b16 %v477, %v476
    %v592 = vpack.c.b16 %v479, %v478
    %v593 = vpack.c.b16 %v481, %v480
    %v594 = vpack.c.b16 %v483, %v482
    %v595 = vpack.c.b16 %v485, %v484
    %v596 = vpack.c.b16 %v487, %v486
    %v597 = vpack.c.b16 %v489, %v488
    %v598 = vpack.c.b16 %v491, %v490
    %v599 = vpack.c.b16 %v493, %v492
    %v600 = vpack.c.b16 %v495, %v494
    %v601 = vpack.c.b16 %v497, %v496
    %v602 = vpack.c.b16 %v499, %v498
    %v603 = vpack.c.b16 %v501, %v500
    %v604 = vpack.c.b16 %v503, %v502
    %v605 = vpack.c.b16 %v505, %v504
    %v606 = vpack.c.b16 %v507, %v506
    %v607 = vpack.c.b16 %v509, %v508
    %v608 = vpack.c.b16 %v511, %v510
    %v609 = vpack.c.b16 %v513, %v512
    %v610 = vpack.c.b16 %v515, %v514
    %v611 = vpack.c.b16 %v517, %v516
    %v612 = vpack.c.b16 %v519, %v518
    %v613 = vpack.c.b16 %v521, %v520
    %v614 = vpack.c.b16 %v523, %v522
    %v615 = vpack.c.b16 %v525, %v524
    %v616 = vpack.c.b16 %v527, %v526
    %v617 = vpack.c.b16 %v529, %v528
    %v618 = vpack.c.b16 %v531, %v530
    %v619 = vpack.c.b16 %v533, %v532
    %v620 = vpack.c.b16 %v535, %v534
    %v621 = vpack.c.b16 %v537, %v536
    %v622 = vpack.c.b16 %v539, %v538
    %v623 = vpack.c.b16 %v541, %v540
    %v624 = vpack.c.b16 %v543, %v542
    %v625 = vpack.c.b16 %v545, %v544
    %v626 = vpack.c.b16 %v547, %v546
    %v627 = vpack.c.b16 %v549, %v548
    %v628 = vpack.c.b16 %v551, %v550
    %v629 = vpack.c.b16 %v553, %v552
    %v630 = vpack.c.b16 %v555, %v554
    %v631 = vpack.c.b16 %v557, %v556
    %v632 = vpack.c.b16 %v559, %v558
    %v633 = vpack.c.b16 %v561, %v560
    %706 = vmatpush.bf16.msra.mxu0 %v569
    %707 = vmatpush.bf16.msra.mxu0 %v568
    %708 = vmatpush.bf16.msra.mxu0 %v567
    %709 = vmatpush.bf16.msra.mxu0 %v566
    %710 = vmatpush.bf16.msra.mxu0 %v565
    %711 = vmatpush.bf16.msra.mxu0 %v564
    %712 = vmatpush.bf16.msra.mxu0 %v563
    %713 = vmatpush.bf16.msra.mxu0 %v562
    %714 = vmatmul.bf16.gmra.mxu0 %v238
    %v715 = vpop.f32.mrf.mxu0
    %v716 = vadd.f32 %v194, %v715
    %v717 = vpop.f32.mrf.mxu0
    %v718 = vadd.f32 %v194, %v717
    %719 = vmatmul.bf16.gmra.mxu0 %v247
    %v720 = vpop.f32.mrf.mxu0
    %v721 = vadd.f32 %v194, %v720
    %v722 = vpop.f32.mrf.mxu0
    %723 = vdwg.mxu0
    %724 = vmatpush.bf16.msra.mxu0 %v577
    %725 = vmatpush.bf16.msra.mxu0 %v576
    %726 = vmatpush.bf16.msra.mxu0 %v575
    %727 = vmatpush.bf16.msra.mxu0 %v574
    %728 = vmatpush.bf16.msra.mxu0 %v573
    %729 = vmatpush.bf16.msra.mxu0 %v572
    %730 = vmatpush.bf16.msra.mxu0 %v571
    %731 = vmatpush.bf16.msra.mxu0 %v570
    %732 = vmatmul.bf16.gmra.mxu0 %v239
    %v733 = vpop.f32.mrf.mxu0
    %v734 = vadd.f32 %v716, %v733
    %v735 = vpop.f32.mrf.mxu0
    %v736 = vadd.f32 %v718, %v735
    %737 = vmatmul.bf16.gmra.mxu0 %v248
    %v738 = vpop.f32.mrf.mxu0
    %v739 = vadd.f32 %v721, %v738
    %v740 = vpop.f32.mrf.mxu0
    %741 = vdwg.mxu0
    %742 = vmatpush.bf16.msra.mxu0 %v585
    %743 = vmatpush.bf16.msra.mxu0 %v584
    %744 = vmatpush.bf16.msra.mxu0 %v583
    %745 = vmatpush.bf16.msra.mxu0 %v582
    %746 = vmatpush.bf16.msra.mxu0 %v581
    %747 = vmatpush.bf16.msra.mxu0 %v580
    %748 = vmatpush.bf16.msra.mxu0 %v579
    %749 = vmatpush.bf16.msra.mxu0 %v578
    %750 = vmatmul.bf16.gmra.mxu0 %v240
    %v751 = vpop.f32.mrf.mxu0
    %v752 = vadd.f32 %v734, %v751
    %v753 = vpop.f32.mrf.mxu0
    %v754 = vadd.f32 %v736, %v753
    %755 = vmatmul.bf16.gmra.mxu0 %v249
    %v756 = vpop.f32.mrf.mxu0
    %v757 = vadd.f32 %v739, %v756
    %v758 = vpop.f32.mrf.mxu0
    %759 = vdwg.mxu0
    %760 = vmatpush.bf16.msra.mxu0 %v593
    %761 = vmatpush.bf16.msra.mxu0 %v592
    %762 = vmatpush.bf16.msra.mxu0 %v591
    %763 = vmatpush.bf16.msra.mxu0 %v590
    %764 = vmatpush.bf16.msra.mxu0 %v589
    %765 = vmatpush.bf16.msra.mxu0 %v588
    %766 = vmatpush.bf16.msra.mxu0 %v587
    %767 = vmatpush.bf16.msra.mxu0 %v586
    %768 = vmatmul.bf16.gmra.mxu0 %v241
    %v769 = vpop.f32.mrf.mxu0
    %v770 = vadd.f32 %v752, %v769
    %v771 = vpop.f32.mrf.mxu0
    %v772 = vadd.f32 %v754, %v771
    %773 = vmatmul.bf16.gmra.mxu0 %v250
    %v774 = vpop.f32.mrf.mxu0
    %v775 = vadd.f32 %v757, %v774
    %v776 = vpop.f32.mrf.mxu0
    %777 = vdwg.mxu0
    %778 = vmatpush.bf16.msra.mxu0 %v601
    %779 = vmatpush.bf16.msra.mxu0 %v600
    %780 = vmatpush.bf16.msra.mxu0 %v599
    %781 = vmatpush.bf16.msra.mxu0 %v598
    %782 = vmatpush.bf16.msra.mxu0 %v597
    %783 = vmatpush.bf16.msra.mxu0 %v596
    %784 = vmatpush.bf16.msra.mxu0 %v595
    %785 = vmatpush.bf16.msra.mxu0 %v594
    %786 = vmatmul.bf16.gmra.mxu0 %v242
    %v787 = vpop.f32.mrf.mxu0
    %v788 = vadd.f32 %v770, %v787
    %v789 = vpop.f32.mrf.mxu0
    %v790 = vadd.f32 %v772, %v789
    %791 = vmatmul.bf16.gmra.mxu0 %v251
    %v792 = vpop.f32.mrf.mxu0
    %v793 = vadd.f32 %v775, %v792
    %v794 = vpop.f32.mrf.mxu0
    %795 = vdwg.mxu0
    %796 = vmatpush.bf16.msra.mxu0 %v609
    %797 = vmatpush.bf16.msra.mxu0 %v608
    %798 = vmatpush.bf16.msra.mxu0 %v607
    %799 = vmatpush.bf16.msra.mxu0 %v606
    %800 = vmatpush.bf16.msra.mxu0 %v605
    %801 = vmatpush.bf16.msra.mxu0 %v604
    %802 = vmatpush.bf16.msra.mxu0 %v603
    %803 = vmatpush.bf16.msra.mxu0 %v602
    %804 = vmatmul.bf16.gmra.mxu0 %v243
    %v805 = vpop.f32.mrf.mxu0
    %v806 = vadd.f32 %v788, %v805
    %v807 = vpop.f32.mrf.mxu0
    %v808 = vadd.f32 %v790, %v807
    %809 = vmatmul.bf16.gmra.mxu0 %v252
    %v810 = vpop.f32.mrf.mxu0
    %v811 = vadd.f32 %v793, %v810
    %v812 = vpop.f32.mrf.mxu0
    %813 = vdwg.mxu0
    %814 = vmatpush.bf16.msra.mxu0 %v617
    %815 = vmatpush.bf16.msra.mxu0 %v616
    %816 = vmatpush.bf16.msra.mxu0 %v615
    %817 = vmatpush.bf16.msra.mxu0 %v614
    %818 = vmatpush.bf16.msra.mxu0 %v613
    %819 = vmatpush.bf16.msra.mxu0 %v612
    %820 = vmatpush.bf16.msra.mxu0 %v611
    %821 = vmatpush.bf16.msra.mxu0 %v610
    %822 = vmatmul.bf16.gmra.mxu0 %v244
    %v823 = vpop.f32.mrf.mxu0
    %v824 = vadd.f32 %v806, %v823
    %v825 = vpop.f32.mrf.mxu0
    %v826 = vadd.f32 %v808, %v825
    %827 = vmatmul.bf16.gmra.mxu0 %v253
    %v828 = vpop.f32.mrf.mxu0
    %v829 = vadd.f32 %v811, %v828
    %v830 = vpop.f32.mrf.mxu0
    %831 = vdwg.mxu0
    %832 = vmatpush.bf16.msra.mxu0 %v625
    %833 = vmatpush.bf16.msra.mxu0 %v624
    %834 = vmatpush.bf16.msra.mxu0 %v623
    %835 = vmatpush.bf16.msra.mxu0 %v622
    %836 = vmatpush.bf16.msra.mxu0 %v621
    %837 = vmatpush.bf16.msra.mxu0 %v620
    %838 = vmatpush.bf16.msra.mxu0 %v619
    %839 = vmatpush.bf16.msra.mxu0 %v618
    %840 = vmatmul.bf16.gmra.mxu0 %v245
    %v841 = vpop.f32.mrf.mxu0
    %v842 = vadd.f32 %v824, %v841
    %v843 = vpop.f32.mrf.mxu0
    %v844 = vadd.f32 %v826, %v843
    %845 = vmatmul.bf16.gmra.mxu0 %v254
    %v846 = vpop.f32.mrf.mxu0
    %v847 = vadd.f32 %v829, %v846
    %v848 = vpop.f32.mrf.mxu0
    %849 = vdwg.mxu0
    %850 = vmatpush.bf16.msra.mxu0 %v633
    %851 = vmatpush.bf16.msra.mxu0 %v632
    %852 = vmatpush.bf16.msra.mxu0 %v631
    %853 = vmatpush.bf16.msra.mxu0 %v630
    %854 = vmatpush.bf16.msra.mxu0 %v629
    %855 = vmatpush.bf16.msra.mxu0 %v628
    %856 = vmatpush.bf16.msra.mxu0 %v627
    %857 = vmatpush.bf16.msra.mxu0 %v626
    %858 = vmatmul.bf16.gmra.mxu0 %v246
    %v859 = vpop.f32.mrf.mxu0
    %v860 = vadd.f32 %v842, %v859
    %v861 = vpop.f32.mrf.mxu0
    %v862 = vadd.f32 %v844, %v861
    %863 = vmatmul.bf16.gmra.mxu0 %v255
    %v864 = vpop.f32.mrf.mxu0
    %v865 = vadd.f32 %v847, %v864
    %v866 = vpop.f32.mrf.mxu0
    %867 = vdwg.mxu0
    %v868 = vmax.f32 %v860, 0.0
    %v869 = vmax.f32 %v862, 0.0
    %v870 = vmax.f32 %v865, 0.0
    %v871 = vmax.f32 %v868, %v869
    %v873 = vrot.slane %v868, 2
    %v875 = vmax.f32 %v868, %v873
    %v877 = vrot.slane %v869, 2
    %v879 = vmax.f32 %v869, %v877
    %v880 = vmax.f32 %v875, %v879
    %v882 = vrot.slane %v870, 2
    %v884 = vmax.f32 %v870, %v882
    %v885 = vld [vmem:[%s4] sm:$0x3f]
    %v886 = vpack.c.bf16 %v871, %v871
    %v887 = vld [vmem:[%s3] sm:$0xff]
    %v888 = vld [vmem:[%s3 + $0x8] sm:$0xff]
    %v889 = vld [vmem:[%s3 + $0x10] sm:$0xff]
    %v890 = vld [vmem:[%s3 + $0x18] sm:$0xff]
    %v891 = vld [vmem:[%s3 + $0x20] sm:$0xff]
    %v892 = vld [vmem:[%s3 + $0x28] sm:$0xff]
    %v893 = vld [vmem:[%s3 + $0x30] sm:$0xff]
    %v894 = vld [vmem:[%s3 + $0x38] sm:$0xff]
    %v895 = vld [vmem:[%s3 + $0x40] sm:$0xff]
    %v896 = vld [vmem:[%s3 + $0x48] sm:$0xff]
    %v897 = vld [vmem:[%s3 + $0x50] sm:$0xff]
    %v898 = vld [vmem:[%s3 + $0x58] sm:$0xff]
    %v899 = vld [vmem:[%s3 + $0x60] sm:$0xff]
    %v900 = vld [vmem:[%s3 + $0x68] sm:$0xff]
    %v901 = vld [vmem:[%s3 + $0x70] sm:$0xff]
    %v902 = vld [vmem:[%s3 + $0x78] sm:$0xff]
    %v903 = vld [vmem:[%s3 + $0x80] sm:$0xff]
    %v904 = vld [vmem:[%s3 + $0x88] sm:$0xff]
    %v905 = vld [vmem:[%s3 + $0x90] sm:$0xff]
    %v906 = vld [vmem:[%s3 + $0x98] sm:$0xff]
    %v907 = vld [vmem:[%s3 + $0xa0] sm:$0xff]
    %v908 = vld [vmem:[%s3 + $0xa8] sm:$0xff]
    %v909 = vld [vmem:[%s3 + $0xb0] sm:$0xff]
    %v910 = vld [vmem:[%s3 + $0xb8] sm:$0xff]
    %v911 = vld [vmem:[%s3 + $0xc0] sm:$0xff]
    %v912 = vld [vmem:[%s3 + $0xc8] sm:$0xff]
    %v913 = vld [vmem:[%s3 + $0xd0] sm:$0xff]
    %v914 = vld [vmem:[%s3 + $0xd8] sm:$0xff]
    %v915 = vld [vmem:[%s3 + $0xe0] sm:$0xff]
    %v916 = vld [vmem:[%s3 + $0xe8] sm:$0xff]
    %v917 = vld [vmem:[%s3 + $0xf0] sm:$0xff]
    %v918 = vld [vmem:[%s3 + $0xf8] sm:$0xff]
    %v919 = vld [vmem:[%s3 + $0x100] sm:$0xff]
    %v920 = vld [vmem:[%s3 + $0x108] sm:$0xff]
    %v921 = vld [vmem:[%s3 + $0x110] sm:$0xff]
    %v922 = vld [vmem:[%s3 + $0x118] sm:$0xff]
    %v923 = vld [vmem:[%s3 + $0x120] sm:$0xff]
    %v924 = vld [vmem:[%s3 + $0x128] sm:$0xff]
    %v925 = vld [vmem:[%s3 + $0x130] sm:$0xff]
    %v926 = vld [vmem:[%s3 + $0x138] sm:$0xff]
    %v927 = vld [vmem:[%s3 + $0x140] sm:$0xff]
    %v928 = vld [vmem:[%s3 + $0x148] sm:$0xff]
    %v929 = vld [vmem:[%s3 + $0x150] sm:$0xff]
    %v930 = vld [vmem:[%s3 + $0x158] sm:$0xff]
    %v931 = vld [vmem:[%s3 + $0x160] sm:$0xff]
    %v932 = vld [vmem:[%s3 + $0x168] sm:$0xff]
    %v933 = vld [vmem:[%s3 + $0x170] sm:$0xff]
    %v934 = vld [vmem:[%s3 + $0x178] sm:$0xff]
    %v983 = vunpack.c.l.b16 %v887
    %v984 = vunpack.c.h.b16 %v887
    %v985 = vunpack.c.l.b16 %v888
    %v986 = vunpack.c.h.b16 %v888
    %v987 = vunpack.c.l.b16 %v889
    %v988 = vunpack.c.h.b16 %v889
    %v989 = vunpack.c.l.b16 %v890
    %v990 = vunpack.c.h.b16 %v890
    %v991 = vunpack.c.l.b16 %v891
    %v992 = vunpack.c.h.b16 %v891
    %v993 = vunpack.c.l.b16 %v892
    %v994 = vunpack.c.h.b16 %v892
    %v995 = vunpack.c.l.b16 %v893
    %v996 = vunpack.c.h.b16 %v893
    %v997 = vunpack.c.l.b16 %v894
    %v998 = vunpack.c.h.b16 %v894
    %v999 = vunpack.c.l.b16 %v895
    %v1000 = vunpack.c.h.b16 %v895
    %v1001 = vunpack.c.l.b16 %v896
    %v1002 = vunpack.c.h.b16 %v896
    %v1003 = vunpack.c.l.b16 %v897
    %v1004 = vunpack.c.h.b16 %v897
    %v1005 = vunpack.c.l.b16 %v898
    %v1006 = vunpack.c.h.b16 %v898
    %v1007 = vunpack.c.l.b16 %v899
    %v1008 = vunpack.c.h.b16 %v899
    %v1009 = vunpack.c.l.b16 %v900
    %v1010 = vunpack.c.h.b16 %v900
    %v1011 = vunpack.c.l.b16 %v901
    %v1012 = vunpack.c.h.b16 %v901
    %v1013 = vunpack.c.l.b16 %v902
    %v1014 = vunpack.c.h.b16 %v902
    %v1015 = vunpack.c.l.b16 %v903
    %v1016 = vunpack.c.h.b16 %v903
    %v1017 = vunpack.c.l.b16 %v904
    %v1018 = vunpack.c.h.b16 %v904
    %v1019 = vunpack.c.l.b16 %v905
    %v1020 = vunpack.c.h.b16 %v905
    %v1021 = vunpack.c.l.b16 %v906
    %v1022 = vunpack.c.h.b16 %v906
    %v1023 = vunpack.c.l.b16 %v907
    %v1024 = vunpack.c.h.b16 %v907
    %v1025 = vunpack.c.l.b16 %v908
    %v1026 = vunpack.c.h.b16 %v908
    %v1027 = vunpack.c.l.b16 %v909
    %v1028 = vunpack.c.h.b16 %v909
    %v1029 = vunpack.c.l.b16 %v910
    %v1030 = vunpack.c.h.b16 %v910
    %v1031 = vunpack.c.l.b16 %v911
    %v1032 = vunpack.c.h.b16 %v911
    %v1033 = vunpack.c.l.b16 %v912
    %v1034 = vunpack.c.h.b16 %v912
    %v1035 = vunpack.c.l.b16 %v913
    %v1036 = vunpack.c.h.b16 %v913
    %v1037 = vunpack.c.l.b16 %v914
    %v1038 = vunpack.c.h.b16 %v914
    %v1039 = vunpack.c.l.b16 %v915
    %v1040 = vunpack.c.h.b16 %v915
    %v1041 = vunpack.c.l.b16 %v916
    %v1042 = vunpack.c.h.b16 %v916
    %v1043 = vunpack.c.l.b16 %v917
    %v1044 = vunpack.c.h.b16 %v917
    %v1045 = vunpack.c.l.b16 %v918
    %v1046 = vunpack.c.h.b16 %v918
    %v1047 = vunpack.c.l.b16 %v919
    %v1048 = vunpack.c.h.b16 %v919
    %v1049 = vunpack.c.l.b16 %v920
    %v1050 = vunpack.c.h.b16 %v920
    %v1051 = vunpack.c.l.b16 %v921
    %v1052 = vunpack.c.h.b16 %v921
    %v1053 = vunpack.c.l.b16 %v922
    %v1054 = vunpack.c.h.b16 %v922
    %v1055 = vunpack.c.l.b16 %v923
    %v1056 = vunpack.c.h.b16 %v923
    %v1057 = vunpack.c.l.b16 %v924
    %v1058 = vunpack.c.h.b16 %v924
    %v1059 = vunpack.c.l.b16 %v925
    %v1060 = vunpack.c.h.b16 %v925
    %v1061 = vunpack.c.l.b16 %v926
    %v1062 = vunpack.c.h.b16 %v926
    %v1063 = vunpack.c.l.b16 %v927
    %v1064 = vunpack.c.h.b16 %v927
    %v1065 = vunpack.c.l.b16 %v928
    %v1066 = vunpack.c.h.b16 %v928
    %v1067 = vunpack.c.l.b16 %v929
    %v1068 = vunpack.c.h.b16 %v929
    %v1069 = vunpack.c.l.b16 %v930
    %v1070 = vunpack.c.h.b16 %v930
    %v1071 = vunpack.c.l.b16 %v931
    %v1072 = vunpack.c.h.b16 %v931
    %v1073 = vunpack.c.l.b16 %v932
    %v1074 = vunpack.c.h.b16 %v932
    %v1075 = vunpack.c.l.b16 %v933
    %v1076 = vunpack.c.h.b16 %v933
    %v1077 = vunpack.c.l.b16 %v934
    %v1078 = vunpack.c.h.b16 %v934
    %v1079 = vpack.c.b16 %v989, %v983
    %v1080 = vpack.c.b16 %v990, %v984
    %v1081 = vpack.c.b16 %v991, %v985
    %v1082 = vpack.c.b16 %v992, %v986
    %v1083 = vpack.c.b16 %v993, %v987
    %v1084 = vpack.c.b16 %v994, %v988
    %v1085 = vpack.c.b16 %v1001, %v995
    %v1086 = vpack.c.b16 %v1002, %v996
    %v1087 = vpack.c.b16 %v1003, %v997
    %v1088 = vpack.c.b16 %v1004, %v998
    %v1089 = vpack.c.b16 %v1005, %v999
    %v1090 = vpack.c.b16 %v1006, %v1000
    %v1091 = vpack.c.b16 %v1013, %v1007
    %v1092 = vpack.c.b16 %v1014, %v1008
    %v1093 = vpack.c.b16 %v1015, %v1009
    %v1094 = vpack.c.b16 %v1016, %v1010
    %v1095 = vpack.c.b16 %v1017, %v1011
    %v1096 = vpack.c.b16 %v1018, %v1012
    %v1097 = vpack.c.b16 %v1025, %v1019
    %v1098 = vpack.c.b16 %v1026, %v1020
    %v1099 = vpack.c.b16 %v1027, %v1021
    %v1100 = vpack.c.b16 %v1028, %v1022
    %v1101 = vpack.c.b16 %v1029, %v1023
    %v1102 = vpack.c.b16 %v1030, %v1024
    %v1103 = vpack.c.b16 %v1037, %v1031
    %v1104 = vpack.c.b16 %v1038, %v1032
    %v1105 = vpack.c.b16 %v1039, %v1033
    %v1106 = vpack.c.b16 %v1040, %v1034
    %v1107 = vpack.c.b16 %v1041, %v1035
    %v1108 = vpack.c.b16 %v1042, %v1036
    %v1109 = vpack.c.b16 %v1049, %v1043
    %v1110 = vpack.c.b16 %v1050, %v1044
    %v1111 = vpack.c.b16 %v1051, %v1045
    %v1112 = vpack.c.b16 %v1052, %v1046
    %v1113 = vpack.c.b16 %v1053, %v1047
    %v1114 = vpack.c.b16 %v1054, %v1048
    %v1115 = vpack.c.b16 %v1061, %v1055
    %v1116 = vpack.c.b16 %v1062, %v1056
    %v1117 = vpack.c.b16 %v1063, %v1057
    %v1118 = vpack.c.b16 %v1064, %v1058
    %v1119 = vpack.c.b16 %v1065, %v1059
    %v1120 = vpack.c.b16 %v1066, %v1060
    %v1121 = vpack.c.b16 %v1073, %v1067
    %v1122 = vpack.c.b16 %v1074, %v1068
    %v1123 = vpack.c.b16 %v1075, %v1069
    %v1124 = vpack.c.b16 %v1076, %v1070
    %v1125 = vpack.c.b16 %v1077, %v1071
    %v1126 = vpack.c.b16 %v1078, %v1072
    %1175 = vmatpush.bf16.msra.mxu0 %v1121
    %1176 = vmatpush.bf16.msra.mxu0 %v1115
    %1177 = vmatpush.bf16.msra.mxu0 %v1109
    %1178 = vmatpush.bf16.msra.mxu0 %v1103
    %1179 = vmatpush.bf16.msra.mxu0 %v1097
    %1180 = vmatpush.bf16.msra.mxu0 %v1091
    %1181 = vmatpush.bf16.msra.mxu0 %v1085
    %1182 = vmatpush.bf16.msra.mxu0 %v1079
    %1183 = vmatmul.bf16.gmra.mxu0 %v886
    %v1184 = vpop.f32.mrf.mxu0
    %v1185 = vadd.f32 0.0, %v1184
    %v1186 = vpop.f32.mrf.mxu0
    %1187 = vdwg.mxu0
    %1188 = vmatpush.bf16.msra.mxu0 %v1122
    %1189 = vmatpush.bf16.msra.mxu0 %v1116
    %1190 = vmatpush.bf16.msra.mxu0 %v1110
    %1191 = vmatpush.bf16.msra.mxu0 %v1104
    %1192 = vmatpush.bf16.msra.mxu0 %v1098
    %1193 = vmatpush.bf16.msra.mxu0 %v1092
    %1194 = vmatpush.bf16.msra.mxu0 %v1086
    %1195 = vmatpush.bf16.msra.mxu0 %v1080
    %1196 = vmatmul.bf16.gmra.mxu0 %v886
    %v1197 = vpop.f32.mrf.mxu0
    %v1198 = vadd.f32 0.0, %v1197
    %v1199 = vpop.f32.mrf.mxu0
    %1200 = vdwg.mxu0
    %1201 = vmatpush.bf16.msra.mxu0 %v1123
    %1202 = vmatpush.bf16.msra.mxu0 %v1117
    %1203 = vmatpush.bf16.msra.mxu0 %v1111
    %1204 = vmatpush.bf16.msra.mxu0 %v1105
    %1205 = vmatpush.bf16.msra.mxu0 %v1099
    %1206 = vmatpush.bf16.msra.mxu0 %v1093
    %1207 = vmatpush.bf16.msra.mxu0 %v1087
    %1208 = vmatpush.bf16.msra.mxu0 %v1081
    %1209 = vmatmul.bf16.gmra.mxu0 %v886
    %v1210 = vpop.f32.mrf.mxu0
    %v1211 = vadd.f32 0.0, %v1210
    %v1212 = vpop.f32.mrf.mxu0
    %1213 = vdwg.mxu0
    %1214 = vmatpush.bf16.msra.mxu0 %v1124
    %1215 = vmatpush.bf16.msra.mxu0 %v1118
    %1216 = vmatpush.bf16.msra.mxu0 %v1112
    %1217 = vmatpush.bf16.msra.mxu0 %v1106
    %1218 = vmatpush.bf16.msra.mxu0 %v1100
    %1219 = vmatpush.bf16.msra.mxu0 %v1094
    %1220 = vmatpush.bf16.msra.mxu0 %v1088
    %1221 = vmatpush.bf16.msra.mxu0 %v1082
    %1222 = vmatmul.bf16.gmra.mxu0 %v886
    %v1223 = vpop.f32.mrf.mxu0
    %v1224 = vadd.f32 0.0, %v1223
    %v1225 = vpop.f32.mrf.mxu0
    %1226 = vdwg.mxu0
    %1227 = vmatpush.bf16.msra.mxu0 %v1125
    %1228 = vmatpush.bf16.msra.mxu0 %v1119
    %1229 = vmatpush.bf16.msra.mxu0 %v1113
    %1230 = vmatpush.bf16.msra.mxu0 %v1107
    %1231 = vmatpush.bf16.msra.mxu0 %v1101
    %1232 = vmatpush.bf16.msra.mxu0 %v1095
    %1233 = vmatpush.bf16.msra.mxu0 %v1089
    %1234 = vmatpush.bf16.msra.mxu0 %v1083
    %1235 = vmatmul.bf16.gmra.mxu0 %v886
    %v1236 = vpop.f32.mrf.mxu0
    %v1237 = vadd.f32 0.0, %v1236
    %v1238 = vpop.f32.mrf.mxu0
    %1239 = vdwg.mxu0
    %1240 = vmatpush.bf16.msra.mxu0 %v1126
    %1241 = vmatpush.bf16.msra.mxu0 %v1120
    %1242 = vmatpush.bf16.msra.mxu0 %v1114
    %1243 = vmatpush.bf16.msra.mxu0 %v1108
    %1244 = vmatpush.bf16.msra.mxu0 %v1102
    %1245 = vmatpush.bf16.msra.mxu0 %v1096
    %1246 = vmatpush.bf16.msra.mxu0 %v1090
    %1247 = vmatpush.bf16.msra.mxu0 %v1084
    %1248 = vmatmul.bf16.gmra.mxu0 %v886
    %v1249 = vpop.f32.mrf.mxu0
    %v1250 = vadd.f32 0.0, %v1249
    %v1251 = vpop.f32.mrf.mxu0
    %1252 = vdwg.mxu0
    %v1254 = vperm.slane %v885, 0
    %v1255 = vperm.slane %v885, 1
    %v1256 = vperm.slane %v885, 2
    %v1257 = vperm.slane %v885, 3
    %v1258 = vperm.slane %v885, 4
    %v1259 = vperm.slane %v885, 5
    %v1266 = vadd.f32 %v1254, %v1185
    %v1267 = vadd.f32 %v1255, %v1198
    %v1268 = vadd.f32 %v1256, %v1211
    %v1269 = vadd.f32 %v1257, %v1224
    %v1270 = vadd.f32 %v1258, %v1237
    %v1271 = vadd.f32 %v1259, %v1250
    %v1272 = vpack.c.bf16 %v880, %v880
    %v1273 = vld [vmem:[%s3 + $0x180] sm:$0xff]
    %v1274 = vld [vmem:[%s3 + $0x188] sm:$0xff]
    %v1275 = vld [vmem:[%s3 + $0x190] sm:$0xff]
    %v1276 = vld [vmem:[%s3 + $0x198] sm:$0xff]
    %v1277 = vld [vmem:[%s3 + $0x1a0] sm:$0xff]
    %v1278 = vld [vmem:[%s3 + $0x1a8] sm:$0xff]
    %v1279 = vld [vmem:[%s3 + $0x1b0] sm:$0xff]
    %v1280 = vld [vmem:[%s3 + $0x1b8] sm:$0xff]
    %v1281 = vld [vmem:[%s3 + $0x1c0] sm:$0xff]
    %v1282 = vld [vmem:[%s3 + $0x1c8] sm:$0xff]
    %v1283 = vld [vmem:[%s3 + $0x1d0] sm:$0xff]
    %v1284 = vld [vmem:[%s3 + $0x1d8] sm:$0xff]
    %v1285 = vld [vmem:[%s3 + $0x1e0] sm:$0xff]
    %v1286 = vld [vmem:[%s3 + $0x1e8] sm:$0xff]
    %v1287 = vld [vmem:[%s3 + $0x1f0] sm:$0xff]
    %v1288 = vld [vmem:[%s3 + $0x1f8] sm:$0xff]
    %v1289 = vld [vmem:[%s3 + $0x200] sm:$0xff]
    %v1290 = vld [vmem:[%s3 + $0x208] sm:$0xff]
    %v1291 = vld [vmem:[%s3 + $0x210] sm:$0xff]
    %v1292 = vld [vmem:[%s3 + $0x218] sm:$0xff]
    %v1293 = vld [vmem:[%s3 + $0x220] sm:$0xff]
    %v1294 = vld [vmem:[%s3 + $0x228] sm:$0xff]
    %v1295 = vld [vmem:[%s3 + $0x230] sm:$0xff]
    %v1296 = vld [vmem:[%s3 + $0x238] sm:$0xff]
    %v1297 = vld [vmem:[%s3 + $0x240] sm:$0xff]
    %v1298 = vld [vmem:[%s3 + $0x248] sm:$0xff]
    %v1299 = vld [vmem:[%s3 + $0x250] sm:$0xff]
    %v1300 = vld [vmem:[%s3 + $0x258] sm:$0xff]
    %v1301 = vld [vmem:[%s3 + $0x260] sm:$0xff]
    %v1302 = vld [vmem:[%s3 + $0x268] sm:$0xff]
    %v1303 = vld [vmem:[%s3 + $0x270] sm:$0xff]
    %v1304 = vld [vmem:[%s3 + $0x278] sm:$0xff]
    %v1305 = vld [vmem:[%s3 + $0x280] sm:$0xff]
    %v1306 = vld [vmem:[%s3 + $0x288] sm:$0xff]
    %v1307 = vld [vmem:[%s3 + $0x290] sm:$0xff]
    %v1308 = vld [vmem:[%s3 + $0x298] sm:$0xff]
    %v1309 = vld [vmem:[%s3 + $0x2a0] sm:$0xff]
    %v1310 = vld [vmem:[%s3 + $0x2a8] sm:$0xff]
    %v1311 = vld [vmem:[%s3 + $0x2b0] sm:$0xff]
    %v1312 = vld [vmem:[%s3 + $0x2b8] sm:$0xff]
    %v1313 = vld [vmem:[%s3 + $0x2c0] sm:$0xff]
    %v1314 = vld [vmem:[%s3 + $0x2c8] sm:$0xff]
    %v1315 = vld [vmem:[%s3 + $0x2d0] sm:$0xff]
    %v1316 = vld [vmem:[%s3 + $0x2d8] sm:$0xff]
    %v1317 = vld [vmem:[%s3 + $0x2e0] sm:$0xff]
    %v1318 = vld [vmem:[%s3 + $0x2e8] sm:$0xff]
    %v1319 = vld [vmem:[%s3 + $0x2f0] sm:$0xff]
    %v1320 = vld [vmem:[%s3 + $0x2f8] sm:$0xff]
    %v1322 = vrot.slane %v1272, 1
    %v1372 = vunpack.c.l.b16 %v1273
    %v1373 = vunpack.c.h.b16 %v1273
    %v1374 = vunpack.c.l.b16 %v1274
    %v1375 = vunpack.c.h.b16 %v1274
    %v1376 = vunpack.c.l.b16 %v1275
    %v1377 = vunpack.c.h.b16 %v1275
    %v1378 = vunpack.c.l.b16 %v1276
    %v1379 = vunpack.c.h.b16 %v1276
    %v1380 = vunpack.c.l.b16 %v1277
    %v1381 = vunpack.c.h.b16 %v1277
    %v1382 = vunpack.c.l.b16 %v1278
    %v1383 = vunpack.c.h.b16 %v1278
    %v1384 = vunpack.c.l.b16 %v1279
    %v1385 = vunpack.c.h.b16 %v1279
    %v1386 = vunpack.c.l.b16 %v1280
    %v1387 = vunpack.c.h.b16 %v1280
    %v1388 = vunpack.c.l.b16 %v1281
    %v1389 = vunpack.c.h.b16 %v1281
    %v1390 = vunpack.c.l.b16 %v1282
    %v1391 = vunpack.c.h.b16 %v1282
    %v1392 = vunpack.c.l.b16 %v1283
    %v1393 = vunpack.c.h.b16 %v1283
    %v1394 = vunpack.c.l.b16 %v1284
    %v1395 = vunpack.c.h.b16 %v1284
    %v1396 = vunpack.c.l.b16 %v1285
    %v1397 = vunpack.c.h.b16 %v1285
    %v1398 = vunpack.c.l.b16 %v1286
    %v1399 = vunpack.c.h.b16 %v1286
    %v1400 = vunpack.c.l.b16 %v1287
    %v1401 = vunpack.c.h.b16 %v1287
    %v1402 = vunpack.c.l.b16 %v1288
    %v1403 = vunpack.c.h.b16 %v1288
    %v1404 = vunpack.c.l.b16 %v1289
    %v1405 = vunpack.c.h.b16 %v1289
    %v1406 = vunpack.c.l.b16 %v1290
    %v1407 = vunpack.c.h.b16 %v1290
    %v1408 = vunpack.c.l.b16 %v1291
    %v1409 = vunpack.c.h.b16 %v1291
    %v1410 = vunpack.c.l.b16 %v1292
    %v1411 = vunpack.c.h.b16 %v1292
    %v1412 = vunpack.c.l.b16 %v1293
    %v1413 = vunpack.c.h.b16 %v1293
    %v1414 = vunpack.c.l.b16 %v1294
    %v1415 = vunpack.c.h.b16 %v1294
    %v1416 = vunpack.c.l.b16 %v1295
    %v1417 = vunpack.c.h.b16 %v1295
    %v1418 = vunpack.c.l.b16 %v1296
    %v1419 = vunpack.c.h.b16 %v1296
    %v1420 = vunpack.c.l.b16 %v1297
    %v1421 = vunpack.c.h.b16 %v1297
    %v1422 = vunpack.c.l.b16 %v1298
    %v1423 = vunpack.c.h.b16 %v1298
    %v1424 = vunpack.c.l.b16 %v1299
    %v1425 = vunpack.c.h.b16 %v1299
    %v1426 = vunpack.c.l.b16 %v1300
    %v1427 = vunpack.c.h.b16 %v1300
    %v1428 = vunpack.c.l.b16 %v1301
    %v1429 = vunpack.c.h.b16 %v1301
    %v1430 = vunpack.c.l.b16 %v1302
    %v1431 = vunpack.c.h.b16 %v1302
    %v1432 = vunpack.c.l.b16 %v1303
    %v1433 = vunpack.c.h.b16 %v1303
    %v1434 = vunpack.c.l.b16 %v1304
    %v1435 = vunpack.c.h.b16 %v1304
    %v1436 = vunpack.c.l.b16 %v1305
    %v1437 = vunpack.c.h.b16 %v1305
    %v1438 = vunpack.c.l.b16 %v1306
    %v1439 = vunpack.c.h.b16 %v1306
    %v1440 = vunpack.c.l.b16 %v1307
    %v1441 = vunpack.c.h.b16 %v1307
    %v1442 = vunpack.c.l.b16 %v1308
    %v1443 = vunpack.c.h.b16 %v1308
    %v1444 = vunpack.c.l.b16 %v1309
    %v1445 = vunpack.c.h.b16 %v1309
    %v1446 = vunpack.c.l.b16 %v1310
    %v1447 = vunpack.c.h.b16 %v1310
    %v1448 = vunpack.c.l.b16 %v1311
    %v1449 = vunpack.c.h.b16 %v1311
    %v1450 = vunpack.c.l.b16 %v1312
    %v1451 = vunpack.c.h.b16 %v1312
    %v1452 = vunpack.c.l.b16 %v1313
    %v1453 = vunpack.c.h.b16 %v1313
    %v1454 = vunpack.c.l.b16 %v1314
    %v1455 = vunpack.c.h.b16 %v1314
    %v1456 = vunpack.c.l.b16 %v1315
    %v1457 = vunpack.c.h.b16 %v1315
    %v1458 = vunpack.c.l.b16 %v1316
    %v1459 = vunpack.c.h.b16 %v1316
    %v1460 = vunpack.c.l.b16 %v1317
    %v1461 = vunpack.c.h.b16 %v1317
    %v1462 = vunpack.c.l.b16 %v1318
    %v1463 = vunpack.c.h.b16 %v1318
    %v1464 = vunpack.c.l.b16 %v1319
    %v1465 = vunpack.c.h.b16 %v1319
    %v1466 = vunpack.c.l.b16 %v1320
    %v1467 = vunpack.c.h.b16 %v1320
    %v1468 = vpack.c.b16 %v1378, %v1372
    %v1469 = vpack.c.b16 %v1379, %v1373
    %v1470 = vpack.c.b16 %v1380, %v1374
    %v1471 = vpack.c.b16 %v1381, %v1375
    %v1472 = vpack.c.b16 %v1382, %v1376
    %v1473 = vpack.c.b16 %v1383, %v1377
    %v1474 = vpack.c.b16 %v1390, %v1384
    %v1475 = vpack.c.b16 %v1391, %v1385
    %v1476 = vpack.c.b16 %v1392, %v1386
    %v1477 = vpack.c.b16 %v1393, %v1387
    %v1478 = vpack.c.b16 %v1394, %v1388
    %v1479 = vpack.c.b16 %v1395, %v1389
    %v1480 = vpack.c.b16 %v1402, %v1396
    %v1481 = vpack.c.b16 %v1403, %v1397
    %v1482 = vpack.c.b16 %v1404, %v1398
    %v1483 = vpack.c.b16 %v1405, %v1399
    %v1484 = vpack.c.b16 %v1406, %v1400
    %v1485 = vpack.c.b16 %v1407, %v1401
    %v1486 = vpack.c.b16 %v1414, %v1408
    %v1487 = vpack.c.b16 %v1415, %v1409
    %v1488 = vpack.c.b16 %v1416, %v1410
    %v1489 = vpack.c.b16 %v1417, %v1411
    %v1490 = vpack.c.b16 %v1418, %v1412
    %v1491 = vpack.c.b16 %v1419, %v1413
    %v1492 = vpack.c.b16 %v1426, %v1420
    %v1493 = vpack.c.b16 %v1427, %v1421
    %v1494 = vpack.c.b16 %v1428, %v1422
    %v1495 = vpack.c.b16 %v1429, %v1423
    %v1496 = vpack.c.b16 %v1430, %v1424
    %v1497 = vpack.c.b16 %v1431, %v1425
    %v1498 = vpack.c.b16 %v1438, %v1432
    %v1499 = vpack.c.b16 %v1439, %v1433
    %v1500 = vpack.c.b16 %v1440, %v1434
    %v1501 = vpack.c.b16 %v1441, %v1435
    %v1502 = vpack.c.b16 %v1442, %v1436
    %v1503 = vpack.c.b16 %v1443, %v1437
    %v1504 = vpack.c.b16 %v1450, %v1444
    %v1505 = vpack.c.b16 %v1451, %v1445
    %v1506 = vpack.c.b16 %v1452, %v1446
    %v1507 = vpack.c.b16 %v1453, %v1447
    %v1508 = vpack.c.b16 %v1454, %v1448
    %v1509 = vpack.c.b16 %v1455, %v1449
    %v1510 = vpack.c.b16 %v1462, %v1456
    %v1511 = vpack.c.b16 %v1463, %v1457
    %v1512 = vpack.c.b16 %v1464, %v1458
    %v1513 = vpack.c.b16 %v1465, %v1459
    %v1514 = vpack.c.b16 %v1466, %v1460
    %v1515 = vpack.c.b16 %v1467, %v1461
    %1564 = vmatpush.bf16.msra.mxu0 %v1510
    %1565 = vmatpush.bf16.msra.mxu0 %v1504
    %1566 = vmatpush.bf16.msra.mxu0 %v1498
    %1567 = vmatpush.bf16.msra.mxu0 %v1492
    %1568 = vmatpush.bf16.msra.mxu0 %v1486
    %1569 = vmatpush.bf16.msra.mxu0 %v1480
    %1570 = vmatpush.bf16.msra.mxu0 %v1474
    %1571 = vmatpush.bf16.msra.mxu0 %v1468
    %1572 = vmatmul.bf16.gmra.mxu0 %v1322
    %v1573 = vpop.f32.mrf.mxu0
    %v1574 = vadd.f32 0.0, %v1573
    %v1575 = vpop.f32.mrf.mxu0
    %1576 = vdwg.mxu0
    %1577 = vmatpush.bf16.msra.mxu0 %v1511
    %1578 = vmatpush.bf16.msra.mxu0 %v1505
    %1579 = vmatpush.bf16.msra.mxu0 %v1499
    %1580 = vmatpush.bf16.msra.mxu0 %v1493
    %1581 = vmatpush.bf16.msra.mxu0 %v1487
    %1582 = vmatpush.bf16.msra.mxu0 %v1481
    %1583 = vmatpush.bf16.msra.mxu0 %v1475
    %1584 = vmatpush.bf16.msra.mxu0 %v1469
    %1585 = vmatmul.bf16.gmra.mxu0 %v1322
    %v1586 = vpop.f32.mrf.mxu0
    %v1587 = vadd.f32 0.0, %v1586
    %v1588 = vpop.f32.mrf.mxu0
    %1589 = vdwg.mxu0
    %1590 = vmatpush.bf16.msra.mxu0 %v1512
    %1591 = vmatpush.bf16.msra.mxu0 %v1506
    %1592 = vmatpush.bf16.msra.mxu0 %v1500
    %1593 = vmatpush.bf16.msra.mxu0 %v1494
    %1594 = vmatpush.bf16.msra.mxu0 %v1488
    %1595 = vmatpush.bf16.msra.mxu0 %v1482
    %1596 = vmatpush.bf16.msra.mxu0 %v1476
    %1597 = vmatpush.bf16.msra.mxu0 %v1470
    %1598 = vmatmul.bf16.gmra.mxu0 %v1322
    %v1599 = vpop.f32.mrf.mxu0
    %v1600 = vadd.f32 0.0, %v1599
    %v1601 = vpop.f32.mrf.mxu0
    %1602 = vdwg.mxu0
    %1603 = vmatpush.bf16.msra.mxu0 %v1513
    %1604 = vmatpush.bf16.msra.mxu0 %v1507
    %1605 = vmatpush.bf16.msra.mxu0 %v1501
    %1606 = vmatpush.bf16.msra.mxu0 %v1495
    %1607 = vmatpush.bf16.msra.mxu0 %v1489
    %1608 = vmatpush.bf16.msra.mxu0 %v1483
    %1609 = vmatpush.bf16.msra.mxu0 %v1477
    %1610 = vmatpush.bf16.msra.mxu0 %v1471
    %1611 = vmatmul.bf16.gmra.mxu0 %v1322
    %v1612 = vpop.f32.mrf.mxu0
    %v1613 = vadd.f32 0.0, %v1612
    %v1614 = vpop.f32.mrf.mxu0
    %1615 = vdwg.mxu0
    %1616 = vmatpush.bf16.msra.mxu0 %v1514
    %1617 = vmatpush.bf16.msra.mxu0 %v1508
    %1618 = vmatpush.bf16.msra.mxu0 %v1502
    %1619 = vmatpush.bf16.msra.mxu0 %v1496
    %1620 = vmatpush.bf16.msra.mxu0 %v1490
    %1621 = vmatpush.bf16.msra.mxu0 %v1484
    %1622 = vmatpush.bf16.msra.mxu0 %v1478
    %1623 = vmatpush.bf16.msra.mxu0 %v1472
    %1624 = vmatmul.bf16.gmra.mxu0 %v1322
    %v1625 = vpop.f32.mrf.mxu0
    %v1626 = vadd.f32 0.0, %v1625
    %v1627 = vpop.f32.mrf.mxu0
    %1628 = vdwg.mxu0
    %1629 = vmatpush.bf16.msra.mxu0 %v1515
    %1630 = vmatpush.bf16.msra.mxu0 %v1509
    %1631 = vmatpush.bf16.msra.mxu0 %v1503
    %1632 = vmatpush.bf16.msra.mxu0 %v1497
    %1633 = vmatpush.bf16.msra.mxu0 %v1491
    %1634 = vmatpush.bf16.msra.mxu0 %v1485
    %1635 = vmatpush.bf16.msra.mxu0 %v1479
    %1636 = vmatpush.bf16.msra.mxu0 %v1473
    %1637 = vmatmul.bf16.gmra.mxu0 %v1322
    %v1638 = vpop.f32.mrf.mxu0
    %v1639 = vadd.f32 0.0, %v1638
    %v1640 = vpop.f32.mrf.mxu0
    %1641 = vdwg.mxu0
    %v1642 = vadd.f32 %v1266, %v1574
    %v1643 = vadd.f32 %v1267, %v1587
    %v1644 = vadd.f32 %v1268, %v1600
    %v1645 = vadd.f32 %v1269, %v1613
    %v1646 = vadd.f32 %v1270, %v1626
    %v1647 = vadd.f32 %v1271, %v1639
    %v1648 = vld [vmem:[%s3 + $0x300] sm:$0xff]
    %v1649 = vld [vmem:[%s3 + $0x308] sm:$0xff]
    %v1650 = vld [vmem:[%s3 + $0x310] sm:$0xff]
    %v1651 = vld [vmem:[%s3 + $0x318] sm:$0xff]
    %v1652 = vld [vmem:[%s3 + $0x320] sm:$0xff]
    %v1653 = vld [vmem:[%s3 + $0x328] sm:$0xff]
    %v1654 = vld [vmem:[%s3 + $0x330] sm:$0xff]
    %v1655 = vld [vmem:[%s3 + $0x338] sm:$0xff]
    %v1656 = vld [vmem:[%s3 + $0x340] sm:$0xff]
    %v1657 = vld [vmem:[%s3 + $0x348] sm:$0xff]
    %v1658 = vld [vmem:[%s3 + $0x350] sm:$0xff]
    %v1659 = vld [vmem:[%s3 + $0x358] sm:$0xff]
    %v1660 = vld [vmem:[%s3 + $0x360] sm:$0xff]
    %v1661 = vld [vmem:[%s3 + $0x368] sm:$0xff]
    %v1662 = vld [vmem:[%s3 + $0x370] sm:$0xff]
    %v1663 = vld [vmem:[%s3 + $0x378] sm:$0xff]
    %v1664 = vld [vmem:[%s3 + $0x380] sm:$0xff]
    %v1665 = vld [vmem:[%s3 + $0x388] sm:$0xff]
    %v1666 = vld [vmem:[%s3 + $0x390] sm:$0xff]
    %v1667 = vld [vmem:[%s3 + $0x398] sm:$0xff]
    %v1668 = vld [vmem:[%s3 + $0x3a0] sm:$0xff]
    %v1669 = vld [vmem:[%s3 + $0x3a8] sm:$0xff]
    %v1670 = vld [vmem:[%s3 + $0x3b0] sm:$0xff]
    %v1671 = vld [vmem:[%s3 + $0x3b8] sm:$0xff]
    %v1672 = vld [vmem:[%s3 + $0x3c0] sm:$0xff]
    %v1673 = vld [vmem:[%s3 + $0x3c8] sm:$0xff]
    %v1674 = vld [vmem:[%s3 + $0x3d0] sm:$0xff]
    %v1675 = vld [vmem:[%s3 + $0x3d8] sm:$0xff]
    %v1676 = vld [vmem:[%s3 + $0x3e0] sm:$0xff]
    %v1677 = vld [vmem:[%s3 + $0x3e8] sm:$0xff]
    %v1678 = vld [vmem:[%s3 + $0x3f0] sm:$0xff]
    %v1679 = vld [vmem:[%s3 + $0x3f8] sm:$0xff]
    %v1680 = vld [vmem:[%s3 + $0x400] sm:$0xff]
    %v1681 = vld [vmem:[%s3 + $0x408] sm:$0xff]
    %v1682 = vld [vmem:[%s3 + $0x410] sm:$0xff]
    %v1683 = vld [vmem:[%s3 + $0x418] sm:$0xff]
    %v1684 = vld [vmem:[%s3 + $0x420] sm:$0xff]
    %v1685 = vld [vmem:[%s3 + $0x428] sm:$0xff]
    %v1686 = vld [vmem:[%s3 + $0x430] sm:$0xff]
    %v1687 = vld [vmem:[%s3 + $0x438] sm:$0xff]
    %v1688 = vld [vmem:[%s3 + $0x440] sm:$0xff]
    %v1689 = vld [vmem:[%s3 + $0x448] sm:$0xff]
    %v1690 = vld [vmem:[%s3 + $0x450] sm:$0xff]
    %v1691 = vld [vmem:[%s3 + $0x458] sm:$0xff]
    %v1692 = vld [vmem:[%s3 + $0x460] sm:$0xff]
    %v1693 = vld [vmem:[%s3 + $0x468] sm:$0xff]
    %v1694 = vld [vmem:[%s3 + $0x470] sm:$0xff]
    %v1695 = vld [vmem:[%s3 + $0x478] sm:$0xff]
    %v1697 = vrot.slane %v886, 3
    %v1747 = vunpack.c.l.b16 %v1648
    %v1748 = vunpack.c.h.b16 %v1648
    %v1749 = vunpack.c.l.b16 %v1649
    %v1750 = vunpack.c.h.b16 %v1649
    %v1751 = vunpack.c.l.b16 %v1650
    %v1752 = vunpack.c.h.b16 %v1650
    %v1753 = vunpack.c.l.b16 %v1651
    %v1754 = vunpack.c.h.b16 %v1651
    %v1755 = vunpack.c.l.b16 %v1652
    %v1756 = vunpack.c.h.b16 %v1652
    %v1757 = vunpack.c.l.b16 %v1653
    %v1758 = vunpack.c.h.b16 %v1653
    %v1759 = vunpack.c.l.b16 %v1654
    %v1760 = vunpack.c.h.b16 %v1654
    %v1761 = vunpack.c.l.b16 %v1655
    %v1762 = vunpack.c.h.b16 %v1655
    %v1763 = vunpack.c.l.b16 %v1656
    %v1764 = vunpack.c.h.b16 %v1656
    %v1765 = vunpack.c.l.b16 %v1657
    %v1766 = vunpack.c.h.b16 %v1657
    %v1767 = vunpack.c.l.b16 %v1658
    %v1768 = vunpack.c.h.b16 %v1658
    %v1769 = vunpack.c.l.b16 %v1659
    %v1770 = vunpack.c.h.b16 %v1659
    %v1771 = vunpack.c.l.b16 %v1660
    %v1772 = vunpack.c.h.b16 %v1660
    %v1773 = vunpack.c.l.b16 %v1661
    %v1774 = vunpack.c.h.b16 %v1661
    %v1775 = vunpack.c.l.b16 %v1662
    %v1776 = vunpack.c.h.b16 %v1662
    %v1777 = vunpack.c.l.b16 %v1663
    %v1778 = vunpack.c.h.b16 %v1663
    %v1779 = vunpack.c.l.b16 %v1664
    %v1780 = vunpack.c.h.b16 %v1664
    %v1781 = vunpack.c.l.b16 %v1665
    %v1782 = vunpack.c.h.b16 %v1665
    %v1783 = vunpack.c.l.b16 %v1666
    %v1784 = vunpack.c.h.b16 %v1666
    %v1785 = vunpack.c.l.b16 %v1667
    %v1786 = vunpack.c.h.b16 %v1667
    %v1787 = vunpack.c.l.b16 %v1668
    %v1788 = vunpack.c.h.b16 %v1668
    %v1789 = vunpack.c.l.b16 %v1669
    %v1790 = vunpack.c.h.b16 %v1669
    %v1791 = vunpack.c.l.b16 %v1670
    %v1792 = vunpack.c.h.b16 %v1670
    %v1793 = vunpack.c.l.b16 %v1671
    %v1794 = vunpack.c.h.b16 %v1671
    %v1795 = vunpack.c.l.b16 %v1672
    %v1796 = vunpack.c.h.b16 %v1672
    %v1797 = vunpack.c.l.b16 %v1673
    %v1798 = vunpack.c.h.b16 %v1673
    %v1799 = vunpack.c.l.b16 %v1674
    %v1800 = vunpack.c.h.b16 %v1674
    %v1801 = vunpack.c.l.b16 %v1675
    %v1802 = vunpack.c.h.b16 %v1675
    %v1803 = vunpack.c.l.b16 %v1676
    %v1804 = vunpack.c.h.b16 %v1676
    %v1805 = vunpack.c.l.b16 %v1677
    %v1806 = vunpack.c.h.b16 %v1677
    %v1807 = vunpack.c.l.b16 %v1678
    %v1808 = vunpack.c.h.b16 %v1678
    %v1809 = vunpack.c.l.b16 %v1679
    %v1810 = vunpack.c.h.b16 %v1679
    %v1811 = vunpack.c.l.b16 %v1680
    %v1812 = vunpack.c.h.b16 %v1680
    %v1813 = vunpack.c.l.b16 %v1681
    %v1814 = vunpack.c.h.b16 %v1681
    %v1815 = vunpack.c.l.b16 %v1682
    %v1816 = vunpack.c.h.b16 %v1682
    %v1817 = vunpack.c.l.b16 %v1683
    %v1818 = vunpack.c.h.b16 %v1683
    %v1819 = vunpack.c.l.b16 %v1684
    %v1820 = vunpack.c.h.b16 %v1684
    %v1821 = vunpack.c.l.b16 %v1685
    %v1822 = vunpack.c.h.b16 %v1685
    %v1823 = vunpack.c.l.b16 %v1686
    %v1824 = vunpack.c.h.b16 %v1686
    %v1825 = vunpack.c.l.b16 %v1687
    %v1826 = vunpack.c.h.b16 %v1687
    %v1827 = vunpack.c.l.b16 %v1688
    %v1828 = vunpack.c.h.b16 %v1688
    %v1829 = vunpack.c.l.b16 %v1689
    %v1830 = vunpack.c.h.b16 %v1689
    %v1831 = vunpack.c.l.b16 %v1690
    %v1832 = vunpack.c.h.b16 %v1690
    %v1833 = vunpack.c.l.b16 %v1691
    %v1834 = vunpack.c.h.b16 %v1691
    %v1835 = vunpack.c.l.b16 %v1692
    %v1836 = vunpack.c.h.b16 %v1692
    %v1837 = vunpack.c.l.b16 %v1693
    %v1838 = vunpack.c.h.b16 %v1693
    %v1839 = vunpack.c.l.b16 %v1694
    %v1840 = vunpack.c.h.b16 %v1694
    %v1841 = vunpack.c.l.b16 %v1695
    %v1842 = vunpack.c.h.b16 %v1695
    %v1843 = vpack.c.b16 %v1753, %v1747
    %v1844 = vpack.c.b16 %v1754, %v1748
    %v1845 = vpack.c.b16 %v1755, %v1749
    %v1846 = vpack.c.b16 %v1756, %v1750
    %v1847 = vpack.c.b16 %v1757, %v1751
    %v1848 = vpack.c.b16 %v1758, %v1752
    %v1849 = vpack.c.b16 %v1765, %v1759
    %v1850 = vpack.c.b16 %v1766, %v1760
    %v1851 = vpack.c.b16 %v1767, %v1761
    %v1852 = vpack.c.b16 %v1768, %v1762
    %v1853 = vpack.c.b16 %v1769, %v1763
    %v1854 = vpack.c.b16 %v1770, %v1764
    %v1855 = vpack.c.b16 %v1777, %v1771
    %v1856 = vpack.c.b16 %v1778, %v1772
    %v1857 = vpack.c.b16 %v1779, %v1773
    %v1858 = vpack.c.b16 %v1780, %v1774
    %v1859 = vpack.c.b16 %v1781, %v1775
    %v1860 = vpack.c.b16 %v1782, %v1776
    %v1861 = vpack.c.b16 %v1789, %v1783
    %v1862 = vpack.c.b16 %v1790, %v1784
    %v1863 = vpack.c.b16 %v1791, %v1785
    %v1864 = vpack.c.b16 %v1792, %v1786
    %v1865 = vpack.c.b16 %v1793, %v1787
    %v1866 = vpack.c.b16 %v1794, %v1788
    %v1867 = vpack.c.b16 %v1801, %v1795
    %v1868 = vpack.c.b16 %v1802, %v1796
    %v1869 = vpack.c.b16 %v1803, %v1797
    %v1870 = vpack.c.b16 %v1804, %v1798
    %v1871 = vpack.c.b16 %v1805, %v1799
    %v1872 = vpack.c.b16 %v1806, %v1800
    %v1873 = vpack.c.b16 %v1813, %v1807
    %v1874 = vpack.c.b16 %v1814, %v1808
    %v1875 = vpack.c.b16 %v1815, %v1809
    %v1876 = vpack.c.b16 %v1816, %v1810
    %v1877 = vpack.c.b16 %v1817, %v1811
    %v1878 = vpack.c.b16 %v1818, %v1812
    %v1879 = vpack.c.b16 %v1825, %v1819
    %v1880 = vpack.c.b16 %v1826, %v1820
    %v1881 = vpack.c.b16 %v1827, %v1821
    %v1882 = vpack.c.b16 %v1828, %v1822
    %v1883 = vpack.c.b16 %v1829, %v1823
    %v1884 = vpack.c.b16 %v1830, %v1824
    %v1885 = vpack.c.b16 %v1837, %v1831
    %v1886 = vpack.c.b16 %v1838, %v1832
    %v1887 = vpack.c.b16 %v1839, %v1833
    %v1888 = vpack.c.b16 %v1840, %v1834
    %v1889 = vpack.c.b16 %v1841, %v1835
    %v1890 = vpack.c.b16 %v1842, %v1836
    %1939 = vmatpush.bf16.msra.mxu0 %v1885
    %1940 = vmatpush.bf16.msra.mxu0 %v1879
    %1941 = vmatpush.bf16.msra.mxu0 %v1873
    %1942 = vmatpush.bf16.msra.mxu0 %v1867
    %1943 = vmatpush.bf16.msra.mxu0 %v1861
    %1944 = vmatpush.bf16.msra.mxu0 %v1855
    %1945 = vmatpush.bf16.msra.mxu0 %v1849
    %1946 = vmatpush.bf16.msra.mxu0 %v1843
    %1947 = vmatmul.bf16.gmra.mxu0 %v1697
    %v1948 = vpop.f32.mrf.mxu0
    %v1949 = vadd.f32 0.0, %v1948
    %v1950 = vpop.f32.mrf.mxu0
    %1951 = vdwg.mxu0
    %1952 = vmatpush.bf16.msra.mxu0 %v1886
    %1953 = vmatpush.bf16.msra.mxu0 %v1880
    %1954 = vmatpush.bf16.msra.mxu0 %v1874
    %1955 = vmatpush.bf16.msra.mxu0 %v1868
    %1956 = vmatpush.bf16.msra.mxu0 %v1862
    %1957 = vmatpush.bf16.msra.mxu0 %v1856
    %1958 = vmatpush.bf16.msra.mxu0 %v1850
    %1959 = vmatpush.bf16.msra.mxu0 %v1844
    %1960 = vmatmul.bf16.gmra.mxu0 %v1697
    %v1961 = vpop.f32.mrf.mxu0
    %v1962 = vadd.f32 0.0, %v1961
    %v1963 = vpop.f32.mrf.mxu0
    %1964 = vdwg.mxu0
    %1965 = vmatpush.bf16.msra.mxu0 %v1887
    %1966 = vmatpush.bf16.msra.mxu0 %v1881
    %1967 = vmatpush.bf16.msra.mxu0 %v1875
    %1968 = vmatpush.bf16.msra.mxu0 %v1869
    %1969 = vmatpush.bf16.msra.mxu0 %v1863
    %1970 = vmatpush.bf16.msra.mxu0 %v1857
    %1971 = vmatpush.bf16.msra.mxu0 %v1851
    %1972 = vmatpush.bf16.msra.mxu0 %v1845
    %1973 = vmatmul.bf16.gmra.mxu0 %v1697
    %v1974 = vpop.f32.mrf.mxu0
    %v1975 = vadd.f32 0.0, %v1974
    %v1976 = vpop.f32.mrf.mxu0
    %1977 = vdwg.mxu0
    %1978 = vmatpush.bf16.msra.mxu0 %v1888
    %1979 = vmatpush.bf16.msra.mxu0 %v1882
    %1980 = vmatpush.bf16.msra.mxu0 %v1876
    %1981 = vmatpush.bf16.msra.mxu0 %v1870
    %1982 = vmatpush.bf16.msra.mxu0 %v1864
    %1983 = vmatpush.bf16.msra.mxu0 %v1858
    %1984 = vmatpush.bf16.msra.mxu0 %v1852
    %1985 = vmatpush.bf16.msra.mxu0 %v1846
    %1986 = vmatmul.bf16.gmra.mxu0 %v1697
    %v1987 = vpop.f32.mrf.mxu0
    %v1988 = vadd.f32 0.0, %v1987
    %v1989 = vpop.f32.mrf.mxu0
    %1990 = vdwg.mxu0
    %1991 = vmatpush.bf16.msra.mxu0 %v1889
    %1992 = vmatpush.bf16.msra.mxu0 %v1883
    %1993 = vmatpush.bf16.msra.mxu0 %v1877
    %1994 = vmatpush.bf16.msra.mxu0 %v1871
    %1995 = vmatpush.bf16.msra.mxu0 %v1865
    %1996 = vmatpush.bf16.msra.mxu0 %v1859
    %1997 = vmatpush.bf16.msra.mxu0 %v1853
    %1998 = vmatpush.bf16.msra.mxu0 %v1847
    %1999 = vmatmul.bf16.gmra.mxu0 %v1697
    %v2000 = vpop.f32.mrf.mxu0
    %v2001 = vadd.f32 0.0, %v2000
    %v2002 = vpop.f32.mrf.mxu0
    %2003 = vdwg.mxu0
    %2004 = vmatpush.bf16.msra.mxu0 %v1890
    %2005 = vmatpush.bf16.msra.mxu0 %v1884
    %2006 = vmatpush.bf16.msra.mxu0 %v1878
    %2007 = vmatpush.bf16.msra.mxu0 %v1872
    %2008 = vmatpush.bf16.msra.mxu0 %v1866
    %2009 = vmatpush.bf16.msra.mxu0 %v1860
    %2010 = vmatpush.bf16.msra.mxu0 %v1854
    %2011 = vmatpush.bf16.msra.mxu0 %v1848
    %2012 = vmatmul.bf16.gmra.mxu0 %v1697
    %v2013 = vpop.f32.mrf.mxu0
    %v2014 = vadd.f32 0.0, %v2013
    %v2015 = vpop.f32.mrf.mxu0
    %2016 = vdwg.mxu0
    %v2017 = vadd.f32 %v1642, %v1949
    %v2018 = vadd.f32 %v1643, %v1962
    %v2019 = vadd.f32 %v1644, %v1975
    %v2020 = vadd.f32 %v1645, %v1988
    %v2021 = vadd.f32 %v1646, %v2001
    %v2022 = vadd.f32 %v1647, %v2014
    %v2023 = vpack.c.bf16 %v870, %v870
    %v2024 = vld [vmem:[%s3 + $0x480] sm:$0xff]
    %v2025 = vld [vmem:[%s3 + $0x488] sm:$0xff]
    %v2026 = vld [vmem:[%s3 + $0x490] sm:$0xff]
    %v2027 = vld [vmem:[%s3 + $0x498] sm:$0xff]
    %v2028 = vld [vmem:[%s3 + $0x4a0] sm:$0xff]
    %v2029 = vld [vmem:[%s3 + $0x4a8] sm:$0xff]
    %v2030 = vld [vmem:[%s3 + $0x4b0] sm:$0xff]
    %v2031 = vld [vmem:[%s3 + $0x4b8] sm:$0xff]
    %v2032 = vld [vmem:[%s3 + $0x4c0] sm:$0xff]
    %v2033 = vld [vmem:[%s3 + $0x4c8] sm:$0xff]
    %v2034 = vld [vmem:[%s3 + $0x4d0] sm:$0xff]
    %v2035 = vld [vmem:[%s3 + $0x4d8] sm:$0xff]
    %v2036 = vld [vmem:[%s3 + $0x4e0] sm:$0xff]
    %v2037 = vld [vmem:[%s3 + $0x4e8] sm:$0xff]
    %v2038 = vld [vmem:[%s3 + $0x4f0] sm:$0xff]
    %v2039 = vld [vmem:[%s3 + $0x4f8] sm:$0xff]
    %v2040 = vld [vmem:[%s3 + $0x500] sm:$0xff]
    %v2041 = vld [vmem:[%s3 + $0x508] sm:$0xff]
    %v2042 = vld [vmem:[%s3 + $0x510] sm:$0xff]
    %v2043 = vld [vmem:[%s3 + $0x518] sm:$0xff]
    %v2044 = vld [vmem:[%s3 + $0x520] sm:$0xff]
    %v2045 = vld [vmem:[%s3 + $0x528] sm:$0xff]
    %v2046 = vld [vmem:[%s3 + $0x530] sm:$0xff]
    %v2047 = vld [vmem:[%s3 + $0x538] sm:$0xff]
    %v2048 = vld [vmem:[%s3 + $0x540] sm:$0xff]
    %v2049 = vld [vmem:[%s3 + $0x548] sm:$0xff]
    %v2050 = vld [vmem:[%s3 + $0x550] sm:$0xff]
    %v2051 = vld [vmem:[%s3 + $0x558] sm:$0xff]
    %v2052 = vld [vmem:[%s3 + $0x560] sm:$0xff]
    %v2053 = vld [vmem:[%s3 + $0x568] sm:$0xff]
    %v2054 = vld [vmem:[%s3 + $0x570] sm:$0xff]
    %v2055 = vld [vmem:[%s3 + $0x578] sm:$0xff]
    %v2056 = vld [vmem:[%s3 + $0x580] sm:$0xff]
    %v2057 = vld [vmem:[%s3 + $0x588] sm:$0xff]
    %v2058 = vld [vmem:[%s3 + $0x590] sm:$0xff]
    %v2059 = vld [vmem:[%s3 + $0x598] sm:$0xff]
    %v2060 = vld [vmem:[%s3 + $0x5a0] sm:$0xff]
    %v2061 = vld [vmem:[%s3 + $0x5a8] sm:$0xff]
    %v2062 = vld [vmem:[%s3 + $0x5b0] sm:$0xff]
    %v2063 = vld [vmem:[%s3 + $0x5b8] sm:$0xff]
    %v2064 = vld [vmem:[%s3 + $0x5c0] sm:$0xff]
    %v2065 = vld [vmem:[%s3 + $0x5c8] sm:$0xff]
    %v2066 = vld [vmem:[%s3 + $0x5d0] sm:$0xff]
    %v2067 = vld [vmem:[%s3 + $0x5d8] sm:$0xff]
    %v2068 = vld [vmem:[%s3 + $0x5e0] sm:$0xff]
    %v2069 = vld [vmem:[%s3 + $0x5e8] sm:$0xff]
    %v2070 = vld [vmem:[%s3 + $0x5f0] sm:$0xff]
    %v2071 = vld [vmem:[%s3 + $0x5f8] sm:$0xff]
    %v2120 = vunpack.c.l.b16 %v2024
    %v2121 = vunpack.c.h.b16 %v2024
    %v2122 = vunpack.c.l.b16 %v2025
    %v2123 = vunpack.c.h.b16 %v2025
    %v2124 = vunpack.c.l.b16 %v2026
    %v2125 = vunpack.c.h.b16 %v2026
    %v2126 = vunpack.c.l.b16 %v2027
    %v2127 = vunpack.c.h.b16 %v2027
    %v2128 = vunpack.c.l.b16 %v2028
    %v2129 = vunpack.c.h.b16 %v2028
    %v2130 = vunpack.c.l.b16 %v2029
    %v2131 = vunpack.c.h.b16 %v2029
    %v2132 = vunpack.c.l.b16 %v2030
    %v2133 = vunpack.c.h.b16 %v2030
    %v2134 = vunpack.c.l.b16 %v2031
    %v2135 = vunpack.c.h.b16 %v2031
    %v2136 = vunpack.c.l.b16 %v2032
    %v2137 = vunpack.c.h.b16 %v2032
    %v2138 = vunpack.c.l.b16 %v2033
    %v2139 = vunpack.c.h.b16 %v2033
    %v2140 = vunpack.c.l.b16 %v2034
    %v2141 = vunpack.c.h.b16 %v2034
    %v2142 = vunpack.c.l.b16 %v2035
    %v2143 = vunpack.c.h.b16 %v2035
    %v2144 = vunpack.c.l.b16 %v2036
    %v2145 = vunpack.c.h.b16 %v2036
    %v2146 = vunpack.c.l.b16 %v2037
    %v2147 = vunpack.c.h.b16 %v2037
    %v2148 = vunpack.c.l.b16 %v2038
    %v2149 = vunpack.c.h.b16 %v2038
    %v2150 = vunpack.c.l.b16 %v2039
    %v2151 = vunpack.c.h.b16 %v2039
    %v2152 = vunpack.c.l.b16 %v2040
    %v2153 = vunpack.c.h.b16 %v2040
    %v2154 = vunpack.c.l.b16 %v2041
    %v2155 = vunpack.c.h.b16 %v2041
    %v2156 = vunpack.c.l.b16 %v2042
    %v2157 = vunpack.c.h.b16 %v2042
    %v2158 = vunpack.c.l.b16 %v2043
    %v2159 = vunpack.c.h.b16 %v2043
    %v2160 = vunpack.c.l.b16 %v2044
    %v2161 = vunpack.c.h.b16 %v2044
    %v2162 = vunpack.c.l.b16 %v2045
    %v2163 = vunpack.c.h.b16 %v2045
    %v2164 = vunpack.c.l.b16 %v2046
    %v2165 = vunpack.c.h.b16 %v2046
    %v2166 = vunpack.c.l.b16 %v2047
    %v2167 = vunpack.c.h.b16 %v2047
    %v2168 = vunpack.c.l.b16 %v2048
    %v2169 = vunpack.c.h.b16 %v2048
    %v2170 = vunpack.c.l.b16 %v2049
    %v2171 = vunpack.c.h.b16 %v2049
    %v2172 = vunpack.c.l.b16 %v2050
    %v2173 = vunpack.c.h.b16 %v2050
    %v2174 = vunpack.c.l.b16 %v2051
    %v2175 = vunpack.c.h.b16 %v2051
    %v2176 = vunpack.c.l.b16 %v2052
    %v2177 = vunpack.c.h.b16 %v2052
    %v2178 = vunpack.c.l.b16 %v2053
    %v2179 = vunpack.c.h.b16 %v2053
    %v2180 = vunpack.c.l.b16 %v2054
    %v2181 = vunpack.c.h.b16 %v2054
    %v2182 = vunpack.c.l.b16 %v2055
    %v2183 = vunpack.c.h.b16 %v2055
    %v2184 = vunpack.c.l.b16 %v2056
    %v2185 = vunpack.c.h.b16 %v2056
    %v2186 = vunpack.c.l.b16 %v2057
    %v2187 = vunpack.c.h.b16 %v2057
    %v2188 = vunpack.c.l.b16 %v2058
    %v2189 = vunpack.c.h.b16 %v2058
    %v2190 = vunpack.c.l.b16 %v2059
    %v2191 = vunpack.c.h.b16 %v2059
    %v2192 = vunpack.c.l.b16 %v2060
    %v2193 = vunpack.c.h.b16 %v2060
    %v2194 = vunpack.c.l.b16 %v2061
    %v2195 = vunpack.c.h.b16 %v2061
    %v2196 = vunpack.c.l.b16 %v2062
    %v2197 = vunpack.c.h.b16 %v2062
    %v2198 = vunpack.c.l.b16 %v2063
    %v2199 = vunpack.c.h.b16 %v2063
    %v2200 = vunpack.c.l.b16 %v2064
    %v2201 = vunpack.c.h.b16 %v2064
    %v2202 = vunpack.c.l.b16 %v2065
    %v2203 = vunpack.c.h.b16 %v2065
    %v2204 = vunpack.c.l.b16 %v2066
    %v2205 = vunpack.c.h.b16 %v2066
    %v2206 = vunpack.c.l.b16 %v2067
    %v2207 = vunpack.c.h.b16 %v2067
    %v2208 = vunpack.c.l.b16 %v2068
    %v2209 = vunpack.c.h.b16 %v2068
    %v2210 = vunpack.c.l.b16 %v2069
    %v2211 = vunpack.c.h.b16 %v2069
    %v2212 = vunpack.c.l.b16 %v2070
    %v2213 = vunpack.c.h.b16 %v2070
    %v2214 = vunpack.c.l.b16 %v2071
    %v2215 = vunpack.c.h.b16 %v2071
    %v2216 = vpack.c.b16 %v2126, %v2120
    %v2217 = vpack.c.b16 %v2127, %v2121
    %v2218 = vpack.c.b16 %v2128, %v2122
    %v2219 = vpack.c.b16 %v2129, %v2123
    %v2220 = vpack.c.b16 %v2130, %v2124
    %v2221 = vpack.c.b16 %v2131, %v2125
    %v2222 = vpack.c.b16 %v2138, %v2132
    %v2223 = vpack.c.b16 %v2139, %v2133
    %v2224 = vpack.c.b16 %v2140, %v2134
    %v2225 = vpack.c.b16 %v2141, %v2135
    %v2226 = vpack.c.b16 %v2142, %v2136
    %v2227 = vpack.c.b16 %v2143, %v2137
    %v2228 = vpack.c.b16 %v2150, %v2144
    %v2229 = vpack.c.b16 %v2151, %v2145
    %v2230 = vpack.c.b16 %v2152, %v2146
    %v2231 = vpack.c.b16 %v2153, %v2147
    %v2232 = vpack.c.b16 %v2154, %v2148
    %v2233 = vpack.c.b16 %v2155, %v2149
    %v2234 = vpack.c.b16 %v2162, %v2156
    %v2235 = vpack.c.b16 %v2163, %v2157
    %v2236 = vpack.c.b16 %v2164, %v2158
    %v2237 = vpack.c.b16 %v2165, %v2159
    %v2238 = vpack.c.b16 %v2166, %v2160
    %v2239 = vpack.c.b16 %v2167, %v2161
    %v2240 = vpack.c.b16 %v2174, %v2168
    %v2241 = vpack.c.b16 %v2175, %v2169
    %v2242 = vpack.c.b16 %v2176, %v2170
    %v2243 = vpack.c.b16 %v2177, %v2171
    %v2244 = vpack.c.b16 %v2178, %v2172
    %v2245 = vpack.c.b16 %v2179, %v2173
    %v2246 = vpack.c.b16 %v2186, %v2180
    %v2247 = vpack.c.b16 %v2187, %v2181
    %v2248 = vpack.c.b16 %v2188, %v2182
    %v2249 = vpack.c.b16 %v2189, %v2183
    %v2250 = vpack.c.b16 %v2190, %v2184
    %v2251 = vpack.c.b16 %v2191, %v2185
    %v2252 = vpack.c.b16 %v2198, %v2192
    %v2253 = vpack.c.b16 %v2199, %v2193
    %v2254 = vpack.c.b16 %v2200, %v2194
    %v2255 = vpack.c.b16 %v2201, %v2195
    %v2256 = vpack.c.b16 %v2202, %v2196
    %v2257 = vpack.c.b16 %v2203, %v2197
    %v2258 = vpack.c.b16 %v2210, %v2204
    %v2259 = vpack.c.b16 %v2211, %v2205
    %v2260 = vpack.c.b16 %v2212, %v2206
    %v2261 = vpack.c.b16 %v2213, %v2207
    %v2262 = vpack.c.b16 %v2214, %v2208
    %v2263 = vpack.c.b16 %v2215, %v2209
    %2312 = vmatpush.bf16.msra.mxu0 %v2258
    %2313 = vmatpush.bf16.msra.mxu0 %v2252
    %2314 = vmatpush.bf16.msra.mxu0 %v2246
    %2315 = vmatpush.bf16.msra.mxu0 %v2240
    %2316 = vmatpush.bf16.msra.mxu0 %v2234
    %2317 = vmatpush.bf16.msra.mxu0 %v2228
    %2318 = vmatpush.bf16.msra.mxu0 %v2222
    %2319 = vmatpush.bf16.msra.mxu0 %v2216
    %2320 = vmatmul.bf16.gmra.mxu0 %v2023
    %v2321 = vpop.f32.mrf.mxu0
    %v2322 = vadd.f32 0.0, %v2321
    %v2323 = vpop.f32.mrf.mxu0
    %2324 = vdwg.mxu0
    %2325 = vmatpush.bf16.msra.mxu0 %v2259
    %2326 = vmatpush.bf16.msra.mxu0 %v2253
    %2327 = vmatpush.bf16.msra.mxu0 %v2247
    %2328 = vmatpush.bf16.msra.mxu0 %v2241
    %2329 = vmatpush.bf16.msra.mxu0 %v2235
    %2330 = vmatpush.bf16.msra.mxu0 %v2229
    %2331 = vmatpush.bf16.msra.mxu0 %v2223
    %2332 = vmatpush.bf16.msra.mxu0 %v2217
    %2333 = vmatmul.bf16.gmra.mxu0 %v2023
    %v2334 = vpop.f32.mrf.mxu0
    %v2335 = vadd.f32 0.0, %v2334
    %v2336 = vpop.f32.mrf.mxu0
    %2337 = vdwg.mxu0
    %2338 = vmatpush.bf16.msra.mxu0 %v2260
    %2339 = vmatpush.bf16.msra.mxu0 %v2254
    %2340 = vmatpush.bf16.msra.mxu0 %v2248
    %2341 = vmatpush.bf16.msra.mxu0 %v2242
    %2342 = vmatpush.bf16.msra.mxu0 %v2236
    %2343 = vmatpush.bf16.msra.mxu0 %v2230
    %2344 = vmatpush.bf16.msra.mxu0 %v2224
    %2345 = vmatpush.bf16.msra.mxu0 %v2218
    %2346 = vmatmul.bf16.gmra.mxu0 %v2023
    %v2347 = vpop.f32.mrf.mxu0
    %v2348 = vadd.f32 0.0, %v2347
    %v2349 = vpop.f32.mrf.mxu0
    %2350 = vdwg.mxu0
    %2351 = vmatpush.bf16.msra.mxu0 %v2261
    %2352 = vmatpush.bf16.msra.mxu0 %v2255
    %2353 = vmatpush.bf16.msra.mxu0 %v2249
    %2354 = vmatpush.bf16.msra.mxu0 %v2243
    %2355 = vmatpush.bf16.msra.mxu0 %v2237
    %2356 = vmatpush.bf16.msra.mxu0 %v2231
    %2357 = vmatpush.bf16.msra.mxu0 %v2225
    %2358 = vmatpush.bf16.msra.mxu0 %v2219
    %2359 = vmatmul.bf16.gmra.mxu0 %v2023
    %v2360 = vpop.f32.mrf.mxu0
    %v2361 = vadd.f32 0.0, %v2360
    %v2362 = vpop.f32.mrf.mxu0
    %2363 = vdwg.mxu0
    %2364 = vmatpush.bf16.msra.mxu0 %v2262
    %2365 = vmatpush.bf16.msra.mxu0 %v2256
    %2366 = vmatpush.bf16.msra.mxu0 %v2250
    %2367 = vmatpush.bf16.msra.mxu0 %v2244
    %2368 = vmatpush.bf16.msra.mxu0 %v2238
    %2369 = vmatpush.bf16.msra.mxu0 %v2232
    %2370 = vmatpush.bf16.msra.mxu0 %v2226
    %2371 = vmatpush.bf16.msra.mxu0 %v2220
    %2372 = vmatmul.bf16.gmra.mxu0 %v2023
    %v2373 = vpop.f32.mrf.mxu0
    %v2374 = vadd.f32 0.0, %v2373
    %v2375 = vpop.f32.mrf.mxu0
    %2376 = vdwg.mxu0
    %2377 = vmatpush.bf16.msra.mxu0 %v2263
    %2378 = vmatpush.bf16.msra.mxu0 %v2257
    %2379 = vmatpush.bf16.msra.mxu0 %v2251
    %2380 = vmatpush.bf16.msra.mxu0 %v2245
    %2381 = vmatpush.bf16.msra.mxu0 %v2239
    %2382 = vmatpush.bf16.msra.mxu0 %v2233
    %2383 = vmatpush.bf16.msra.mxu0 %v2227
    %2384 = vmatpush.bf16.msra.mxu0 %v2221
    %2385 = vmatmul.bf16.gmra.mxu0 %v2023
    %v2386 = vpop.f32.mrf.mxu0
    %v2387 = vadd.f32 0.0, %v2386
    %v2388 = vpop.f32.mrf.mxu0
    %2389 = vdwg.mxu0
    %v2390 = vadd.f32 %v2017, %v2322
    %v2391 = vadd.f32 %v2018, %v2335
    %v2392 = vadd.f32 %v2019, %v2348
    %v2393 = vadd.f32 %v2020, %v2361
    %v2394 = vadd.f32 %v2021, %v2374
    %v2395 = vadd.f32 %v2022, %v2387
    %v2396 = vpack.c.bf16 %v884, %v884
    %v2397 = vld [vmem:[%s3 + $0x600] sm:$0xff]
    %v2398 = vld [vmem:[%s3 + $0x608] sm:$0xff]
    %v2399 = vld [vmem:[%s3 + $0x610] sm:$0xff]
    %v2400 = vld [vmem:[%s3 + $0x618] sm:$0xff]
    %v2401 = vld [vmem:[%s3 + $0x620] sm:$0xff]
    %v2402 = vld [vmem:[%s3 + $0x628] sm:$0xff]
    %v2403 = vld [vmem:[%s3 + $0x630] sm:$0xff]
    %v2404 = vld [vmem:[%s3 + $0x638] sm:$0xff]
    %v2405 = vld [vmem:[%s3 + $0x640] sm:$0xff]
    %v2406 = vld [vmem:[%s3 + $0x648] sm:$0xff]
    %v2407 = vld [vmem:[%s3 + $0x650] sm:$0xff]
    %v2408 = vld [vmem:[%s3 + $0x658] sm:$0xff]
    %v2409 = vld [vmem:[%s3 + $0x660] sm:$0xff]
    %v2410 = vld [vmem:[%s3 + $0x668] sm:$0xff]
    %v2411 = vld [vmem:[%s3 + $0x670] sm:$0xff]
    %v2412 = vld [vmem:[%s3 + $0x678] sm:$0xff]
    %v2413 = vld [vmem:[%s3 + $0x680] sm:$0xff]
    %v2414 = vld [vmem:[%s3 + $0x688] sm:$0xff]
    %v2415 = vld [vmem:[%s3 + $0x690] sm:$0xff]
    %v2416 = vld [vmem:[%s3 + $0x698] sm:$0xff]
    %v2417 = vld [vmem:[%s3 + $0x6a0] sm:$0xff]
    %v2418 = vld [vmem:[%s3 + $0x6a8] sm:$0xff]
    %v2419 = vld [vmem:[%s3 + $0x6b0] sm:$0xff]
    %v2420 = vld [vmem:[%s3 + $0x6b8] sm:$0xff]
    %v2421 = vld [vmem:[%s3 + $0x6c0] sm:$0xff]
    %v2422 = vld [vmem:[%s3 + $0x6c8] sm:$0xff]
    %v2423 = vld [vmem:[%s3 + $0x6d0] sm:$0xff]
    %v2424 = vld [vmem:[%s3 + $0x6d8] sm:$0xff]
    %v2425 = vld [vmem:[%s3 + $0x6e0] sm:$0xff]
    %v2426 = vld [vmem:[%s3 + $0x6e8] sm:$0xff]
    %v2427 = vld [vmem:[%s3 + $0x6f0] sm:$0xff]
    %v2428 = vld [vmem:[%s3 + $0x6f8] sm:$0xff]
    %v2429 = vld [vmem:[%s3 + $0x700] sm:$0xff]
    %v2430 = vld [vmem:[%s3 + $0x708] sm:$0xff]
    %v2431 = vld [vmem:[%s3 + $0x710] sm:$0xff]
    %v2432 = vld [vmem:[%s3 + $0x718] sm:$0xff]
    %v2433 = vld [vmem:[%s3 + $0x720] sm:$0xff]
    %v2434 = vld [vmem:[%s3 + $0x728] sm:$0xff]
    %v2435 = vld [vmem:[%s3 + $0x730] sm:$0xff]
    %v2436 = vld [vmem:[%s3 + $0x738] sm:$0xff]
    %v2437 = vld [vmem:[%s3 + $0x740] sm:$0xff]
    %v2438 = vld [vmem:[%s3 + $0x748] sm:$0xff]
    %v2439 = vld [vmem:[%s3 + $0x750] sm:$0xff]
    %v2440 = vld [vmem:[%s3 + $0x758] sm:$0xff]
    %v2441 = vld [vmem:[%s3 + $0x760] sm:$0xff]
    %v2442 = vld [vmem:[%s3 + $0x768] sm:$0xff]
    %v2443 = vld [vmem:[%s3 + $0x770] sm:$0xff]
    %v2444 = vld [vmem:[%s3 + $0x778] sm:$0xff]
    %v2446 = vrot.slane %v2396, 1
    %v2496 = vunpack.c.l.b16 %v2397
    %v2497 = vunpack.c.h.b16 %v2397
    %v2498 = vunpack.c.l.b16 %v2398
    %v2499 = vunpack.c.h.b16 %v2398
    %v2500 = vunpack.c.l.b16 %v2399
    %v2501 = vunpack.c.h.b16 %v2399
    %v2502 = vunpack.c.l.b16 %v2400
    %v2503 = vunpack.c.h.b16 %v2400
    %v2504 = vunpack.c.l.b16 %v2401
    %v2505 = vunpack.c.h.b16 %v2401
    %v2506 = vunpack.c.l.b16 %v2402
    %v2507 = vunpack.c.h.b16 %v2402
    %v2508 = vunpack.c.l.b16 %v2403
    %v2509 = vunpack.c.h.b16 %v2403
    %v2510 = vunpack.c.l.b16 %v2404
    %v2511 = vunpack.c.h.b16 %v2404
    %v2512 = vunpack.c.l.b16 %v2405
    %v2513 = vunpack.c.h.b16 %v2405
    %v2514 = vunpack.c.l.b16 %v2406
    %v2515 = vunpack.c.h.b16 %v2406
    %v2516 = vunpack.c.l.b16 %v2407
    %v2517 = vunpack.c.h.b16 %v2407
    %v2518 = vunpack.c.l.b16 %v2408
    %v2519 = vunpack.c.h.b16 %v2408
    %v2520 = vunpack.c.l.b16 %v2409
    %v2521 = vunpack.c.h.b16 %v2409
    %v2522 = vunpack.c.l.b16 %v2410
    %v2523 = vunpack.c.h.b16 %v2410
    %v2524 = vunpack.c.l.b16 %v2411
    %v2525 = vunpack.c.h.b16 %v2411
    %v2526 = vunpack.c.l.b16 %v2412
    %v2527 = vunpack.c.h.b16 %v2412
    %v2528 = vunpack.c.l.b16 %v2413
    %v2529 = vunpack.c.h.b16 %v2413
    %v2530 = vunpack.c.l.b16 %v2414
    %v2531 = vunpack.c.h.b16 %v2414
    %v2532 = vunpack.c.l.b16 %v2415
    %v2533 = vunpack.c.h.b16 %v2415
    %v2534 = vunpack.c.l.b16 %v2416
    %v2535 = vunpack.c.h.b16 %v2416
    %v2536 = vunpack.c.l.b16 %v2417
    %v2537 = vunpack.c.h.b16 %v2417
    %v2538 = vunpack.c.l.b16 %v2418
    %v2539 = vunpack.c.h.b16 %v2418
    %v2540 = vunpack.c.l.b16 %v2419
    %v2541 = vunpack.c.h.b16 %v2419
    %v2542 = vunpack.c.l.b16 %v2420
    %v2543 = vunpack.c.h.b16 %v2420
    %v2544 = vunpack.c.l.b16 %v2421
    %v2545 = vunpack.c.h.b16 %v2421
    %v2546 = vunpack.c.l.b16 %v2422
    %v2547 = vunpack.c.h.b16 %v2422
    %v2548 = vunpack.c.l.b16 %v2423
    %v2549 = vunpack.c.h.b16 %v2423
    %v2550 = vunpack.c.l.b16 %v2424
    %v2551 = vunpack.c.h.b16 %v2424
    %v2552 = vunpack.c.l.b16 %v2425
    %v2553 = vunpack.c.h.b16 %v2425
    %v2554 = vunpack.c.l.b16 %v2426
    %v2555 = vunpack.c.h.b16 %v2426
    %v2556 = vunpack.c.l.b16 %v2427
    %v2557 = vunpack.c.h.b16 %v2427
    %v2558 = vunpack.c.l.b16 %v2428
    %v2559 = vunpack.c.h.b16 %v2428
    %v2560 = vunpack.c.l.b16 %v2429
    %v2561 = vunpack.c.h.b16 %v2429
    %v2562 = vunpack.c.l.b16 %v2430
    %v2563 = vunpack.c.h.b16 %v2430
    %v2564 = vunpack.c.l.b16 %v2431
    %v2565 = vunpack.c.h.b16 %v2431
    %v2566 = vunpack.c.l.b16 %v2432
    %v2567 = vunpack.c.h.b16 %v2432
    %v2568 = vunpack.c.l.b16 %v2433
    %v2569 = vunpack.c.h.b16 %v2433
    %v2570 = vunpack.c.l.b16 %v2434
    %v2571 = vunpack.c.h.b16 %v2434
    %v2572 = vunpack.c.l.b16 %v2435
    %v2573 = vunpack.c.h.b16 %v2435
    %v2574 = vunpack.c.l.b16 %v2436
    %v2575 = vunpack.c.h.b16 %v2436
    %v2576 = vunpack.c.l.b16 %v2437
    %v2577 = vunpack.c.h.b16 %v2437
    %v2578 = vunpack.c.l.b16 %v2438
    %v2579 = vunpack.c.h.b16 %v2438
    %v2580 = vunpack.c.l.b16 %v2439
    %v2581 = vunpack.c.h.b16 %v2439
    %v2582 = vunpack.c.l.b16 %v2440
    %v2583 = vunpack.c.h.b16 %v2440
    %v2584 = vunpack.c.l.b16 %v2441
    %v2585 = vunpack.c.h.b16 %v2441
    %v2586 = vunpack.c.l.b16 %v2442
    %v2587 = vunpack.c.h.b16 %v2442
    %v2588 = vunpack.c.l.b16 %v2443
    %v2589 = vunpack.c.h.b16 %v2443
    %v2590 = vunpack.c.l.b16 %v2444
    %v2591 = vunpack.c.h.b16 %v2444
    %v2592 = vpack.c.b16 %v2502, %v2496
    %v2593 = vpack.c.b16 %v2503, %v2497
    %v2594 = vpack.c.b16 %v2504, %v2498
    %v2595 = vpack.c.b16 %v2505, %v2499
    %v2596 = vpack.c.b16 %v2506, %v2500
    %v2597 = vpack.c.b16 %v2507, %v2501
    %v2598 = vpack.c.b16 %v2514, %v2508
    %v2599 = vpack.c.b16 %v2515, %v2509
    %v2600 = vpack.c.b16 %v2516, %v2510
    %v2601 = vpack.c.b16 %v2517, %v2511
    %v2602 = vpack.c.b16 %v2518, %v2512
    %v2603 = vpack.c.b16 %v2519, %v2513
    %v2604 = vpack.c.b16 %v2526, %v2520
    %v2605 = vpack.c.b16 %v2527, %v2521
    %v2606 = vpack.c.b16 %v2528, %v2522
    %v2607 = vpack.c.b16 %v2529, %v2523
    %v2608 = vpack.c.b16 %v2530, %v2524
    %v2609 = vpack.c.b16 %v2531, %v2525
    %v2610 = vpack.c.b16 %v2538, %v2532
    %v2611 = vpack.c.b16 %v2539, %v2533
    %v2612 = vpack.c.b16 %v2540, %v2534
    %v2613 = vpack.c.b16 %v2541, %v2535
    %v2614 = vpack.c.b16 %v2542, %v2536
    %v2615 = vpack.c.b16 %v2543, %v2537
    %v2616 = vpack.c.b16 %v2550, %v2544
    %v2617 = vpack.c.b16 %v2551, %v2545
    %v2618 = vpack.c.b16 %v2552, %v2546
    %v2619 = vpack.c.b16 %v2553, %v2547
    %v2620 = vpack.c.b16 %v2554, %v2548
    %v2621 = vpack.c.b16 %v2555, %v2549
    %v2622 = vpack.c.b16 %v2562, %v2556
    %v2623 = vpack.c.b16 %v2563, %v2557
    %v2624 = vpack.c.b16 %v2564, %v2558
    %v2625 = vpack.c.b16 %v2565, %v2559
    %v2626 = vpack.c.b16 %v2566, %v2560
    %v2627 = vpack.c.b16 %v2567, %v2561
    %v2628 = vpack.c.b16 %v2574, %v2568
    %v2629 = vpack.c.b16 %v2575, %v2569
    %v2630 = vpack.c.b16 %v2576, %v2570
    %v2631 = vpack.c.b16 %v2577, %v2571
    %v2632 = vpack.c.b16 %v2578, %v2572
    %v2633 = vpack.c.b16 %v2579, %v2573
    %v2634 = vpack.c.b16 %v2586, %v2580
    %v2635 = vpack.c.b16 %v2587, %v2581
    %v2636 = vpack.c.b16 %v2588, %v2582
    %v2637 = vpack.c.b16 %v2589, %v2583
    %v2638 = vpack.c.b16 %v2590, %v2584
    %v2639 = vpack.c.b16 %v2591, %v2585
    %2688 = vmatpush.bf16.msra.mxu0 %v2634
    %2689 = vmatpush.bf16.msra.mxu0 %v2628
    %2690 = vmatpush.bf16.msra.mxu0 %v2622
    %2691 = vmatpush.bf16.msra.mxu0 %v2616
    %2692 = vmatpush.bf16.msra.mxu0 %v2610
    %2693 = vmatpush.bf16.msra.mxu0 %v2604
    %2694 = vmatpush.bf16.msra.mxu0 %v2598
    %2695 = vmatpush.bf16.msra.mxu0 %v2592
    %2696 = vmatmul.bf16.gmra.mxu0 %v2446
    %v2697 = vpop.f32.mrf.mxu0
    %v2698 = vadd.f32 0.0, %v2697
    %v2699 = vpop.f32.mrf.mxu0
    %2700 = vdwg.mxu0
    %2701 = vmatpush.bf16.msra.mxu0 %v2635
    %2702 = vmatpush.bf16.msra.mxu0 %v2629
    %2703 = vmatpush.bf16.msra.mxu0 %v2623
    %2704 = vmatpush.bf16.msra.mxu0 %v2617
    %2705 = vmatpush.bf16.msra.mxu0 %v2611
    %2706 = vmatpush.bf16.msra.mxu0 %v2605
    %2707 = vmatpush.bf16.msra.mxu0 %v2599
    %2708 = vmatpush.bf16.msra.mxu0 %v2593
    %2709 = vmatmul.bf16.gmra.mxu0 %v2446
    %v2710 = vpop.f32.mrf.mxu0
    %v2711 = vadd.f32 0.0, %v2710
    %v2712 = vpop.f32.mrf.mxu0
    %2713 = vdwg.mxu0
    %2714 = vmatpush.bf16.msra.mxu0 %v2636
    %2715 = vmatpush.bf16.msra.mxu0 %v2630
    %2716 = vmatpush.bf16.msra.mxu0 %v2624
    %2717 = vmatpush.bf16.msra.mxu0 %v2618
    %2718 = vmatpush.bf16.msra.mxu0 %v2612
    %2719 = vmatpush.bf16.msra.mxu0 %v2606
    %2720 = vmatpush.bf16.msra.mxu0 %v2600
    %2721 = vmatpush.bf16.msra.mxu0 %v2594
    %2722 = vmatmul.bf16.gmra.mxu0 %v2446
    %v2723 = vpop.f32.mrf.mxu0
    %v2724 = vadd.f32 0.0, %v2723
    %v2725 = vpop.f32.mrf.mxu0
    %2726 = vdwg.mxu0
    %2727 = vmatpush.bf16.msra.mxu0 %v2637
    %2728 = vmatpush.bf16.msra.mxu0 %v2631
    %2729 = vmatpush.bf16.msra.mxu0 %v2625
    %2730 = vmatpush.bf16.msra.mxu0 %v2619
    %2731 = vmatpush.bf16.msra.mxu0 %v2613
    %2732 = vmatpush.bf16.msra.mxu0 %v2607
    %2733 = vmatpush.bf16.msra.mxu0 %v2601
    %2734 = vmatpush.bf16.msra.mxu0 %v2595
    %2735 = vmatmul.bf16.gmra.mxu0 %v2446
    %v2736 = vpop.f32.mrf.mxu0
    %v2737 = vadd.f32 0.0, %v2736
    %v2738 = vpop.f32.mrf.mxu0
    %2739 = vdwg.mxu0
    %2740 = vmatpush.bf16.msra.mxu0 %v2638
    %2741 = vmatpush.bf16.msra.mxu0 %v2632
    %2742 = vmatpush.bf16.msra.mxu0 %v2626
    %2743 = vmatpush.bf16.msra.mxu0 %v2620
    %2744 = vmatpush.bf16.msra.mxu0 %v2614
    %2745 = vmatpush.bf16.msra.mxu0 %v2608
    %2746 = vmatpush.bf16.msra.mxu0 %v2602
    %2747 = vmatpush.bf16.msra.mxu0 %v2596
    %2748 = vmatmul.bf16.gmra.mxu0 %v2446
    %v2749 = vpop.f32.mrf.mxu0
    %v2750 = vadd.f32 0.0, %v2749
    %v2751 = vpop.f32.mrf.mxu0
    %2752 = vdwg.mxu0
    %2753 = vmatpush.bf16.msra.mxu0 %v2639
    %2754 = vmatpush.bf16.msra.mxu0 %v2633
    %2755 = vmatpush.bf16.msra.mxu0 %v2627
    %2756 = vmatpush.bf16.msra.mxu0 %v2621
    %2757 = vmatpush.bf16.msra.mxu0 %v2615
    %2758 = vmatpush.bf16.msra.mxu0 %v2609
    %2759 = vmatpush.bf16.msra.mxu0 %v2603
    %2760 = vmatpush.bf16.msra.mxu0 %v2597
    %2761 = vmatmul.bf16.gmra.mxu0 %v2446
    %v2762 = vpop.f32.mrf.mxu0
    %v2763 = vadd.f32 0.0, %v2762
    %v2764 = vpop.f32.mrf.mxu0
    %2765 = vdwg.mxu0
    %v2766 = vadd.f32 %v2390, %v2698
    %v2767 = vadd.f32 %v2391, %v2711
    %v2768 = vadd.f32 %v2392, %v2724
    %v2769 = vadd.f32 %v2393, %v2737
    %v2770 = vadd.f32 %v2394, %v2750
    %v2771 = vadd.f32 %v2395, %v2763
    %v2772 = vld [vmem:[%s3 + $0x780] sm:$0xff]
    %v2773 = vld [vmem:[%s3 + $0x788] sm:$0xff]
    %v2774 = vld [vmem:[%s3 + $0x790] sm:$0xff]
    %v2775 = vld [vmem:[%s3 + $0x798] sm:$0xff]
    %v2776 = vld [vmem:[%s3 + $0x7a0] sm:$0xff]
    %v2777 = vld [vmem:[%s3 + $0x7a8] sm:$0xff]
    %v2778 = vld [vmem:[%s3 + $0x7b0] sm:$0xff]
    %v2779 = vld [vmem:[%s3 + $0x7b8] sm:$0xff]
    %v2780 = vld [vmem:[%s3 + $0x7c0] sm:$0xff]
    %v2781 = vld [vmem:[%s3 + $0x7c8] sm:$0xff]
    %v2782 = vld [vmem:[%s3 + $0x7d0] sm:$0xff]
    %v2783 = vld [vmem:[%s3 + $0x7d8] sm:$0xff]
    %v2784 = vld [vmem:[%s3 + $0x7e0] sm:$0xff]
    %v2785 = vld [vmem:[%s3 + $0x7e8] sm:$0xff]
    %v2786 = vld [vmem:[%s3 + $0x7f0] sm:$0xff]
    %v2787 = vld [vmem:[%s3 + $0x7f8] sm:$0xff]
    %v2788 = vld [vmem:[%s3 + $0x800] sm:$0xff]
    %v2789 = vld [vmem:[%s3 + $0x808] sm:$0xff]
    %v2790 = vld [vmem:[%s3 + $0x810] sm:$0xff]
    %v2791 = vld [vmem:[%s3 + $0x818] sm:$0xff]
    %v2792 = vld [vmem:[%s3 + $0x820] sm:$0xff]
    %v2793 = vld [vmem:[%s3 + $0x828] sm:$0xff]
    %v2794 = vld [vmem:[%s3 + $0x830] sm:$0xff]
    %v2795 = vld [vmem:[%s3 + $0x838] sm:$0xff]
    %v2796 = vld [vmem:[%s3 + $0x840] sm:$0xff]
    %v2797 = vld [vmem:[%s3 + $0x848] sm:$0xff]
    %v2798 = vld [vmem:[%s3 + $0x850] sm:$0xff]
    %v2799 = vld [vmem:[%s3 + $0x858] sm:$0xff]
    %v2800 = vld [vmem:[%s3 + $0x860] sm:$0xff]
    %v2801 = vld [vmem:[%s3 + $0x868] sm:$0xff]
    %v2802 = vld [vmem:[%s3 + $0x870] sm:$0xff]
    %v2803 = vld [vmem:[%s3 + $0x878] sm:$0xff]
    %v2804 = vld [vmem:[%s3 + $0x880] sm:$0xff]
    %v2805 = vld [vmem:[%s3 + $0x888] sm:$0xff]
    %v2806 = vld [vmem:[%s3 + $0x890] sm:$0xff]
    %v2807 = vld [vmem:[%s3 + $0x898] sm:$0xff]
    %v2808 = vld [vmem:[%s3 + $0x8a0] sm:$0xff]
    %v2809 = vld [vmem:[%s3 + $0x8a8] sm:$0xff]
    %v2810 = vld [vmem:[%s3 + $0x8b0] sm:$0xff]
    %v2811 = vld [vmem:[%s3 + $0x8b8] sm:$0xff]
    %v2812 = vld [vmem:[%s3 + $0x8c0] sm:$0xff]
    %v2813 = vld [vmem:[%s3 + $0x8c8] sm:$0xff]
    %v2814 = vld [vmem:[%s3 + $0x8d0] sm:$0xff]
    %v2815 = vld [vmem:[%s3 + $0x8d8] sm:$0xff]
    %v2816 = vld [vmem:[%s3 + $0x8e0] sm:$0xff]
    %v2817 = vld [vmem:[%s3 + $0x8e8] sm:$0xff]
    %v2818 = vld [vmem:[%s3 + $0x8f0] sm:$0xff]
    %v2819 = vld [vmem:[%s3 + $0x8f8] sm:$0xff]
    %v2821 = vrot.slane %v2023, 3
    %v2871 = vunpack.c.l.b16 %v2772
    %v2872 = vunpack.c.h.b16 %v2772
    %v2873 = vunpack.c.l.b16 %v2773
    %v2874 = vunpack.c.h.b16 %v2773
    %v2875 = vunpack.c.l.b16 %v2774
    %v2876 = vunpack.c.h.b16 %v2774
    %v2877 = vunpack.c.l.b16 %v2775
    %v2878 = vunpack.c.h.b16 %v2775
    %v2879 = vunpack.c.l.b16 %v2776
    %v2880 = vunpack.c.h.b16 %v2776
    %v2881 = vunpack.c.l.b16 %v2777
    %v2882 = vunpack.c.h.b16 %v2777
    %v2883 = vunpack.c.l.b16 %v2778
    %v2884 = vunpack.c.h.b16 %v2778
    %v2885 = vunpack.c.l.b16 %v2779
    %v2886 = vunpack.c.h.b16 %v2779
    %v2887 = vunpack.c.l.b16 %v2780
    %v2888 = vunpack.c.h.b16 %v2780
    %v2889 = vunpack.c.l.b16 %v2781
    %v2890 = vunpack.c.h.b16 %v2781
    %v2891 = vunpack.c.l.b16 %v2782
    %v2892 = vunpack.c.h.b16 %v2782
    %v2893 = vunpack.c.l.b16 %v2783
    %v2894 = vunpack.c.h.b16 %v2783
    %v2895 = vunpack.c.l.b16 %v2784
    %v2896 = vunpack.c.h.b16 %v2784
    %v2897 = vunpack.c.l.b16 %v2785
    %v2898 = vunpack.c.h.b16 %v2785
    %v2899 = vunpack.c.l.b16 %v2786
    %v2900 = vunpack.c.h.b16 %v2786
    %v2901 = vunpack.c.l.b16 %v2787
    %v2902 = vunpack.c.h.b16 %v2787
    %v2903 = vunpack.c.l.b16 %v2788
    %v2904 = vunpack.c.h.b16 %v2788
    %v2905 = vunpack.c.l.b16 %v2789
    %v2906 = vunpack.c.h.b16 %v2789
    %v2907 = vunpack.c.l.b16 %v2790
    %v2908 = vunpack.c.h.b16 %v2790
    %v2909 = vunpack.c.l.b16 %v2791
    %v2910 = vunpack.c.h.b16 %v2791
    %v2911 = vunpack.c.l.b16 %v2792
    %v2912 = vunpack.c.h.b16 %v2792
    %v2913 = vunpack.c.l.b16 %v2793
    %v2914 = vunpack.c.h.b16 %v2793
    %v2915 = vunpack.c.l.b16 %v2794
    %v2916 = vunpack.c.h.b16 %v2794
    %v2917 = vunpack.c.l.b16 %v2795
    %v2918 = vunpack.c.h.b16 %v2795
    %v2919 = vunpack.c.l.b16 %v2796
    %v2920 = vunpack.c.h.b16 %v2796
    %v2921 = vunpack.c.l.b16 %v2797
    %v2922 = vunpack.c.h.b16 %v2797
    %v2923 = vunpack.c.l.b16 %v2798
    %v2924 = vunpack.c.h.b16 %v2798
    %v2925 = vunpack.c.l.b16 %v2799
    %v2926 = vunpack.c.h.b16 %v2799
    %v2927 = vunpack.c.l.b16 %v2800
    %v2928 = vunpack.c.h.b16 %v2800
    %v2929 = vunpack.c.l.b16 %v2801
    %v2930 = vunpack.c.h.b16 %v2801
    %v2931 = vunpack.c.l.b16 %v2802
    %v2932 = vunpack.c.h.b16 %v2802
    %v2933 = vunpack.c.l.b16 %v2803
    %v2934 = vunpack.c.h.b16 %v2803
    %v2935 = vunpack.c.l.b16 %v2804
    %v2936 = vunpack.c.h.b16 %v2804
    %v2937 = vunpack.c.l.b16 %v2805
    %v2938 = vunpack.c.h.b16 %v2805
    %v2939 = vunpack.c.l.b16 %v2806
    %v2940 = vunpack.c.h.b16 %v2806
    %v2941 = vunpack.c.l.b16 %v2807
    %v2942 = vunpack.c.h.b16 %v2807
    %v2943 = vunpack.c.l.b16 %v2808
    %v2944 = vunpack.c.h.b16 %v2808
    %v2945 = vunpack.c.l.b16 %v2809
    %v2946 = vunpack.c.h.b16 %v2809
    %v2947 = vunpack.c.l.b16 %v2810
    %v2948 = vunpack.c.h.b16 %v2810
    %v2949 = vunpack.c.l.b16 %v2811
    %v2950 = vunpack.c.h.b16 %v2811
    %v2951 = vunpack.c.l.b16 %v2812
    %v2952 = vunpack.c.h.b16 %v2812
    %v2953 = vunpack.c.l.b16 %v2813
    %v2954 = vunpack.c.h.b16 %v2813
    %v2955 = vunpack.c.l.b16 %v2814
    %v2956 = vunpack.c.h.b16 %v2814
    %v2957 = vunpack.c.l.b16 %v2815
    %v2958 = vunpack.c.h.b16 %v2815
    %v2959 = vunpack.c.l.b16 %v2816
    %v2960 = vunpack.c.h.b16 %v2816
    %v2961 = vunpack.c.l.b16 %v2817
    %v2962 = vunpack.c.h.b16 %v2817
    %v2963 = vunpack.c.l.b16 %v2818
    %v2964 = vunpack.c.h.b16 %v2818
    %v2965 = vunpack.c.l.b16 %v2819
    %v2966 = vunpack.c.h.b16 %v2819
    %v2967 = vpack.c.b16 %v2877, %v2871
    %v2968 = vpack.c.b16 %v2878, %v2872
    %v2969 = vpack.c.b16 %v2879, %v2873
    %v2970 = vpack.c.b16 %v2880, %v2874
    %v2971 = vpack.c.b16 %v2881, %v2875
    %v2972 = vpack.c.b16 %v2882, %v2876
    %v2973 = vpack.c.b16 %v2889, %v2883
    %v2974 = vpack.c.b16 %v2890, %v2884
    %v2975 = vpack.c.b16 %v2891, %v2885
    %v2976 = vpack.c.b16 %v2892, %v2886
    %v2977 = vpack.c.b16 %v2893, %v2887
    %v2978 = vpack.c.b16 %v2894, %v2888
    %v2979 = vpack.c.b16 %v2901, %v2895
    %v2980 = vpack.c.b16 %v2902, %v2896
    %v2981 = vpack.c.b16 %v2903, %v2897
    %v2982 = vpack.c.b16 %v2904, %v2898
    %v2983 = vpack.c.b16 %v2905, %v2899
    %v2984 = vpack.c.b16 %v2906, %v2900
    %v2985 = vpack.c.b16 %v2913, %v2907
    %v2986 = vpack.c.b16 %v2914, %v2908
    %v2987 = vpack.c.b16 %v2915, %v2909
    %v2988 = vpack.c.b16 %v2916, %v2910
    %v2989 = vpack.c.b16 %v2917, %v2911
    %v2990 = vpack.c.b16 %v2918, %v2912
    %v2991 = vpack.c.b16 %v2925, %v2919
    %v2992 = vpack.c.b16 %v2926, %v2920
    %v2993 = vpack.c.b16 %v2927, %v2921
    %v2994 = vpack.c.b16 %v2928, %v2922
    %v2995 = vpack.c.b16 %v2929, %v2923
    %v2996 = vpack.c.b16 %v2930, %v2924
    %v2997 = vpack.c.b16 %v2937, %v2931
    %v2998 = vpack.c.b16 %v2938, %v2932
    %v2999 = vpack.c.b16 %v2939, %v2933
    %v3000 = vpack.c.b16 %v2940, %v2934
    %v3001 = vpack.c.b16 %v2941, %v2935
    %v3002 = vpack.c.b16 %v2942, %v2936
    %v3003 = vpack.c.b16 %v2949, %v2943
    %v3004 = vpack.c.b16 %v2950, %v2944
    %v3005 = vpack.c.b16 %v2951, %v2945
    %v3006 = vpack.c.b16 %v2952, %v2946
    %v3007 = vpack.c.b16 %v2953, %v2947
    %v3008 = vpack.c.b16 %v2954, %v2948
    %v3009 = vpack.c.b16 %v2961, %v2955
    %v3010 = vpack.c.b16 %v2962, %v2956
    %v3011 = vpack.c.b16 %v2963, %v2957
    %v3012 = vpack.c.b16 %v2964, %v2958
    %v3013 = vpack.c.b16 %v2965, %v2959
    %v3014 = vpack.c.b16 %v2966, %v2960
    %3063 = vmatpush.bf16.msra.mxu0 %v3009
    %3064 = vmatpush.bf16.msra.mxu0 %v3003
    %3065 = vmatpush.bf16.msra.mxu0 %v2997
    %3066 = vmatpush.bf16.msra.mxu0 %v2991
    %3067 = vmatpush.bf16.msra.mxu0 %v2985
    %3068 = vmatpush.bf16.msra.mxu0 %v2979
    %3069 = vmatpush.bf16.msra.mxu0 %v2973
    %3070 = vmatpush.bf16.msra.mxu0 %v2967
    %3071 = vmatmul.bf16.gmra.mxu0 %v2821
    %v3072 = vpop.f32.mrf.mxu0
    %v3073 = vadd.f32 0.0, %v3072
    %v3074 = vpop.f32.mrf.mxu0
    %3075 = vdwg.mxu0
    %3076 = vmatpush.bf16.msra.mxu0 %v3010
    %3077 = vmatpush.bf16.msra.mxu0 %v3004
    %3078 = vmatpush.bf16.msra.mxu0 %v2998
    %3079 = vmatpush.bf16.msra.mxu0 %v2992
    %3080 = vmatpush.bf16.msra.mxu0 %v2986
    %3081 = vmatpush.bf16.msra.mxu0 %v2980
    %3082 = vmatpush.bf16.msra.mxu0 %v2974
    %3083 = vmatpush.bf16.msra.mxu0 %v2968
    %3084 = vmatmul.bf16.gmra.mxu0 %v2821
    %v3085 = vpop.f32.mrf.mxu0
    %v3086 = vadd.f32 0.0, %v3085
    %v3087 = vpop.f32.mrf.mxu0
    %3088 = vdwg.mxu0
    %3089 = vmatpush.bf16.msra.mxu0 %v3011
    %3090 = vmatpush.bf16.msra.mxu0 %v3005
    %3091 = vmatpush.bf16.msra.mxu0 %v2999
    %3092 = vmatpush.bf16.msra.mxu0 %v2993
    %3093 = vmatpush.bf16.msra.mxu0 %v2987
    %3094 = vmatpush.bf16.msra.mxu0 %v2981
    %3095 = vmatpush.bf16.msra.mxu0 %v2975
    %3096 = vmatpush.bf16.msra.mxu0 %v2969
    %3097 = vmatmul.bf16.gmra.mxu0 %v2821
    %v3098 = vpop.f32.mrf.mxu0
    %v3099 = vadd.f32 0.0, %v3098
    %v3100 = vpop.f32.mrf.mxu0
    %3101 = vdwg.mxu0
    %3102 = vmatpush.bf16.msra.mxu0 %v3012
    %3103 = vmatpush.bf16.msra.mxu0 %v3006
    %3104 = vmatpush.bf16.msra.mxu0 %v3000
    %3105 = vmatpush.bf16.msra.mxu0 %v2994
    %3106 = vmatpush.bf16.msra.mxu0 %v2988
    %3107 = vmatpush.bf16.msra.mxu0 %v2982
    %3108 = vmatpush.bf16.msra.mxu0 %v2976
    %3109 = vmatpush.bf16.msra.mxu0 %v2970
    %3110 = vmatmul.bf16.gmra.mxu0 %v2821
    %v3111 = vpop.f32.mrf.mxu0
    %v3112 = vadd.f32 0.0, %v3111
    %v3113 = vpop.f32.mrf.mxu0
    %3114 = vdwg.mxu0
    %3115 = vmatpush.bf16.msra.mxu0 %v3013
    %3116 = vmatpush.bf16.msra.mxu0 %v3007
    %3117 = vmatpush.bf16.msra.mxu0 %v3001
    %3118 = vmatpush.bf16.msra.mxu0 %v2995
    %3119 = vmatpush.bf16.msra.mxu0 %v2989
    %3120 = vmatpush.bf16.msra.mxu0 %v2983
    %3121 = vmatpush.bf16.msra.mxu0 %v2977
    %3122 = vmatpush.bf16.msra.mxu0 %v2971
    %3123 = vmatmul.bf16.gmra.mxu0 %v2821
    %v3124 = vpop.f32.mrf.mxu0
    %v3125 = vadd.f32 0.0, %v3124
    %v3126 = vpop.f32.mrf.mxu0
    %3127 = vdwg.mxu0
    %3128 = vmatpush.bf16.msra.mxu0 %v3014
    %3129 = vmatpush.bf16.msra.mxu0 %v3008
    %3130 = vmatpush.bf16.msra.mxu0 %v3002
    %3131 = vmatpush.bf16.msra.mxu0 %v2996
    %3132 = vmatpush.bf16.msra.mxu0 %v2990
    %3133 = vmatpush.bf16.msra.mxu0 %v2984
    %3134 = vmatpush.bf16.msra.mxu0 %v2978
    %3135 = vmatpush.bf16.msra.mxu0 %v2972
    %3136 = vmatmul.bf16.gmra.mxu0 %v2821
    %v3137 = vpop.f32.mrf.mxu0
    %v3138 = vadd.f32 0.0, %v3137
    %v3139 = vpop.f32.mrf.mxu0
    %3140 = vdwg.mxu0
    %v3141 = vadd.f32 %v2766, %v3073
    %v3142 = vadd.f32 %v2767, %v3086
    %v3143 = vadd.f32 %v2768, %v3099
    %v3144 = vadd.f32 %v2769, %v3112
    %v3145 = vadd.f32 %v2770, %v3125
    %v3146 = vadd.f32 %v2771, %v3138
    %v3147 = vmax.f32 %v3141, 0.0
    %v3148 = vmax.f32 %v3142, 0.0
    %v3149 = vmax.f32 %v3143, 0.0
    %v3150 = vmax.f32 %v3144, 0.0
    %v3151 = vmax.f32 %v3145, 0.0
    %v3152 = vmax.f32 %v3146, 0.0
    %v3153 = vpack.c.bf16 %v3147, %v3147
    %v3154 = vpack.c.bf16 %v3148, %v3148
    %v3155 = vpack.c.bf16 %v3149, %v3149
    %v3156 = vpack.c.bf16 %v3150, %v3150
    %v3157 = vpack.c.bf16 %v3151, %v3151
    %v3158 = vpack.c.bf16 %v3152, %v3152
    %v3159 = vld [vmem:[%s5] sm:$0xff]
    %v3160 = vld [vmem:[%s5 + $0x8] sm:$0xff]
    %v3161 = vld [vmem:[%s5 + $0x10] sm:$0xff]
    %v3162 = vld [vmem:[%s5 + $0x18] sm:$0xff]
    %v3163 = vld [vmem:[%s5 + $0x20] sm:$0xff]
    %v3164 = vld [vmem:[%s5 + $0x28] sm:$0xff]
    %v3165 = vld [vmem:[%s5 + $0x30] sm:$0xff]
    %v3166 = vld [vmem:[%s5 + $0x38] sm:$0xff]
    %v3167 = vld [vmem:[%s5 + $0x40] sm:$0xff]
    %v3168 = vld [vmem:[%s5 + $0x48] sm:$0xff]
    %v3169 = vld [vmem:[%s5 + $0x50] sm:$0xff]
    %v3170 = vld [vmem:[%s5 + $0x58] sm:$0xff]
    %v3171 = vld [vmem:[%s5 + $0x60] sm:$0xff]
    %v3172 = vld [vmem:[%s5 + $0x68] sm:$0xff]
    %v3173 = vld [vmem:[%s5 + $0x70] sm:$0xff]
    %v3174 = vld [vmem:[%s5 + $0x78] sm:$0xff]
    %v3175 = vld [vmem:[%s5 + $0x80] sm:$0xff]
    %v3176 = vld [vmem:[%s5 + $0x88] sm:$0xff]
    %v3177 = vld [vmem:[%s5 + $0x90] sm:$0xff]
    %v3178 = vld [vmem:[%s5 + $0x98] sm:$0xff]
    %v3179 = vld [vmem:[%s5 + $0xa0] sm:$0xff]
    %v3180 = vld [vmem:[%s5 + $0xa8] sm:$0xff]
    %v3181 = vld [vmem:[%s5 + $0xb0] sm:$0xff]
    %v3182 = vld [vmem:[%s5 + $0xb8] sm:$0xff]
    %v3183 = vld [vmem:[%s5 + $0xc0] sm:$0xff]
    %v3184 = vld [vmem:[%s5 + $0xc8] sm:$0xff]
    %v3185 = vld [vmem:[%s5 + $0xd0] sm:$0xff]
    %v3186 = vld [vmem:[%s5 + $0xd8] sm:$0xff]
    %v3187 = vld [vmem:[%s5 + $0xe0] sm:$0xff]
    %v3188 = vld [vmem:[%s5 + $0xe8] sm:$0xff]
    %v3189 = vld [vmem:[%s5 + $0xf0] sm:$0xff]
    %v3190 = vld [vmem:[%s5 + $0xf8] sm:$0xff]
    %v3191 = vld [vmem:[%s5 + $0x100] sm:$0xff]
    %v3192 = vld [vmem:[%s5 + $0x108] sm:$0xff]
    %v3193 = vld [vmem:[%s5 + $0x110] sm:$0xff]
    %v3194 = vld [vmem:[%s5 + $0x118] sm:$0xff]
    %v3195 = vld [vmem:[%s5 + $0x120] sm:$0xff]
    %v3196 = vld [vmem:[%s5 + $0x128] sm:$0xff]
    %v3197 = vld [vmem:[%s5 + $0x130] sm:$0xff]
    %v3198 = vld [vmem:[%s5 + $0x138] sm:$0xff]
    %v3199 = vld [vmem:[%s5 + $0x140] sm:$0xff]
    %v3200 = vld [vmem:[%s5 + $0x148] sm:$0xff]
    %v3201 = vld [vmem:[%s5 + $0x150] sm:$0xff]
    %v3202 = vld [vmem:[%s5 + $0x158] sm:$0xff]
    %v3203 = vld [vmem:[%s5 + $0x160] sm:$0xff]
    %v3204 = vld [vmem:[%s5 + $0x168] sm:$0xff]
    %v3205 = vld [vmem:[%s5 + $0x170] sm:$0xff]
    %v3206 = vld [vmem:[%s5 + $0x178] sm:$0xff]
    %v3207 = vld [vmem:[%s5 + $0x180] sm:$0xff]
    %v3208 = vld [vmem:[%s5 + $0x188] sm:$0xff]
    %v3209 = vld [vmem:[%s5 + $0x190] sm:$0xff]
    %v3210 = vld [vmem:[%s5 + $0x198] sm:$0xff]
    %v3211 = vld [vmem:[%s5 + $0x1a0] sm:$0xff]
    %v3212 = vld [vmem:[%s5 + $0x1a8] sm:$0xff]
    %v3213 = vld [vmem:[%s5 + $0x1b0] sm:$0xff]
    %v3214 = vld [vmem:[%s5 + $0x1b8] sm:$0xff]
    %v3215 = vld [vmem:[%s5 + $0x1c0] sm:$0xff]
    %v3216 = vld [vmem:[%s5 + $0x1c8] sm:$0xff]
    %v3217 = vld [vmem:[%s5 + $0x1d0] sm:$0xff]
    %v3218 = vld [vmem:[%s5 + $0x1d8] sm:$0xff]
    %v3219 = vld [vmem:[%s5 + $0x1e0] sm:$0xff]
    %v3220 = vld [vmem:[%s5 + $0x1e8] sm:$0xff]
    %v3221 = vld [vmem:[%s5 + $0x1f0] sm:$0xff]
    %v3222 = vld [vmem:[%s5 + $0x1f8] sm:$0xff]
    %v3223 = vld [vmem:[%s5 + $0x200] sm:$0xff]
    %v3224 = vld [vmem:[%s5 + $0x208] sm:$0xff]
    %v3225 = vld [vmem:[%s5 + $0x210] sm:$0xff]
    %v3226 = vld [vmem:[%s5 + $0x218] sm:$0xff]
    %v3227 = vld [vmem:[%s5 + $0x220] sm:$0xff]
    %v3228 = vld [vmem:[%s5 + $0x228] sm:$0xff]
    %v3229 = vld [vmem:[%s5 + $0x230] sm:$0xff]
    %v3230 = vld [vmem:[%s5 + $0x238] sm:$0xff]
    %v3231 = vld [vmem:[%s5 + $0x240] sm:$0xff]
    %v3232 = vld [vmem:[%s5 + $0x248] sm:$0xff]
    %v3233 = vld [vmem:[%s5 + $0x250] sm:$0xff]
    %v3234 = vld [vmem:[%s5 + $0x258] sm:$0xff]
    %v3235 = vld [vmem:[%s5 + $0x260] sm:$0xff]
    %v3236 = vld [vmem:[%s5 + $0x268] sm:$0xff]
    %v3237 = vld [vmem:[%s5 + $0x270] sm:$0xff]
    %v3238 = vld [vmem:[%s5 + $0x278] sm:$0xff]
    %v3239 = vld [vmem:[%s5 + $0x280] sm:$0xff]
    %v3240 = vld [vmem:[%s5 + $0x288] sm:$0xff]
    %v3241 = vld [vmem:[%s5 + $0x290] sm:$0xff]
    %v3242 = vld [vmem:[%s5 + $0x298] sm:$0xff]
    %v3243 = vld [vmem:[%s5 + $0x2a0] sm:$0xff]
    %v3244 = vld [vmem:[%s5 + $0x2a8] sm:$0xff]
    %v3245 = vld [vmem:[%s5 + $0x2b0] sm:$0xff]
    %v3246 = vld [vmem:[%s5 + $0x2b8] sm:$0xff]
    %v3247 = vld [vmem:[%s5 + $0x2c0] sm:$0xff]
    %v3248 = vld [vmem:[%s5 + $0x2c8] sm:$0xff]
    %v3249 = vld [vmem:[%s5 + $0x2d0] sm:$0xff]
    %v3250 = vld [vmem:[%s5 + $0x2d8] sm:$0xff]
    %v3251 = vld [vmem:[%s5 + $0x2e0] sm:$0xff]
    %v3252 = vld [vmem:[%s5 + $0x2e8] sm:$0xff]
    %v3253 = vld [vmem:[%s5 + $0x2f0] sm:$0xff]
    %v3254 = vld [vmem:[%s5 + $0x2f8] sm:$0xff]
    %v3255 = vld [vmem:[%s5 + $0x300] sm:$0xff]
    %v3256 = vld [vmem:[%s5 + $0x308] sm:$0xff]
    %v3257 = vld [vmem:[%s5 + $0x310] sm:$0xff]
    %v3258 = vld [vmem:[%s5 + $0x318] sm:$0xff]
    %v3259 = vld [vmem:[%s5 + $0x320] sm:$0xff]
    %v3260 = vld [vmem:[%s5 + $0x328] sm:$0xff]
    %v3261 = vld [vmem:[%s5 + $0x330] sm:$0xff]
    %v3262 = vld [vmem:[%s5 + $0x338] sm:$0xff]
    %v3263 = vld [vmem:[%s5 + $0x340] sm:$0xff]
    %v3264 = vld [vmem:[%s5 + $0x348] sm:$0xff]
    %v3265 = vld [vmem:[%s5 + $0x350] sm:$0xff]
    %v3266 = vld [vmem:[%s5 + $0x358] sm:$0xff]
    %v3267 = vld [vmem:[%s5 + $0x360] sm:$0xff]
    %v3268 = vld [vmem:[%s5 + $0x368] sm:$0xff]
    %v3269 = vld [vmem:[%s5 + $0x370] sm:$0xff]
    %v3270 = vld [vmem:[%s5 + $0x378] sm:$0xff]
    %v3271 = vld [vmem:[%s5 + $0x380] sm:$0xff]
    %v3272 = vld [vmem:[%s5 + $0x388] sm:$0xff]
    %v3273 = vld [vmem:[%s5 + $0x390] sm:$0xff]
    %v3274 = vld [vmem:[%s5 + $0x398] sm:$0xff]
    %v3275 = vld [vmem:[%s5 + $0x3a0] sm:$0xff]
    %v3276 = vld [vmem:[%s5 + $0x3a8] sm:$0xff]
    %v3277 = vld [vmem:[%s5 + $0x3b0] sm:$0xff]
    %v3278 = vld [vmem:[%s5 + $0x3b8] sm:$0xff]
    %v3279 = vld [vmem:[%s5 + $0x3c0] sm:$0xff]
    %v3280 = vld [vmem:[%s5 + $0x3c8] sm:$0xff]
    %v3281 = vld [vmem:[%s5 + $0x3d0] sm:$0xff]
    %v3282 = vld [vmem:[%s5 + $0x3d8] sm:$0xff]
    %v3283 = vld [vmem:[%s5 + $0x3e0] sm:$0xff]
    %v3284 = vld [vmem:[%s5 + $0x3e8] sm:$0xff]
    %v3285 = vld [vmem:[%s5 + $0x3f0] sm:$0xff]
    %v3286 = vld [vmem:[%s5 + $0x3f8] sm:$0xff]
    %v3287 = vld [vmem:[%s5 + $0x400] sm:$0xff]
    %v3288 = vld [vmem:[%s5 + $0x408] sm:$0xff]
    %v3289 = vld [vmem:[%s5 + $0x410] sm:$0xff]
    %v3290 = vld [vmem:[%s5 + $0x418] sm:$0xff]
    %v3291 = vld [vmem:[%s5 + $0x420] sm:$0xff]
    %v3292 = vld [vmem:[%s5 + $0x428] sm:$0xff]
    %v3293 = vld [vmem:[%s5 + $0x430] sm:$0xff]
    %v3294 = vld [vmem:[%s5 + $0x438] sm:$0xff]
    %v3295 = vld [vmem:[%s5 + $0x440] sm:$0xff]
    %v3296 = vld [vmem:[%s5 + $0x448] sm:$0xff]
    %v3297 = vld [vmem:[%s5 + $0x450] sm:$0xff]
    %v3298 = vld [vmem:[%s5 + $0x458] sm:$0xff]
    %v3299 = vld [vmem:[%s5 + $0x460] sm:$0xff]
    %v3300 = vld [vmem:[%s5 + $0x468] sm:$0xff]
    %v3301 = vld [vmem:[%s5 + $0x470] sm:$0xff]
    %v3302 = vld [vmem:[%s5 + $0x478] sm:$0xff]
    %v3303 = vld [vmem:[%s5 + $0x480] sm:$0xff]
    %v3304 = vld [vmem:[%s5 + $0x488] sm:$0xff]
    %v3305 = vld [vmem:[%s5 + $0x490] sm:$0xff]
    %v3306 = vld [vmem:[%s5 + $0x498] sm:$0xff]
    %v3307 = vld [vmem:[%s5 + $0x4a0] sm:$0xff]
    %v3308 = vld [vmem:[%s5 + $0x4a8] sm:$0xff]
    %v3309 = vld [vmem:[%s5 + $0x4b0] sm:$0xff]
    %v3310 = vld [vmem:[%s5 + $0x4b8] sm:$0xff]
    %v3311 = vld [vmem:[%s5 + $0x4c0] sm:$0xff]
    %v3312 = vld [vmem:[%s5 + $0x4c8] sm:$0xff]
    %v3313 = vld [vmem:[%s5 + $0x4d0] sm:$0xff]
    %v3314 = vld [vmem:[%s5 + $0x4d8] sm:$0xff]
    %v3315 = vld [vmem:[%s5 + $0x4e0] sm:$0xff]
    %v3316 = vld [vmem:[%s5 + $0x4e8] sm:$0xff]
    %v3317 = vld [vmem:[%s5 + $0x4f0] sm:$0xff]
    %v3318 = vld [vmem:[%s5 + $0x4f8] sm:$0xff]
    %v3319 = vld [vmem:[%s5 + $0x500] sm:$0xff]
    %v3320 = vld [vmem:[%s5 + $0x508] sm:$0xff]
    %v3321 = vld [vmem:[%s5 + $0x510] sm:$0xff]
    %v3322 = vld [vmem:[%s5 + $0x518] sm:$0xff]
    %v3323 = vld [vmem:[%s5 + $0x520] sm:$0xff]
    %v3324 = vld [vmem:[%s5 + $0x528] sm:$0xff]
    %v3325 = vld [vmem:[%s5 + $0x530] sm:$0xff]
    %v3326 = vld [vmem:[%s5 + $0x538] sm:$0xff]
    %v3327 = vld [vmem:[%s5 + $0x540] sm:$0xff]
    %v3328 = vld [vmem:[%s5 + $0x548] sm:$0xff]
    %v3329 = vld [vmem:[%s5 + $0x550] sm:$0xff]
    %v3330 = vld [vmem:[%s5 + $0x558] sm:$0xff]
    %v3331 = vld [vmem:[%s5 + $0x560] sm:$0xff]
    %v3332 = vld [vmem:[%s5 + $0x568] sm:$0xff]
    %v3333 = vld [vmem:[%s5 + $0x570] sm:$0xff]
    %v3334 = vld [vmem:[%s5 + $0x578] sm:$0xff]
    %v3335 = vld [vmem:[%s5 + $0x580] sm:$0xff]
    %v3336 = vld [vmem:[%s5 + $0x588] sm:$0xff]
    %v3337 = vld [vmem:[%s5 + $0x590] sm:$0xff]
    %v3338 = vld [vmem:[%s5 + $0x598] sm:$0xff]
    %v3339 = vld [vmem:[%s5 + $0x5a0] sm:$0xff]
    %v3340 = vld [vmem:[%s5 + $0x5a8] sm:$0xff]
    %v3341 = vld [vmem:[%s5 + $0x5b0] sm:$0xff]
    %v3342 = vld [vmem:[%s5 + $0x5b8] sm:$0xff]
    %v3343 = vld [vmem:[%s5 + $0x5c0] sm:$0xff]
    %v3344 = vld [vmem:[%s5 + $0x5c8] sm:$0xff]
    %v3345 = vld [vmem:[%s5 + $0x5d0] sm:$0xff]
    %v3346 = vld [vmem:[%s5 + $0x5d8] sm:$0xff]
    %v3347 = vld [vmem:[%s5 + $0x5e0] sm:$0xff]
    %v3348 = vld [vmem:[%s5 + $0x5e8] sm:$0xff]
    %v3349 = vld [vmem:[%s5 + $0x5f0] sm:$0xff]
    %v3350 = vld [vmem:[%s5 + $0x5f8] sm:$0xff]
    %v3351 = vld [vmem:[%s6] sm:$0xf]
    %v3353 = vperm.slane %v3351, 0
    %v3354 = vperm.slane %v3351, 1
    %v3355 = vperm.slane %v3351, 2
    %v3356 = vperm.slane %v3351, 3
    %v3553 = vunpack.c.l.b16 %v3159
    %v3554 = vunpack.c.h.b16 %v3159
    %v3555 = vunpack.c.l.b16 %v3160
    %v3556 = vunpack.c.h.b16 %v3160
    %v3557 = vunpack.c.l.b16 %v3161
    %v3558 = vunpack.c.h.b16 %v3161
    %v3559 = vunpack.c.l.b16 %v3162
    %v3560 = vunpack.c.h.b16 %v3162
    %v3561 = vunpack.c.l.b16 %v3163
    %v3562 = vunpack.c.h.b16 %v3163
    %v3563 = vunpack.c.l.b16 %v3164
    %v3564 = vunpack.c.h.b16 %v3164
    %v3565 = vunpack.c.l.b16 %v3165
    %v3566 = vunpack.c.h.b16 %v3165
    %v3567 = vunpack.c.l.b16 %v3166
    %v3568 = vunpack.c.h.b16 %v3166
    %v3569 = vunpack.c.l.b16 %v3167
    %v3570 = vunpack.c.h.b16 %v3167
    %v3571 = vunpack.c.l.b16 %v3168
    %v3572 = vunpack.c.h.b16 %v3168
    %v3573 = vunpack.c.l.b16 %v3169
    %v3574 = vunpack.c.h.b16 %v3169
    %v3575 = vunpack.c.l.b16 %v3170
    %v3576 = vunpack.c.h.b16 %v3170
    %v3577 = vunpack.c.l.b16 %v3171
    %v3578 = vunpack.c.h.b16 %v3171
    %v3579 = vunpack.c.l.b16 %v3172
    %v3580 = vunpack.c.h.b16 %v3172
    %v3581 = vunpack.c.l.b16 %v3173
    %v3582 = vunpack.c.h.b16 %v3173
    %v3583 = vunpack.c.l.b16 %v3174
    %v3584 = vunpack.c.h.b16 %v3174
    %v3585 = vunpack.c.l.b16 %v3175
    %v3586 = vunpack.c.h.b16 %v3175
    %v3587 = vunpack.c.l.b16 %v3176
    %v3588 = vunpack.c.h.b16 %v3176
    %v3589 = vunpack.c.l.b16 %v3177
    %v3590 = vunpack.c.h.b16 %v3177
    %v3591 = vunpack.c.l.b16 %v3178
    %v3592 = vunpack.c.h.b16 %v3178
    %v3593 = vunpack.c.l.b16 %v3179
    %v3594 = vunpack.c.h.b16 %v3179
    %v3595 = vunpack.c.l.b16 %v3180
    %v3596 = vunpack.c.h.b16 %v3180
    %v3597 = vunpack.c.l.b16 %v3181
    %v3598 = vunpack.c.h.b16 %v3181
    %v3599 = vunpack.c.l.b16 %v3182
    %v3600 = vunpack.c.h.b16 %v3182
    %v3601 = vunpack.c.l.b16 %v3183
    %v3602 = vunpack.c.h.b16 %v3183
    %v3603 = vunpack.c.l.b16 %v3184
    %v3604 = vunpack.c.h.b16 %v3184
    %v3605 = vunpack.c.l.b16 %v3185
    %v3606 = vunpack.c.h.b16 %v3185
    %v3607 = vunpack.c.l.b16 %v3186
    %v3608 = vunpack.c.h.b16 %v3186
    %v3609 = vunpack.c.l.b16 %v3187
    %v3610 = vunpack.c.h.b16 %v3187
    %v3611 = vunpack.c.l.b16 %v3188
    %v3612 = vunpack.c.h.b16 %v3188
    %v3613 = vunpack.c.l.b16 %v3189
    %v3614 = vunpack.c.h.b16 %v3189
    %v3615 = vunpack.c.l.b16 %v3190
    %v3616 = vunpack.c.h.b16 %v3190
    %v3617 = vunpack.c.l.b16 %v3191
    %v3618 = vunpack.c.h.b16 %v3191
    %v3619 = vunpack.c.l.b16 %v3192
    %v3620 = vunpack.c.h.b16 %v3192
    %v3621 = vunpack.c.l.b16 %v3193
    %v3622 = vunpack.c.h.b16 %v3193
    %v3623 = vunpack.c.l.b16 %v3194
    %v3624 = vunpack.c.h.b16 %v3194
    %v3625 = vunpack.c.l.b16 %v3195
    %v3626 = vunpack.c.h.b16 %v3195
    %v3627 = vunpack.c.l.b16 %v3196
    %v3628 = vunpack.c.h.b16 %v3196
    %v3629 = vunpack.c.l.b16 %v3197
    %v3630 = vunpack.c.h.b16 %v3197
    %v3631 = vunpack.c.l.b16 %v3198
    %v3632 = vunpack.c.h.b16 %v3198
    %v3633 = vunpack.c.l.b16 %v3199
    %v3634 = vunpack.c.h.b16 %v3199
    %v3635 = vunpack.c.l.b16 %v3200
    %v3636 = vunpack.c.h.b16 %v3200
    %v3637 = vunpack.c.l.b16 %v3201
    %v3638 = vunpack.c.h.b16 %v3201
    %v3639 = vunpack.c.l.b16 %v3202
    %v3640 = vunpack.c.h.b16 %v3202
    %v3641 = vunpack.c.l.b16 %v3203
    %v3642 = vunpack.c.h.b16 %v3203
    %v3643 = vunpack.c.l.b16 %v3204
    %v3644 = vunpack.c.h.b16 %v3204
    %v3645 = vunpack.c.l.b16 %v3205
    %v3646 = vunpack.c.h.b16 %v3205
    %v3647 = vunpack.c.l.b16 %v3206
    %v3648 = vunpack.c.h.b16 %v3206
    %v3649 = vunpack.c.l.b16 %v3207
    %v3650 = vunpack.c.h.b16 %v3207
    %v3651 = vunpack.c.l.b16 %v3208
    %v3652 = vunpack.c.h.b16 %v3208
    %v3653 = vunpack.c.l.b16 %v3209
    %v3654 = vunpack.c.h.b16 %v3209
    %v3655 = vunpack.c.l.b16 %v3210
    %v3656 = vunpack.c.h.b16 %v3210
    %v3657 = vunpack.c.l.b16 %v3211
    %v3658 = vunpack.c.h.b16 %v3211
    %v3659 = vunpack.c.l.b16 %v3212
    %v3660 = vunpack.c.h.b16 %v3212
    %v3661 = vunpack.c.l.b16 %v3213
    %v3662 = vunpack.c.h.b16 %v3213
    %v3663 = vunpack.c.l.b16 %v3214
    %v3664 = vunpack.c.h.b16 %v3214
    %v3665 = vunpack.c.l.b16 %v3215
    %v3666 = vunpack.c.h.b16 %v3215
    %v3667 = vunpack.c.l.b16 %v3216
    %v3668 = vunpack.c.h.b16 %v3216
    %v3669 = vunpack.c.l.b16 %v3217
    %v3670 = vunpack.c.h.b16 %v3217
    %v3671 = vunpack.c.l.b16 %v3218
    %v3672 = vunpack.c.h.b16 %v3218
    %v3673 = vunpack.c.l.b16 %v3219
    %v3674 = vunpack.c.h.b16 %v3219
    %v3675 = vunpack.c.l.b16 %v3220
    %v3676 = vunpack.c.h.b16 %v3220
    %v3677 = vunpack.c.l.b16 %v3221
    %v3678 = vunpack.c.h.b16 %v3221
    %v3679 = vunpack.c.l.b16 %v3222
    %v3680 = vunpack.c.h.b16 %v3222
    %v3681 = vunpack.c.l.b16 %v3223
    %v3682 = vunpack.c.h.b16 %v3223
    %v3683 = vunpack.c.l.b16 %v3224
    %v3684 = vunpack.c.h.b16 %v3224
    %v3685 = vunpack.c.l.b16 %v3225
    %v3686 = vunpack.c.h.b16 %v3225
    %v3687 = vunpack.c.l.b16 %v3226
    %v3688 = vunpack.c.h.b16 %v3226
    %v3689 = vunpack.c.l.b16 %v3227
    %v3690 = vunpack.c.h.b16 %v3227
    %v3691 = vunpack.c.l.b16 %v3228
    %v3692 = vunpack.c.h.b16 %v3228
    %v3693 = vunpack.c.l.b16 %v3229
    %v3694 = vunpack.c.h.b16 %v3229
    %v3695 = vunpack.c.l.b16 %v3230
    %v3696 = vunpack.c.h.b16 %v3230
    %v3697 = vunpack.c.l.b16 %v3231
    %v3698 = vunpack.c.h.b16 %v3231
    %v3699 = vunpack.c.l.b16 %v3232
    %v3700 = vunpack.c.h.b16 %v3232
    %v3701 = vunpack.c.l.b16 %v3233
    %v3702 = vunpack.c.h.b16 %v3233
    %v3703 = vunpack.c.l.b16 %v3234
    %v3704 = vunpack.c.h.b16 %v3234
    %v3705 = vunpack.c.l.b16 %v3235
    %v3706 = vunpack.c.h.b16 %v3235
    %v3707 = vunpack.c.l.b16 %v3236
    %v3708 = vunpack.c.h.b16 %v3236
    %v3709 = vunpack.c.l.b16 %v3237
    %v3710 = vunpack.c.h.b16 %v3237
    %v3711 = vunpack.c.l.b16 %v3238
    %v3712 = vunpack.c.h.b16 %v3238
    %v3713 = vunpack.c.l.b16 %v3239
    %v3714 = vunpack.c.h.b16 %v3239
    %v3715 = vunpack.c.l.b16 %v3240
    %v3716 = vunpack.c.h.b16 %v3240
    %v3717 = vunpack.c.l.b16 %v3241
    %v3718 = vunpack.c.h.b16 %v3241
    %v3719 = vunpack.c.l.b16 %v3242
    %v3720 = vunpack.c.h.b16 %v3242
    %v3721 = vunpack.c.l.b16 %v3243
    %v3722 = vunpack.c.h.b16 %v3243
    %v3723 = vunpack.c.l.b16 %v3244
    %v3724 = vunpack.c.h.b16 %v3244
    %v3725 = vunpack.c.l.b16 %v3245
    %v3726 = vunpack.c.h.b16 %v3245
    %v3727 = vunpack.c.l.b16 %v3246
    %v3728 = vunpack.c.h.b16 %v3246
    %v3729 = vunpack.c.l.b16 %v3247
    %v3730 = vunpack.c.h.b16 %v3247
    %v3731 = vunpack.c.l.b16 %v3248
    %v3732 = vunpack.c.h.b16 %v3248
    %v3733 = vunpack.c.l.b16 %v3249
    %v3734 = vunpack.c.h.b16 %v3249
    %v3735 = vunpack.c.l.b16 %v3250
    %v3736 = vunpack.c.h.b16 %v3250
    %v3737 = vunpack.c.l.b16 %v3251
    %v3738 = vunpack.c.h.b16 %v3251
    %v3739 = vunpack.c.l.b16 %v3252
    %v3740 = vunpack.c.h.b16 %v3252
    %v3741 = vunpack.c.l.b16 %v3253
    %v3742 = vunpack.c.h.b16 %v3253
    %v3743 = vunpack.c.l.b16 %v3254
    %v3744 = vunpack.c.h.b16 %v3254
    %v3745 = vunpack.c.l.b16 %v3255
    %v3746 = vunpack.c.h.b16 %v3255
    %v3747 = vunpack.c.l.b16 %v3256
    %v3748 = vunpack.c.h.b16 %v3256
    %v3749 = vunpack.c.l.b16 %v3257
    %v3750 = vunpack.c.h.b16 %v3257
    %v3751 = vunpack.c.l.b16 %v3258
    %v3752 = vunpack.c.h.b16 %v3258
    %v3753 = vunpack.c.l.b16 %v3259
    %v3754 = vunpack.c.h.b16 %v3259
    %v3755 = vunpack.c.l.b16 %v3260
    %v3756 = vunpack.c.h.b16 %v3260
    %v3757 = vunpack.c.l.b16 %v3261
    %v3758 = vunpack.c.h.b16 %v3261
    %v3759 = vunpack.c.l.b16 %v3262
    %v3760 = vunpack.c.h.b16 %v3262
    %v3761 = vunpack.c.l.b16 %v3263
    %v3762 = vunpack.c.h.b16 %v3263
    %v3763 = vunpack.c.l.b16 %v3264
    %v3764 = vunpack.c.h.b16 %v3264
    %v3765 = vunpack.c.l.b16 %v3265
    %v3766 = vunpack.c.h.b16 %v3265
    %v3767 = vunpack.c.l.b16 %v3266
    %v3768 = vunpack.c.h.b16 %v3266
    %v3769 = vunpack.c.l.b16 %v3267
    %v3770 = vunpack.c.h.b16 %v3267
    %v3771 = vunpack.c.l.b16 %v3268
    %v3772 = vunpack.c.h.b16 %v3268
    %v3773 = vunpack.c.l.b16 %v3269
    %v3774 = vunpack.c.h.b16 %v3269
    %v3775 = vunpack.c.l.b16 %v3270
    %v3776 = vunpack.c.h.b16 %v3270
    %v3777 = vunpack.c.l.b16 %v3271
    %v3778 = vunpack.c.h.b16 %v3271
    %v3779 = vunpack.c.l.b16 %v3272
    %v3780 = vunpack.c.h.b16 %v3272
    %v3781 = vunpack.c.l.b16 %v3273
    %v3782 = vunpack.c.h.b16 %v3273
    %v3783 = vunpack.c.l.b16 %v3274
    %v3784 = vunpack.c.h.b16 %v3274
    %v3785 = vunpack.c.l.b16 %v3275
    %v3786 = vunpack.c.h.b16 %v3275
    %v3787 = vunpack.c.l.b16 %v3276
    %v3788 = vunpack.c.h.b16 %v3276
    %v3789 = vunpack.c.l.b16 %v3277
    %v3790 = vunpack.c.h.b16 %v3277
    %v3791 = vunpack.c.l.b16 %v3278
    %v3792 = vunpack.c.h.b16 %v3278
    %v3793 = vunpack.c.l.b16 %v3279
    %v3794 = vunpack.c.h.b16 %v3279
    %v3795 = vunpack.c.l.b16 %v3280
    %v3796 = vunpack.c.h.b16 %v3280
    %v3797 = vunpack.c.l.b16 %v3281
    %v3798 = vunpack.c.h.b16 %v3281
    %v3799 = vunpack.c.l.b16 %v3282
    %v3800 = vunpack.c.h.b16 %v3282
    %v3801 = vunpack.c.l.b16 %v3283
    %v3802 = vunpack.c.h.b16 %v3283
    %v3803 = vunpack.c.l.b16 %v3284
    %v3804 = vunpack.c.h.b16 %v3284
    %v3805 = vunpack.c.l.b16 %v3285
    %v3806 = vunpack.c.h.b16 %v3285
    %v3807 = vunpack.c.l.b16 %v3286
    %v3808 = vunpack.c.h.b16 %v3286
    %v3809 = vunpack.c.l.b16 %v3287
    %v3810 = vunpack.c.h.b16 %v3287
    %v3811 = vunpack.c.l.b16 %v3288
    %v3812 = vunpack.c.h.b16 %v3288
    %v3813 = vunpack.c.l.b16 %v3289
    %v3814 = vunpack.c.h.b16 %v3289
    %v3815 = vunpack.c.l.b16 %v3290
    %v3816 = vunpack.c.h.b16 %v3290
    %v3817 = vunpack.c.l.b16 %v3291
    %v3818 = vunpack.c.h.b16 %v3291
    %v3819 = vunpack.c.l.b16 %v3292
    %v3820 = vunpack.c.h.b16 %v3292
    %v3821 = vunpack.c.l.b16 %v3293
    %v3822 = vunpack.c.h.b16 %v3293
    %v3823 = vunpack.c.l.b16 %v3294
    %v3824 = vunpack.c.h.b16 %v3294
    %v3825 = vunpack.c.l.b16 %v3295
    %v3826 = vunpack.c.h.b16 %v3295
    %v3827 = vunpack.c.l.b16 %v3296
    %v3828 = vunpack.c.h.b16 %v3296
    %v3829 = vunpack.c.l.b16 %v3297
    %v3830 = vunpack.c.h.b16 %v3297
    %v3831 = vunpack.c.l.b16 %v3298
    %v3832 = vunpack.c.h.b16 %v3298
    %v3833 = vunpack.c.l.b16 %v3299
    %v3834 = vunpack.c.h.b16 %v3299
    %v3835 = vunpack.c.l.b16 %v3300
    %v3836 = vunpack.c.h.b16 %v3300
    %v3837 = vunpack.c.l.b16 %v3301
    %v3838 = vunpack.c.h.b16 %v3301
    %v3839 = vunpack.c.l.b16 %v3302
    %v3840 = vunpack.c.h.b16 %v3302
    %v3841 = vunpack.c.l.b16 %v3303
    %v3842 = vunpack.c.h.b16 %v3303
    %v3843 = vunpack.c.l.b16 %v3304
    %v3844 = vunpack.c.h.b16 %v3304
    %v3845 = vunpack.c.l.b16 %v3305
    %v3846 = vunpack.c.h.b16 %v3305
    %v3847 = vunpack.c.l.b16 %v3306
    %v3848 = vunpack.c.h.b16 %v3306
    %v3849 = vunpack.c.l.b16 %v3307
    %v3850 = vunpack.c.h.b16 %v3307
    %v3851 = vunpack.c.l.b16 %v3308
    %v3852 = vunpack.c.h.b16 %v3308
    %v3853 = vunpack.c.l.b16 %v3309
    %v3854 = vunpack.c.h.b16 %v3309
    %v3855 = vunpack.c.l.b16 %v3310
    %v3856 = vunpack.c.h.b16 %v3310
    %v3857 = vunpack.c.l.b16 %v3311
    %v3858 = vunpack.c.h.b16 %v3311
    %v3859 = vunpack.c.l.b16 %v3312
    %v3860 = vunpack.c.h.b16 %v3312
    %v3861 = vunpack.c.l.b16 %v3313
    %v3862 = vunpack.c.h.b16 %v3313
    %v3863 = vunpack.c.l.b16 %v3314
    %v3864 = vunpack.c.h.b16 %v3314
    %v3865 = vunpack.c.l.b16 %v3315
    %v3866 = vunpack.c.h.b16 %v3315
    %v3867 = vunpack.c.l.b16 %v3316
    %v3868 = vunpack.c.h.b16 %v3316
    %v3869 = vunpack.c.l.b16 %v3317
    %v3870 = vunpack.c.h.b16 %v3317
    %v3871 = vunpack.c.l.b16 %v3318
    %v3872 = vunpack.c.h.b16 %v3318
    %v3873 = vunpack.c.l.b16 %v3319
    %v3874 = vunpack.c.h.b16 %v3319
    %v3875 = vunpack.c.l.b16 %v3320
    %v3876 = vunpack.c.h.b16 %v3320
    %v3877 = vunpack.c.l.b16 %v3321
    %v3878 = vunpack.c.h.b16 %v3321
    %v3879 = vunpack.c.l.b16 %v3322
    %v3880 = vunpack.c.h.b16 %v3322
    %v3881 = vunpack.c.l.b16 %v3323
    %v3882 = vunpack.c.h.b16 %v3323
    %v3883 = vunpack.c.l.b16 %v3324
    %v3884 = vunpack.c.h.b16 %v3324
    %v3885 = vunpack.c.l.b16 %v3325
    %v3886 = vunpack.c.h.b16 %v3325
    %v3887 = vunpack.c.l.b16 %v3326
    %v3888 = vunpack.c.h.b16 %v3326
    %v3889 = vunpack.c.l.b16 %v3327
    %v3890 = vunpack.c.h.b16 %v3327
    %v3891 = vunpack.c.l.b16 %v3328
    %v3892 = vunpack.c.h.b16 %v3328
    %v3893 = vunpack.c.l.b16 %v3329
    %v3894 = vunpack.c.h.b16 %v3329
    %v3895 = vunpack.c.l.b16 %v3330
    %v3896 = vunpack.c.h.b16 %v3330
    %v3897 = vunpack.c.l.b16 %v3331
    %v3898 = vunpack.c.h.b16 %v3331
    %v3899 = vunpack.c.l.b16 %v3332
    %v3900 = vunpack.c.h.b16 %v3332
    %v3901 = vunpack.c.l.b16 %v3333
    %v3902 = vunpack.c.h.b16 %v3333
    %v3903 = vunpack.c.l.b16 %v3334
    %v3904 = vunpack.c.h.b16 %v3334
    %v3905 = vunpack.c.l.b16 %v3335
    %v3906 = vunpack.c.h.b16 %v3335
    %v3907 = vunpack.c.l.b16 %v3336
    %v3908 = vunpack.c.h.b16 %v3336
    %v3909 = vunpack.c.l.b16 %v3337
    %v3910 = vunpack.c.h.b16 %v3337
    %v3911 = vunpack.c.l.b16 %v3338
    %v3912 = vunpack.c.h.b16 %v3338
    %v3913 = vunpack.c.l.b16 %v3339
    %v3914 = vunpack.c.h.b16 %v3339
    %v3915 = vunpack.c.l.b16 %v3340
    %v3916 = vunpack.c.h.b16 %v3340
    %v3917 = vunpack.c.l.b16 %v3341
    %v3918 = vunpack.c.h.b16 %v3341
    %v3919 = vunpack.c.l.b16 %v3342
    %v3920 = vunpack.c.h.b16 %v3342
    %v3921 = vunpack.c.l.b16 %v3343
    %v3922 = vunpack.c.h.b16 %v3343
    %v3923 = vunpack.c.l.b16 %v3344
    %v3924 = vunpack.c.h.b16 %v3344
    %v3925 = vunpack.c.l.b16 %v3345
    %v3926 = vunpack.c.h.b16 %v3345
    %v3927 = vunpack.c.l.b16 %v3346
    %v3928 = vunpack.c.h.b16 %v3346
    %v3929 = vunpack.c.l.b16 %v3347
    %v3930 = vunpack.c.h.b16 %v3347
    %v3931 = vunpack.c.l.b16 %v3348
    %v3932 = vunpack.c.h.b16 %v3348
    %v3933 = vunpack.c.l.b16 %v3349
    %v3934 = vunpack.c.h.b16 %v3349
    %v3935 = vunpack.c.l.b16 %v3350
    %v3936 = vunpack.c.h.b16 %v3350
    %v3937 = vpack.c.b16 %v3557, %v3553
    %v3938 = vpack.c.b16 %v3558, %v3554
    %v3939 = vpack.c.b16 %v3559, %v3555
    %v3940 = vpack.c.b16 %v3560, %v3556
    %v3941 = vpack.c.b16 %v3565, %v3561
    %v3942 = vpack.c.b16 %v3566, %v3562
    %v3943 = vpack.c.b16 %v3567, %v3563
    %v3944 = vpack.c.b16 %v3568, %v3564
    %v3945 = vpack.c.b16 %v3573, %v3569
    %v3946 = vpack.c.b16 %v3574, %v3570
    %v3947 = vpack.c.b16 %v3575, %v3571
    %v3948 = vpack.c.b16 %v3576, %v3572
    %v3949 = vpack.c.b16 %v3581, %v3577
    %v3950 = vpack.c.b16 %v3582, %v3578
    %v3951 = vpack.c.b16 %v3583, %v3579
    %v3952 = vpack.c.b16 %v3584, %v3580
    %v3953 = vpack.c.b16 %v3589, %v3585
    %v3954 = vpack.c.b16 %v3590, %v3586
    %v3955 = vpack.c.b16 %v3591, %v3587
    %v3956 = vpack.c.b16 %v3592, %v3588
    %v3957 = vpack.c.b16 %v3597, %v3593
    %v3958 = vpack.c.b16 %v3598, %v3594
    %v3959 = vpack.c.b16 %v3599, %v3595
    %v3960 = vpack.c.b16 %v3600, %v3596
    %v3961 = vpack.c.b16 %v3605, %v3601
    %v3962 = vpack.c.b16 %v3606, %v3602
    %v3963 = vpack.c.b16 %v3607, %v3603
    %v3964 = vpack.c.b16 %v3608, %v3604
    %v3965 = vpack.c.b16 %v3613, %v3609
    %v3966 = vpack.c.b16 %v3614, %v3610
    %v3967 = vpack.c.b16 %v3615, %v3611
    %v3968 = vpack.c.b16 %v3616, %v3612
    %v3969 = vpack.c.b16 %v3621, %v3617
    %v3970 = vpack.c.b16 %v3622, %v3618
    %v3971 = vpack.c.b16 %v3623, %v3619
    %v3972 = vpack.c.b16 %v3624, %v3620
    %v3973 = vpack.c.b16 %v3629, %v3625
    %v3974 = vpack.c.b16 %v3630, %v3626
    %v3975 = vpack.c.b16 %v3631, %v3627
    %v3976 = vpack.c.b16 %v3632, %v3628
    %v3977 = vpack.c.b16 %v3637, %v3633
    %v3978 = vpack.c.b16 %v3638, %v3634
    %v3979 = vpack.c.b16 %v3639, %v3635
    %v3980 = vpack.c.b16 %v3640, %v3636
    %v3981 = vpack.c.b16 %v3645, %v3641
    %v3982 = vpack.c.b16 %v3646, %v3642
    %v3983 = vpack.c.b16 %v3647, %v3643
    %v3984 = vpack.c.b16 %v3648, %v3644
    %v3985 = vpack.c.b16 %v3653, %v3649
    %v3986 = vpack.c.b16 %v3654, %v3650
    %v3987 = vpack.c.b16 %v3655, %v3651
    %v3988 = vpack.c.b16 %v3656, %v3652
    %v3989 = vpack.c.b16 %v3661, %v3657
    %v3990 = vpack.c.b16 %v3662, %v3658
    %v3991 = vpack.c.b16 %v3663, %v3659
    %v3992 = vpack.c.b16 %v3664, %v3660
    %v3993 = vpack.c.b16 %v3669, %v3665
    %v3994 = vpack.c.b16 %v3670, %v3666
    %v3995 = vpack.c.b16 %v3671, %v3667
    %v3996 = vpack.c.b16 %v3672, %v3668
    %v3997 = vpack.c.b16 %v3677, %v3673
    %v3998 = vpack.c.b16 %v3678, %v3674
    %v3999 = vpack.c.b16 %v3679, %v3675
    %v4000 = vpack.c.b16 %v3680, %v3676
    %v4001 = vpack.c.b16 %v3685, %v3681
    %v4002 = vpack.c.b16 %v3686, %v3682
    %v4003 = vpack.c.b16 %v3687, %v3683
    %v4004 = vpack.c.b16 %v3688, %v3684
    %v4005 = vpack.c.b16 %v3693, %v3689
    %v4006 = vpack.c.b16 %v3694, %v3690
    %v4007 = vpack.c.b16 %v3695, %v3691
    %v4008 = vpack.c.b16 %v3696, %v3692
    %v4009 = vpack.c.b16 %v3701, %v3697
    %v4010 = vpack.c.b16 %v3702, %v3698
    %v4011 = vpack.c.b16 %v3703, %v3699
    %v4012 = vpack.c.b16 %v3704, %v3700
    %v4013 = vpack.c.b16 %v3709, %v3705
    %v4014 = vpack.c.b16 %v3710, %v3706
    %v4015 = vpack.c.b16 %v3711, %v3707
    %v4016 = vpack.c.b16 %v3712, %v3708
    %v4017 = vpack.c.b16 %v3717, %v3713
    %v4018 = vpack.c.b16 %v3718, %v3714
    %v4019 = vpack.c.b16 %v3719, %v3715
    %v4020 = vpack.c.b16 %v3720, %v3716
    %v4021 = vpack.c.b16 %v3725, %v3721
    %v4022 = vpack.c.b16 %v3726, %v3722
    %v4023 = vpack.c.b16 %v3727, %v3723
    %v4024 = vpack.c.b16 %v3728, %v3724
    %v4025 = vpack.c.b16 %v3733, %v3729
    %v4026 = vpack.c.b16 %v3734, %v3730
    %v4027 = vpack.c.b16 %v3735, %v3731
    %v4028 = vpack.c.b16 %v3736, %v3732
    %v4029 = vpack.c.b16 %v3741, %v3737
    %v4030 = vpack.c.b16 %v3742, %v3738
    %v4031 = vpack.c.b16 %v3743, %v3739
    %v4032 = vpack.c.b16 %v3744, %v3740
    %v4033 = vpack.c.b16 %v3749, %v3745
    %v4034 = vpack.c.b16 %v3750, %v3746
    %v4035 = vpack.c.b16 %v3751, %v3747
    %v4036 = vpack.c.b16 %v3752, %v3748
    %v4037 = vpack.c.b16 %v3757, %v3753
    %v4038 = vpack.c.b16 %v3758, %v3754
    %v4039 = vpack.c.b16 %v3759, %v3755
    %v4040 = vpack.c.b16 %v3760, %v3756
    %v4041 = vpack.c.b16 %v3765, %v3761
    %v4042 = vpack.c.b16 %v3766, %v3762
    %v4043 = vpack.c.b16 %v3767, %v3763
    %v4044 = vpack.c.b16 %v3768, %v3764
    %v4045 = vpack.c.b16 %v3773, %v3769
    %v4046 = vpack.c.b16 %v3774, %v3770
    %v4047 = vpack.c.b16 %v3775, %v3771
    %v4048 = vpack.c.b16 %v3776, %v3772
    %v4049 = vpack.c.b16 %v3781, %v3777
    %v4050 = vpack.c.b16 %v3782, %v3778
    %v4051 = vpack.c.b16 %v3783, %v3779
    %v4052 = vpack.c.b16 %v3784, %v3780
    %v4053 = vpack.c.b16 %v3789, %v3785
    %v4054 = vpack.c.b16 %v3790, %v3786
    %v4055 = vpack.c.b16 %v3791, %v3787
    %v4056 = vpack.c.b16 %v3792, %v3788
    %v4057 = vpack.c.b16 %v3797, %v3793
    %v4058 = vpack.c.b16 %v3798, %v3794
    %v4059 = vpack.c.b16 %v3799, %v3795
    %v4060 = vpack.c.b16 %v3800, %v3796
    %v4061 = vpack.c.b16 %v3805, %v3801
    %v4062 = vpack.c.b16 %v3806, %v3802
    %v4063 = vpack.c.b16 %v3807, %v3803
    %v4064 = vpack.c.b16 %v3808, %v3804
    %v4065 = vpack.c.b16 %v3813, %v3809
    %v4066 = vpack.c.b16 %v3814, %v3810
    %v4067 = vpack.c.b16 %v3815, %v3811
    %v4068 = vpack.c.b16 %v3816, %v3812
    %v4069 = vpack.c.b16 %v3821, %v3817
    %v4070 = vpack.c.b16 %v3822, %v3818
    %v4071 = vpack.c.b16 %v3823, %v3819
    %v4072 = vpack.c.b16 %v3824, %v3820
    %v4073 = vpack.c.b16 %v3829, %v3825
    %v4074 = vpack.c.b16 %v3830, %v3826
    %v4075 = vpack.c.b16 %v3831, %v3827
    %v4076 = vpack.c.b16 %v3832, %v3828
    %v4077 = vpack.c.b16 %v3837, %v3833
    %v4078 = vpack.c.b16 %v3838, %v3834
    %v4079 = vpack.c.b16 %v3839, %v3835
    %v4080 = vpack.c.b16 %v3840, %v3836
    %v4081 = vpack.c.b16 %v3845, %v3841
    %v4082 = vpack.c.b16 %v3846, %v3842
    %v4083 = vpack.c.b16 %v3847, %v3843
    %v4084 = vpack.c.b16 %v3848, %v3844
    %v4085 = vpack.c.b16 %v3853, %v3849
    %v4086 = vpack.c.b16 %v3854, %v3850
    %v4087 = vpack.c.b16 %v3855, %v3851
    %v4088 = vpack.c.b16 %v3856, %v3852
    %v4089 = vpack.c.b16 %v3861, %v3857
    %v4090 = vpack.c.b16 %v3862, %v3858
    %v4091 = vpack.c.b16 %v3863, %v3859
    %v4092 = vpack.c.b16 %v3864, %v3860
    %v4093 = vpack.c.b16 %v3869, %v3865
    %v4094 = vpack.c.b16 %v3870, %v3866
    %v4095 = vpack.c.b16 %v3871, %v3867
    %v4096 = vpack.c.b16 %v3872, %v3868
    %v4097 = vpack.c.b16 %v3877, %v3873
    %v4098 = vpack.c.b16 %v3878, %v3874
    %v4099 = vpack.c.b16 %v3879, %v3875
    %v4100 = vpack.c.b16 %v3880, %v3876
    %v4101 = vpack.c.b16 %v3885, %v3881
    %v4102 = vpack.c.b16 %v3886, %v3882
    %v4103 = vpack.c.b16 %v3887, %v3883
    %v4104 = vpack.c.b16 %v3888, %v3884
    %v4105 = vpack.c.b16 %v3893, %v3889
    %v4106 = vpack.c.b16 %v3894, %v3890
    %v4107 = vpack.c.b16 %v3895, %v3891
    %v4108 = vpack.c.b16 %v3896, %v3892
    %v4109 = vpack.c.b16 %v3901, %v3897
    %v4110 = vpack.c.b16 %v3902, %v3898
    %v4111 = vpack.c.b16 %v3903, %v3899
    %v4112 = vpack.c.b16 %v3904, %v3900
    %v4113 = vpack.c.b16 %v3909, %v3905
    %v4114 = vpack.c.b16 %v3910, %v3906
    %v4115 = vpack.c.b16 %v3911, %v3907
    %v4116 = vpack.c.b16 %v3912, %v3908
    %v4117 = vpack.c.b16 %v3917, %v3913
    %v4118 = vpack.c.b16 %v3918, %v3914
    %v4119 = vpack.c.b16 %v3919, %v3915
    %v4120 = vpack.c.b16 %v3920, %v3916
    %v4121 = vpack.c.b16 %v3925, %v3921
    %v4122 = vpack.c.b16 %v3926, %v3922
    %v4123 = vpack.c.b16 %v3927, %v3923
    %v4124 = vpack.c.b16 %v3928, %v3924
    %v4125 = vpack.c.b16 %v3933, %v3929
    %v4126 = vpack.c.b16 %v3934, %v3930
    %v4127 = vpack.c.b16 %v3935, %v3931
    %v4128 = vpack.c.b16 %v3936, %v3932
    %4321 = vmatpush.bf16.msra.mxu0 %v3965
    %4322 = vmatpush.bf16.msra.mxu0 %v3961
    %4323 = vmatpush.bf16.msra.mxu0 %v3957
    %4324 = vmatpush.bf16.msra.mxu0 %v3953
    %4325 = vmatpush.bf16.msra.mxu0 %v3949
    %4326 = vmatpush.bf16.msra.mxu0 %v3945
    %4327 = vmatpush.bf16.msra.mxu0 %v3941
    %4328 = vmatpush.bf16.msra.mxu0 %v3937
    %4329 = vmatmul.bf16.gmra.mxu0 %v3153
    %v4330 = vpop.f32.mrf.mxu0
    %v4331 = vadd.f32 %v3353, %v4330
    %v4332 = vpop.f32.mrf.mxu0
    %4333 = vdwg.mxu0
    %4334 = vmatpush.bf16.msra.mxu0 %v3997
    %4335 = vmatpush.bf16.msra.mxu0 %v3993
    %4336 = vmatpush.bf16.msra.mxu0 %v3989
    %4337 = vmatpush.bf16.msra.mxu0 %v3985
    %4338 = vmatpush.bf16.msra.mxu0 %v3981
    %4339 = vmatpush.bf16.msra.mxu0 %v3977
    %4340 = vmatpush.bf16.msra.mxu0 %v3973
    %4341 = vmatpush.bf16.msra.mxu0 %v3969
    %4342 = vmatmul.bf16.gmra.mxu0 %v3154
    %v4343 = vpop.f32.mrf.mxu0
    %v4344 = vadd.f32 %v4331, %v4343
    %v4345 = vpop.f32.mrf.mxu0
    %4346 = vdwg.mxu0
    %4347 = vmatpush.bf16.msra.mxu0 %v4029
    %4348 = vmatpush.bf16.msra.mxu0 %v4025
    %4349 = vmatpush.bf16.msra.mxu0 %v4021
    %4350 = vmatpush.bf16.msra.mxu0 %v4017
    %4351 = vmatpush.bf16.msra.mxu0 %v4013
    %4352 = vmatpush.bf16.msra.mxu0 %v4009
    %4353 = vmatpush.bf16.msra.mxu0 %v4005
    %4354 = vmatpush.bf16.msra.mxu0 %v4001
    %4355 = vmatmul.bf16.gmra.mxu0 %v3155
    %v4356 = vpop.f32.mrf.mxu0
    %v4357 = vadd.f32 %v4344, %v4356
    %v4358 = vpop.f32.mrf.mxu0
    %4359 = vdwg.mxu0
    %4360 = vmatpush.bf16.msra.mxu0 %v4061
    %4361 = vmatpush.bf16.msra.mxu0 %v4057
    %4362 = vmatpush.bf16.msra.mxu0 %v4053
    %4363 = vmatpush.bf16.msra.mxu0 %v4049
    %4364 = vmatpush.bf16.msra.mxu0 %v4045
    %4365 = vmatpush.bf16.msra.mxu0 %v4041
    %4366 = vmatpush.bf16.msra.mxu0 %v4037
    %4367 = vmatpush.bf16.msra.mxu0 %v4033
    %4368 = vmatmul.bf16.gmra.mxu0 %v3156
    %v4369 = vpop.f32.mrf.mxu0
    %v4370 = vadd.f32 %v4357, %v4369
    %v4371 = vpop.f32.mrf.mxu0
    %4372 = vdwg.mxu0
    %4373 = vmatpush.bf16.msra.mxu0 %v4093
    %4374 = vmatpush.bf16.msra.mxu0 %v4089
    %4375 = vmatpush.bf16.msra.mxu0 %v4085
    %4376 = vmatpush.bf16.msra.mxu0 %v4081
    %4377 = vmatpush.bf16.msra.mxu0 %v4077
    %4378 = vmatpush.bf16.msra.mxu0 %v4073
    %4379 = vmatpush.bf16.msra.mxu0 %v4069
    %4380 = vmatpush.bf16.msra.mxu0 %v4065
    %4381 = vmatmul.bf16.gmra.mxu0 %v3157
    %v4382 = vpop.f32.mrf.mxu0
    %v4383 = vadd.f32 %v4370, %v4382
    %v4384 = vpop.f32.mrf.mxu0
    %4385 = vdwg.mxu0
    %4386 = vmatpush.bf16.msra.mxu0 %v4125
    %4387 = vmatpush.bf16.msra.mxu0 %v4121
    %4388 = vmatpush.bf16.msra.mxu0 %v4117
    %4389 = vmatpush.bf16.msra.mxu0 %v4113
    %4390 = vmatpush.bf16.msra.mxu0 %v4109
    %4391 = vmatpush.bf16.msra.mxu0 %v4105
    %4392 = vmatpush.bf16.msra.mxu0 %v4101
    %4393 = vmatpush.bf16.msra.mxu0 %v4097
    %4394 = vmatmul.bf16.gmra.mxu0 %v3158
    %v4395 = vpop.f32.mrf.mxu0
    %v4396 = vadd.f32 %v4383, %v4395
    %v4397 = vpop.f32.mrf.mxu0
    %4398 = vdwg.mxu0
    %4399 = vmatpush.bf16.msra.mxu0 %v3966
    %4400 = vmatpush.bf16.msra.mxu0 %v3962
    %4401 = vmatpush.bf16.msra.mxu0 %v3958
    %4402 = vmatpush.bf16.msra.mxu0 %v3954
    %4403 = vmatpush.bf16.msra.mxu0 %v3950
    %4404 = vmatpush.bf16.msra.mxu0 %v3946
    %4405 = vmatpush.bf16.msra.mxu0 %v3942
    %4406 = vmatpush.bf16.msra.mxu0 %v3938
    %4407 = vmatmul.bf16.gmra.mxu0 %v3153
    %v4408 = vpop.f32.mrf.mxu0
    %v4409 = vadd.f32 %v3354, %v4408
    %v4410 = vpop.f32.mrf.mxu0
    %4411 = vdwg.mxu0
    %4412 = vmatpush.bf16.msra.mxu0 %v3998
    %4413 = vmatpush.bf16.msra.mxu0 %v3994
    %4414 = vmatpush.bf16.msra.mxu0 %v3990
    %4415 = vmatpush.bf16.msra.mxu0 %v3986
    %4416 = vmatpush.bf16.msra.mxu0 %v3982
    %4417 = vmatpush.bf16.msra.mxu0 %v3978
    %4418 = vmatpush.bf16.msra.mxu0 %v3974
    %4419 = vmatpush.bf16.msra.mxu0 %v3970
    %4420 = vmatmul.bf16.gmra.mxu0 %v3154
    %v4421 = vpop.f32.mrf.mxu0
    %v4422 = vadd.f32 %v4409, %v4421
    %v4423 = vpop.f32.mrf.mxu0
    %4424 = vdwg.mxu0
    %4425 = vmatpush.bf16.msra.mxu0 %v4030
    %4426 = vmatpush.bf16.msra.mxu0 %v4026
    %4427 = vmatpush.bf16.msra.mxu0 %v4022
    %4428 = vmatpush.bf16.msra.mxu0 %v4018
    %4429 = vmatpush.bf16.msra.mxu0 %v4014
    %4430 = vmatpush.bf16.msra.mxu0 %v4010
    %4431 = vmatpush.bf16.msra.mxu0 %v4006
    %4432 = vmatpush.bf16.msra.mxu0 %v4002
    %4433 = vmatmul.bf16.gmra.mxu0 %v3155
    %v4434 = vpop.f32.mrf.mxu0
    %v4435 = vadd.f32 %v4422, %v4434
    %v4436 = vpop.f32.mrf.mxu0
    %4437 = vdwg.mxu0
    %4438 = vmatpush.bf16.msra.mxu0 %v4062
    %4439 = vmatpush.bf16.msra.mxu0 %v4058
    %4440 = vmatpush.bf16.msra.mxu0 %v4054
    %4441 = vmatpush.bf16.msra.mxu0 %v4050
    %4442 = vmatpush.bf16.msra.mxu0 %v4046
    %4443 = vmatpush.bf16.msra.mxu0 %v4042
    %4444 = vmatpush.bf16.msra.mxu0 %v4038
    %4445 = vmatpush.bf16.msra.mxu0 %v4034
    %4446 = vmatmul.bf16.gmra.mxu0 %v3156
    %v4447 = vpop.f32.mrf.mxu0
    %v4448 = vadd.f32 %v4435, %v4447
    %v4449 = vpop.f32.mrf.mxu0
    %4450 = vdwg.mxu0
    %4451 = vmatpush.bf16.msra.mxu0 %v4094
    %4452 = vmatpush.bf16.msra.mxu0 %v4090
    %4453 = vmatpush.bf16.msra.mxu0 %v4086
    %4454 = vmatpush.bf16.msra.mxu0 %v4082
    %4455 = vmatpush.bf16.msra.mxu0 %v4078
    %4456 = vmatpush.bf16.msra.mxu0 %v4074
    %4457 = vmatpush.bf16.msra.mxu0 %v4070
    %4458 = vmatpush.bf16.msra.mxu0 %v4066
    %4459 = vmatmul.bf16.gmra.mxu0 %v3157
    %v4460 = vpop.f32.mrf.mxu0
    %v4461 = vadd.f32 %v4448, %v4460
    %v4462 = vpop.f32.mrf.mxu0
    %4463 = vdwg.mxu0
    %4464 = vmatpush.bf16.msra.mxu0 %v4126
    %4465 = vmatpush.bf16.msra.mxu0 %v4122
    %4466 = vmatpush.bf16.msra.mxu0 %v4118
    %4467 = vmatpush.bf16.msra.mxu0 %v4114
    %4468 = vmatpush.bf16.msra.mxu0 %v4110
    %4469 = vmatpush.bf16.msra.mxu0 %v4106
    %4470 = vmatpush.bf16.msra.mxu0 %v4102
    %4471 = vmatpush.bf16.msra.mxu0 %v4098
    %4472 = vmatmul.bf16.gmra.mxu0 %v3158
    %v4473 = vpop.f32.mrf.mxu0
    %v4474 = vadd.f32 %v4461, %v4473
    %v4475 = vpop.f32.mrf.mxu0
    %4476 = vdwg.mxu0
    %4477 = vmatpush.bf16.msra.mxu0 %v3967
    %4478 = vmatpush.bf16.msra.mxu0 %v3963
    %4479 = vmatpush.bf16.msra.mxu0 %v3959
    %4480 = vmatpush.bf16.msra.mxu0 %v3955
    %4481 = vmatpush.bf16.msra.mxu0 %v3951
    %4482 = vmatpush.bf16.msra.mxu0 %v3947
    %4483 = vmatpush.bf16.msra.mxu0 %v3943
    %4484 = vmatpush.bf16.msra.mxu0 %v3939
    %4485 = vmatmul.bf16.gmra.mxu0 %v3153
    %v4486 = vpop.f32.mrf.mxu0
    %v4487 = vadd.f32 %v3355, %v4486
    %v4488 = vpop.f32.mrf.mxu0
    %4489 = vdwg.mxu0
    %4490 = vmatpush.bf16.msra.mxu0 %v3999
    %4491 = vmatpush.bf16.msra.mxu0 %v3995
    %4492 = vmatpush.bf16.msra.mxu0 %v3991
    %4493 = vmatpush.bf16.msra.mxu0 %v3987
    %4494 = vmatpush.bf16.msra.mxu0 %v3983
    %4495 = vmatpush.bf16.msra.mxu0 %v3979
    %4496 = vmatpush.bf16.msra.mxu0 %v3975
    %4497 = vmatpush.bf16.msra.mxu0 %v3971
    %4498 = vmatmul.bf16.gmra.mxu0 %v3154
    %v4499 = vpop.f32.mrf.mxu0
    %v4500 = vadd.f32 %v4487, %v4499
    %v4501 = vpop.f32.mrf.mxu0
    %4502 = vdwg.mxu0
    %4503 = vmatpush.bf16.msra.mxu0 %v4031
    %4504 = vmatpush.bf16.msra.mxu0 %v4027
    %4505 = vmatpush.bf16.msra.mxu0 %v4023
    %4506 = vmatpush.bf16.msra.mxu0 %v4019
    %4507 = vmatpush.bf16.msra.mxu0 %v4015
    %4508 = vmatpush.bf16.msra.mxu0 %v4011
    %4509 = vmatpush.bf16.msra.mxu0 %v4007
    %4510 = vmatpush.bf16.msra.mxu0 %v4003
    %4511 = vmatmul.bf16.gmra.mxu0 %v3155
    %v4512 = vpop.f32.mrf.mxu0
    %v4513 = vadd.f32 %v4500, %v4512
    %v4514 = vpop.f32.mrf.mxu0
    %4515 = vdwg.mxu0
    %4516 = vmatpush.bf16.msra.mxu0 %v4063
    %4517 = vmatpush.bf16.msra.mxu0 %v4059
    %4518 = vmatpush.bf16.msra.mxu0 %v4055
    %4519 = vmatpush.bf16.msra.mxu0 %v4051
    %4520 = vmatpush.bf16.msra.mxu0 %v4047
    %4521 = vmatpush.bf16.msra.mxu0 %v4043
    %4522 = vmatpush.bf16.msra.mxu0 %v4039
    %4523 = vmatpush.bf16.msra.mxu0 %v4035
    %4524 = vmatmul.bf16.gmra.mxu0 %v3156
    %v4525 = vpop.f32.mrf.mxu0
    %v4526 = vadd.f32 %v4513, %v4525
    %v4527 = vpop.f32.mrf.mxu0
    %4528 = vdwg.mxu0
    %4529 = vmatpush.bf16.msra.mxu0 %v4095
    %4530 = vmatpush.bf16.msra.mxu0 %v4091
    %4531 = vmatpush.bf16.msra.mxu0 %v4087
    %4532 = vmatpush.bf16.msra.mxu0 %v4083
    %4533 = vmatpush.bf16.msra.mxu0 %v4079
    %4534 = vmatpush.bf16.msra.mxu0 %v4075
    %4535 = vmatpush.bf16.msra.mxu0 %v4071
    %4536 = vmatpush.bf16.msra.mxu0 %v4067
    %4537 = vmatmul.bf16.gmra.mxu0 %v3157
    %v4538 = vpop.f32.mrf.mxu0
    %v4539 = vadd.f32 %v4526, %v4538
    %v4540 = vpop.f32.mrf.mxu0
    %4541 = vdwg.mxu0
    %4542 = vmatpush.bf16.msra.mxu0 %v4127
    %4543 = vmatpush.bf16.msra.mxu0 %v4123
    %4544 = vmatpush.bf16.msra.mxu0 %v4119
    %4545 = vmatpush.bf16.msra.mxu0 %v4115
    %4546 = vmatpush.bf16.msra.mxu0 %v4111
    %4547 = vmatpush.bf16.msra.mxu0 %v4107
    %4548 = vmatpush.bf16.msra.mxu0 %v4103
    %4549 = vmatpush.bf16.msra.mxu0 %v4099
    %4550 = vmatmul.bf16.gmra.mxu0 %v3158
    %v4551 = vpop.f32.mrf.mxu0
    %v4552 = vadd.f32 %v4539, %v4551
    %v4553 = vpop.f32.mrf.mxu0
    %4554 = vdwg.mxu0
    %4555 = vmatpush.bf16.msra.mxu0 %v3968
    %4556 = vmatpush.bf16.msra.mxu0 %v3964
    %4557 = vmatpush.bf16.msra.mxu0 %v3960
    %4558 = vmatpush.bf16.msra.mxu0 %v3956
    %4559 = vmatpush.bf16.msra.mxu0 %v3952
    %4560 = vmatpush.bf16.msra.mxu0 %v3948
    %4561 = vmatpush.bf16.msra.mxu0 %v3944
    %4562 = vmatpush.bf16.msra.mxu0 %v3940
    %4563 = vmatmul.bf16.gmra.mxu0 %v3153
    %v4564 = vpop.f32.mrf.mxu0
    %v4565 = vadd.f32 %v3356, %v4564
    %v4566 = vpop.f32.mrf.mxu0
    %4567 = vdwg.mxu0
    %4568 = vmatpush.bf16.msra.mxu0 %v4000
    %4569 = vmatpush.bf16.msra.mxu0 %v3996
    %4570 = vmatpush.bf16.msra.mxu0 %v3992
    %4571 = vmatpush.bf16.msra.mxu0 %v3988
    %4572 = vmatpush.bf16.msra.mxu0 %v3984
    %4573 = vmatpush.bf16.msra.mxu0 %v3980
    %4574 = vmatpush.bf16.msra.mxu0 %v3976
    %4575 = vmatpush.bf16.msra.mxu0 %v3972
    %4576 = vmatmul.bf16.gmra.mxu0 %v3154
    %v4577 = vpop.f32.mrf.mxu0
    %v4578 = vadd.f32 %v4565, %v4577
    %v4579 = vpop.f32.mrf.mxu0
    %4580 = vdwg.mxu0
    %4581 = vmatpush.bf16.msra.mxu0 %v4032
    %4582 = vmatpush.bf16.msra.mxu0 %v4028
    %4583 = vmatpush.bf16.msra.mxu0 %v4024
    %4584 = vmatpush.bf16.msra.mxu0 %v4020
    %4585 = vmatpush.bf16.msra.mxu0 %v4016
    %4586 = vmatpush.bf16.msra.mxu0 %v4012
    %4587 = vmatpush.bf16.msra.mxu0 %v4008
    %4588 = vmatpush.bf16.msra.mxu0 %v4004
    %4589 = vmatmul.bf16.gmra.mxu0 %v3155
    %v4590 = vpop.f32.mrf.mxu0
    %v4591 = vadd.f32 %v4578, %v4590
    %v4592 = vpop.f32.mrf.mxu0
    %4593 = vdwg.mxu0
    %4594 = vmatpush.bf16.msra.mxu0 %v4064
    %4595 = vmatpush.bf16.msra.mxu0 %v4060
    %4596 = vmatpush.bf16.msra.mxu0 %v4056
    %4597 = vmatpush.bf16.msra.mxu0 %v4052
    %4598 = vmatpush.bf16.msra.mxu0 %v4048
    %4599 = vmatpush.bf16.msra.mxu0 %v4044
    %4600 = vmatpush.bf16.msra.mxu0 %v4040
    %4601 = vmatpush.bf16.msra.mxu0 %v4036
    %4602 = vmatmul.bf16.gmra.mxu0 %v3156
    %v4603 = vpop.f32.mrf.mxu0
    %v4604 = vadd.f32 %v4591, %v4603
    %v4605 = vpop.f32.mrf.mxu0
    %4606 = vdwg.mxu0
    %4607 = vmatpush.bf16.msra.mxu0 %v4096
    %4608 = vmatpush.bf16.msra.mxu0 %v4092
    %4609 = vmatpush.bf16.msra.mxu0 %v4088
    %4610 = vmatpush.bf16.msra.mxu0 %v4084
    %4611 = vmatpush.bf16.msra.mxu0 %v4080
    %4612 = vmatpush.bf16.msra.mxu0 %v4076
    %4613 = vmatpush.bf16.msra.mxu0 %v4072
    %4614 = vmatpush.bf16.msra.mxu0 %v4068
    %4615 = vmatmul.bf16.gmra.mxu0 %v3157
    %v4616 = vpop.f32.mrf.mxu0
    %v4617 = vadd.f32 %v4604, %v4616
    %v4618 = vpop.f32.mrf.mxu0
    %4619 = vdwg.mxu0
    %4620 = vmatpush.bf16.msra.mxu0 %v4128
    %4621 = vmatpush.bf16.msra.mxu0 %v4124
    %4622 = vmatpush.bf16.msra.mxu0 %v4120
    %4623 = vmatpush.bf16.msra.mxu0 %v4116
    %4624 = vmatpush.bf16.msra.mxu0 %v4112
    %4625 = vmatpush.bf16.msra.mxu0 %v4108
    %4626 = vmatpush.bf16.msra.mxu0 %v4104
    %4627 = vmatpush.bf16.msra.mxu0 %v4100
    %4628 = vmatmul.bf16.gmra.mxu0 %v3158
    %v4629 = vpop.f32.mrf.mxu0
    %v4630 = vadd.f32 %v4617, %v4629
    %v4631 = vpop.f32.mrf.mxu0
    %4632 = vdwg.mxu0
    %v4633 = vmax.f32 %v4396, 0.0
    %v4634 = vmax.f32 %v4474, 0.0
    %v4635 = vmax.f32 %v4552, 0.0
    %v4636 = vmax.f32 %v4630, 0.0
    %v4637 = vpack.c.bf16 %v4633, %v4633
    %v4638 = vpack.c.bf16 %v4634, %v4634
    %v4639 = vpack.c.bf16 %v4635, %v4635
    %v4640 = vpack.c.bf16 %v4636, %v4636
    %v4641 = vld [vmem:[%s7] sm:$0xf]
    %v4642 = vld [vmem:[%s7 + $0x4] sm:$0xf]
    %v4643 = vld [vmem:[%s7 + $0x8] sm:$0xf]
    %v4644 = vld [vmem:[%s7 + $0xc] sm:$0xf]
    %v4645 = vld [vmem:[%s7 + $0x10] sm:$0xf]
    %v4646 = vld [vmem:[%s7 + $0x14] sm:$0xf]
    %v4647 = vld [vmem:[%s7 + $0x18] sm:$0xf]
    %v4648 = vld [vmem:[%s7 + $0x1c] sm:$0xf]
    %v4649 = vld [vmem:[%s7 + $0x20] sm:$0xf]
    %v4650 = vld [vmem:[%s7 + $0x24] sm:$0xf]
    %v4651 = vld [vmem:[%s7 + $0x28] sm:$0xf]
    %v4652 = vld [vmem:[%s7 + $0x2c] sm:$0xf]
    %v4653 = vld [vmem:[%s7 + $0x30] sm:$0xf]
    %v4654 = vld [vmem:[%s7 + $0x34] sm:$0xf]
    %v4655 = vld [vmem:[%s7 + $0x38] sm:$0xf]
    %v4656 = vld [vmem:[%s7 + $0x3c] sm:$0xf]
    %v4657 = vld [vmem:[%s7 + $0x40] sm:$0xf]
    %v4658 = vld [vmem:[%s7 + $0x44] sm:$0xf]
    %v4659 = vld [vmem:[%s7 + $0x48] sm:$0xf]
    %v4660 = vld [vmem:[%s7 + $0x4c] sm:$0xf]
    %v4661 = vld [vmem:[%s7 + $0x50] sm:$0xf]
    %v4662 = vld [vmem:[%s7 + $0x54] sm:$0xf]
    %v4663 = vld [vmem:[%s7 + $0x58] sm:$0xf]
    %v4664 = vld [vmem:[%s7 + $0x5c] sm:$0xf]
    %v4665 = vld [vmem:[%s7 + $0x60] sm:$0xf]
    %v4666 = vld [vmem:[%s7 + $0x64] sm:$0xf]
    %v4667 = vld [vmem:[%s7 + $0x68] sm:$0xf]
    %v4668 = vld [vmem:[%s7 + $0x6c] sm:$0xf]
    %v4669 = vld [vmem:[%s7 + $0x70] sm:$0xf]
    %v4670 = vld [vmem:[%s7 + $0x74] sm:$0xf]
    %v4671 = vld [vmem:[%s7 + $0x78] sm:$0xf]
    %v4672 = vld [vmem:[%s7 + $0x7c] sm:$0xf]
    %v4673 = vld [vmem:[%s7 + $0x80] sm:$0xf]
    %v4674 = vld [vmem:[%s7 + $0x84] sm:$0xf]
    %v4675 = vld [vmem:[%s7 + $0x88] sm:$0xf]
    %v4676 = vld [vmem:[%s7 + $0x8c] sm:$0xf]
    %v4677 = vld [vmem:[%s7 + $0x90] sm:$0xf]
    %v4678 = vld [vmem:[%s7 + $0x94] sm:$0xf]
    %v4679 = vld [vmem:[%s7 + $0x98] sm:$0xf]
    %v4680 = vld [vmem:[%s7 + $0x9c] sm:$0xf]
    %v4681 = vld [vmem:[%s7 + $0xa0] sm:$0xf]
    %v4682 = vld [vmem:[%s7 + $0xa4] sm:$0xf]
    %v4683 = vld [vmem:[%s7 + $0xa8] sm:$0xf]
    %v4684 = vld [vmem:[%s7 + $0xac] sm:$0xf]
    %v4685 = vld [vmem:[%s7 + $0xb0] sm:$0xf]
    %v4686 = vld [vmem:[%s7 + $0xb4] sm:$0xf]
    %v4687 = vld [vmem:[%s7 + $0xb8] sm:$0xf]
    %v4688 = vld [vmem:[%s7 + $0xbc] sm:$0xf]
    %v4689 = vld [vmem:[%s7 + $0xc0] sm:$0xf]
    %v4690 = vld [vmem:[%s7 + $0xc4] sm:$0xf]
    %v4691 = vld [vmem:[%s7 + $0xc8] sm:$0xf]
    %v4692 = vld [vmem:[%s7 + $0xcc] sm:$0xf]
    %v4693 = vld [vmem:[%s7 + $0xd0] sm:$0xf]
    %v4694 = vld [vmem:[%s7 + $0xd4] sm:$0xf]
    %v4695 = vld [vmem:[%s7 + $0xd8] sm:$0xf]
    %v4696 = vld [vmem:[%s7 + $0xdc] sm:$0xf]
    %v4697 = vld [vmem:[%s7 + $0xe0] sm:$0xf]
    %v4698 = vld [vmem:[%s7 + $0xe4] sm:$0xf]
    %v4699 = vld [vmem:[%s7 + $0xe8] sm:$0xf]
    %v4700 = vld [vmem:[%s7 + $0xec] sm:$0xf]
    %v4701 = vld [vmem:[%s7 + $0xf0] sm:$0xf]
    %v4702 = vld [vmem:[%s7 + $0xf4] sm:$0xf]
    %v4703 = vld [vmem:[%s7 + $0xf8] sm:$0xf]
    %v4704 = vld [vmem:[%s7 + $0xfc] sm:$0xf]
    %v4705 = vld [vmem:[%s8] sm:$0x1]
    %v4707 = vperm.slane %v4705, 0
    %v4773 = vunpack.c.l.b16 %v4641
    %v4774 = vunpack.c.l.b16 %v4642
    %v4775 = vunpack.c.l.b16 %v4643
    %v4776 = vunpack.c.l.b16 %v4644
    %v4777 = vunpack.c.l.b16 %v4645
    %v4778 = vunpack.c.l.b16 %v4646
    %v4779 = vunpack.c.l.b16 %v4647
    %v4780 = vunpack.c.l.b16 %v4648
    %v4781 = vunpack.c.l.b16 %v4649
    %v4782 = vunpack.c.l.b16 %v4650
    %v4783 = vunpack.c.l.b16 %v4651
    %v4784 = vunpack.c.l.b16 %v4652
    %v4785 = vunpack.c.l.b16 %v4653
    %v4786 = vunpack.c.l.b16 %v4654
    %v4787 = vunpack.c.l.b16 %v4655
    %v4788 = vunpack.c.l.b16 %v4656
    %v4789 = vunpack.c.l.b16 %v4657
    %v4790 = vunpack.c.l.b16 %v4658
    %v4791 = vunpack.c.l.b16 %v4659
    %v4792 = vunpack.c.l.b16 %v4660
    %v4793 = vunpack.c.l.b16 %v4661
    %v4794 = vunpack.c.l.b16 %v4662
    %v4795 = vunpack.c.l.b16 %v4663
    %v4796 = vunpack.c.l.b16 %v4664
    %v4797 = vunpack.c.l.b16 %v4665
    %v4798 = vunpack.c.l.b16 %v4666
    %v4799 = vunpack.c.l.b16 %v4667
    %v4800 = vunpack.c.l.b16 %v4668
    %v4801 = vunpack.c.l.b16 %v4669
    %v4802 = vunpack.c.l.b16 %v4670
    %v4803 = vunpack.c.l.b16 %v4671
    %v4804 = vunpack.c.l.b16 %v4672
    %v4805 = vunpack.c.l.b16 %v4673
    %v4806 = vunpack.c.l.b16 %v4674
    %v4807 = vunpack.c.l.b16 %v4675
    %v4808 = vunpack.c.l.b16 %v4676
    %v4809 = vunpack.c.l.b16 %v4677
    %v4810 = vunpack.c.l.b16 %v4678
    %v4811 = vunpack.c.l.b16 %v4679
    %v4812 = vunpack.c.l.b16 %v4680
    %v4813 = vunpack.c.l.b16 %v4681
    %v4814 = vunpack.c.l.b16 %v4682
    %v4815 = vunpack.c.l.b16 %v4683
    %v4816 = vunpack.c.l.b16 %v4684
    %v4817 = vunpack.c.l.b16 %v4685
    %v4818 = vunpack.c.l.b16 %v4686
    %v4819 = vunpack.c.l.b16 %v4687
    %v4820 = vunpack.c.l.b16 %v4688
    %v4821 = vunpack.c.l.b16 %v4689
    %v4822 = vunpack.c.l.b16 %v4690
    %v4823 = vunpack.c.l.b16 %v4691
    %v4824 = vunpack.c.l.b16 %v4692
    %v4825 = vunpack.c.l.b16 %v4693
    %v4826 = vunpack.c.l.b16 %v4694
    %v4827 = vunpack.c.l.b16 %v4695
    %v4828 = vunpack.c.l.b16 %v4696
    %v4829 = vunpack.c.l.b16 %v4697
    %v4830 = vunpack.c.l.b16 %v4698
    %v4831 = vunpack.c.l.b16 %v4699
    %v4832 = vunpack.c.l.b16 %v4700
    %v4833 = vunpack.c.l.b16 %v4701
    %v4834 = vunpack.c.l.b16 %v4702
    %v4835 = vunpack.c.l.b16 %v4703
    %v4836 = vunpack.c.l.b16 %v4704
    %v4837 = vpack.c.b16 %v4774, %v4773
    %v4838 = vpack.c.b16 %v4776, %v4775
    %v4839 = vpack.c.b16 %v4778, %v4777
    %v4840 = vpack.c.b16 %v4780, %v4779
    %v4841 = vpack.c.b16 %v4782, %v4781
    %v4842 = vpack.c.b16 %v4784, %v4783
    %v4843 = vpack.c.b16 %v4786, %v4785
    %v4844 = vpack.c.b16 %v4788, %v4787
    %v4845 = vpack.c.b16 %v4790, %v4789
    %v4846 = vpack.c.b16 %v4792, %v4791
    %v4847 = vpack.c.b16 %v4794, %v4793
    %v4848 = vpack.c.b16 %v4796, %v4795
    %v4849 = vpack.c.b16 %v4798, %v4797
    %v4850 = vpack.c.b16 %v4800, %v4799
    %v4851 = vpack.c.b16 %v4802, %v4801
    %v4852 = vpack.c.b16 %v4804, %v4803
    %v4853 = vpack.c.b16 %v4806, %v4805
    %v4854 = vpack.c.b16 %v4808, %v4807
    %v4855 = vpack.c.b16 %v4810, %v4809
    %v4856 = vpack.c.b16 %v4812, %v4811
    %v4857 = vpack.c.b16 %v4814, %v4813
    %v4858 = vpack.c.b16 %v4816, %v4815
    %v4859 = vpack.c.b16 %v4818, %v4817
    %v4860 = vpack.c.b16 %v4820, %v4819
    %v4861 = vpack.c.b16 %v4822, %v4821
    %v4862 = vpack.c.b16 %v4824, %v4823
    %v4863 = vpack.c.b16 %v4826, %v4825
    %v4864 = vpack.c.b16 %v4828, %v4827
    %v4865 = vpack.c.b16 %v4830, %v4829
    %v4866 = vpack.c.b16 %v4832, %v4831
    %v4867 = vpack.c.b16 %v4834, %v4833
    %v4868 = vpack.c.b16 %v4836, %v4835
    %4901 = vmatpush.bf16.msra.mxu0 %v4844
    %4902 = vmatpush.bf16.msra.mxu0 %v4843
    %4903 = vmatpush.bf16.msra.mxu0 %v4842
    %4904 = vmatpush.bf16.msra.mxu0 %v4841
    %4905 = vmatpush.bf16.msra.mxu0 %v4840
    %4906 = vmatpush.bf16.msra.mxu0 %v4839
    %4907 = vmatpush.bf16.msra.mxu0 %v4838
    %4908 = vmatpush.bf16.msra.mxu0 %v4837
    %4909 = vmatmul.bf16.gmra.mxu0 %v4637
    %v4910 = vpop.f32.mrf.mxu0
    %v4911 = vadd.f32 %v4707, %v4910
    %v4912 = vpop.f32.mrf.mxu0
    %4913 = vdwg.mxu0
    %4914 = vmatpush.bf16.msra.mxu0 %v4852
    %4915 = vmatpush.bf16.msra.mxu0 %v4851
    %4916 = vmatpush.bf16.msra.mxu0 %v4850
    %4917 = vmatpush.bf16.msra.mxu0 %v4849
    %4918 = vmatpush.bf16.msra.mxu0 %v4848
    %4919 = vmatpush.bf16.msra.mxu0 %v4847
    %4920 = vmatpush.bf16.msra.mxu0 %v4846
    %4921 = vmatpush.bf16.msra.mxu0 %v4845
    %4922 = vmatmul.bf16.gmra.mxu0 %v4638
    %v4923 = vpop.f32.mrf.mxu0
    %v4924 = vadd.f32 %v4911, %v4923
    %v4925 = vpop.f32.mrf.mxu0
    %4926 = vdwg.mxu0
    %4927 = vmatpush.bf16.msra.mxu0 %v4860
    %4928 = vmatpush.bf16.msra.mxu0 %v4859
    %4929 = vmatpush.bf16.msra.mxu0 %v4858
    %4930 = vmatpush.bf16.msra.mxu0 %v4857
    %4931 = vmatpush.bf16.msra.mxu0 %v4856
    %4932 = vmatpush.bf16.msra.mxu0 %v4855
    %4933 = vmatpush.bf16.msra.mxu0 %v4854
    %4934 = vmatpush.bf16.msra.mxu0 %v4853
    %4935 = vmatmul.bf16.gmra.mxu0 %v4639
    %v4936 = vpop.f32.mrf.mxu0
    %v4937 = vadd.f32 %v4924, %v4936
    %v4938 = vpop.f32.mrf.mxu0
    %4939 = vdwg.mxu0
    %4940 = vmatpush.bf16.msra.mxu0 %v4868
    %4941 = vmatpush.bf16.msra.mxu0 %v4867
    %4942 = vmatpush.bf16.msra.mxu0 %v4866
    %4943 = vmatpush.bf16.msra.mxu0 %v4865
    %4944 = vmatpush.bf16.msra.mxu0 %v4864
    %4945 = vmatpush.bf16.msra.mxu0 %v4863
    %4946 = vmatpush.bf16.msra.mxu0 %v4862
    %4947 = vmatpush.bf16.msra.mxu0 %v4861
    %4948 = vmatmul.bf16.gmra.mxu0 %v4640
    %v4949 = vpop.f32.mrf.mxu0
    %v4950 = vadd.f32 %v4937, %v4949
    %v4951 = vpop.f32.mrf.mxu0
    %4952 = vdwg.mxu0
    %v4953 = vxor.u32 %v4950, 2147483648
    %v4954 = vmul.f32 %v4953, 1.442695
    %v4955 = vpow.pop %v4954
    %v4956 = vadd.f32 %v4955, 1.0
    %v4957 = vrcp.pop %v4956
    %v4958 = vmul.f32 %v4956, %v4957
    %v4959 = vsub.f32 1.0, %v4958
    %v4960 = vmul.f32 %v4957, %v4959
    %v4961 = vadd.f32 %v4957, %v4960
    %vm4962 = vweird.f32 %v4956
    %vm4963 = vweird.f32 %v4957
    %vm4964 = vmor %vm4962, %vm4963
    %v4965 = vsel %vm4964, %v4957, %v4961
    %v4966 = vand.u32 2147483647, %v4956
    %vm4967 = vcmp.eq.f32.partialorder %v4966, 8.507059e+37
    %v4968 = vand.u32 %v4956, 2147483648
    %v4969 = vor.u32 1.1754944e-38, %v4968
    %v4970 = vsel %vm4967, %v4969, %v4965
    %v4971 = vmul.f32 1.0, %v4970
    %vm4972 = vcmask 99328
    %4973 = vst.msk [vmem:[#allocation2] sm:$0x3] %vm4972, %v4971
    // Predicated region
    $region38: #{cnn_forward.9} parent=1 // pred_check
      _
    $region39: #{cnn_forward.9} parent=1 // pred_check_branch
      %4975 = sbr.rel (0) target = $region41
    $region40: #{cnn_forward.9} parent=1 // pred_region
      %4977 = vsyncadd [#allocation3], 0
      %s4979 = sshll.u32 [#allocation2], 4
      %s4980 = int_to_ptr.vmem [resolvable:$true] %s4979
      %s4981 = sshll.u32 %s9, 4
      %s4982 = int_to_ptr.hbm [resolvable:$true] %s4981
      %4984 = dma.vmem_to_hbm [thread:$0]  %s4980, 32, %s4982, [#allocation3]
    $region41: #{cnn_forward.9} parent=1 // pred_fallthru
      _
    // Predicated region
    $region42: #{cnn_forward.9} parent=1 // pred_check
      _
    $region43: #{cnn_forward.9} parent=1 // pred_check_branch
      %4986 = sbr.rel (0) target = $region45
    $region44: #{cnn_forward.9} parent=1 // pred_region
      %4988 = dma.done [#allocation3], 32
    $region45: #{cnn_forward.9} parent=1 // pred_fallthru
      _
    %4989 = vsyncpa [#allocation3], 1

</llo_original>
